<compile_context>
chip_gen: v6e
topology: v6e:2x2x1
jax: 0.10.0
libtpu: 0.0.40
codegen_flags: <defaults>
</compile_context>

<pallas_src>
import jax
import jax.numpy as jnp
from jax.experimental import pallas as pl
from jax.experimental.pallas import tpu as pltpu


def se_bottleneck_kernel(
    x_ref,            # (Bn, H, W, Cin)        input block (Bn samples), bf16
    w1s_ref,          # (Cin, Cexp + C1)       [shortcut | conv1] fused 1x1 weight, bf16
    s1s_ref, b1s_ref, # (1, Cexp + C1)         folded BN scale / bias for fused matmul, f32
    w2_ref,           # (9*C1, C1)             3x3 conv weight, im2col layout, bf16
    s2_ref, b2_ref,   # (1, C1)                folded BN2 scale / bias, f32
    w3_ref,           # (C1, Cexp)             conv3 (expansion) weight, bf16
    s3_ref, b3_ref,   # (1, Cexp)              folded BN3 scale / bias, f32
    wfc1_ref,         # (Cexp, Crp)            SE fc1 weight (lane-padded to Crp), bf16
    wfc2_ref,         # (Crp, Cexp)            SE fc2 weight (lane-padded to Crp), bf16
    o_ref,            # (Bn, H, W, Cexp)       output block, bf16
    pad_ref,          # (Bn, H+2, W+2, C1)     VMEM scratch: zero-padded conv2 input, bf16
):
    Bn, H, W, Cin = x_ref.shape
    C1 = w2_ref.shape[1]
    Cexp = w3_ref.shape[1]
    M = Bn * H * W

    xf = x_ref[...].reshape(M, Cin)                           # bf16, (M, Cin)

    # ---- fused conv1 (1x1) + shortcut projection: one MXU pass over the shared LHS ------
    h = jnp.dot(xf, w1s_ref[...], preferred_element_type=jnp.float32)   # (M, Cexp+C1)
    h = h * s1s_ref[...] + b1s_ref[...]
    sc = h[:, :Cexp]                                          # shortcut BN output (no ReLU)
    h1 = jnp.maximum(h[:, Cexp:], 0.0)                        # conv1 + BN + ReLU, (M, C1)

    # ---- 3x3 conv (pad=1, stride=1) via im2col: single K = 9*C1 matmul, bf16 end-to-end --
    # Zero only the 1-pixel border; the interior is fully rewritten every grid step.
    pad_ref[:, 0:1, :, :] = jnp.zeros((Bn, 1, W + 2, C1), jnp.bfloat16)
    pad_ref[:, H + 1:H + 2, :, :] = jnp.zeros((Bn, 1, W + 2, C1), jnp.bfloat16)
    pad_ref[:, 1:H + 1, 0:1, :] = jnp.zeros((Bn, H, 1, C1), jnp.bfloat16)
    pad_ref[:, 1:H + 1, W + 1:W + 2, :] = jnp.zeros((Bn, H, 1, C1), jnp.bfloat16)
    pad_ref[:, 1:H + 1, 1:W + 1, :] = h1.reshape(Bn, H, W, C1).astype(jnp.bfloat16)

    col = jnp.concatenate(
        [pad_ref[:, kh:kh + H, kw:kw + W, :].reshape(M, C1)
         for kh in range(3) for kw in range(3)],
        axis=-1)                                              # (M, 9*C1) bf16, lane-aligned
    h2 = jnp.dot(col, w2_ref[...], preferred_element_type=jnp.float32)
    h2 = jnp.maximum(h2 * s2_ref[...] + b2_ref[...], 0.0)     # (M, C1)

    # ---- conv3 (1x1 expansion) + BN ------------------------------------------------------
    h3 = jnp.dot(h2.astype(jnp.bfloat16), w3_ref[...],
                 preferred_element_type=jnp.float32)
    h3 = h3 * s3_ref[...] + b3_ref[...]                       # (M, Cexp)

    # ---- residual add + ReLU -------------------------------------------------------------
    y = jnp.maximum(h3 + sc, 0.0)                             # (M, Cexp) f32
    y3 = y.reshape(Bn, H * W, Cexp)

    # ---- SE gate: per-sample global avg pool -> fc1 -> ReLU -> fc2 -> sigmoid ------------
    pooled = jnp.mean(y3, axis=1)                             # (Bn, Cexp)
    z = jnp.maximum(
        jnp.dot(pooled.astype(jnp.bfloat16), wfc1_ref[...],
                preferred_element_type=jnp.float32), 0.0)     # (Bn, Crp)
    gate = jax.nn.sigmoid(
        jnp.dot(z.astype(jnp.bfloat16), wfc2_ref[...],
                preferred_element_type=jnp.float32))          # (Bn, Cexp)

    o_ref[...] = (y3 * gate[:, None, :]).reshape(Bn, H, W, Cexp).astype(o_ref.dtype)


def se_bottleneck(x_nchw, params, block_n=4):
    """Fused SE_BottleNeck forward. Input is NCHW f32; output is NCHW bf16."""
    # NOTE: in a full network keep activations NHWC end-to-end; these transposes exist
    # only to match the PyTorch NCHW interface at the block boundary.
    x = jnp.transpose(x_nchw, (0, 2, 3, 1)).astype(jnp.float32)   # -> NHWC
    N, H, W, Cin = x.shape
    C1 = params["w1"].shape[1]
    Cexp = params["w3"].shape[1]
    Cr = params["wfc1"].shape[1]
    Crp = 128 * pl.cdiv(Cr, 128)                 # lane-pad SE bottleneck width

    # Largest batch-block size <= block_n that divides N.
    bn = max(b for b in range(1, min(block_n, N) + 1) if N % b == 0)

    bf = lambda a: a.astype(jnp.bfloat16)

    # Fuse conv1 + shortcut projection weights / folded-BN params: [shortcut | conv1].
    w1s = bf(jnp.concatenate([params["ws"], params["w1"]], axis=1))   # (Cin, Cexp+C1)
    s1s = jnp.concatenate([params["ss"], params["s1"]], axis=1)
    b1s = jnp.concatenate([params["bs"], params["b1"]], axis=1)
    w2f = bf(params["w2"].reshape(9 * C1, C1))                        # im2col weight layout

    # Zero-pad the SE FC weights to a lane-dense hidden width (no-op mathematically).
    wfc1 = jnp.zeros((Cexp, Crp), jnp.float32).at[:, :Cr].set(params["wfc1"])
    wfc2 = jnp.zeros((Crp, Cexp), jnp.float32).at[:Cr, :].set(params["wfc2"])

    inputs = (
        bf(x),
        w1s, s1s, b1s,
        w2f, params["s2"], params["b2"],
        bf(params["w3"]), params["s3"], params["b3"],
        bf(wfc1), bf(wfc2),
    )

    def resident(a):   # whole array, VMEM-resident, single-buffered (constant index_map)
        nd = a.ndim
        return pl.BlockSpec(a.shape, lambda n, nd=nd: (0,) * nd,
                            pipeline_mode=pl.Buffered(1))

    in_specs = [pl.BlockSpec((bn, H, W, Cin), lambda n: (n, 0, 0, 0))] \
             + [resident(a) for a in inputs[1:]]

    out = pl.pallas_call(
        se_bottleneck_kernel,
        out_shape=jax.ShapeDtypeStruct((N, H, W, Cexp), jnp.bfloat16),
        grid_spec=pltpu.PrefetchScalarGridSpec(
            num_scalar_prefetch=0,
            grid=(N // bn,),
            in_specs=in_specs,
            out_specs=pl.BlockSpec((bn, H, W, Cexp), lambda n: (n, 0, 0, 0)),
            scratch_shapes=[pltpu.VMEM((bn, H + 2, W + 2, C1), jnp.bfloat16)],
        ),
        compiler_params=pltpu.CompilerParams(
            dimension_semantics=("parallel",),       # megacore sharding on v7x
            vmem_limit_bytes=48 * 1024 * 1024,       # explicit, v7x-safe (< 64 MiB physical)
        ),
    )(*inputs)

    return jnp.transpose(out, (0, 3, 1, 2))                       # -> NCHW, bf16


# ------------------------- parameter construction ----------------------------
def fold_bn(gamma, beta, mean, var, eps=1e-5):
    scale = gamma / jnp.sqrt(var + eps)
    bias = beta - mean * scale
    return scale[None, :], bias[None, :]


def make_params(key, in_c, out_c, expansion=4, reduction=16):
    c_exp = out_c * expansion
    c_red = c_exp // reduction
    keys = jax.random.split(key, 10)

    def w(k, shape, fan_in):
        return (jax.random.normal(k, shape, jnp.float32) / jnp.sqrt(fan_in)).astype(jnp.float32)

    def bn(k, c):
        kg, kb = jax.random.split(k)
        gamma = 1.0 + 0.1 * jax.random.normal(kg, (c,), jnp.float32)
        beta = 0.1 * jax.random.normal(kb, (c,), jnp.float32)
        mean = jnp.zeros((c,), jnp.float32)
        var = jnp.ones((c,), jnp.float32)
        return fold_bn(gamma, beta, mean, var)

    s1, b1 = bn(keys[1], out_c)
    s2, b2 = bn(keys[3], out_c)
    s3, b3 = bn(keys[5], c_exp)
    ss, bs = bn(keys[7], c_exp)
    return dict(
        w1=w(keys[0], (in_c, out_c), in_c), s1=s1, b1=b1,
        w2=w(keys[2], (3, 3, out_c, out_c), 9 * out_c), s2=s2, b2=b2,
        w3=w(keys[4], (out_c, c_exp), out_c), s3=s3, b3=b3,
        ws=w(keys[6], (in_c, c_exp), in_c), ss=ss, bs=bs,
        wfc1=w(keys[8], (c_exp, c_red), c_exp),
        wfc2=w(keys[9], (c_red, c_exp), c_red),
    )


# ------------------------------ pure-JAX reference ----------------------------
def reference(x_nchw, p):
    """Same math (bf16 MXU operands, f32 accumulation / elementwise) in plain JAX, f32 out."""
    bf = lambda a: a.astype(jnp.bfloat16)
    x = jnp.transpose(x_nchw, (0, 2, 3, 1)).astype(jnp.float32)
    N, H, W, Cin = x.shape
    C1 = p["w1"].shape[1]
    Cexp = p["w3"].shape[1]
    xf = x.reshape(-1, Cin)

    h1 = jnp.dot(bf(xf), bf(p["w1"]), preferred_element_type=jnp.float32)
    h1 = jnp.maximum(h1 * p["s1"] + p["b1"], 0.0).reshape(N, H, W, C1)
    hp = jnp.pad(h1, ((0, 0), (1, 1), (1, 1), (0, 0)))
    col = jnp.concatenate(
        [hp[:, kh:kh + H, kw:kw + W, :].reshape(N * H * W, C1)
         for kh in range(3) for kw in range(3)], axis=-1)
    h2 = jnp.dot(bf(col), bf(p["w2"].reshape(9 * C1, C1)),
                 preferred_element_type=jnp.float32)
    h2 = jnp.maximum(h2 * p["s2"] + p["b2"], 0.0)
    h3 = jnp.dot(bf(h2), bf(p["w3"]), preferred_element_type=jnp.float32) * p["s3"] + p["b3"]
    sc = jnp.dot(bf(xf), bf(p["ws"]), preferred_element_type=jnp.float32) * p["ss"] + p["bs"]
    y = jnp.maximum(h3 + sc, 0.0).reshape(N, H * W, Cexp)
    pooled = jnp.mean(y, axis=1)
    z = jnp.maximum(jnp.dot(bf(pooled), bf(p["wfc1"]), preferred_element_type=jnp.float32), 0.0)
    gate = jax.nn.sigmoid(jnp.dot(bf(z), bf(p["wfc2"]), preferred_element_type=jnp.float32))
    out = (y * gate[:, None, :]).reshape(N, H, W, Cexp)
    return jnp.transpose(out, (0, 3, 1, 2))


if __name__ == "__main__":
    # Lane-dense small config: batch=16, in_channels=256, out_channels=128
    # -> C1=128, expanded channels Cexp=512, SE hidden=32 (lane-padded to 128), spatial 8x8.
    # BLOCK_N=4 -> grid=(4,): M=256 per matmul and >=2 grid steps per TensorCore on v7x.
    N, IN_C, OUT_C, H, W = 16, 256, 128, 8, 8

    key = jax.random.PRNGKey(0)
    kx, kp = jax.random.split(key)
    x = jax.random.normal(kx, (N, IN_C, H, W), jnp.float32)      # NCHW, like PyTorch
    params = make_params(kp, IN_C, OUT_C)

    out = jax.block_until_ready(se_bottleneck(x, params, block_n=4))
    ref = jax.block_until_ready(reference(x, params))

    assert out.shape == (N, OUT_C * 4, H, W), out.shape
    out_f32 = out.astype(jnp.float32)
    rel_err = float(jnp.max(jnp.abs(out_f32 - ref) / (1.0 + jnp.abs(ref))))
    assert rel_err < 1e-2, rel_err
    print("KERNEL_OK")
</pallas_src>

<mosaic_0001>
module attributes {stable_mosaic.version = 11 : i64} {
  func.func @se_bottleneck_kernel(%arg0: i32, %arg1: memref<4x8x8x256xbf16, #tpu.memory_space<vmem>>, %arg2: memref<256x640xbf16, #tpu.memory_space<vmem>>, %arg3: memref<1x640xf32, #tpu.memory_space<vmem>>, %arg4: memref<1x640xf32, #tpu.memory_space<vmem>>, %arg5: memref<1152x128xbf16, #tpu.memory_space<vmem>>, %arg6: memref<1x128xf32, #tpu.memory_space<vmem>>, %arg7: memref<1x128xf32, #tpu.memory_space<vmem>>, %arg8: memref<128x512xbf16, #tpu.memory_space<vmem>>, %arg9: memref<1x512xf32, #tpu.memory_space<vmem>>, %arg10: memref<1x512xf32, #tpu.memory_space<vmem>>, %arg11: memref<512x128xbf16, #tpu.memory_space<vmem>>, %arg12: memref<128x512xbf16, #tpu.memory_space<vmem>>, %arg13: memref<4x8x8x512xbf16, #tpu.memory_space<vmem>>, %arg14: memref<4x10x10x128xbf16, #tpu.memory_space<vmem>>) attributes {dimension_semantics = [#tpu.dimension_semantics<parallel>], iteration_bounds = array<i64: 4>, scalar_prefetch = 0 : i64, scratch_operands = 1 : i64, tpu.core_type = #tpu.core_type<tc>, window_params = [{transform_indices = @transform_0, window_bounds = array<i64: 4, 8, 8, 256>}, {pipeline_mode = #tpu.pipeline_mode<synchronous>, transform_indices = @transform_1, window_bounds = array<i64: 256, 640>}, {pipeline_mode = #tpu.pipeline_mode<synchronous>, transform_indices = @transform_2, window_bounds = array<i64: 1, 640>}, {pipeline_mode = #tpu.pipeline_mode<synchronous>, transform_indices = @transform_3, window_bounds = array<i64: 1, 640>}, {pipeline_mode = #tpu.pipeline_mode<synchronous>, transform_indices = @transform_4, window_bounds = array<i64: 1152, 128>}, {pipeline_mode = #tpu.pipeline_mode<synchronous>, transform_indices = @transform_5, window_bounds = array<i64: 1, 128>}, {pipeline_mode = #tpu.pipeline_mode<synchronous>, transform_indices = @transform_6, window_bounds = array<i64: 1, 128>}, {pipeline_mode = #tpu.pipeline_mode<synchronous>, transform_indices = @transform_7, window_bounds = array<i64: 128, 512>}, {pipeline_mode = #tpu.pipeline_mode<synchronous>, transform_indices = @transform_8, window_bounds = array<i64: 1, 512>}, {pipeline_mode = #tpu.pipeline_mode<synchronous>, transform_indices = @transform_9, window_bounds = array<i64: 1, 512>}, {pipeline_mode = #tpu.pipeline_mode<synchronous>, transform_indices = @transform_10, window_bounds = array<i64: 512, 128>}, {pipeline_mode = #tpu.pipeline_mode<synchronous>, transform_indices = @transform_11, window_bounds = array<i64: 128, 512>}, {transform_indices = @transform_12, window_bounds = array<i64: 4, 8, 8, 512>}]} {
    %c0 = arith.constant 0 : index
    %c0_0 = arith.constant 0 : index
    %c0_1 = arith.constant 0 : index
    %c0_2 = arith.constant 0 : index
    %0 = vector.load %arg1[%c0, %c0_0, %c0_1, %c0_2] : memref<4x8x8x256xbf16, #tpu.memory_space<vmem>>, vector<4x8x8x256xbf16>
    %1 = vector.shape_cast %0 : vector<4x8x8x256xbf16> to vector<256x256xbf16>
    %c0_3 = arith.constant 0 : index
    %c0_4 = arith.constant 0 : index
    %2 = vector.load %arg2[%c0_3, %c0_4] : memref<256x640xbf16, #tpu.memory_space<vmem>>, vector<256x640xbf16>
    %cst = arith.constant dense<0.000000e+00> : vector<256x640xf32>
    %3 = tpu.matmul %1, %2, %cst {dimension_numbers = #tpu.dot_dimension_numbers<[1], [0], [0], [1], [0, 0, 1, 1], [], []>} : vector<256x256xbf16>, vector<256x640xbf16>, vector<256x640xf32> -> vector<256x640xf32>
    %c0_5 = arith.constant 0 : index
    %c0_6 = arith.constant 0 : index
    %4 = vector.load %arg3[%c0_5, %c0_6] : memref<1x640xf32, #tpu.memory_space<vmem>>, vector<1x640xf32>
    %5 = vector.broadcast %4 : vector<1x640xf32> to vector<256x640xf32>
    %6 = arith.mulf %3, %5 : vector<256x640xf32>
    %c0_7 = arith.constant 0 : index
    %c0_8 = arith.constant 0 : index
    %7 = vector.load %arg4[%c0_7, %c0_8] : memref<1x640xf32, #tpu.memory_space<vmem>>, vector<1x640xf32>
    %8 = vector.broadcast %7 : vector<1x640xf32> to vector<256x640xf32>
    %9 = arith.addf %6, %8 : vector<256x640xf32>
    %10 = vector.extract_strided_slice %9 {offsets = [0, 0], sizes = [256, 512], strides = [1, 1]} : vector<256x640xf32> to vector<256x512xf32>
    %11 = vector.extract_strided_slice %9 {offsets = [0, 512], sizes = [256, 128], strides = [1, 1]} : vector<256x640xf32> to vector<256x128xf32>
    %cst_9 = arith.constant 0.000000e+00 : f32
    %12 = vector.broadcast %cst_9 : f32 to vector<256x128xf32>
    %13 = arith.maximumf %11, %12 : vector<256x128xf32>
    %cst_10 = arith.constant 0.000000e+00 : bf16
    %14 = vector.broadcast %cst_10 : bf16 to vector<4x1x10x128xbf16>
    %c0_11 = arith.constant 0 : index
    %c0_12 = arith.constant 0 : index
    %c0_13 = arith.constant 0 : index
    %c0_14 = arith.constant 0 : index
    %15 = vector.load %arg14[%c0_11, %c0_12, %c0_13, %c0_14] : memref<4x10x10x128xbf16, #tpu.memory_space<vmem>>, vector<4x1x10x128xbf16>
    tpu.vector_store %arg14[%c0_11, %c0_12, %c0_13, %c0_14], %14 {strides = array<i32>} : memref<4x10x10x128xbf16, #tpu.memory_space<vmem>>, vector<4x1x10x128xbf16>,
    %cst_15 = arith.constant 0.000000e+00 : bf16
    %16 = vector.broadcast %cst_15 : bf16 to vector<4x1x10x128xbf16>
    %c0_16 = arith.constant 0 : index
    %c9 = arith.constant 9 : index
    %c0_17 = arith.constant 0 : index
    %c0_18 = arith.constant 0 : index
    %17 = vector.load %arg14[%c0_16, %c9, %c0_17, %c0_18] : memref<4x10x10x128xbf16, #tpu.memory_space<vmem>>, vector<4x1x10x128xbf16>
    tpu.vector_store %arg14[%c0_16, %c9, %c0_17, %c0_18], %16 {strides = array<i32>} : memref<4x10x10x128xbf16, #tpu.memory_space<vmem>>, vector<4x1x10x128xbf16>,
    %cst_19 = arith.constant 0.000000e+00 : bf16
    %18 = vector.broadcast %cst_19 : bf16 to vector<4x8x1x128xbf16>
    %c0_20 = arith.constant 0 : index
    %c1 = arith.constant 1 : index
    %c0_21 = arith.constant 0 : index
    %c0_22 = arith.constant 0 : index
    %19 = vector.load %arg14[%c0_20, %c1, %c0_21, %c0_22] : memref<4x10x10x128xbf16, #tpu.memory_space<vmem>>, vector<4x8x1x128xbf16>
    tpu.vector_store %arg14[%c0_20, %c1, %c0_21, %c0_22], %18 {strides = array<i32>} : memref<4x10x10x128xbf16, #tpu.memory_space<vmem>>, vector<4x8x1x128xbf16>,
    %cst_23 = arith.constant 0.000000e+00 : bf16
    %20 = vector.broadcast %cst_23 : bf16 to vector<4x8x1x128xbf16>
    %c0_24 = arith.constant 0 : index
    %c1_25 = arith.constant 1 : index
    %c9_26 = arith.constant 9 : index
    %c0_27 = arith.constant 0 : index
    %21 = vector.load %arg14[%c0_24, %c1_25, %c9_26, %c0_27] : memref<4x10x10x128xbf16, #tpu.memory_space<vmem>>, vector<4x8x1x128xbf16>
    tpu.vector_store %arg14[%c0_24, %c1_25, %c9_26, %c0_27], %20 {strides = array<i32>} : memref<4x10x10x128xbf16, #tpu.memory_space<vmem>>, vector<4x8x1x128xbf16>,
    %22 = vector.shape_cast %13 : vector<256x128xf32> to vector<4x8x8x128xf32>
    %23 = arith.truncf %22 : vector<4x8x8x128xf32> to vector<4x8x8x128xbf16>
    %c0_28 = arith.constant 0 : index
    %c1_29 = arith.constant 1 : index
    %c1_30 = arith.constant 1 : index
    %c0_31 = arith.constant 0 : index
    %24 = vector.load %arg14[%c0_28, %c1_29, %c1_30, %c0_31] : memref<4x10x10x128xbf16, #tpu.memory_space<vmem>>, vector<4x8x8x128xbf16>
    tpu.vector_store %arg14[%c0_28, %c1_29, %c1_30, %c0_31], %23 {strides = array<i32>} : memref<4x10x10x128xbf16, #tpu.memory_space<vmem>>, vector<4x8x8x128xbf16>,
    %c0_32 = arith.constant 0 : index
    %c0_33 = arith.constant 0 : index
    %c0_34 = arith.constant 0 : index
    %c0_35 = arith.constant 0 : index
    %25 = vector.load %arg14[%c0_32, %c0_33, %c0_34, %c0_35] : memref<4x10x10x128xbf16, #tpu.memory_space<vmem>>, vector<4x8x8x128xbf16>
    %26 = vector.shape_cast %25 : vector<4x8x8x128xbf16> to vector<256x128xbf16>
    %c0_36 = arith.constant 0 : index
    %c0_37 = arith.constant 0 : index
    %c1_38 = arith.constant 1 : index
    %c0_39 = arith.constant 0 : index
    %27 = vector.load %arg14[%c0_36, %c0_37, %c1_38, %c0_39] : memref<4x10x10x128xbf16, #tpu.memory_space<vmem>>, vector<4x8x8x128xbf16>
    %28 = vector.shape_cast %27 : vector<4x8x8x128xbf16> to vector<256x128xbf16>
    %c0_40 = arith.constant 0 : index
    %c0_41 = arith.constant 0 : index
    %c2 = arith.constant 2 : index
    %c0_42 = arith.constant 0 : index
    %29 = vector.load %arg14[%c0_40, %c0_41, %c2, %c0_42] : memref<4x10x10x128xbf16, #tpu.memory_space<vmem>>, vector<4x8x8x128xbf16>
    %30 = vector.shape_cast %29 : vector<4x8x8x128xbf16> to vector<256x128xbf16>
    %c0_43 = arith.constant 0 : index
    %c1_44 = arith.constant 1 : index
    %c0_45 = arith.constant 0 : index
    %c0_46 = arith.constant 0 : index
    %31 = vector.load %arg14[%c0_43, %c1_44, %c0_45, %c0_46] : memref<4x10x10x128xbf16, #tpu.memory_space<vmem>>, vector<4x8x8x128xbf16>
    %32 = vector.shape_cast %31 : vector<4x8x8x128xbf16> to vector<256x128xbf16>
    %c0_47 = arith.constant 0 : index
    %c1_48 = arith.constant 1 : index
    %c1_49 = arith.constant 1 : index
    %c0_50 = arith.constant 0 : index
    %33 = vector.load %arg14[%c0_47, %c1_48, %c1_49, %c0_50] : memref<4x10x10x128xbf16, #tpu.memory_space<vmem>>, vector<4x8x8x128xbf16>
    %34 = vector.shape_cast %33 : vector<4x8x8x128xbf16> to vector<256x128xbf16>
    %c0_51 = arith.constant 0 : index
    %c1_52 = arith.constant 1 : index
    %c2_53 = arith.constant 2 : index
    %c0_54 = arith.constant 0 : index
    %35 = vector.load %arg14[%c0_51, %c1_52, %c2_53, %c0_54] : memref<4x10x10x128xbf16, #tpu.memory_space<vmem>>, vector<4x8x8x128xbf16>
    %36 = vector.shape_cast %35 : vector<4x8x8x128xbf16> to vector<256x128xbf16>
    %c0_55 = arith.constant 0 : index
    %c2_56 = arith.constant 2 : index
    %c0_57 = arith.constant 0 : index
    %c0_58 = arith.constant 0 : index
    %37 = vector.load %arg14[%c0_55, %c2_56, %c0_57, %c0_58] : memref<4x10x10x128xbf16, #tpu.memory_space<vmem>>, vector<4x8x8x128xbf16>
    %38 = vector.shape_cast %37 : vector<4x8x8x128xbf16> to vector<256x128xbf16>
    %c0_59 = arith.constant 0 : index
    %c2_60 = arith.constant 2 : index
    %c1_61 = arith.constant 1 : index
    %c0_62 = arith.constant 0 : index
    %39 = vector.load %arg14[%c0_59, %c2_60, %c1_61, %c0_62] : memref<4x10x10x128xbf16, #tpu.memory_space<vmem>>, vector<4x8x8x128xbf16>
    %40 = vector.shape_cast %39 : vector<4x8x8x128xbf16> to vector<256x128xbf16>
    %c0_63 = arith.constant 0 : index
    %c2_64 = arith.constant 2 : index
    %c2_65 = arith.constant 2 : index
    %c0_66 = arith.constant 0 : index
    %41 = vector.load %arg14[%c0_63, %c2_64, %c2_65, %c0_66] : memref<4x10x10x128xbf16, #tpu.memory_space<vmem>>, vector<4x8x8x128xbf16>
    %42 = vector.shape_cast %41 : vector<4x8x8x128xbf16> to vector<256x128xbf16>
    %43 = tpu.concatenate %26, %28, %30, %32, %34, %36, %38, %40, %42 in 1 : vector<256x128xbf16>, vector<256x128xbf16>, vector<256x128xbf16>, vector<256x128xbf16>, vector<256x128xbf16>, vector<256x128xbf16>, vector<256x128xbf16>, vector<256x128xbf16>, vector<256x128xbf16> -> vector<256x1152xbf16>
    %c0_67 = arith.constant 0 : index
    %c0_68 = arith.constant 0 : index
    %44 = vector.load %arg5[%c0_67, %c0_68] : memref<1152x128xbf16, #tpu.memory_space<vmem>>, vector<1152x128xbf16>
    %cst_69 = arith.constant dense<0.000000e+00> : vector<256x128xf32>
    %45 = tpu.matmul %43, %44, %cst_69 {dimension_numbers = #tpu.dot_dimension_numbers<[1], [0], [0], [1], [0, 0, 1, 1], [], []>} : vector<256x1152xbf16>, vector<1152x128xbf16>, vector<256x128xf32> -> vector<256x128xf32>
    %c0_70 = arith.constant 0 : index
    %c0_71 = arith.constant 0 : index
    %46 = vector.load %arg6[%c0_70, %c0_71] : memref<1x128xf32, #tpu.memory_space<vmem>>, vector<1x128xf32>
    %47 = vector.broadcast %46 : vector<1x128xf32> to vector<256x128xf32>
    %48 = arith.mulf %45, %47 : vector<256x128xf32>
    %c0_72 = arith.constant 0 : index
    %c0_73 = arith.constant 0 : index
    %49 = vector.load %arg7[%c0_72, %c0_73] : memref<1x128xf32, #tpu.memory_space<vmem>>, vector<1x128xf32>
    %50 = vector.broadcast %49 : vector<1x128xf32> to vector<256x128xf32>
    %51 = arith.addf %48, %50 : vector<256x128xf32>
    %cst_74 = arith.constant 0.000000e+00 : f32
    %52 = vector.broadcast %cst_74 : f32 to vector<256x128xf32>
    %53 = arith.maximumf %51, %52 : vector<256x128xf32>
    %54 = arith.truncf %53 : vector<256x128xf32> to vector<256x128xbf16>
    %c0_75 = arith.constant 0 : index
    %c0_76 = arith.constant 0 : index
    %55 = vector.load %arg8[%c0_75, %c0_76] : memref<128x512xbf16, #tpu.memory_space<vmem>>, vector<128x512xbf16>
    %cst_77 = arith.constant dense<0.000000e+00> : vector<256x512xf32>
    %56 = tpu.matmul %54, %55, %cst_77 {dimension_numbers = #tpu.dot_dimension_numbers<[1], [0], [0], [1], [0, 0, 1, 1], [], []>} : vector<256x128xbf16>, vector<128x512xbf16>, vector<256x512xf32> -> vector<256x512xf32>
    %c0_78 = arith.constant 0 : index
    %c0_79 = arith.constant 0 : index
    %57 = vector.load %arg9[%c0_78, %c0_79] : memref<1x512xf32, #tpu.memory_space<vmem>>, vector<1x512xf32>
    %58 = vector.broadcast %57 : vector<1x512xf32> to vector<256x512xf32>
    %59 = arith.mulf %56, %58 : vector<256x512xf32>
    %c0_80 = arith.constant 0 : index
    %c0_81 = arith.constant 0 : index
    %60 = vector.load %arg10[%c0_80, %c0_81] : memref<1x512xf32, #tpu.memory_space<vmem>>, vector<1x512xf32>
    %61 = vector.broadcast %60 : vector<1x512xf32> to vector<256x512xf32>
    %62 = arith.addf %59, %61 : vector<256x512xf32>
    %63 = arith.addf %62, %10 : vector<256x512xf32>
    %cst_82 = arith.constant 0.000000e+00 : f32
    %64 = vector.broadcast %cst_82 : f32 to vector<256x512xf32>
    %65 = arith.maximumf %63, %64 : vector<256x512xf32>
    %66 = vector.shape_cast %65 : vector<256x512xf32> to vector<4x64x512xf32>
    %cst_83 = arith.constant dense<0.000000e+00> : vector<4x512xf32>
    %67 = vector.multi_reduction <add>, %66, %cst_83 [1] : vector<4x64x512xf32> to vector<4x512xf32>
    %cst_84 = arith.constant 6.400000e+01 : f32
    %68 = vector.broadcast %cst_84 : f32 to vector<4x512xf32>
    %69 = arith.divf %67, %68 : vector<4x512xf32>
    %70 = arith.truncf %69 : vector<4x512xf32> to vector<4x512xbf16>
    %c0_85 = arith.constant 0 : index
    %c0_86 = arith.constant 0 : index
    %71 = vector.load %arg11[%c0_85, %c0_86] : memref<512x128xbf16, #tpu.memory_space<vmem>>, vector<512x128xbf16>
    %cst_87 = arith.constant dense<0.000000e+00> : vector<4x128xf32>
    %72 = tpu.matmul %70, %71, %cst_87 {dimension_numbers = #tpu.dot_dimension_numbers<[1], [0], [0], [1], [0, 0, 1, 1], [], []>} : vector<4x512xbf16>, vector<512x128xbf16>, vector<4x128xf32> -> vector<4x128xf32>
    %cst_88 = arith.constant 0.000000e+00 : f32
    %73 = vector.broadcast %cst_88 : f32 to vector<4x128xf32>
    %74 = arith.maximumf %72, %73 : vector<4x128xf32>
    %75 = arith.truncf %74 : vector<4x128xf32> to vector<4x128xbf16>
    %c0_89 = arith.constant 0 : index
    %c0_90 = arith.constant 0 : index
    %76 = vector.load %arg12[%c0_89, %c0_90] : memref<128x512xbf16, #tpu.memory_space<vmem>>, vector<128x512xbf16>
    %cst_91 = arith.constant dense<0.000000e+00> : vector<4x512xf32>
    %77 = tpu.matmul %75, %76, %cst_91 {dimension_numbers = #tpu.dot_dimension_numbers<[1], [0], [0], [1], [0, 0, 1, 1], [], []>} : vector<4x128xbf16>, vector<128x512xbf16>, vector<4x512xf32> -> vector<4x512xf32>
    %78 = arith.negf %77 : vector<4x512xf32>
    %79 = math.exp %78 : vector<4x512xf32>
    %cst_92 = arith.constant 1.000000e+00 : f32
    %80 = vector.broadcast %cst_92 : f32 to vector<4x512xf32>
    %81 = arith.addf %80, %79 : vector<4x512xf32>
    %82 = arith.divf %80, %81 : vector<4x512xf32>
    %83 = vector.shape_cast %82 : vector<4x512xf32> to vector<4x1x512xf32>
    %84 = vector.broadcast %83 : vector<4x1x512xf32> to vector<4x64x512xf32>
    %85 = arith.mulf %66, %84 : vector<4x64x512xf32>
    %86 = vector.shape_cast %85 : vector<4x64x512xf32> to vector<4x8x8x512xf32>
    %87 = arith.truncf %86 : vector<4x8x8x512xf32> to vector<4x8x8x512xbf16>
    %c0_93 = arith.constant 0 : index
    %c0_94 = arith.constant 0 : index
    %c0_95 = arith.constant 0 : index
    %c0_96 = arith.constant 0 : index
    %88 = vector.load %arg13[%c0_93, %c0_94, %c0_95, %c0_96] : memref<4x8x8x512xbf16, #tpu.memory_space<vmem>>, vector<4x8x8x512xbf16>
    tpu.vector_store %arg13[%c0_93, %c0_94, %c0_95, %c0_96], %87 {strides = array<i32>} : memref<4x8x8x512xbf16, #tpu.memory_space<vmem>>, vector<4x8x8x512xbf16>,
    return
  }
  func.func @transform_0(%arg0: i32) -> (i32, i32, i32, i32) {
    %c0_i32 = arith.constant 0 : i32
    %c0_i32_0 = arith.constant 0 : i32
    %c0_i32_1 = arith.constant 0 : i32
    %c0_i32_2 = arith.constant 0 : i32
    return %arg0, %c0_i32, %c0_i32_0, %c0_i32_1 : i32, i32, i32, i32
  }
  func.func @transform_1(%arg0: i32) -> (i32, i32) {
    %c0_i32 = arith.constant 0 : i32
    %c0_i32_0 = arith.constant 0 : i32
    %c0_i32_1 = arith.constant 0 : i32
    return %c0_i32, %c0_i32_0 : i32, i32
  }
  func.func @transform_2(%arg0: i32) -> (i32, i32) {
    %c0_i32 = arith.constant 0 : i32
    %c0_i32_0 = arith.constant 0 : i32
    %c0_i32_1 = arith.constant 0 : i32
    return %c0_i32, %c0_i32_0 : i32, i32
  }
  func.func @transform_3(%arg0: i32) -> (i32, i32) {
    %c0_i32 = arith.constant 0 : i32
    %c0_i32_0 = arith.constant 0 : i32
    %c0_i32_1 = arith.constant 0 : i32
    return %c0_i32, %c0_i32_0 : i32, i32
  }
  func.func @transform_4(%arg0: i32) -> (i32, i32) {
    %c0_i32 = arith.constant 0 : i32
    %c0_i32_0 = arith.constant 0 : i32
    %c0_i32_1 = arith.constant 0 : i32
    return %c0_i32, %c0_i32_0 : i32, i32
  }
  func.func @transform_5(%arg0: i32) -> (i32, i32) {
    %c0_i32 = arith.constant 0 : i32
    %c0_i32_0 = arith.constant 0 : i32
    %c0_i32_1 = arith.constant 0 : i32
    return %c0_i32, %c0_i32_0 : i32, i32
  }
  func.func @transform_6(%arg0: i32) -> (i32, i32) {
    %c0_i32 = arith.constant 0 : i32
    %c0_i32_0 = arith.constant 0 : i32
    %c0_i32_1 = arith.constant 0 : i32
    return %c0_i32, %c0_i32_0 : i32, i32
  }
  func.func @transform_7(%arg0: i32) -> (i32, i32) {
    %c0_i32 = arith.constant 0 : i32
    %c0_i32_0 = arith.constant 0 : i32
    %c0_i32_1 = arith.constant 0 : i32
    return %c0_i32, %c0_i32_0 : i32, i32
  }
  func.func @transform_8(%arg0: i32) -> (i32, i32) {
    %c0_i32 = arith.constant 0 : i32
    %c0_i32_0 = arith.constant 0 : i32
    %c0_i32_1 = arith.constant 0 : i32
    return %c0_i32, %c0_i32_0 : i32, i32
  }
  func.func @transform_9(%arg0: i32) -> (i32, i32) {
    %c0_i32 = arith.constant 0 : i32
    %c0_i32_0 = arith.constant 0 : i32
    %c0_i32_1 = arith.constant 0 : i32
    return %c0_i32, %c0_i32_0 : i32, i32
  }
  func.func @transform_10(%arg0: i32) -> (i32, i32) {
    %c0_i32 = arith.constant 0 : i32
    %c0_i32_0 = arith.constant 0 : i32
    %c0_i32_1 = arith.constant 0 : i32
    return %c0_i32, %c0_i32_0 : i32, i32
  }
  func.func @transform_11(%arg0: i32) -> (i32, i32) {
    %c0_i32 = arith.constant 0 : i32
    %c0_i32_0 = arith.constant 0 : i32
    %c0_i32_1 = arith.constant 0 : i32
    return %c0_i32, %c0_i32_0 : i32, i32
  }
  func.func @transform_12(%arg0: i32) -> (i32, i32, i32, i32) {
    %c0_i32 = arith.constant 0 : i32
    %c0_i32_0 = arith.constant 0 : i32
    %c0_i32_1 = arith.constant 0 : i32
    %c0_i32_2 = arith.constant 0 : i32
    return %arg0, %c0_i32, %c0_i32_0, %c0_i32_1 : i32, i32, i32, i32
  }
}

</mosaic_0001>

<llo_original>
// kernel: tpu_custom_call.1
$region0: #{tpu_custom_call.1}
  #allocation0 [shape = 'u32[]', space=smem, size = 0x4, offset = 0x4, fixed_abs, tag = 'smem constant byte address 0x4 - core index']
  #allocation1 [shape = 'u32[144,128]{1,0:T(1,128)}', space=vmem, size = 0x12000, scoped, tag = 'internal scratch']
  #allocation2 [shape = 'bf16[4,10,10,128]{3,2,1,0:T(8,128)(2,1)}', space=vmem, size = 0x28000, scoped, tag = 'scratch operand']
  %s0 = inlined_call_operand.hbm [shape: bf16[16,8,8,256], index: 0, kind: input, shape index: {}]
  %s1 = inlined_call_operand.hbm [shape: bf16[256,640], index: 1, kind: input, shape index: {}]
  %s2 = inlined_call_operand.hbm [shape: f32[1,640], index: 2, kind: input, shape index: {}]
  %s3 = inlined_call_operand.vmem [shape: f32[1,640], index: 3, kind: input, shape index: {}]
  %s4 = inlined_call_operand.hbm [shape: bf16[1152,128], index: 4, kind: input, shape index: {}]
  %s5 = inlined_call_operand.hbm [shape: f32[1,128], index: 5, kind: input, shape index: {}]
  %s6 = inlined_call_operand.vmem [shape: f32[1,128], index: 6, kind: input, shape index: {}]
  %s7 = inlined_call_operand.hbm [shape: bf16[128,512], index: 7, kind: input, shape index: {}]
  %s8 = inlined_call_operand.vmem [shape: f32[1,512], index: 8, kind: input, shape index: {}]
  %s9 = inlined_call_operand.vmem [shape: f32[1,512], index: 9, kind: input, shape index: {}]
  %s10 = inlined_call_operand.hbm [shape: bf16[512,128], index: 10, kind: input, shape index: {}]
  %s11 = inlined_call_operand.hbm [shape: bf16[128,512], index: 11, kind: input, shape index: {}]
  %s12 = inlined_call_operand.hbm [shape: bf16[16,8,8,512], index: 12, kind: output, shape index: {}]
  %s13 = sld [smem:[#allocation0]]
  $region113: #{tpu_custom_call.1} parent=0
    _
  %s15 = ssub.s32 1, %s13
  %s16 = scalar_select 0, %s15, %s13
  $region1: #{tpu_custom_call.1} parent=0
    #allocation3 [shape = 'u8[262144]{0}', space=vmem, size = 0x40000, scoped, tag = 'input window, operand 0']
    #allocation4 [shape = 's32[2]{0}', space=sflag, size = 0x8, scoped, tag = 'scoped memory for tpu_custom_call.1']
    #allocation5 [shape = 's32[2]{0}', space=sflag, size = 0x8, scoped, tag = 'scoped memory for tpu_custom_call.1']
    #allocation6 [shape = 'u8[327680]{0}', space=vmem, size = 0x50000, scoped, tag = 'input window, operand 1, single buffered']
    #allocation7 [shape = 's32[1]{0}', space=sflag, size = 0x4, scoped, tag = 'scoped memory for tpu_custom_call.1']
    #allocation8 [shape = 'u8[2560]{0}', space=vmem, size = 0xc00, scoped, tag = 'input window, operand 2, single buffered']
    #allocation9 [shape = 'u8[294912]{0}', space=vmem, size = 0x48000, scoped, tag = 'input window, operand 4, single buffered']
    #allocation10 [shape = 's32[1]{0}', space=sflag, size = 0x4, scoped, tag = 'scoped memory for tpu_custom_call.1']
    #allocation11 [shape = 'u8[512]{0}', space=vmem, size = 0x400, scoped, tag = 'input window, operand 5, single buffered']
    #allocation12 [shape = 'u8[131072]{0}', space=vmem, size = 0x20000, scoped, tag = 'input window, operand 7, single buffered']
    #allocation13 [shape = 's32[1]{0}', space=sflag, size = 0x4, scoped, tag = 'scoped memory for tpu_custom_call.1']
    #allocation14 [shape = 'u8[131072]{0}', space=vmem, size = 0x20000, scoped, tag = 'input window, operand 10, single buffered']
    #allocation15 [shape = 'u8[131072]{0}', space=vmem, size = 0x20000, scoped, tag = 'input window, operand 11, single buffered']
    #allocation16 [shape = 's32[1]{0}', space=sflag, size = 0x4, scoped, tag = 'scoped memory for tpu_custom_call.1']
    #allocation17 [shape = 'u8[524288]{0}', space=vmem, size = 0x80000, scoped, tag = 'output window, operand 0']
    %17 = vsyncpa [#allocation4], 0
    %s18 = scalar_lea.sflag [#allocation4], 1
    %19 = vsyncpa %s18, 0
    %20 = vsyncpa [#allocation7], 0
    %21 = vsyncpa [#allocation10], 0
    %22 = vsyncpa [#allocation13], 0
    %23 = vsyncpa [#allocation16], 0
    %24 = vsyncpa [#allocation5], 0
    %s25 = scalar_lea.sflag [#allocation5], 1
    %26 = vsyncpa %s25, 0
    loop: start=0, step=1, limit=6
    $region2: #{tpu_custom_call.1} parent=1 // loop_pre_header
      _
    $region3: #{tpu_custom_call.1} parent=1 // loop_header
      %s28 = sphi 0, %s32
      %p29 = scmp.ge.s32.totalorder %s28, 6
      %s38 = sphi 0, %s40
      %s41 = sphi 0, %s38
      %s42 = sphi 0, %s41
      %s58 = sphi 0, %s42
      %s62 = sphi 0, %s62
      %s64 = sphi 0, %s62
      %s65 = sphi 0, %s64
      %s79 = sphi 0, %s65
      %s83 = sphi 0, %s83
      %s85 = sphi 0, %s83
      %s86 = sphi 0, %s85
      %s100 = sphi 0, %s86
      %s104 = sphi 0, %s104
      %s106 = sphi 0, %s104
      %s107 = sphi 0, %s106
      %s121 = sphi 0, %s107
      %s125 = sphi 0, %s125
      %s127 = sphi 0, %s125
      %s128 = sphi 0, %s127
      %s142 = sphi 0, %s128
      %s146 = sphi 0, %s146
      %s148 = sphi 0, %s146
      %s149 = sphi 0, %s148
      %s163 = sphi 0, %s149
      %s167 = sphi 0, %s167
      %s169 = sphi 0, %s167
      %s170 = sphi 0, %s169
      %s184 = sphi 0, %s170
      %s188 = sphi 0, %s188
      %s190 = sphi 0, %s188
      %s191 = sphi 0, %s190
      %s205 = sphi 0, %s191
      %s209 = sphi 0, %s209
      %s211 = sphi 0, %s209
      %s212 = sphi 0, %s211
      %s226 = sphi 0, %s212
      %s230 = sphi 0, %s230
      %s232 = sphi 0, %s230
      %s233 = sphi 0, %s232
      %s247 = sphi 0, %s233
      %s251 = sphi 0, %s251
      %s253 = sphi 0, %s251
      %s254 = sphi 0, %s253
      %s268 = sphi 0, %s254
      %s272 = sphi 0, %s272
      %s274 = sphi 0, %s272
      %s275 = sphi 0, %s274
      %s289 = sphi 0, %s275
      %s295 = sphi 0, %s297
      %s298 = sphi 0, %s295
      %s299 = sphi 0, %s298
      %s315 = sphi 0, %s299
    $region4: #{tpu_custom_call.1} parent=1 // loop_header_branch
      %31 = sbr.rel (%p29) target = $region8
    $region5: #{tpu_custom_call.1} parent=1 // loop_body
      %s33 = ssub.s32 %s28, 1
      %s34 = ssub.s32 %s28, 2
      %s35 = sadd.s32 %s28, 1
      %s36 = ssub.s32 %s28, %s35
      %p37 = scmp.eq.s32.totalorder %s36, 0
      %s39 = sadd.s32 %s38, 1
      %s40 = scalar_select %p37, %s38, %s39
      %p43 = pneg %p37
      %p44 = scmp.eq.s32.totalorder %s28, 3
      %p45 = por %p43, %p44
      %p46 = scmp.ne.s32.totalorder %s38, %s41
      %p47 = scmp.eq.s32.totalorder %s28, 0
      %p48 = por %p46, %p47
      %p49 = scmp.ne.s32.totalorder %s38, %s41
      %p50 = scmp.eq.s32.totalorder %s33, 3
      %p51 = por %p49, %p50
      %p52 = scmp.ne.s32.totalorder %s41, %s42
      %p53 = scmp.eq.s32.totalorder %s33, 0
      %p54 = por %p52, %p53
      %p55 = scmp.ne.s32.totalorder %s41, %s42
      %p56 = scmp.eq.s32.totalorder %s34, 3
      %p57 = por %p55, %p56
      %p59 = scmp.ne.s32.totalorder %s42, %s58
      %p60 = scmp.eq.s32.totalorder %s34, 0
      %p61 = por %p59, %p60
      %s63 = sadd.s32 %s62, 1
      %p66 = scmp.eq.s32.totalorder %s28, 3
      %p67 = scmp.ne.s32.totalorder %s62, %s64
      %p68 = scmp.eq.s32.totalorder %s28, 0
      %p69 = por %p67, %p68
      %p70 = scmp.ne.s32.totalorder %s62, %s64
      %p71 = scmp.eq.s32.totalorder %s33, 3
      %p72 = por %p70, %p71
      %p73 = scmp.ne.s32.totalorder %s64, %s65
      %p74 = scmp.eq.s32.totalorder %s33, 0
      %p75 = por %p73, %p74
      %p76 = scmp.ne.s32.totalorder %s64, %s65
      %p77 = scmp.eq.s32.totalorder %s34, 3
      %p78 = por %p76, %p77
      %p80 = scmp.ne.s32.totalorder %s65, %s79
      %p81 = scmp.eq.s32.totalorder %s34, 0
      %p82 = por %p80, %p81
      %s84 = sadd.s32 %s83, 1
      %p87 = scmp.eq.s32.totalorder %s28, 3
      %p88 = scmp.ne.s32.totalorder %s83, %s85
      %p89 = scmp.eq.s32.totalorder %s28, 0
      %p90 = por %p88, %p89
      %p91 = scmp.ne.s32.totalorder %s83, %s85
      %p92 = scmp.eq.s32.totalorder %s33, 3
      %p93 = por %p91, %p92
      %p94 = scmp.ne.s32.totalorder %s85, %s86
      %p95 = scmp.eq.s32.totalorder %s33, 0
      %p96 = por %p94, %p95
      %p97 = scmp.ne.s32.totalorder %s85, %s86
      %p98 = scmp.eq.s32.totalorder %s34, 3
      %p99 = por %p97, %p98
      %p101 = scmp.ne.s32.totalorder %s86, %s100
      %p102 = scmp.eq.s32.totalorder %s34, 0
      %p103 = por %p101, %p102
      %s105 = sadd.s32 %s104, 1
      %p108 = scmp.eq.s32.totalorder %s28, 3
      %p109 = scmp.ne.s32.totalorder %s104, %s106
      %p110 = scmp.eq.s32.totalorder %s28, 0
      %p111 = por %p109, %p110
      %p112 = scmp.ne.s32.totalorder %s104, %s106
      %p113 = scmp.eq.s32.totalorder %s33, 3
      %p114 = por %p112, %p113
      %p115 = scmp.ne.s32.totalorder %s106, %s107
      %p116 = scmp.eq.s32.totalorder %s33, 0
      %p117 = por %p115, %p116
      %p118 = scmp.ne.s32.totalorder %s106, %s107
      %p119 = scmp.eq.s32.totalorder %s34, 3
      %p120 = por %p118, %p119
      %p122 = scmp.ne.s32.totalorder %s107, %s121
      %p123 = scmp.eq.s32.totalorder %s34, 0
      %p124 = por %p122, %p123
      %s126 = sadd.s32 %s125, 1
      %p129 = scmp.eq.s32.totalorder %s28, 3
      %p130 = scmp.ne.s32.totalorder %s125, %s127
      %p131 = scmp.eq.s32.totalorder %s28, 0
      %p132 = por %p130, %p131
      %p133 = scmp.ne.s32.totalorder %s125, %s127
      %p134 = scmp.eq.s32.totalorder %s33, 3
      %p135 = por %p133, %p134
      %p136 = scmp.ne.s32.totalorder %s127, %s128
      %p137 = scmp.eq.s32.totalorder %s33, 0
      %p138 = por %p136, %p137
      %p139 = scmp.ne.s32.totalorder %s127, %s128
      %p140 = scmp.eq.s32.totalorder %s34, 3
      %p141 = por %p139, %p140
      %p143 = scmp.ne.s32.totalorder %s128, %s142
      %p144 = scmp.eq.s32.totalorder %s34, 0
      %p145 = por %p143, %p144
      %s147 = sadd.s32 %s146, 1
      %p150 = scmp.eq.s32.totalorder %s28, 3
      %p151 = scmp.ne.s32.totalorder %s146, %s148
      %p152 = scmp.eq.s32.totalorder %s28, 0
      %p153 = por %p151, %p152
      %p154 = scmp.ne.s32.totalorder %s146, %s148
      %p155 = scmp.eq.s32.totalorder %s33, 3
      %p156 = por %p154, %p155
      %p157 = scmp.ne.s32.totalorder %s148, %s149
      %p158 = scmp.eq.s32.totalorder %s33, 0
      %p159 = por %p157, %p158
      %p160 = scmp.ne.s32.totalorder %s148, %s149
      %p161 = scmp.eq.s32.totalorder %s34, 3
      %p162 = por %p160, %p161
      %p164 = scmp.ne.s32.totalorder %s149, %s163
      %p165 = scmp.eq.s32.totalorder %s34, 0
      %p166 = por %p164, %p165
      %s168 = sadd.s32 %s167, 1
      %p171 = scmp.eq.s32.totalorder %s28, 3
      %p172 = scmp.ne.s32.totalorder %s167, %s169
      %p173 = scmp.eq.s32.totalorder %s28, 0
      %p174 = por %p172, %p173
      %p175 = scmp.ne.s32.totalorder %s167, %s169
      %p176 = scmp.eq.s32.totalorder %s33, 3
      %p177 = por %p175, %p176
      %p178 = scmp.ne.s32.totalorder %s169, %s170
      %p179 = scmp.eq.s32.totalorder %s33, 0
      %p180 = por %p178, %p179
      %p181 = scmp.ne.s32.totalorder %s169, %s170
      %p182 = scmp.eq.s32.totalorder %s34, 3
      %p183 = por %p181, %p182
      %p185 = scmp.ne.s32.totalorder %s170, %s184
      %p186 = scmp.eq.s32.totalorder %s34, 0
      %p187 = por %p185, %p186
      %s189 = sadd.s32 %s188, 1
      %p192 = scmp.eq.s32.totalorder %s28, 3
      %p193 = scmp.ne.s32.totalorder %s188, %s190
      %p194 = scmp.eq.s32.totalorder %s28, 0
      %p195 = por %p193, %p194
      %p196 = scmp.ne.s32.totalorder %s188, %s190
      %p197 = scmp.eq.s32.totalorder %s33, 3
      %p198 = por %p196, %p197
      %p199 = scmp.ne.s32.totalorder %s190, %s191
      %p200 = scmp.eq.s32.totalorder %s33, 0
      %p201 = por %p199, %p200
      %p202 = scmp.ne.s32.totalorder %s190, %s191
      %p203 = scmp.eq.s32.totalorder %s34, 3
      %p204 = por %p202, %p203
      %p206 = scmp.ne.s32.totalorder %s191, %s205
      %p207 = scmp.eq.s32.totalorder %s34, 0
      %p208 = por %p206, %p207
      %s210 = sadd.s32 %s209, 1
      %p213 = scmp.eq.s32.totalorder %s28, 3
      %p214 = scmp.ne.s32.totalorder %s209, %s211
      %p215 = scmp.eq.s32.totalorder %s28, 0
      %p216 = por %p214, %p215
      %p217 = scmp.ne.s32.totalorder %s209, %s211
      %p218 = scmp.eq.s32.totalorder %s33, 3
      %p219 = por %p217, %p218
      %p220 = scmp.ne.s32.totalorder %s211, %s212
      %p221 = scmp.eq.s32.totalorder %s33, 0
      %p222 = por %p220, %p221
      %p223 = scmp.ne.s32.totalorder %s211, %s212
      %p224 = scmp.eq.s32.totalorder %s34, 3
      %p225 = por %p223, %p224
      %p227 = scmp.ne.s32.totalorder %s212, %s226
      %p228 = scmp.eq.s32.totalorder %s34, 0
      %p229 = por %p227, %p228
      %s231 = sadd.s32 %s230, 1
      %p234 = scmp.eq.s32.totalorder %s28, 3
      %p235 = scmp.ne.s32.totalorder %s230, %s232
      %p236 = scmp.eq.s32.totalorder %s28, 0
      %p237 = por %p235, %p236
      %p238 = scmp.ne.s32.totalorder %s230, %s232
      %p239 = scmp.eq.s32.totalorder %s33, 3
      %p240 = por %p238, %p239
      %p241 = scmp.ne.s32.totalorder %s232, %s233
      %p242 = scmp.eq.s32.totalorder %s33, 0
      %p243 = por %p241, %p242
      %p244 = scmp.ne.s32.totalorder %s232, %s233
      %p245 = scmp.eq.s32.totalorder %s34, 3
      %p246 = por %p244, %p245
      %p248 = scmp.ne.s32.totalorder %s233, %s247
      %p249 = scmp.eq.s32.totalorder %s34, 0
      %p250 = por %p248, %p249
      %s252 = sadd.s32 %s251, 1
      %p255 = scmp.eq.s32.totalorder %s28, 3
      %p256 = scmp.ne.s32.totalorder %s251, %s253
      %p257 = scmp.eq.s32.totalorder %s28, 0
      %p258 = por %p256, %p257
      %p259 = scmp.ne.s32.totalorder %s251, %s253
      %p260 = scmp.eq.s32.totalorder %s33, 3
      %p261 = por %p259, %p260
      %p262 = scmp.ne.s32.totalorder %s253, %s254
      %p263 = scmp.eq.s32.totalorder %s33, 0
      %p264 = por %p262, %p263
      %p265 = scmp.ne.s32.totalorder %s253, %s254
      %p266 = scmp.eq.s32.totalorder %s34, 3
      %p267 = por %p265, %p266
      %p269 = scmp.ne.s32.totalorder %s254, %s268
      %p270 = scmp.eq.s32.totalorder %s34, 0
      %p271 = por %p269, %p270
      %s273 = sadd.s32 %s272, 1
      %p276 = scmp.eq.s32.totalorder %s28, 3
      %p277 = scmp.ne.s32.totalorder %s272, %s274
      %p278 = scmp.eq.s32.totalorder %s28, 0
      %p279 = por %p277, %p278
      %p280 = scmp.ne.s32.totalorder %s272, %s274
      %p281 = scmp.eq.s32.totalorder %s33, 3
      %p282 = por %p280, %p281
      %p283 = scmp.ne.s32.totalorder %s274, %s275
      %p284 = scmp.eq.s32.totalorder %s33, 0
      %p285 = por %p283, %p284
      %p286 = scmp.ne.s32.totalorder %s274, %s275
      %p287 = scmp.eq.s32.totalorder %s34, 3
      %p288 = por %p286, %p287
      %p290 = scmp.ne.s32.totalorder %s275, %s289
      %p291 = scmp.eq.s32.totalorder %s34, 0
      %p292 = por %p290, %p291
      %s293 = ssub.s32 %s28, %s35
      %p294 = scmp.eq.s32.totalorder %s293, 0
      %s296 = sadd.s32 %s295, 1
      %s297 = scalar_select %p294, %s295, %s296
      %p300 = pneg %p294
      %p301 = scmp.eq.s32.totalorder %s28, 3
      %p302 = por %p300, %p301
      %p303 = scmp.ne.s32.totalorder %s295, %s298
      %p304 = scmp.eq.s32.totalorder %s28, 0
      %p305 = por %p303, %p304
      %p306 = scmp.ne.s32.totalorder %s295, %s298
      %p307 = scmp.eq.s32.totalorder %s33, 3
      %p308 = por %p306, %p307
      %p309 = scmp.ne.s32.totalorder %s298, %s299
      %p310 = scmp.eq.s32.totalorder %s33, 0
      %p311 = por %p309, %p310
      %p312 = scmp.ne.s32.totalorder %s298, %s299
      %p313 = scmp.eq.s32.totalorder %s34, 3
      %p314 = por %p312, %p313
      %p316 = scmp.ne.s32.totalorder %s299, %s315
      %p317 = scmp.eq.s32.totalorder %s34, 0
      %p318 = por %p316, %p317
      %p319 = scmp.le.s32.totalorder 1, %s28
      %p320 = scmp.lt.s32.totalorder %s28, 5
      %p321 = pnand %p319, %p320
      %p322 = pneg %p321
      // Predicated region
      $region9: #{tpu_custom_call.1} parent=5 // pred_check
        _
      $region10: #{tpu_custom_call.1} parent=5 // pred_check_branch
        %324 = sbr.rel (%p321) target = $region12
      $region11: #{tpu_custom_call.1} parent=5 // pred_region
        %s325 = ssub.s32 %s28, 1
        // Predicated region
        $region13: #{tpu_custom_call.1} parent=11 // pred_check
          %p326 = pneg %p75
        $region14: #{tpu_custom_call.1} parent=11 // pred_check_branch
          %328 = sbr.rel (%p326) target = $region16
        $region15: #{tpu_custom_call.1} parent=11 // pred_region
          %s330 = ssub.s32 10240, 10240
          %331 = vsyncadd [#allocation7], %s330
          %s332 = sshll.u32 [#allocation6], 4
          %s333 = int_to_ptr.vmem [resolvable:$true] %s332
          %338 = dma.hbm_to_vmem [thread:$0]  %s1, 10240, %s333, [#allocation7], 320, 320, 20
        $region16: #{tpu_custom_call.1} parent=11 // pred_fallthru
          _
        // Predicated region
        $region17: #{tpu_custom_call.1} parent=11 // pred_check
          %p339 = pneg %p96
        $region18: #{tpu_custom_call.1} parent=11 // pred_check_branch
          %341 = sbr.rel (%p339) target = $region20
        $region19: #{tpu_custom_call.1} parent=11 // pred_region
          %s343 = ssub.s32 80, 80
          %344 = vsyncadd [#allocation7], %s343
          %s346 = sshll.u32 [#allocation8], 4
          %s347 = int_to_ptr.vmem [resolvable:$true] %s346
          %349 = dma.hbm_to_vmem [thread:$0]  %s2, 80, %s347, [#allocation7]
        $region20: #{tpu_custom_call.1} parent=11 // pred_fallthru
          _
        // Predicated region
        $region21: #{tpu_custom_call.1} parent=11 // pred_check
          %p350 = pneg %p117
        $region22: #{tpu_custom_call.1} parent=11 // pred_check_branch
          %352 = sbr.rel (%p350) target = $region24
        $region23: #{tpu_custom_call.1} parent=11 // pred_region
          _
        $region24: #{tpu_custom_call.1} parent=11 // pred_fallthru
          _
        // Predicated region
        $region25: #{tpu_custom_call.1} parent=11 // pred_check
          %p353 = pneg %p138
        $region26: #{tpu_custom_call.1} parent=11 // pred_check_branch
          %355 = sbr.rel (%p353) target = $region28
        $region27: #{tpu_custom_call.1} parent=11 // pred_region
          %s357 = ssub.s32 9216, 9216
          %358 = vsyncadd [#allocation10], %s357
          %s359 = sshll.u32 [#allocation9], 4
          %s360 = int_to_ptr.vmem [resolvable:$true] %s359
          %365 = dma.hbm_to_vmem [thread:$0]  %s4, 9216, %s360, [#allocation10], 64, 64, 4
        $region28: #{tpu_custom_call.1} parent=11 // pred_fallthru
          _
        // Predicated region
        $region29: #{tpu_custom_call.1} parent=11 // pred_check
          %p366 = pneg %p159
        $region30: #{tpu_custom_call.1} parent=11 // pred_check_branch
          %368 = sbr.rel (%p366) target = $region32
        $region31: #{tpu_custom_call.1} parent=11 // pred_region
          %s370 = ssub.s32 16, 16
          %371 = vsyncadd [#allocation10], %s370
          %s373 = sshll.u32 [#allocation11], 4
          %s374 = int_to_ptr.vmem [resolvable:$true] %s373
          %376 = dma.hbm_to_vmem [thread:$0]  %s5, 16, %s374, [#allocation10]
        $region32: #{tpu_custom_call.1} parent=11 // pred_fallthru
          _
        // Predicated region
        $region33: #{tpu_custom_call.1} parent=11 // pred_check
          %p377 = pneg %p180
        $region34: #{tpu_custom_call.1} parent=11 // pred_check_branch
          %379 = sbr.rel (%p377) target = $region36
        $region35: #{tpu_custom_call.1} parent=11 // pred_region
          _
        $region36: #{tpu_custom_call.1} parent=11 // pred_fallthru
          _
        // Predicated region
        $region37: #{tpu_custom_call.1} parent=11 // pred_check
          %p380 = pneg %p201
        $region38: #{tpu_custom_call.1} parent=11 // pred_check_branch
          %382 = sbr.rel (%p380) target = $region40
        $region39: #{tpu_custom_call.1} parent=11 // pred_region
          %s384 = ssub.s32 4096, 4096
          %385 = vsyncadd [#allocation13], %s384
          %s386 = sshll.u32 [#allocation12], 4
          %s387 = int_to_ptr.vmem [resolvable:$true] %s386
          %392 = dma.hbm_to_vmem [thread:$0]  %s7, 4096, %s387, [#allocation13], 256, 256, 16
        $region40: #{tpu_custom_call.1} parent=11 // pred_fallthru
          _
        // Predicated region
        $region41: #{tpu_custom_call.1} parent=11 // pred_check
          %p393 = pneg %p222
        $region42: #{tpu_custom_call.1} parent=11 // pred_check_branch
          %395 = sbr.rel (%p393) target = $region44
        $region43: #{tpu_custom_call.1} parent=11 // pred_region
          _
        $region44: #{tpu_custom_call.1} parent=11 // pred_fallthru
          _
        // Predicated region
        $region45: #{tpu_custom_call.1} parent=11 // pred_check
          %p396 = pneg %p243
        $region46: #{tpu_custom_call.1} parent=11 // pred_check_branch
          %398 = sbr.rel (%p396) target = $region48
        $region47: #{tpu_custom_call.1} parent=11 // pred_region
          _
        $region48: #{tpu_custom_call.1} parent=11 // pred_fallthru
          _
        // Predicated region
        $region49: #{tpu_custom_call.1} parent=11 // pred_check
          %p399 = pneg %p264
        $region50: #{tpu_custom_call.1} parent=11 // pred_check_branch
          %401 = sbr.rel (%p399) target = $region52
        $region51: #{tpu_custom_call.1} parent=11 // pred_region
          %s403 = ssub.s32 4096, 4096
          %404 = vsyncadd [#allocation13], %s403
          %s405 = sshll.u32 [#allocation14], 4
          %s406 = int_to_ptr.vmem [resolvable:$true] %s405
          %411 = dma.hbm_to_vmem [thread:$0]  %s10, 4096, %s406, [#allocation13], 64, 64, 4
        $region52: #{tpu_custom_call.1} parent=11 // pred_fallthru
          _
        // Predicated region
        $region53: #{tpu_custom_call.1} parent=11 // pred_check
          %p412 = pneg %p285
        $region54: #{tpu_custom_call.1} parent=11 // pred_check_branch
          %414 = sbr.rel (%p412) target = $region56
        $region55: #{tpu_custom_call.1} parent=11 // pred_region
          %s416 = ssub.s32 4096, 4096
          %417 = vsyncadd [#allocation16], %s416
          %s418 = sshll.u32 [#allocation15], 4
          %s419 = int_to_ptr.vmem [resolvable:$true] %s418
          %424 = dma.hbm_to_vmem [thread:$0]  %s11, 4096, %s419, [#allocation16], 256, 256, 16
        $region56: #{tpu_custom_call.1} parent=11 // pred_fallthru
          _
      $region12: #{tpu_custom_call.1} parent=5 // pred_fallthru
        _
      %p425 = scmp.lt.s32.totalorder %s28, 4
      // Predicated region
      $region57: #{tpu_custom_call.1} parent=5 // pred_check
        %p426 = pneg %p425
      $region58: #{tpu_custom_call.1} parent=5 // pred_check_branch
        %428 = sbr.rel (%p426) target = $region60
      $region59: #{tpu_custom_call.1} parent=5 // pred_region
        // Predicated region
        $region61: #{tpu_custom_call.1} parent=59 // pred_check
          %p429 = pneg %p48
        $region62: #{tpu_custom_call.1} parent=59 // pred_check_branch
          %431 = sbr.rel (%p429) target = $region64
        $region63: #{tpu_custom_call.1} parent=59 // pred_region
          %s432 = sand.u32 %s38, 1
          %s433 = scalar_lea.sflag [#allocation4], %s432
          %s434 = sand.u32 %s38, 1
          %s435 = smul.addr %s434, 256
          %s436 = scalar_lea.vmem [#allocation3], %s435
          %s437 = smul.u32 4, %s28
          %s439 = ssub.s32 4096, 4096
          %440 = vsyncadd %s433, %s439
          %s441 = smul.addr %s437, 16
          %s442 = smul.addr %s441, 64
          %s443 = scalar_lea.hbm %s0, %s442
          %s444 = sshll.u32 %s436, 4
          %s445 = int_to_ptr.vmem [resolvable:$true] %s444
          %450 = dma.hbm_to_vmem [thread:$0]  %s443, 4096, %s445, %s433, 128, 128, 8
        $region64: #{tpu_custom_call.1} parent=59 // pred_fallthru
          _
      $region60: #{tpu_custom_call.1} parent=5 // pred_fallthru
        _
      %p451 = scmp.le.s32.totalorder 1, %s28
      %p452 = scmp.lt.s32.totalorder %s28, 5
      %p453 = pnand %p451, %p452
      %p454 = pneg %p453
      // Predicated region
      $region65: #{tpu_custom_call.1} parent=5 // pred_check
        _
      $region66: #{tpu_custom_call.1} parent=5 // pred_check_branch
        %456 = sbr.rel (%p453) target = $region68
      $region67: #{tpu_custom_call.1} parent=5 // pred_region
        %s457 = ssub.s32 %s28, 1
        %s458 = sand.u32 %s41, 1
        %s459 = scalar_lea.sflag [#allocation4], %s458
        %s460 = sand.u32 %s41, 1
        %s461 = smul.addr %s460, 256
        %s462 = scalar_lea.vmem [#allocation3], %s461
        // Predicated region
        $region69: #{tpu_custom_call.1} parent=67 // pred_check
          %p463 = pneg %p54
        $region70: #{tpu_custom_call.1} parent=67 // pred_check_branch
          %465 = sbr.rel (%p463) target = $region72
        $region71: #{tpu_custom_call.1} parent=67 // pred_region
          %466 = dma.done %s459, 4096
        $region72: #{tpu_custom_call.1} parent=67 // pred_fallthru
          _
        // Predicated region
        $region73: #{tpu_custom_call.1} parent=67 // pred_check
          %p467 = pneg %p75
        $region74: #{tpu_custom_call.1} parent=67 // pred_check_branch
          %469 = sbr.rel (%p467) target = $region76
        $region75: #{tpu_custom_call.1} parent=67 // pred_region
          %470 = dma.done [#allocation7], 10240
        $region76: #{tpu_custom_call.1} parent=67 // pred_fallthru
          _
        // Predicated region
        $region77: #{tpu_custom_call.1} parent=67 // pred_check
          %p471 = pneg %p96
        $region78: #{tpu_custom_call.1} parent=67 // pred_check_branch
          %473 = sbr.rel (%p471) target = $region80
        $region79: #{tpu_custom_call.1} parent=67 // pred_region
          %474 = dma.done [#allocation7], 80
        $region80: #{tpu_custom_call.1} parent=67 // pred_fallthru
          _
        // Predicated region
        $region81: #{tpu_custom_call.1} parent=67 // pred_check
          %p475 = pneg %p138
        $region82: #{tpu_custom_call.1} parent=67 // pred_check_branch
          %477 = sbr.rel (%p475) target = $region84
        $region83: #{tpu_custom_call.1} parent=67 // pred_region
          %478 = dma.done [#allocation10], 9216
        $region84: #{tpu_custom_call.1} parent=67 // pred_fallthru
          _
        // Predicated region
        $region85: #{tpu_custom_call.1} parent=67 // pred_check
          %p479 = pneg %p159
        $region86: #{tpu_custom_call.1} parent=67 // pred_check_branch
          %481 = sbr.rel (%p479) target = $region88
        $region87: #{tpu_custom_call.1} parent=67 // pred_region
          %482 = dma.done [#allocation10], 16
        $region88: #{tpu_custom_call.1} parent=67 // pred_fallthru
          _
        // Predicated region
        $region89: #{tpu_custom_call.1} parent=67 // pred_check
          %p483 = pneg %p201
        $region90: #{tpu_custom_call.1} parent=67 // pred_check_branch
          %485 = sbr.rel (%p483) target = $region92
        $region91: #{tpu_custom_call.1} parent=67 // pred_region
          %486 = dma.done [#allocation13], 4096
        $region92: #{tpu_custom_call.1} parent=67 // pred_fallthru
          _
        // Predicated region
        $region93: #{tpu_custom_call.1} parent=67 // pred_check
          %p487 = pneg %p264
        $region94: #{tpu_custom_call.1} parent=67 // pred_check_branch
          %489 = sbr.rel (%p487) target = $region96
        $region95: #{tpu_custom_call.1} parent=67 // pred_region
          %490 = dma.done [#allocation13], 4096
        $region96: #{tpu_custom_call.1} parent=67 // pred_fallthru
          _
        // Predicated region
        $region97: #{tpu_custom_call.1} parent=67 // pred_check
          %p491 = pneg %p285
        $region98: #{tpu_custom_call.1} parent=67 // pred_check_branch
          %493 = sbr.rel (%p491) target = $region100
        $region99: #{tpu_custom_call.1} parent=67 // pred_region
          %494 = dma.done [#allocation16], 4096
        $region100: #{tpu_custom_call.1} parent=67 // pred_fallthru
          _
        %s495 = sand.u32 %s41, 1
        %s496 = scalar_lea.sflag [#allocation4], %s495
        %s497 = sand.u32 %s41, 1
        %s498 = smul.addr %s497, 256
        %s499 = scalar_lea.vmem [#allocation3], %s498
        %p500 = pneg %p54
        %p501 = pneg %p51
        %p502 = pneg %p75
        %p503 = pneg %p72
        %p504 = pneg %p96
        %p505 = pneg %p93
        %p506 = pneg %p117
        %p507 = pneg %p114
        %p508 = pneg %p138
        %p509 = pneg %p135
        %p510 = pneg %p159
        %p511 = pneg %p156
        %p512 = pneg %p180
        %p513 = pneg %p177
        %p514 = pneg %p201
        %p515 = pneg %p198
        %p516 = pneg %p222
        %p517 = pneg %p219
        %p518 = pneg %p243
        %p519 = pneg %p240
        %p520 = pneg %p264
        %p521 = pneg %p261
        %p522 = pneg %p285
        %p523 = pneg %p282
        %p524 = pneg %p311
        %p525 = pneg %p308
        %s526 = sand.u32 %s298, 1
        %s527 = scalar_lea.sflag [#allocation5], %s526
        %s528 = sand.u32 %s298, 1
        %s529 = smul.addr %s528, 512
        %s530 = scalar_lea.vmem [#allocation17], %s529
        %s531 = smul.u32 4, %s33
        %s532 = smul.u32 4, %s33
        %v534 = vld [vmem:[%s462] sm:$0xff]
        %v535 = vld [vmem:[%s462 + $0x8] sm:$0xff]
        %v536 = vld [vmem:[%s462 + $0x10] sm:$0xff]
        %v537 = vld [vmem:[%s462 + $0x18] sm:$0xff]
        %v538 = vld [vmem:[%s462 + $0x20] sm:$0xff]
        %v539 = vld [vmem:[%s462 + $0x28] sm:$0xff]
        %v540 = vld [vmem:[%s462 + $0x30] sm:$0xff]
        %v541 = vld [vmem:[%s462 + $0x38] sm:$0xff]
        %v542 = vld [vmem:[%s462 + $0x40] sm:$0xff]
        %v543 = vld [vmem:[%s462 + $0x48] sm:$0xff]
        %v544 = vld [vmem:[%s462 + $0x50] sm:$0xff]
        %v545 = vld [vmem:[%s462 + $0x58] sm:$0xff]
        %v546 = vld [vmem:[%s462 + $0x60] sm:$0xff]
        %v547 = vld [vmem:[%s462 + $0x68] sm:$0xff]
        %v548 = vld [vmem:[%s462 + $0x70] sm:$0xff]
        %v549 = vld [vmem:[%s462 + $0x78] sm:$0xff]
        %v550 = vld [vmem:[%s462 + $0x80] sm:$0xff]
        %v551 = vld [vmem:[%s462 + $0x88] sm:$0xff]
        %v552 = vld [vmem:[%s462 + $0x90] sm:$0xff]
        %v553 = vld [vmem:[%s462 + $0x98] sm:$0xff]
        %v554 = vld [vmem:[%s462 + $0xa0] sm:$0xff]
        %v555 = vld [vmem:[%s462 + $0xa8] sm:$0xff]
        %v556 = vld [vmem:[%s462 + $0xb0] sm:$0xff]
        %v557 = vld [vmem:[%s462 + $0xb8] sm:$0xff]
        %v558 = vld [vmem:[%s462 + $0xc0] sm:$0xff]
        %v559 = vld [vmem:[%s462 + $0xc8] sm:$0xff]
        %v560 = vld [vmem:[%s462 + $0xd0] sm:$0xff]
        %v561 = vld [vmem:[%s462 + $0xd8] sm:$0xff]
        %v562 = vld [vmem:[%s462 + $0xe0] sm:$0xff]
        %v563 = vld [vmem:[%s462 + $0xe8] sm:$0xff]
        %v564 = vld [vmem:[%s462 + $0xf0] sm:$0xff]
        %v565 = vld [vmem:[%s462 + $0xf8] sm:$0xff]
        %v566 = vld [vmem:[#allocation6] sm:$0xff]
        %v567 = vld [vmem:[#allocation6 + $0x8] sm:$0xff]
        %v568 = vld [vmem:[#allocation6 + $0x10] sm:$0xf]
        %v569 = vld [vmem:[#allocation6 + $0x14] sm:$0xff]
        %v570 = vld [vmem:[#allocation6 + $0x1c] sm:$0xff]
        %v571 = vld [vmem:[#allocation6 + $0x24] sm:$0xf]
        %v572 = vld [vmem:[#allocation6 + $0x28] sm:$0xff]
        %v573 = vld [vmem:[#allocation6 + $0x30] sm:$0xff]
        %v574 = vld [vmem:[#allocation6 + $0x38] sm:$0xf]
        %v575 = vld [vmem:[#allocation6 + $0x3c] sm:$0xff]
        %v576 = vld [vmem:[#allocation6 + $0x44] sm:$0xff]
        %v577 = vld [vmem:[#allocation6 + $0x4c] sm:$0xf]
        %v578 = vld [vmem:[#allocation6 + $0x50] sm:$0xff]
        %v579 = vld [vmem:[#allocation6 + $0x58] sm:$0xff]
        %v580 = vld [vmem:[#allocation6 + $0x60] sm:$0xf]
        %v581 = vld [vmem:[#allocation6 + $0x64] sm:$0xff]
        %v582 = vld [vmem:[#allocation6 + $0x6c] sm:$0xff]
        %v583 = vld [vmem:[#allocation6 + $0x74] sm:$0xf]
        %v584 = vld [vmem:[#allocation6 + $0x78] sm:$0xff]
        %v585 = vld [vmem:[#allocation6 + $0x80] sm:$0xff]
        %v586 = vld [vmem:[#allocation6 + $0x88] sm:$0xf]
        %v587 = vld [vmem:[#allocation6 + $0x8c] sm:$0xff]
        %v588 = vld [vmem:[#allocation6 + $0x94] sm:$0xff]
        %v589 = vld [vmem:[#allocation6 + $0x9c] sm:$0xf]
        %v590 = vld [vmem:[#allocation6 + $0xa0] sm:$0xff]
        %v591 = vld [vmem:[#allocation6 + $0xa8] sm:$0xff]
        %v592 = vld [vmem:[#allocation6 + $0xb0] sm:$0xf]
        %v593 = vld [vmem:[#allocation6 + $0xb4] sm:$0xff]
        %v594 = vld [vmem:[#allocation6 + $0xbc] sm:$0xff]
        %v595 = vld [vmem:[#allocation6 + $0xc4] sm:$0xf]
        %v596 = vld [vmem:[#allocation6 + $0xc8] sm:$0xff]
        %v597 = vld [vmem:[#allocation6 + $0xd0] sm:$0xff]
        %v598 = vld [vmem:[#allocation6 + $0xd8] sm:$0xf]
        %v599 = vld [vmem:[#allocation6 + $0xdc] sm:$0xff]
        %v600 = vld [vmem:[#allocation6 + $0xe4] sm:$0xff]
        %v601 = vld [vmem:[#allocation6 + $0xec] sm:$0xf]
        %v602 = vld [vmem:[#allocation6 + $0xf0] sm:$0xff]
        %v603 = vld [vmem:[#allocation6 + $0xf8] sm:$0xff]
        %v604 = vld [vmem:[#allocation6 + $0x100] sm:$0xf]
        %v605 = vld [vmem:[#allocation6 + $0x104] sm:$0xff]
        %v606 = vld [vmem:[#allocation6 + $0x10c] sm:$0xff]
        %v607 = vld [vmem:[#allocation6 + $0x114] sm:$0xf]
        %v608 = vld [vmem:[#allocation6 + $0x118] sm:$0xff]
        %v609 = vld [vmem:[#allocation6 + $0x120] sm:$0xff]
        %v610 = vld [vmem:[#allocation6 + $0x128] sm:$0xf]
        %v611 = vld [vmem:[#allocation6 + $0x12c] sm:$0xff]
        %v612 = vld [vmem:[#allocation6 + $0x134] sm:$0xff]
        %v613 = vld [vmem:[#allocation6 + $0x13c] sm:$0xf]
        %v614 = vld [vmem:[#allocation6 + $0x140] sm:$0xff]
        %v615 = vld [vmem:[#allocation6 + $0x148] sm:$0xff]
        %v616 = vld [vmem:[#allocation6 + $0x150] sm:$0xf]
        %v617 = vld [vmem:[#allocation6 + $0x154] sm:$0xff]
        %v618 = vld [vmem:[#allocation6 + $0x15c] sm:$0xff]
        %v619 = vld [vmem:[#allocation6 + $0x164] sm:$0xf]
        %v620 = vld [vmem:[#allocation6 + $0x168] sm:$0xff]
        %v621 = vld [vmem:[#allocation6 + $0x170] sm:$0xff]
        %v622 = vld [vmem:[#allocation6 + $0x178] sm:$0xf]
        %v623 = vld [vmem:[#allocation6 + $0x17c] sm:$0xff]
        %v624 = vld [vmem:[#allocation6 + $0x184] sm:$0xff]
        %v625 = vld [vmem:[#allocation6 + $0x18c] sm:$0xf]
        %v626 = vld [vmem:[#allocation6 + $0x190] sm:$0xff]
        %v627 = vld [vmem:[#allocation6 + $0x198] sm:$0xff]
        %v628 = vld [vmem:[#allocation6 + $0x1a0] sm:$0xf]
        %v629 = vld [vmem:[#allocation6 + $0x1a4] sm:$0xff]
        %v630 = vld [vmem:[#allocation6 + $0x1ac] sm:$0xff]
        %v631 = vld [vmem:[#allocation6 + $0x1b4] sm:$0xf]
        %v632 = vld [vmem:[#allocation6 + $0x1b8] sm:$0xff]
        %v633 = vld [vmem:[#allocation6 + $0x1c0] sm:$0xff]
        %v634 = vld [vmem:[#allocation6 + $0x1c8] sm:$0xf]
        %v635 = vld [vmem:[#allocation6 + $0x1cc] sm:$0xff]
        %v636 = vld [vmem:[#allocation6 + $0x1d4] sm:$0xff]
        %v637 = vld [vmem:[#allocation6 + $0x1dc] sm:$0xf]
        %v638 = vld [vmem:[#allocation6 + $0x1e0] sm:$0xff]
        %v639 = vld [vmem:[#allocation6 + $0x1e8] sm:$0xff]
        %v640 = vld [vmem:[#allocation6 + $0x1f0] sm:$0xf]
        %v641 = vld [vmem:[#allocation6 + $0x1f4] sm:$0xff]
        %v642 = vld [vmem:[#allocation6 + $0x1fc] sm:$0xff]
        %v643 = vld [vmem:[#allocation6 + $0x204] sm:$0xf]
        %v644 = vld [vmem:[#allocation6 + $0x208] sm:$0xff]
        %v645 = vld [vmem:[#allocation6 + $0x210] sm:$0xff]
        %v646 = vld [vmem:[#allocation6 + $0x218] sm:$0xf]
        %v647 = vld [vmem:[#allocation6 + $0x21c] sm:$0xff]
        %v648 = vld [vmem:[#allocation6 + $0x224] sm:$0xff]
        %v649 = vld [vmem:[#allocation6 + $0x22c] sm:$0xf]
        %v650 = vld [vmem:[#allocation6 + $0x230] sm:$0xff]
        %v651 = vld [vmem:[#allocation6 + $0x238] sm:$0xff]
        %v652 = vld [vmem:[#allocation6 + $0x240] sm:$0xf]
        %v653 = vld [vmem:[#allocation6 + $0x244] sm:$0xff]
        %v654 = vld [vmem:[#allocation6 + $0x24c] sm:$0xff]
        %v655 = vld [vmem:[#allocation6 + $0x254] sm:$0xf]
        %v656 = vld [vmem:[#allocation6 + $0x258] sm:$0xff]
        %v657 = vld [vmem:[#allocation6 + $0x260] sm:$0xff]
        %v658 = vld [vmem:[#allocation6 + $0x268] sm:$0xf]
        %v659 = vld [vmem:[#allocation6 + $0x26c] sm:$0xff]
        %v660 = vld [vmem:[#allocation6 + $0x274] sm:$0xff]
        %v661 = vld [vmem:[#allocation6 + $0x27c] sm:$0xf]
        %v694 = vunpack.c.l.b16 %v534
        %v695 = vunpack.c.h.b16 %v534
        %v696 = vunpack.c.l.b16 %v535
        %v697 = vunpack.c.h.b16 %v535
        %v698 = vunpack.c.l.b16 %v536
        %v699 = vunpack.c.h.b16 %v536
        %v700 = vunpack.c.l.b16 %v537
        %v701 = vunpack.c.h.b16 %v537
        %v702 = vunpack.c.l.b16 %v538
        %v703 = vunpack.c.h.b16 %v538
        %v704 = vunpack.c.l.b16 %v539
        %v705 = vunpack.c.h.b16 %v539
        %v706 = vunpack.c.l.b16 %v540
        %v707 = vunpack.c.h.b16 %v540
        %v708 = vunpack.c.l.b16 %v541
        %v709 = vunpack.c.h.b16 %v541
        %v710 = vunpack.c.l.b16 %v542
        %v711 = vunpack.c.h.b16 %v542
        %v712 = vunpack.c.l.b16 %v543
        %v713 = vunpack.c.h.b16 %v543
        %v714 = vunpack.c.l.b16 %v544
        %v715 = vunpack.c.h.b16 %v544
        %v716 = vunpack.c.l.b16 %v545
        %v717 = vunpack.c.h.b16 %v545
        %v718 = vunpack.c.l.b16 %v546
        %v719 = vunpack.c.h.b16 %v546
        %v720 = vunpack.c.l.b16 %v547
        %v721 = vunpack.c.h.b16 %v547
        %v722 = vunpack.c.l.b16 %v548
        %v723 = vunpack.c.h.b16 %v548
        %v724 = vunpack.c.l.b16 %v549
        %v725 = vunpack.c.h.b16 %v549
        %v726 = vunpack.c.l.b16 %v550
        %v727 = vunpack.c.h.b16 %v550
        %v728 = vunpack.c.l.b16 %v551
        %v729 = vunpack.c.h.b16 %v551
        %v730 = vunpack.c.l.b16 %v552
        %v731 = vunpack.c.h.b16 %v552
        %v732 = vunpack.c.l.b16 %v553
        %v733 = vunpack.c.h.b16 %v553
        %v734 = vunpack.c.l.b16 %v554
        %v735 = vunpack.c.h.b16 %v554
        %v736 = vunpack.c.l.b16 %v555
        %v737 = vunpack.c.h.b16 %v555
        %v738 = vunpack.c.l.b16 %v556
        %v739 = vunpack.c.h.b16 %v556
        %v740 = vunpack.c.l.b16 %v557
        %v741 = vunpack.c.h.b16 %v557
        %v742 = vunpack.c.l.b16 %v558
        %v743 = vunpack.c.h.b16 %v558
        %v744 = vunpack.c.l.b16 %v559
        %v745 = vunpack.c.h.b16 %v559
        %v746 = vunpack.c.l.b16 %v560
        %v747 = vunpack.c.h.b16 %v560
        %v748 = vunpack.c.l.b16 %v561
        %v749 = vunpack.c.h.b16 %v561
        %v750 = vunpack.c.l.b16 %v562
        %v751 = vunpack.c.h.b16 %v562
        %v752 = vunpack.c.l.b16 %v563
        %v753 = vunpack.c.h.b16 %v563
        %v754 = vunpack.c.l.b16 %v564
        %v755 = vunpack.c.h.b16 %v564
        %v756 = vunpack.c.l.b16 %v565
        %v757 = vunpack.c.h.b16 %v565
        %v758 = vpack.c.b16 %v696, %v694
        %v759 = vpack.c.b16 %v697, %v695
        %v760 = vpack.c.b16 %v700, %v698
        %v761 = vpack.c.b16 %v701, %v699
        %v762 = vpack.c.b16 %v704, %v702
        %v763 = vpack.c.b16 %v705, %v703
        %v764 = vpack.c.b16 %v708, %v706
        %v765 = vpack.c.b16 %v709, %v707
        %v766 = vpack.c.b16 %v712, %v710
        %v767 = vpack.c.b16 %v713, %v711
        %v768 = vpack.c.b16 %v716, %v714
        %v769 = vpack.c.b16 %v717, %v715
        %v770 = vpack.c.b16 %v720, %v718
        %v771 = vpack.c.b16 %v721, %v719
        %v772 = vpack.c.b16 %v724, %v722
        %v773 = vpack.c.b16 %v725, %v723
        %v774 = vpack.c.b16 %v728, %v726
        %v775 = vpack.c.b16 %v729, %v727
        %v776 = vpack.c.b16 %v732, %v730
        %v777 = vpack.c.b16 %v733, %v731
        %v778 = vpack.c.b16 %v736, %v734
        %v779 = vpack.c.b16 %v737, %v735
        %v780 = vpack.c.b16 %v740, %v738
        %v781 = vpack.c.b16 %v741, %v739
        %v782 = vpack.c.b16 %v744, %v742
        %v783 = vpack.c.b16 %v745, %v743
        %v784 = vpack.c.b16 %v748, %v746
        %v785 = vpack.c.b16 %v749, %v747
        %v786 = vpack.c.b16 %v752, %v750
        %v787 = vpack.c.b16 %v753, %v751
        %v788 = vpack.c.b16 %v756, %v754
        %v789 = vpack.c.b16 %v757, %v755
        %v918 = vunpack.c.l.b16 %v566
        %v919 = vunpack.c.h.b16 %v566
        %v920 = vunpack.c.l.b16 %v567
        %v921 = vunpack.c.h.b16 %v567
        %v922 = vunpack.c.l.b16 %v568
        %v923 = vunpack.c.l.b16 %v569
        %v924 = vunpack.c.h.b16 %v569
        %v925 = vunpack.c.l.b16 %v570
        %v926 = vunpack.c.h.b16 %v570
        %v927 = vunpack.c.l.b16 %v571
        %v928 = vunpack.c.l.b16 %v572
        %v929 = vunpack.c.h.b16 %v572
        %v930 = vunpack.c.l.b16 %v573
        %v931 = vunpack.c.h.b16 %v573
        %v932 = vunpack.c.l.b16 %v574
        %v933 = vunpack.c.l.b16 %v575
        %v934 = vunpack.c.h.b16 %v575
        %v935 = vunpack.c.l.b16 %v576
        %v936 = vunpack.c.h.b16 %v576
        %v937 = vunpack.c.l.b16 %v577
        %v938 = vunpack.c.l.b16 %v578
        %v939 = vunpack.c.h.b16 %v578
        %v940 = vunpack.c.l.b16 %v579
        %v941 = vunpack.c.h.b16 %v579
        %v942 = vunpack.c.l.b16 %v580
        %v943 = vunpack.c.l.b16 %v581
        %v944 = vunpack.c.h.b16 %v581
        %v945 = vunpack.c.l.b16 %v582
        %v946 = vunpack.c.h.b16 %v582
        %v947 = vunpack.c.l.b16 %v583
        %v948 = vunpack.c.l.b16 %v584
        %v949 = vunpack.c.h.b16 %v584
        %v950 = vunpack.c.l.b16 %v585
        %v951 = vunpack.c.h.b16 %v585
        %v952 = vunpack.c.l.b16 %v586
        %v953 = vunpack.c.l.b16 %v587
        %v954 = vunpack.c.h.b16 %v587
        %v955 = vunpack.c.l.b16 %v588
        %v956 = vunpack.c.h.b16 %v588
        %v957 = vunpack.c.l.b16 %v589
        %v958 = vunpack.c.l.b16 %v590
        %v959 = vunpack.c.h.b16 %v590
        %v960 = vunpack.c.l.b16 %v591
        %v961 = vunpack.c.h.b16 %v591
        %v962 = vunpack.c.l.b16 %v592
        %v963 = vunpack.c.l.b16 %v593
        %v964 = vunpack.c.h.b16 %v593
        %v965 = vunpack.c.l.b16 %v594
        %v966 = vunpack.c.h.b16 %v594
        %v967 = vunpack.c.l.b16 %v595
        %v968 = vunpack.c.l.b16 %v596
        %v969 = vunpack.c.h.b16 %v596
        %v970 = vunpack.c.l.b16 %v597
        %v971 = vunpack.c.h.b16 %v597
        %v972 = vunpack.c.l.b16 %v598
        %v973 = vunpack.c.l.b16 %v599
        %v974 = vunpack.c.h.b16 %v599
        %v975 = vunpack.c.l.b16 %v600
        %v976 = vunpack.c.h.b16 %v600
        %v977 = vunpack.c.l.b16 %v601
        %v978 = vunpack.c.l.b16 %v602
        %v979 = vunpack.c.h.b16 %v602
        %v980 = vunpack.c.l.b16 %v603
        %v981 = vunpack.c.h.b16 %v603
        %v982 = vunpack.c.l.b16 %v604
        %v983 = vunpack.c.l.b16 %v605
        %v984 = vunpack.c.h.b16 %v605
        %v985 = vunpack.c.l.b16 %v606
        %v986 = vunpack.c.h.b16 %v606
        %v987 = vunpack.c.l.b16 %v607
        %v988 = vunpack.c.l.b16 %v608
        %v989 = vunpack.c.h.b16 %v608
        %v990 = vunpack.c.l.b16 %v609
        %v991 = vunpack.c.h.b16 %v609
        %v992 = vunpack.c.l.b16 %v610
        %v993 = vunpack.c.l.b16 %v611
        %v994 = vunpack.c.h.b16 %v611
        %v995 = vunpack.c.l.b16 %v612
        %v996 = vunpack.c.h.b16 %v612
        %v997 = vunpack.c.l.b16 %v613
        %v998 = vunpack.c.l.b16 %v614
        %v999 = vunpack.c.h.b16 %v614
        %v1000 = vunpack.c.l.b16 %v615
        %v1001 = vunpack.c.h.b16 %v615
        %v1002 = vunpack.c.l.b16 %v616
        %v1003 = vunpack.c.l.b16 %v617
        %v1004 = vunpack.c.h.b16 %v617
        %v1005 = vunpack.c.l.b16 %v618
        %v1006 = vunpack.c.h.b16 %v618
        %v1007 = vunpack.c.l.b16 %v619
        %v1008 = vunpack.c.l.b16 %v620
        %v1009 = vunpack.c.h.b16 %v620
        %v1010 = vunpack.c.l.b16 %v621
        %v1011 = vunpack.c.h.b16 %v621
        %v1012 = vunpack.c.l.b16 %v622
        %v1013 = vunpack.c.l.b16 %v623
        %v1014 = vunpack.c.h.b16 %v623
        %v1015 = vunpack.c.l.b16 %v624
        %v1016 = vunpack.c.h.b16 %v624
        %v1017 = vunpack.c.l.b16 %v625
        %v1018 = vunpack.c.l.b16 %v626
        %v1019 = vunpack.c.h.b16 %v626
        %v1020 = vunpack.c.l.b16 %v627
        %v1021 = vunpack.c.h.b16 %v627
        %v1022 = vunpack.c.l.b16 %v628
        %v1023 = vunpack.c.l.b16 %v629
        %v1024 = vunpack.c.h.b16 %v629
        %v1025 = vunpack.c.l.b16 %v630
        %v1026 = vunpack.c.h.b16 %v630
        %v1027 = vunpack.c.l.b16 %v631
        %v1028 = vunpack.c.l.b16 %v632
        %v1029 = vunpack.c.h.b16 %v632
        %v1030 = vunpack.c.l.b16 %v633
        %v1031 = vunpack.c.h.b16 %v633
        %v1032 = vunpack.c.l.b16 %v634
        %v1033 = vunpack.c.l.b16 %v635
        %v1034 = vunpack.c.h.b16 %v635
        %v1035 = vunpack.c.l.b16 %v636
        %v1036 = vunpack.c.h.b16 %v636
        %v1037 = vunpack.c.l.b16 %v637
        %v1038 = vunpack.c.l.b16 %v638
        %v1039 = vunpack.c.h.b16 %v638
        %v1040 = vunpack.c.l.b16 %v639
        %v1041 = vunpack.c.h.b16 %v639
        %v1042 = vunpack.c.l.b16 %v640
        %v1043 = vunpack.c.l.b16 %v641
        %v1044 = vunpack.c.h.b16 %v641
        %v1045 = vunpack.c.l.b16 %v642
        %v1046 = vunpack.c.h.b16 %v642
        %v1047 = vunpack.c.l.b16 %v643
        %v1048 = vunpack.c.l.b16 %v644
        %v1049 = vunpack.c.h.b16 %v644
        %v1050 = vunpack.c.l.b16 %v645
        %v1051 = vunpack.c.h.b16 %v645
        %v1052 = vunpack.c.l.b16 %v646
        %v1053 = vunpack.c.l.b16 %v647
        %v1054 = vunpack.c.h.b16 %v647
        %v1055 = vunpack.c.l.b16 %v648
        %v1056 = vunpack.c.h.b16 %v648
        %v1057 = vunpack.c.l.b16 %v649
        %v1058 = vunpack.c.l.b16 %v650
        %v1059 = vunpack.c.h.b16 %v650
        %v1060 = vunpack.c.l.b16 %v651
        %v1061 = vunpack.c.h.b16 %v651
        %v1062 = vunpack.c.l.b16 %v652
        %v1063 = vunpack.c.l.b16 %v653
        %v1064 = vunpack.c.h.b16 %v653
        %v1065 = vunpack.c.l.b16 %v654
        %v1066 = vunpack.c.h.b16 %v654
        %v1067 = vunpack.c.l.b16 %v655
        %v1068 = vunpack.c.l.b16 %v656
        %v1069 = vunpack.c.h.b16 %v656
        %v1070 = vunpack.c.l.b16 %v657
        %v1071 = vunpack.c.h.b16 %v657
        %v1072 = vunpack.c.l.b16 %v658
        %v1073 = vunpack.c.l.b16 %v659
        %v1074 = vunpack.c.h.b16 %v659
        %v1075 = vunpack.c.l.b16 %v660
        %v1076 = vunpack.c.h.b16 %v660
        %v1077 = vunpack.c.l.b16 %v661
        %v1078 = vpack.c.b16 %v923, %v918
        %v1079 = vpack.c.b16 %v924, %v919
        %v1080 = vpack.c.b16 %v925, %v920
        %v1081 = vpack.c.b16 %v926, %v921
        %v1082 = vpack.c.b16 %v927, %v922
        %v1083 = vpack.c.b16 %v933, %v928
        %v1084 = vpack.c.b16 %v934, %v929
        %v1085 = vpack.c.b16 %v935, %v930
        %v1086 = vpack.c.b16 %v936, %v931
        %v1087 = vpack.c.b16 %v937, %v932
        %v1088 = vpack.c.b16 %v943, %v938
        %v1089 = vpack.c.b16 %v944, %v939
        %v1090 = vpack.c.b16 %v945, %v940
        %v1091 = vpack.c.b16 %v946, %v941
        %v1092 = vpack.c.b16 %v947, %v942
        %v1093 = vpack.c.b16 %v953, %v948
        %v1094 = vpack.c.b16 %v954, %v949
        %v1095 = vpack.c.b16 %v955, %v950
        %v1096 = vpack.c.b16 %v956, %v951
        %v1097 = vpack.c.b16 %v957, %v952
        %v1098 = vpack.c.b16 %v963, %v958
        %v1099 = vpack.c.b16 %v964, %v959
        %v1100 = vpack.c.b16 %v965, %v960
        %v1101 = vpack.c.b16 %v966, %v961
        %v1102 = vpack.c.b16 %v967, %v962
        %v1103 = vpack.c.b16 %v973, %v968
        %v1104 = vpack.c.b16 %v974, %v969
        %v1105 = vpack.c.b16 %v975, %v970
        %v1106 = vpack.c.b16 %v976, %v971
        %v1107 = vpack.c.b16 %v977, %v972
        %v1108 = vpack.c.b16 %v983, %v978
        %v1109 = vpack.c.b16 %v984, %v979
        %v1110 = vpack.c.b16 %v985, %v980
        %v1111 = vpack.c.b16 %v986, %v981
        %v1112 = vpack.c.b16 %v987, %v982
        %v1113 = vpack.c.b16 %v993, %v988
        %v1114 = vpack.c.b16 %v994, %v989
        %v1115 = vpack.c.b16 %v995, %v990
        %v1116 = vpack.c.b16 %v996, %v991
        %v1117 = vpack.c.b16 %v997, %v992
        %v1118 = vpack.c.b16 %v1003, %v998
        %v1119 = vpack.c.b16 %v1004, %v999
        %v1120 = vpack.c.b16 %v1005, %v1000
        %v1121 = vpack.c.b16 %v1006, %v1001
        %v1122 = vpack.c.b16 %v1007, %v1002
        %v1123 = vpack.c.b16 %v1013, %v1008
        %v1124 = vpack.c.b16 %v1014, %v1009
        %v1125 = vpack.c.b16 %v1015, %v1010
        %v1126 = vpack.c.b16 %v1016, %v1011
        %v1127 = vpack.c.b16 %v1017, %v1012
        %v1128 = vpack.c.b16 %v1023, %v1018
        %v1129 = vpack.c.b16 %v1024, %v1019
        %v1130 = vpack.c.b16 %v1025, %v1020
        %v1131 = vpack.c.b16 %v1026, %v1021
        %v1132 = vpack.c.b16 %v1027, %v1022
        %v1133 = vpack.c.b16 %v1033, %v1028
        %v1134 = vpack.c.b16 %v1034, %v1029
        %v1135 = vpack.c.b16 %v1035, %v1030
        %v1136 = vpack.c.b16 %v1036, %v1031
        %v1137 = vpack.c.b16 %v1037, %v1032
        %v1138 = vpack.c.b16 %v1043, %v1038
        %v1139 = vpack.c.b16 %v1044, %v1039
        %v1140 = vpack.c.b16 %v1045, %v1040
        %v1141 = vpack.c.b16 %v1046, %v1041
        %v1142 = vpack.c.b16 %v1047, %v1042
        %v1143 = vpack.c.b16 %v1053, %v1048
        %v1144 = vpack.c.b16 %v1054, %v1049
        %v1145 = vpack.c.b16 %v1055, %v1050
        %v1146 = vpack.c.b16 %v1056, %v1051
        %v1147 = vpack.c.b16 %v1057, %v1052
        %v1148 = vpack.c.b16 %v1063, %v1058
        %v1149 = vpack.c.b16 %v1064, %v1059
        %v1150 = vpack.c.b16 %v1065, %v1060
        %v1151 = vpack.c.b16 %v1066, %v1061
        %v1152 = vpack.c.b16 %v1067, %v1062
        %v1153 = vpack.c.b16 %v1073, %v1068
        %v1154 = vpack.c.b16 %v1074, %v1069
        %v1155 = vpack.c.b16 %v1075, %v1070
        %v1156 = vpack.c.b16 %v1076, %v1071
        %v1157 = vpack.c.b16 %v1077, %v1072
        %1238 = vmatprep.subr.bf16.mxu0 %v1114
        %1239 = vmatpush1.bf16.msra.mxu0 %v1113
        %1240 = vmatprep.subr.bf16.mxu0 %v1109
        %1241 = vmatpush1.bf16.msra.mxu0 %v1108
        %1242 = vmatprep.subr.bf16.mxu0 %v1104
        %1243 = vmatpush1.bf16.msra.mxu0 %v1103
        %1244 = vmatprep.subr.bf16.mxu0 %v1099
        %1245 = vmatpush1.bf16.msra.mxu0 %v1098
        %1246 = vmatprep.subr.bf16.mxu0 %v1094
        %1247 = vmatpush1.bf16.msra.mxu0 %v1093
        %1248 = vmatprep.subr.bf16.mxu0 %v1089
        %1249 = vmatpush1.bf16.msra.mxu0 %v1088
        %1250 = vmatprep.subr.bf16.mxu0 %v1084
        %1251 = vmatpush1.bf16.msra.mxu0 %v1083
        %1252 = vmatprep.subr.bf16.mxu0 %v1079
        %1253 = vmatpush1.bf16.msra.mxu0 %v1078
        %1254 = vmatprep.subr.bf16.mxu0 %v1154
        %1255 = vmatpush2.bf16.msra.mxu0 %v1153
        %1256 = vmatprep.subr.bf16.mxu0 %v1149
        %1257 = vmatpush2.bf16.msra.mxu0 %v1148
        %1258 = vmatprep.subr.bf16.mxu0 %v1144
        %1259 = vmatpush2.bf16.msra.mxu0 %v1143
        %1260 = vmatprep.subr.bf16.mxu0 %v1139
        %1261 = vmatpush2.bf16.msra.mxu0 %v1138
        %1262 = vmatprep.subr.bf16.mxu0 %v1134
        %1263 = vmatpush2.bf16.msra.mxu0 %v1133
        %1264 = vmatprep.subr.bf16.mxu0 %v1129
        %1265 = vmatpush2.bf16.msra.mxu0 %v1128
        %1266 = vmatprep.subr.bf16.mxu0 %v1124
        %1267 = vmatpush2.bf16.msra.mxu0 %v1123
        %1268 = vmatprep.subr.bf16.mxu0 %v1119
        %1269 = vmatpush2.bf16.msra.mxu0 %v1118
        %1270 = vmatprep.mubr.bf16.mxu0 %v759
        %1271 = vmatmul.mubr.bf16.gmra.mxu0 %v758
        %v1272 = vpop.f32.mrf.mxu0
        %v1273 = vadd.f32 0.0, %v1272
        %v1274 = vpop.f32.mrf.mxu0
        %v1275 = vadd.f32 0.0, %v1274
        %v1276 = vpop.f32.mrf.mxu0
        %v1277 = vadd.f32 0.0, %v1276
        %v1278 = vpop.f32.mrf.mxu0
        %v1279 = vadd.f32 0.0, %v1278
        %1280 = vmatprep.mubr.bf16.mxu0 %v761
        %1281 = vmatmul.mubr.bf16.gmra.mxu0 %v760
        %v1282 = vpop.f32.mrf.mxu0
        %v1283 = vadd.f32 0.0, %v1282
        %v1284 = vpop.f32.mrf.mxu0
        %v1285 = vadd.f32 0.0, %v1284
        %v1286 = vpop.f32.mrf.mxu0
        %v1287 = vadd.f32 0.0, %v1286
        %v1288 = vpop.f32.mrf.mxu0
        %v1289 = vadd.f32 0.0, %v1288
        %1290 = vmatprep.mubr.bf16.mxu0 %v763
        %1291 = vmatmul.mubr.bf16.gmra.mxu0 %v762
        %v1292 = vpop.f32.mrf.mxu0
        %v1293 = vadd.f32 0.0, %v1292
        %v1294 = vpop.f32.mrf.mxu0
        %v1295 = vadd.f32 0.0, %v1294
        %v1296 = vpop.f32.mrf.mxu0
        %v1297 = vadd.f32 0.0, %v1296
        %v1298 = vpop.f32.mrf.mxu0
        %v1299 = vadd.f32 0.0, %v1298
        %1300 = vmatprep.mubr.bf16.mxu0 %v765
        %1301 = vmatmul.mubr.bf16.gmra.mxu0 %v764
        %v1302 = vpop.f32.mrf.mxu0
        %v1303 = vadd.f32 0.0, %v1302
        %v1304 = vpop.f32.mrf.mxu0
        %v1305 = vadd.f32 0.0, %v1304
        %v1306 = vpop.f32.mrf.mxu0
        %v1307 = vadd.f32 0.0, %v1306
        %v1308 = vpop.f32.mrf.mxu0
        %v1309 = vadd.f32 0.0, %v1308
        %1310 = vmatprep.mubr.bf16.mxu0 %v767
        %1311 = vmatmul.mubr.bf16.gmra.mxu0 %v766
        %v1312 = vpop.f32.mrf.mxu0
        %v1313 = vadd.f32 0.0, %v1312
        %v1314 = vpop.f32.mrf.mxu0
        %v1315 = vadd.f32 0.0, %v1314
        %v1316 = vpop.f32.mrf.mxu0
        %v1317 = vadd.f32 0.0, %v1316
        %v1318 = vpop.f32.mrf.mxu0
        %v1319 = vadd.f32 0.0, %v1318
        %1320 = vmatprep.mubr.bf16.mxu0 %v769
        %1321 = vmatmul.mubr.bf16.gmra.mxu0 %v768
        %v1322 = vpop.f32.mrf.mxu0
        %v1323 = vadd.f32 0.0, %v1322
        %v1324 = vpop.f32.mrf.mxu0
        %v1325 = vadd.f32 0.0, %v1324
        %v1326 = vpop.f32.mrf.mxu0
        %v1327 = vadd.f32 0.0, %v1326
        %v1328 = vpop.f32.mrf.mxu0
        %v1329 = vadd.f32 0.0, %v1328
        %1330 = vmatprep.mubr.bf16.mxu0 %v771
        %1331 = vmatmul.mubr.bf16.gmra.mxu0 %v770
        %v1332 = vpop.f32.mrf.mxu0
        %v1333 = vadd.f32 0.0, %v1332
        %v1334 = vpop.f32.mrf.mxu0
        %v1335 = vadd.f32 0.0, %v1334
        %v1336 = vpop.f32.mrf.mxu0
        %v1337 = vadd.f32 0.0, %v1336
        %v1338 = vpop.f32.mrf.mxu0
        %v1339 = vadd.f32 0.0, %v1338
        %1340 = vmatprep.mubr.bf16.mxu0 %v773
        %1341 = vmatmul.mubr.bf16.gmra.mxu0 %v772
        %v1342 = vpop.f32.mrf.mxu0
        %v1343 = vadd.f32 0.0, %v1342
        %v1344 = vpop.f32.mrf.mxu0
        %v1345 = vadd.f32 0.0, %v1344
        %v1346 = vpop.f32.mrf.mxu0
        %v1347 = vadd.f32 0.0, %v1346
        %v1348 = vpop.f32.mrf.mxu0
        %v1349 = vadd.f32 0.0, %v1348
        %1350 = vmatprep.mubr.bf16.mxu0 %v775
        %1351 = vmatmul.mubr.bf16.gmra.mxu0 %v774
        %v1352 = vpop.f32.mrf.mxu0
        %v1353 = vadd.f32 0.0, %v1352
        %v1354 = vpop.f32.mrf.mxu0
        %v1355 = vadd.f32 0.0, %v1354
        %v1356 = vpop.f32.mrf.mxu0
        %v1357 = vadd.f32 0.0, %v1356
        %v1358 = vpop.f32.mrf.mxu0
        %v1359 = vadd.f32 0.0, %v1358
        %1360 = vmatprep.mubr.bf16.mxu0 %v777
        %1361 = vmatmul.mubr.bf16.gmra.mxu0 %v776
        %v1362 = vpop.f32.mrf.mxu0
        %v1363 = vadd.f32 0.0, %v1362
        %v1364 = vpop.f32.mrf.mxu0
        %v1365 = vadd.f32 0.0, %v1364
        %v1366 = vpop.f32.mrf.mxu0
        %v1367 = vadd.f32 0.0, %v1366
        %v1368 = vpop.f32.mrf.mxu0
        %v1369 = vadd.f32 0.0, %v1368
        %1370 = vmatprep.mubr.bf16.mxu0 %v779
        %1371 = vmatmul.mubr.bf16.gmra.mxu0 %v778
        %v1372 = vpop.f32.mrf.mxu0
        %v1373 = vadd.f32 0.0, %v1372
        %v1374 = vpop.f32.mrf.mxu0
        %v1375 = vadd.f32 0.0, %v1374
        %v1376 = vpop.f32.mrf.mxu0
        %v1377 = vadd.f32 0.0, %v1376
        %v1378 = vpop.f32.mrf.mxu0
        %v1379 = vadd.f32 0.0, %v1378
        %1380 = vmatprep.mubr.bf16.mxu0 %v781
        %1381 = vmatmul.mubr.bf16.gmra.mxu0 %v780
        %v1382 = vpop.f32.mrf.mxu0
        %v1383 = vadd.f32 0.0, %v1382
        %v1384 = vpop.f32.mrf.mxu0
        %v1385 = vadd.f32 0.0, %v1384
        %v1386 = vpop.f32.mrf.mxu0
        %v1387 = vadd.f32 0.0, %v1386
        %v1388 = vpop.f32.mrf.mxu0
        %v1389 = vadd.f32 0.0, %v1388
        %1390 = vmatprep.mubr.bf16.mxu0 %v783
        %1391 = vmatmul.mubr.bf16.gmra.mxu0 %v782
        %v1392 = vpop.f32.mrf.mxu0
        %v1393 = vadd.f32 0.0, %v1392
        %v1394 = vpop.f32.mrf.mxu0
        %v1395 = vadd.f32 0.0, %v1394
        %v1396 = vpop.f32.mrf.mxu0
        %v1397 = vadd.f32 0.0, %v1396
        %v1398 = vpop.f32.mrf.mxu0
        %v1399 = vadd.f32 0.0, %v1398
        %1400 = vmatprep.mubr.bf16.mxu0 %v785
        %1401 = vmatmul.mubr.bf16.gmra.mxu0 %v784
        %v1402 = vpop.f32.mrf.mxu0
        %v1403 = vadd.f32 0.0, %v1402
        %v1404 = vpop.f32.mrf.mxu0
        %v1405 = vadd.f32 0.0, %v1404
        %v1406 = vpop.f32.mrf.mxu0
        %v1407 = vadd.f32 0.0, %v1406
        %v1408 = vpop.f32.mrf.mxu0
        %v1409 = vadd.f32 0.0, %v1408
        %1410 = vmatprep.mubr.bf16.mxu0 %v787
        %1411 = vmatmul.mubr.bf16.gmra.mxu0 %v786
        %v1412 = vpop.f32.mrf.mxu0
        %v1413 = vadd.f32 0.0, %v1412
        %v1414 = vpop.f32.mrf.mxu0
        %v1415 = vadd.f32 0.0, %v1414
        %v1416 = vpop.f32.mrf.mxu0
        %v1417 = vadd.f32 0.0, %v1416
        %v1418 = vpop.f32.mrf.mxu0
        %v1419 = vadd.f32 0.0, %v1418
        %1420 = vmatprep.mubr.bf16.mxu0 %v789
        %1421 = vmatmul.mubr.bf16.gmra.mxu0 %v788
        %v1422 = vpop.f32.mrf.mxu0
        %v1423 = vadd.f32 0.0, %v1422
        %v1424 = vpop.f32.mrf.mxu0
        %v1425 = vadd.f32 0.0, %v1424
        %v1426 = vpop.f32.mrf.mxu0
        %v1427 = vadd.f32 0.0, %v1426
        %v1428 = vpop.f32.mrf.mxu0
        %v1429 = vadd.f32 0.0, %v1428
        %1430 = vdwg.mxu0
        %1431 = vmatprep.subr.bf16.mxu0 %v1116
        %1432 = vmatpush1.bf16.msra.mxu0 %v1115
        %1433 = vmatprep.subr.bf16.mxu0 %v1111
        %1434 = vmatpush1.bf16.msra.mxu0 %v1110
        %1435 = vmatprep.subr.bf16.mxu0 %v1106
        %1436 = vmatpush1.bf16.msra.mxu0 %v1105
        %1437 = vmatprep.subr.bf16.mxu0 %v1101
        %1438 = vmatpush1.bf16.msra.mxu0 %v1100
        %1439 = vmatprep.subr.bf16.mxu0 %v1096
        %1440 = vmatpush1.bf16.msra.mxu0 %v1095
        %1441 = vmatprep.subr.bf16.mxu0 %v1091
        %1442 = vmatpush1.bf16.msra.mxu0 %v1090
        %1443 = vmatprep.subr.bf16.mxu0 %v1086
        %1444 = vmatpush1.bf16.msra.mxu0 %v1085
        %1445 = vmatprep.subr.bf16.mxu0 %v1081
        %1446 = vmatpush1.bf16.msra.mxu0 %v1080
        %1447 = vmatprep.subr.bf16.mxu0 %v1156
        %1448 = vmatpush2.bf16.msra.mxu0 %v1155
        %1449 = vmatprep.subr.bf16.mxu0 %v1151
        %1450 = vmatpush2.bf16.msra.mxu0 %v1150
        %1451 = vmatprep.subr.bf16.mxu0 %v1146
        %1452 = vmatpush2.bf16.msra.mxu0 %v1145
        %1453 = vmatprep.subr.bf16.mxu0 %v1141
        %1454 = vmatpush2.bf16.msra.mxu0 %v1140
        %1455 = vmatprep.subr.bf16.mxu0 %v1136
        %1456 = vmatpush2.bf16.msra.mxu0 %v1135
        %1457 = vmatprep.subr.bf16.mxu0 %v1131
        %1458 = vmatpush2.bf16.msra.mxu0 %v1130
        %1459 = vmatprep.subr.bf16.mxu0 %v1126
        %1460 = vmatpush2.bf16.msra.mxu0 %v1125
        %1461 = vmatprep.subr.bf16.mxu0 %v1121
        %1462 = vmatpush2.bf16.msra.mxu0 %v1120
        %1463 = vmatprep.mubr.bf16.mxu0 %v759
        %1464 = vmatmul.mubr.bf16.gmra.mxu0 %v758
        %v1465 = vpop.f32.mrf.mxu0
        %v1466 = vadd.f32 0.0, %v1465
        %v1467 = vpop.f32.mrf.mxu0
        %v1468 = vadd.f32 0.0, %v1467
        %v1469 = vpop.f32.mrf.mxu0
        %v1470 = vadd.f32 0.0, %v1469
        %v1471 = vpop.f32.mrf.mxu0
        %v1472 = vadd.f32 0.0, %v1471
        %1473 = vmatprep.mubr.bf16.mxu0 %v761
        %1474 = vmatmul.mubr.bf16.gmra.mxu0 %v760
        %v1475 = vpop.f32.mrf.mxu0
        %v1476 = vadd.f32 0.0, %v1475
        %v1477 = vpop.f32.mrf.mxu0
        %v1478 = vadd.f32 0.0, %v1477
        %v1479 = vpop.f32.mrf.mxu0
        %v1480 = vadd.f32 0.0, %v1479
        %v1481 = vpop.f32.mrf.mxu0
        %v1482 = vadd.f32 0.0, %v1481
        %1483 = vmatprep.mubr.bf16.mxu0 %v763
        %1484 = vmatmul.mubr.bf16.gmra.mxu0 %v762
        %v1485 = vpop.f32.mrf.mxu0
        %v1486 = vadd.f32 0.0, %v1485
        %v1487 = vpop.f32.mrf.mxu0
        %v1488 = vadd.f32 0.0, %v1487
        %v1489 = vpop.f32.mrf.mxu0
        %v1490 = vadd.f32 0.0, %v1489
        %v1491 = vpop.f32.mrf.mxu0
        %v1492 = vadd.f32 0.0, %v1491
        %1493 = vmatprep.mubr.bf16.mxu0 %v765
        %1494 = vmatmul.mubr.bf16.gmra.mxu0 %v764
        %v1495 = vpop.f32.mrf.mxu0
        %v1496 = vadd.f32 0.0, %v1495
        %v1497 = vpop.f32.mrf.mxu0
        %v1498 = vadd.f32 0.0, %v1497
        %v1499 = vpop.f32.mrf.mxu0
        %v1500 = vadd.f32 0.0, %v1499
        %v1501 = vpop.f32.mrf.mxu0
        %v1502 = vadd.f32 0.0, %v1501
        %1503 = vmatprep.mubr.bf16.mxu0 %v767
        %1504 = vmatmul.mubr.bf16.gmra.mxu0 %v766
        %v1505 = vpop.f32.mrf.mxu0
        %v1506 = vadd.f32 0.0, %v1505
        %v1507 = vpop.f32.mrf.mxu0
        %v1508 = vadd.f32 0.0, %v1507
        %v1509 = vpop.f32.mrf.mxu0
        %v1510 = vadd.f32 0.0, %v1509
        %v1511 = vpop.f32.mrf.mxu0
        %v1512 = vadd.f32 0.0, %v1511
        %1513 = vmatprep.mubr.bf16.mxu0 %v769
        %1514 = vmatmul.mubr.bf16.gmra.mxu0 %v768
        %v1515 = vpop.f32.mrf.mxu0
        %v1516 = vadd.f32 0.0, %v1515
        %v1517 = vpop.f32.mrf.mxu0
        %v1518 = vadd.f32 0.0, %v1517
        %v1519 = vpop.f32.mrf.mxu0
        %v1520 = vadd.f32 0.0, %v1519
        %v1521 = vpop.f32.mrf.mxu0
        %v1522 = vadd.f32 0.0, %v1521
        %1523 = vmatprep.mubr.bf16.mxu0 %v771
        %1524 = vmatmul.mubr.bf16.gmra.mxu0 %v770
        %v1525 = vpop.f32.mrf.mxu0
        %v1526 = vadd.f32 0.0, %v1525
        %v1527 = vpop.f32.mrf.mxu0
        %v1528 = vadd.f32 0.0, %v1527
        %v1529 = vpop.f32.mrf.mxu0
        %v1530 = vadd.f32 0.0, %v1529
        %v1531 = vpop.f32.mrf.mxu0
        %v1532 = vadd.f32 0.0, %v1531
        %1533 = vmatprep.mubr.bf16.mxu0 %v773
        %1534 = vmatmul.mubr.bf16.gmra.mxu0 %v772
        %v1535 = vpop.f32.mrf.mxu0
        %v1536 = vadd.f32 0.0, %v1535
        %v1537 = vpop.f32.mrf.mxu0
        %v1538 = vadd.f32 0.0, %v1537
        %v1539 = vpop.f32.mrf.mxu0
        %v1540 = vadd.f32 0.0, %v1539
        %v1541 = vpop.f32.mrf.mxu0
        %v1542 = vadd.f32 0.0, %v1541
        %1543 = vmatprep.mubr.bf16.mxu0 %v775
        %1544 = vmatmul.mubr.bf16.gmra.mxu0 %v774
        %v1545 = vpop.f32.mrf.mxu0
        %v1546 = vadd.f32 0.0, %v1545
        %v1547 = vpop.f32.mrf.mxu0
        %v1548 = vadd.f32 0.0, %v1547
        %v1549 = vpop.f32.mrf.mxu0
        %v1550 = vadd.f32 0.0, %v1549
        %v1551 = vpop.f32.mrf.mxu0
        %v1552 = vadd.f32 0.0, %v1551
        %1553 = vmatprep.mubr.bf16.mxu0 %v777
        %1554 = vmatmul.mubr.bf16.gmra.mxu0 %v776
        %v1555 = vpop.f32.mrf.mxu0
        %v1556 = vadd.f32 0.0, %v1555
        %v1557 = vpop.f32.mrf.mxu0
        %v1558 = vadd.f32 0.0, %v1557
        %v1559 = vpop.f32.mrf.mxu0
        %v1560 = vadd.f32 0.0, %v1559
        %v1561 = vpop.f32.mrf.mxu0
        %v1562 = vadd.f32 0.0, %v1561
        %1563 = vmatprep.mubr.bf16.mxu0 %v779
        %1564 = vmatmul.mubr.bf16.gmra.mxu0 %v778
        %v1565 = vpop.f32.mrf.mxu0
        %v1566 = vadd.f32 0.0, %v1565
        %v1567 = vpop.f32.mrf.mxu0
        %v1568 = vadd.f32 0.0, %v1567
        %v1569 = vpop.f32.mrf.mxu0
        %v1570 = vadd.f32 0.0, %v1569
        %v1571 = vpop.f32.mrf.mxu0
        %v1572 = vadd.f32 0.0, %v1571
        %1573 = vmatprep.mubr.bf16.mxu0 %v781
        %1574 = vmatmul.mubr.bf16.gmra.mxu0 %v780
        %v1575 = vpop.f32.mrf.mxu0
        %v1576 = vadd.f32 0.0, %v1575
        %v1577 = vpop.f32.mrf.mxu0
        %v1578 = vadd.f32 0.0, %v1577
        %v1579 = vpop.f32.mrf.mxu0
        %v1580 = vadd.f32 0.0, %v1579
        %v1581 = vpop.f32.mrf.mxu0
        %v1582 = vadd.f32 0.0, %v1581
        %1583 = vmatprep.mubr.bf16.mxu0 %v783
        %1584 = vmatmul.mubr.bf16.gmra.mxu0 %v782
        %v1585 = vpop.f32.mrf.mxu0
        %v1586 = vadd.f32 0.0, %v1585
        %v1587 = vpop.f32.mrf.mxu0
        %v1588 = vadd.f32 0.0, %v1587
        %v1589 = vpop.f32.mrf.mxu0
        %v1590 = vadd.f32 0.0, %v1589
        %v1591 = vpop.f32.mrf.mxu0
        %v1592 = vadd.f32 0.0, %v1591
        %1593 = vmatprep.mubr.bf16.mxu0 %v785
        %1594 = vmatmul.mubr.bf16.gmra.mxu0 %v784
        %v1595 = vpop.f32.mrf.mxu0
        %v1596 = vadd.f32 0.0, %v1595
        %v1597 = vpop.f32.mrf.mxu0
        %v1598 = vadd.f32 0.0, %v1597
        %v1599 = vpop.f32.mrf.mxu0
        %v1600 = vadd.f32 0.0, %v1599
        %v1601 = vpop.f32.mrf.mxu0
        %v1602 = vadd.f32 0.0, %v1601
        %1603 = vmatprep.mubr.bf16.mxu0 %v787
        %1604 = vmatmul.mubr.bf16.gmra.mxu0 %v786
        %v1605 = vpop.f32.mrf.mxu0
        %v1606 = vadd.f32 0.0, %v1605
        %v1607 = vpop.f32.mrf.mxu0
        %v1608 = vadd.f32 0.0, %v1607
        %v1609 = vpop.f32.mrf.mxu0
        %v1610 = vadd.f32 0.0, %v1609
        %v1611 = vpop.f32.mrf.mxu0
        %v1612 = vadd.f32 0.0, %v1611
        %1613 = vmatprep.mubr.bf16.mxu0 %v789
        %1614 = vmatmul.mubr.bf16.gmra.mxu0 %v788
        %v1615 = vpop.f32.mrf.mxu0
        %v1616 = vadd.f32 0.0, %v1615
        %v1617 = vpop.f32.mrf.mxu0
        %v1618 = vadd.f32 0.0, %v1617
        %v1619 = vpop.f32.mrf.mxu0
        %v1620 = vadd.f32 0.0, %v1619
        %v1621 = vpop.f32.mrf.mxu0
        %v1622 = vadd.f32 0.0, %v1621
        %1623 = vdwg.mxu0
        %1624 = vmatprep.subr.bf16.mxu0 0
        %1625 = vmatpush1.bf16.msra.mxu0 %v1117
        %1626 = vmatprep.subr.bf16.mxu0 0
        %1627 = vmatpush1.bf16.msra.mxu0 %v1112
        %1628 = vmatprep.subr.bf16.mxu0 0
        %1629 = vmatpush1.bf16.msra.mxu0 %v1107
        %1630 = vmatprep.subr.bf16.mxu0 0
        %1631 = vmatpush1.bf16.msra.mxu0 %v1102
        %1632 = vmatprep.subr.bf16.mxu0 0
        %1633 = vmatpush1.bf16.msra.mxu0 %v1097
        %1634 = vmatprep.subr.bf16.mxu0 0
        %1635 = vmatpush1.bf16.msra.mxu0 %v1092
        %1636 = vmatprep.subr.bf16.mxu0 0
        %1637 = vmatpush1.bf16.msra.mxu0 %v1087
        %1638 = vmatprep.subr.bf16.mxu0 0
        %1639 = vmatpush1.bf16.msra.mxu0 %v1082
        %1640 = vmatprep.subr.bf16.mxu0 0
        %1641 = vmatpush2.bf16.msra.mxu0 %v1157
        %1642 = vmatprep.subr.bf16.mxu0 0
        %1643 = vmatpush2.bf16.msra.mxu0 %v1152
        %1644 = vmatprep.subr.bf16.mxu0 0
        %1645 = vmatpush2.bf16.msra.mxu0 %v1147
        %1646 = vmatprep.subr.bf16.mxu0 0
        %1647 = vmatpush2.bf16.msra.mxu0 %v1142
        %1648 = vmatprep.subr.bf16.mxu0 0
        %1649 = vmatpush2.bf16.msra.mxu0 %v1137
        %1650 = vmatprep.subr.bf16.mxu0 0
        %1651 = vmatpush2.bf16.msra.mxu0 %v1132
        %1652 = vmatprep.subr.bf16.mxu0 0
        %1653 = vmatpush2.bf16.msra.mxu0 %v1127
        %1654 = vmatprep.subr.bf16.mxu0 0
        %1655 = vmatpush2.bf16.msra.mxu0 %v1122
        %1656 = vmatprep.mubr.bf16.mxu0 %v759
        %1657 = vmatmul.mubr.bf16.gmra.mxu0 %v758
        %v1658 = vpop.f32.mrf.mxu0
        %v1659 = vadd.f32 0.0, %v1658
        %v1660 = vpop.f32.mrf.mxu0
        %v1661 = vpop.f32.mrf.mxu0
        %v1662 = vadd.f32 0.0, %v1661
        %v1663 = vpop.f32.mrf.mxu0
        %1664 = vmatprep.mubr.bf16.mxu0 %v761
        %1665 = vmatmul.mubr.bf16.gmra.mxu0 %v760
        %v1666 = vpop.f32.mrf.mxu0
        %v1667 = vadd.f32 0.0, %v1666
        %v1668 = vpop.f32.mrf.mxu0
        %v1669 = vpop.f32.mrf.mxu0
        %v1670 = vadd.f32 0.0, %v1669
        %v1671 = vpop.f32.mrf.mxu0
        %1672 = vmatprep.mubr.bf16.mxu0 %v763
        %1673 = vmatmul.mubr.bf16.gmra.mxu0 %v762
        %v1674 = vpop.f32.mrf.mxu0
        %v1675 = vadd.f32 0.0, %v1674
        %v1676 = vpop.f32.mrf.mxu0
        %v1677 = vpop.f32.mrf.mxu0
        %v1678 = vadd.f32 0.0, %v1677
        %v1679 = vpop.f32.mrf.mxu0
        %1680 = vmatprep.mubr.bf16.mxu0 %v765
        %1681 = vmatmul.mubr.bf16.gmra.mxu0 %v764
        %v1682 = vpop.f32.mrf.mxu0
        %v1683 = vadd.f32 0.0, %v1682
        %v1684 = vpop.f32.mrf.mxu0
        %v1685 = vpop.f32.mrf.mxu0
        %v1686 = vadd.f32 0.0, %v1685
        %v1687 = vpop.f32.mrf.mxu0
        %1688 = vmatprep.mubr.bf16.mxu0 %v767
        %1689 = vmatmul.mubr.bf16.gmra.mxu0 %v766
        %v1690 = vpop.f32.mrf.mxu0
        %v1691 = vadd.f32 0.0, %v1690
        %v1692 = vpop.f32.mrf.mxu0
        %v1693 = vpop.f32.mrf.mxu0
        %v1694 = vadd.f32 0.0, %v1693
        %v1695 = vpop.f32.mrf.mxu0
        %1696 = vmatprep.mubr.bf16.mxu0 %v769
        %1697 = vmatmul.mubr.bf16.gmra.mxu0 %v768
        %v1698 = vpop.f32.mrf.mxu0
        %v1699 = vadd.f32 0.0, %v1698
        %v1700 = vpop.f32.mrf.mxu0
        %v1701 = vpop.f32.mrf.mxu0
        %v1702 = vadd.f32 0.0, %v1701
        %v1703 = vpop.f32.mrf.mxu0
        %1704 = vmatprep.mubr.bf16.mxu0 %v771
        %1705 = vmatmul.mubr.bf16.gmra.mxu0 %v770
        %v1706 = vpop.f32.mrf.mxu0
        %v1707 = vadd.f32 0.0, %v1706
        %v1708 = vpop.f32.mrf.mxu0
        %v1709 = vpop.f32.mrf.mxu0
        %v1710 = vadd.f32 0.0, %v1709
        %v1711 = vpop.f32.mrf.mxu0
        %1712 = vmatprep.mubr.bf16.mxu0 %v773
        %1713 = vmatmul.mubr.bf16.gmra.mxu0 %v772
        %v1714 = vpop.f32.mrf.mxu0
        %v1715 = vadd.f32 0.0, %v1714
        %v1716 = vpop.f32.mrf.mxu0
        %v1717 = vpop.f32.mrf.mxu0
        %v1718 = vadd.f32 0.0, %v1717
        %v1719 = vpop.f32.mrf.mxu0
        %1720 = vmatprep.mubr.bf16.mxu0 %v775
        %1721 = vmatmul.mubr.bf16.gmra.mxu0 %v774
        %v1722 = vpop.f32.mrf.mxu0
        %v1723 = vadd.f32 0.0, %v1722
        %v1724 = vpop.f32.mrf.mxu0
        %v1725 = vpop.f32.mrf.mxu0
        %v1726 = vadd.f32 0.0, %v1725
        %v1727 = vpop.f32.mrf.mxu0
        %1728 = vmatprep.mubr.bf16.mxu0 %v777
        %1729 = vmatmul.mubr.bf16.gmra.mxu0 %v776
        %v1730 = vpop.f32.mrf.mxu0
        %v1731 = vadd.f32 0.0, %v1730
        %v1732 = vpop.f32.mrf.mxu0
        %v1733 = vpop.f32.mrf.mxu0
        %v1734 = vadd.f32 0.0, %v1733
        %v1735 = vpop.f32.mrf.mxu0
        %1736 = vmatprep.mubr.bf16.mxu0 %v779
        %1737 = vmatmul.mubr.bf16.gmra.mxu0 %v778
        %v1738 = vpop.f32.mrf.mxu0
        %v1739 = vadd.f32 0.0, %v1738
        %v1740 = vpop.f32.mrf.mxu0
        %v1741 = vpop.f32.mrf.mxu0
        %v1742 = vadd.f32 0.0, %v1741
        %v1743 = vpop.f32.mrf.mxu0
        %1744 = vmatprep.mubr.bf16.mxu0 %v781
        %1745 = vmatmul.mubr.bf16.gmra.mxu0 %v780
        %v1746 = vpop.f32.mrf.mxu0
        %v1747 = vadd.f32 0.0, %v1746
        %v1748 = vpop.f32.mrf.mxu0
        %v1749 = vpop.f32.mrf.mxu0
        %v1750 = vadd.f32 0.0, %v1749
        %v1751 = vpop.f32.mrf.mxu0
        %1752 = vmatprep.mubr.bf16.mxu0 %v783
        %1753 = vmatmul.mubr.bf16.gmra.mxu0 %v782
        %v1754 = vpop.f32.mrf.mxu0
        %v1755 = vadd.f32 0.0, %v1754
        %v1756 = vpop.f32.mrf.mxu0
        %v1757 = vpop.f32.mrf.mxu0
        %v1758 = vadd.f32 0.0, %v1757
        %v1759 = vpop.f32.mrf.mxu0
        %1760 = vmatprep.mubr.bf16.mxu0 %v785
        %1761 = vmatmul.mubr.bf16.gmra.mxu0 %v784
        %v1762 = vpop.f32.mrf.mxu0
        %v1763 = vadd.f32 0.0, %v1762
        %v1764 = vpop.f32.mrf.mxu0
        %v1765 = vpop.f32.mrf.mxu0
        %v1766 = vadd.f32 0.0, %v1765
        %v1767 = vpop.f32.mrf.mxu0
        %1768 = vmatprep.mubr.bf16.mxu0 %v787
        %1769 = vmatmul.mubr.bf16.gmra.mxu0 %v786
        %v1770 = vpop.f32.mrf.mxu0
        %v1771 = vadd.f32 0.0, %v1770
        %v1772 = vpop.f32.mrf.mxu0
        %v1773 = vpop.f32.mrf.mxu0
        %v1774 = vadd.f32 0.0, %v1773
        %v1775 = vpop.f32.mrf.mxu0
        %1776 = vmatprep.mubr.bf16.mxu0 %v789
        %1777 = vmatmul.mubr.bf16.gmra.mxu0 %v788
        %v1778 = vpop.f32.mrf.mxu0
        %v1779 = vadd.f32 0.0, %v1778
        %v1780 = vpop.f32.mrf.mxu0
        %v1781 = vpop.f32.mrf.mxu0
        %v1782 = vadd.f32 0.0, %v1781
        %v1783 = vpop.f32.mrf.mxu0
        %1784 = vdwg.mxu0
        %v1785 = vld [vmem:[#allocation8] sm:$0x1f]
        %v1787 = vlaneseq
        %v1788 = vshrl.u32 %v1787, 7
        %v1789 = vsub.s32 0, %v1788
        %v1790 = vrot.slane %v1785, %v1789
        %v1791 = vlaneseq
        %v1792 = vshrl.u32 %v1791, 7
        %v1793 = vsub.s32 1, %v1792
        %v1794 = vrot.slane %v1785, %v1793
        %v1795 = vlaneseq
        %v1796 = vshrl.u32 %v1795, 7
        %v1797 = vsub.s32 2, %v1796
        %v1798 = vrot.slane %v1785, %v1797
        %v1799 = vlaneseq
        %v1800 = vshrl.u32 %v1799, 7
        %v1801 = vsub.s32 3, %v1800
        %v1802 = vrot.slane %v1785, %v1801
        %v1803 = vlaneseq
        %v1804 = vshrl.u32 %v1803, 7
        %v1805 = vsub.s32 4, %v1804
        %v1806 = vrot.slane %v1785, %v1805
        %v1812 = vmul.f32 %v1273, %v1790
        %v1813 = vmul.f32 %v1275, %v1794
        %v1814 = vmul.f32 %v1466, %v1798
        %v1815 = vmul.f32 %v1468, %v1802
        %v1816 = vmul.f32 %v1659, %v1806
        %v1817 = vmul.f32 %v1277, %v1790
        %v1818 = vmul.f32 %v1279, %v1794
        %v1819 = vmul.f32 %v1470, %v1798
        %v1820 = vmul.f32 %v1472, %v1802
        %v1821 = vmul.f32 %v1662, %v1806
        %v1822 = vmul.f32 %v1283, %v1790
        %v1823 = vmul.f32 %v1285, %v1794
        %v1824 = vmul.f32 %v1476, %v1798
        %v1825 = vmul.f32 %v1478, %v1802
        %v1826 = vmul.f32 %v1667, %v1806
        %v1827 = vmul.f32 %v1287, %v1790
        %v1828 = vmul.f32 %v1289, %v1794
        %v1829 = vmul.f32 %v1480, %v1798
        %v1830 = vmul.f32 %v1482, %v1802
        %v1831 = vmul.f32 %v1670, %v1806
        %v1832 = vmul.f32 %v1293, %v1790
        %v1833 = vmul.f32 %v1295, %v1794
        %v1834 = vmul.f32 %v1486, %v1798
        %v1835 = vmul.f32 %v1488, %v1802
        %v1836 = vmul.f32 %v1675, %v1806
        %v1837 = vmul.f32 %v1297, %v1790
        %v1838 = vmul.f32 %v1299, %v1794
        %v1839 = vmul.f32 %v1490, %v1798
        %v1840 = vmul.f32 %v1492, %v1802
        %v1841 = vmul.f32 %v1678, %v1806
        %v1842 = vmul.f32 %v1303, %v1790
        %v1843 = vmul.f32 %v1305, %v1794
        %v1844 = vmul.f32 %v1496, %v1798
        %v1845 = vmul.f32 %v1498, %v1802
        %v1846 = vmul.f32 %v1683, %v1806
        %v1847 = vmul.f32 %v1307, %v1790
        %v1848 = vmul.f32 %v1309, %v1794
        %v1849 = vmul.f32 %v1500, %v1798
        %v1850 = vmul.f32 %v1502, %v1802
        %v1851 = vmul.f32 %v1686, %v1806
        %v1852 = vmul.f32 %v1313, %v1790
        %v1853 = vmul.f32 %v1315, %v1794
        %v1854 = vmul.f32 %v1506, %v1798
        %v1855 = vmul.f32 %v1508, %v1802
        %v1856 = vmul.f32 %v1691, %v1806
        %v1857 = vmul.f32 %v1317, %v1790
        %v1858 = vmul.f32 %v1319, %v1794
        %v1859 = vmul.f32 %v1510, %v1798
        %v1860 = vmul.f32 %v1512, %v1802
        %v1861 = vmul.f32 %v1694, %v1806
        %v1862 = vmul.f32 %v1323, %v1790
        %v1863 = vmul.f32 %v1325, %v1794
        %v1864 = vmul.f32 %v1516, %v1798
        %v1865 = vmul.f32 %v1518, %v1802
        %v1866 = vmul.f32 %v1699, %v1806
        %v1867 = vmul.f32 %v1327, %v1790
        %v1868 = vmul.f32 %v1329, %v1794
        %v1869 = vmul.f32 %v1520, %v1798
        %v1870 = vmul.f32 %v1522, %v1802
        %v1871 = vmul.f32 %v1702, %v1806
        %v1872 = vmul.f32 %v1333, %v1790
        %v1873 = vmul.f32 %v1335, %v1794
        %v1874 = vmul.f32 %v1526, %v1798
        %v1875 = vmul.f32 %v1528, %v1802
        %v1876 = vmul.f32 %v1707, %v1806
        %v1877 = vmul.f32 %v1337, %v1790
        %v1878 = vmul.f32 %v1339, %v1794
        %v1879 = vmul.f32 %v1530, %v1798
        %v1880 = vmul.f32 %v1532, %v1802
        %v1881 = vmul.f32 %v1710, %v1806
        %v1882 = vmul.f32 %v1343, %v1790
        %v1883 = vmul.f32 %v1345, %v1794
        %v1884 = vmul.f32 %v1536, %v1798
        %v1885 = vmul.f32 %v1538, %v1802
        %v1886 = vmul.f32 %v1715, %v1806
        %v1887 = vmul.f32 %v1347, %v1790
        %v1888 = vmul.f32 %v1349, %v1794
        %v1889 = vmul.f32 %v1540, %v1798
        %v1890 = vmul.f32 %v1542, %v1802
        %v1891 = vmul.f32 %v1718, %v1806
        %v1892 = vmul.f32 %v1353, %v1790
        %v1893 = vmul.f32 %v1355, %v1794
        %v1894 = vmul.f32 %v1546, %v1798
        %v1895 = vmul.f32 %v1548, %v1802
        %v1896 = vmul.f32 %v1723, %v1806
        %v1897 = vmul.f32 %v1357, %v1790
        %v1898 = vmul.f32 %v1359, %v1794
        %v1899 = vmul.f32 %v1550, %v1798
        %v1900 = vmul.f32 %v1552, %v1802
        %v1901 = vmul.f32 %v1726, %v1806
        %v1902 = vmul.f32 %v1363, %v1790
        %v1903 = vmul.f32 %v1365, %v1794
        %v1904 = vmul.f32 %v1556, %v1798
        %v1905 = vmul.f32 %v1558, %v1802
        %v1906 = vmul.f32 %v1731, %v1806
        %v1907 = vmul.f32 %v1367, %v1790
        %v1908 = vmul.f32 %v1369, %v1794
        %v1909 = vmul.f32 %v1560, %v1798
        %v1910 = vmul.f32 %v1562, %v1802
        %v1911 = vmul.f32 %v1734, %v1806
        %v1912 = vmul.f32 %v1373, %v1790
        %v1913 = vmul.f32 %v1375, %v1794
        %v1914 = vmul.f32 %v1566, %v1798
        %v1915 = vmul.f32 %v1568, %v1802
        %v1916 = vmul.f32 %v1739, %v1806
        %v1917 = vmul.f32 %v1377, %v1790
        %v1918 = vmul.f32 %v1379, %v1794
        %v1919 = vmul.f32 %v1570, %v1798
        %v1920 = vmul.f32 %v1572, %v1802
        %v1921 = vmul.f32 %v1742, %v1806
        %v1922 = vmul.f32 %v1383, %v1790
        %v1923 = vmul.f32 %v1385, %v1794
        %v1924 = vmul.f32 %v1576, %v1798
        %v1925 = vmul.f32 %v1578, %v1802
        %v1926 = vmul.f32 %v1747, %v1806
        %v1927 = vmul.f32 %v1387, %v1790
        %v1928 = vmul.f32 %v1389, %v1794
        %v1929 = vmul.f32 %v1580, %v1798
        %v1930 = vmul.f32 %v1582, %v1802
        %v1931 = vmul.f32 %v1750, %v1806
        %v1932 = vmul.f32 %v1393, %v1790
        %v1933 = vmul.f32 %v1395, %v1794
        %v1934 = vmul.f32 %v1586, %v1798
        %v1935 = vmul.f32 %v1588, %v1802
        %v1936 = vmul.f32 %v1755, %v1806
        %v1937 = vmul.f32 %v1397, %v1790
        %v1938 = vmul.f32 %v1399, %v1794
        %v1939 = vmul.f32 %v1590, %v1798
        %v1940 = vmul.f32 %v1592, %v1802
        %v1941 = vmul.f32 %v1758, %v1806
        %v1942 = vmul.f32 %v1403, %v1790
        %v1943 = vmul.f32 %v1405, %v1794
        %v1944 = vmul.f32 %v1596, %v1798
        %v1945 = vmul.f32 %v1598, %v1802
        %v1946 = vmul.f32 %v1763, %v1806
        %v1947 = vmul.f32 %v1407, %v1790
        %v1948 = vmul.f32 %v1409, %v1794
        %v1949 = vmul.f32 %v1600, %v1798
        %v1950 = vmul.f32 %v1602, %v1802
        %v1951 = vmul.f32 %v1766, %v1806
        %v1952 = vmul.f32 %v1413, %v1790
        %v1953 = vmul.f32 %v1415, %v1794
        %v1954 = vmul.f32 %v1606, %v1798
        %v1955 = vmul.f32 %v1608, %v1802
        %v1956 = vmul.f32 %v1771, %v1806
        %v1957 = vmul.f32 %v1417, %v1790
        %v1958 = vmul.f32 %v1419, %v1794
        %v1959 = vmul.f32 %v1610, %v1798
        %v1960 = vmul.f32 %v1612, %v1802
        %v1961 = vmul.f32 %v1774, %v1806
        %v1962 = vmul.f32 %v1423, %v1790
        %v1963 = vmul.f32 %v1425, %v1794
        %v1964 = vmul.f32 %v1616, %v1798
        %v1965 = vmul.f32 %v1618, %v1802
        %v1966 = vmul.f32 %v1779, %v1806
        %v1967 = vmul.f32 %v1427, %v1790
        %v1968 = vmul.f32 %v1429, %v1794
        %v1969 = vmul.f32 %v1620, %v1798
        %v1970 = vmul.f32 %v1622, %v1802
        %v1971 = vmul.f32 %v1782, %v1806
        %v1972 = vld [vmem:[%s3] sm:$0x1f]
        %v1974 = vlaneseq
        %v1975 = vshrl.u32 %v1974, 7
        %v1976 = vsub.s32 0, %v1975
        %v1977 = vrot.slane %v1972, %v1976
        %v1978 = vlaneseq
        %v1979 = vshrl.u32 %v1978, 7
        %v1980 = vsub.s32 1, %v1979
        %v1981 = vrot.slane %v1972, %v1980
        %v1982 = vlaneseq
        %v1983 = vshrl.u32 %v1982, 7
        %v1984 = vsub.s32 2, %v1983
        %v1985 = vrot.slane %v1972, %v1984
        %v1986 = vlaneseq
        %v1987 = vshrl.u32 %v1986, 7
        %v1988 = vsub.s32 3, %v1987
        %v1989 = vrot.slane %v1972, %v1988
        %v1990 = vlaneseq
        %v1991 = vshrl.u32 %v1990, 7
        %v1992 = vsub.s32 4, %v1991
        %v1993 = vrot.slane %v1972, %v1992
        %v1999 = vadd.f32 %v1812, %v1977
        %v2000 = vadd.f32 %v1813, %v1981
        %v2001 = vadd.f32 %v1814, %v1985
        %v2002 = vadd.f32 %v1815, %v1989
        %v2003 = vadd.f32 %v1816, %v1993
        %v2004 = vadd.f32 %v1817, %v1977
        %v2005 = vadd.f32 %v1818, %v1981
        %v2006 = vadd.f32 %v1819, %v1985
        %v2007 = vadd.f32 %v1820, %v1989
        %v2008 = vadd.f32 %v1821, %v1993
        %v2009 = vadd.f32 %v1822, %v1977
        %v2010 = vadd.f32 %v1823, %v1981
        %v2011 = vadd.f32 %v1824, %v1985
        %v2012 = vadd.f32 %v1825, %v1989
        %v2013 = vadd.f32 %v1826, %v1993
        %v2014 = vadd.f32 %v1827, %v1977
        %v2015 = vadd.f32 %v1828, %v1981
        %v2016 = vadd.f32 %v1829, %v1985
        %v2017 = vadd.f32 %v1830, %v1989
        %v2018 = vadd.f32 %v1831, %v1993
        %v2019 = vadd.f32 %v1832, %v1977
        %v2020 = vadd.f32 %v1833, %v1981
        %v2021 = vadd.f32 %v1834, %v1985
        %v2022 = vadd.f32 %v1835, %v1989
        %v2023 = vadd.f32 %v1836, %v1993
        %v2024 = vadd.f32 %v1837, %v1977
        %v2025 = vadd.f32 %v1838, %v1981
        %v2026 = vadd.f32 %v1839, %v1985
        %v2027 = vadd.f32 %v1840, %v1989
        %v2028 = vadd.f32 %v1841, %v1993
        %v2029 = vadd.f32 %v1842, %v1977
        %v2030 = vadd.f32 %v1843, %v1981
        %v2031 = vadd.f32 %v1844, %v1985
        %v2032 = vadd.f32 %v1845, %v1989
        %v2033 = vadd.f32 %v1846, %v1993
        %v2034 = vadd.f32 %v1847, %v1977
        %v2035 = vadd.f32 %v1848, %v1981
        %v2036 = vadd.f32 %v1849, %v1985
        %v2037 = vadd.f32 %v1850, %v1989
        %v2038 = vadd.f32 %v1851, %v1993
        %v2039 = vadd.f32 %v1852, %v1977
        %v2040 = vadd.f32 %v1853, %v1981
        %v2041 = vadd.f32 %v1854, %v1985
        %v2042 = vadd.f32 %v1855, %v1989
        %v2043 = vadd.f32 %v1856, %v1993
        %v2044 = vadd.f32 %v1857, %v1977
        %v2045 = vadd.f32 %v1858, %v1981
        %v2046 = vadd.f32 %v1859, %v1985
        %v2047 = vadd.f32 %v1860, %v1989
        %v2048 = vadd.f32 %v1861, %v1993
        %v2049 = vadd.f32 %v1862, %v1977
        %v2050 = vadd.f32 %v1863, %v1981
        %v2051 = vadd.f32 %v1864, %v1985
        %v2052 = vadd.f32 %v1865, %v1989
        %v2053 = vadd.f32 %v1866, %v1993
        %v2054 = vadd.f32 %v1867, %v1977
        %v2055 = vadd.f32 %v1868, %v1981
        %v2056 = vadd.f32 %v1869, %v1985
        %v2057 = vadd.f32 %v1870, %v1989
        %v2058 = vadd.f32 %v1871, %v1993
        %v2059 = vadd.f32 %v1872, %v1977
        %v2060 = vadd.f32 %v1873, %v1981
        %v2061 = vadd.f32 %v1874, %v1985
        %v2062 = vadd.f32 %v1875, %v1989
        %v2063 = vadd.f32 %v1876, %v1993
        %v2064 = vadd.f32 %v1877, %v1977
        %v2065 = vadd.f32 %v1878, %v1981
        %v2066 = vadd.f32 %v1879, %v1985
        %v2067 = vadd.f32 %v1880, %v1989
        %v2068 = vadd.f32 %v1881, %v1993
        %v2069 = vadd.f32 %v1882, %v1977
        %v2070 = vadd.f32 %v1883, %v1981
        %v2071 = vadd.f32 %v1884, %v1985
        %v2072 = vadd.f32 %v1885, %v1989
        %v2073 = vadd.f32 %v1886, %v1993
        %v2074 = vadd.f32 %v1887, %v1977
        %v2075 = vadd.f32 %v1888, %v1981
        %v2076 = vadd.f32 %v1889, %v1985
        %v2077 = vadd.f32 %v1890, %v1989
        %v2078 = vadd.f32 %v1891, %v1993
        %v2079 = vadd.f32 %v1892, %v1977
        %v2080 = vadd.f32 %v1893, %v1981
        %v2081 = vadd.f32 %v1894, %v1985
        %v2082 = vadd.f32 %v1895, %v1989
        %v2083 = vadd.f32 %v1896, %v1993
        %v2084 = vadd.f32 %v1897, %v1977
        %v2085 = vadd.f32 %v1898, %v1981
        %v2086 = vadd.f32 %v1899, %v1985
        %v2087 = vadd.f32 %v1900, %v1989
        %v2088 = vadd.f32 %v1901, %v1993
        %v2089 = vadd.f32 %v1902, %v1977
        %v2090 = vadd.f32 %v1903, %v1981
        %v2091 = vadd.f32 %v1904, %v1985
        %v2092 = vadd.f32 %v1905, %v1989
        %v2093 = vadd.f32 %v1906, %v1993
        %v2094 = vadd.f32 %v1907, %v1977
        %v2095 = vadd.f32 %v1908, %v1981
        %v2096 = vadd.f32 %v1909, %v1985
        %v2097 = vadd.f32 %v1910, %v1989
        %v2098 = vadd.f32 %v1911, %v1993
        %v2099 = vadd.f32 %v1912, %v1977
        %v2100 = vadd.f32 %v1913, %v1981
        %v2101 = vadd.f32 %v1914, %v1985
        %v2102 = vadd.f32 %v1915, %v1989
        %v2103 = vadd.f32 %v1916, %v1993
        %v2104 = vadd.f32 %v1917, %v1977
        %v2105 = vadd.f32 %v1918, %v1981
        %v2106 = vadd.f32 %v1919, %v1985
        %v2107 = vadd.f32 %v1920, %v1989
        %v2108 = vadd.f32 %v1921, %v1993
        %v2109 = vadd.f32 %v1922, %v1977
        %v2110 = vadd.f32 %v1923, %v1981
        %v2111 = vadd.f32 %v1924, %v1985
        %v2112 = vadd.f32 %v1925, %v1989
        %v2113 = vadd.f32 %v1926, %v1993
        %v2114 = vadd.f32 %v1927, %v1977
        %v2115 = vadd.f32 %v1928, %v1981
        %v2116 = vadd.f32 %v1929, %v1985
        %v2117 = vadd.f32 %v1930, %v1989
        %v2118 = vadd.f32 %v1931, %v1993
        %v2119 = vadd.f32 %v1932, %v1977
        %v2120 = vadd.f32 %v1933, %v1981
        %v2121 = vadd.f32 %v1934, %v1985
        %v2122 = vadd.f32 %v1935, %v1989
        %v2123 = vadd.f32 %v1936, %v1993
        %v2124 = vadd.f32 %v1937, %v1977
        %v2125 = vadd.f32 %v1938, %v1981
        %v2126 = vadd.f32 %v1939, %v1985
        %v2127 = vadd.f32 %v1940, %v1989
        %v2128 = vadd.f32 %v1941, %v1993
        %v2129 = vadd.f32 %v1942, %v1977
        %v2130 = vadd.f32 %v1943, %v1981
        %v2131 = vadd.f32 %v1944, %v1985
        %v2132 = vadd.f32 %v1945, %v1989
        %v2133 = vadd.f32 %v1946, %v1993
        %v2134 = vadd.f32 %v1947, %v1977
        %v2135 = vadd.f32 %v1948, %v1981
        %v2136 = vadd.f32 %v1949, %v1985
        %v2137 = vadd.f32 %v1950, %v1989
        %v2138 = vadd.f32 %v1951, %v1993
        %v2139 = vadd.f32 %v1952, %v1977
        %v2140 = vadd.f32 %v1953, %v1981
        %v2141 = vadd.f32 %v1954, %v1985
        %v2142 = vadd.f32 %v1955, %v1989
        %v2143 = vadd.f32 %v1956, %v1993
        %v2144 = vadd.f32 %v1957, %v1977
        %v2145 = vadd.f32 %v1958, %v1981
        %v2146 = vadd.f32 %v1959, %v1985
        %v2147 = vadd.f32 %v1960, %v1989
        %v2148 = vadd.f32 %v1961, %v1993
        %v2149 = vadd.f32 %v1962, %v1977
        %v2150 = vadd.f32 %v1963, %v1981
        %v2151 = vadd.f32 %v1964, %v1985
        %v2152 = vadd.f32 %v1965, %v1989
        %v2153 = vadd.f32 %v1966, %v1993
        %v2154 = vadd.f32 %v1967, %v1977
        %v2155 = vadd.f32 %v1968, %v1981
        %v2156 = vadd.f32 %v1969, %v1985
        %v2157 = vadd.f32 %v1970, %v1989
        %v2158 = vadd.f32 %v1971, %v1993
        %v2159 = vmax.f32 %v2003, 0.0
        %v2160 = vmax.f32 %v2008, 0.0
        %v2161 = vmax.f32 %v2013, 0.0
        %v2162 = vmax.f32 %v2018, 0.0
        %v2163 = vmax.f32 %v2023, 0.0
        %v2164 = vmax.f32 %v2028, 0.0
        %v2165 = vmax.f32 %v2033, 0.0
        %v2166 = vmax.f32 %v2038, 0.0
        %v2167 = vmax.f32 %v2043, 0.0
        %v2168 = vmax.f32 %v2048, 0.0
        %v2169 = vmax.f32 %v2053, 0.0
        %v2170 = vmax.f32 %v2058, 0.0
        %v2171 = vmax.f32 %v2063, 0.0
        %v2172 = vmax.f32 %v2068, 0.0
        %v2173 = vmax.f32 %v2073, 0.0
        %v2174 = vmax.f32 %v2078, 0.0
        %v2175 = vmax.f32 %v2083, 0.0
        %v2176 = vmax.f32 %v2088, 0.0
        %v2177 = vmax.f32 %v2093, 0.0
        %v2178 = vmax.f32 %v2098, 0.0
        %v2179 = vmax.f32 %v2103, 0.0
        %v2180 = vmax.f32 %v2108, 0.0
        %v2181 = vmax.f32 %v2113, 0.0
        %v2182 = vmax.f32 %v2118, 0.0
        %v2183 = vmax.f32 %v2123, 0.0
        %v2184 = vmax.f32 %v2128, 0.0
        %v2185 = vmax.f32 %v2133, 0.0
        %v2186 = vmax.f32 %v2138, 0.0
        %v2187 = vmax.f32 %v2143, 0.0
        %v2188 = vmax.f32 %v2148, 0.0
        %v2189 = vmax.f32 %v2153, 0.0
        %v2190 = vmax.f32 %v2158, 0.0
        %2191 = vst [vmem:[#allocation2] sm:$0xf] 0
        %2192 = vst [vmem:[#allocation2 + $0x4] sm:$0x1] 0
        %2193 = vst [vmem:[#allocation2 + $0x50] sm:$0xf] 0
        %2194 = vst [vmem:[#allocation2 + $0x54] sm:$0x1] 0
        %2195 = vst [vmem:[#allocation2 + $0xa0] sm:$0xf] 0
        %2196 = vst [vmem:[#allocation2 + $0xa4] sm:$0x1] 0
        %2197 = vst [vmem:[#allocation2 + $0xf0] sm:$0xf] 0
        %2198 = vst [vmem:[#allocation2 + $0xf4] sm:$0x1] 0
        %s2199 = scalar_lea.vmem [#allocation2], 72
        %2200 = vst [vmem:[%s2199] sm:$0xf] 0
        %2201 = vst [vmem:[%s2199 + $0x4] sm:$0x1] 0
        %2202 = vst [vmem:[%s2199 + $0x50] sm:$0xf] 0
        %2203 = vst [vmem:[%s2199 + $0x54] sm:$0x1] 0
        %2204 = vst [vmem:[%s2199 + $0xa0] sm:$0xf] 0
        %2205 = vst [vmem:[%s2199 + $0xa4] sm:$0x1] 0
        %2206 = vst [vmem:[%s2199 + $0xf0] sm:$0xf] 0
        %2207 = vst [vmem:[%s2199 + $0xf4] sm:$0x1] 0
        %s2208 = scalar_lea.vmem [#allocation2], 8
        %vm2209 = vcmask 1040384
        %vm2210 = vsmask.f32 256
        %vm2211 = vmand %vm2209, %vm2210
        %v2212 = vld [vmem:[%s2208] sm:$0x1]
        %v2213 = vsel %vm2211, 0, %v2212
        %2214 = vst [vmem:[%s2208] sm:$0x1] %v2213
        %v2215 = vld [vmem:[%s2208 + $0x8] sm:$0x1]
        %v2216 = vsel %vm2211, 0, %v2215
        %2217 = vst [vmem:[%s2208 + $0x8] sm:$0x1] %v2216
        %v2218 = vld [vmem:[%s2208 + $0x10] sm:$0x1]
        %v2219 = vsel %vm2211, 0, %v2218
        %2220 = vst [vmem:[%s2208 + $0x10] sm:$0x1] %v2219
        %v2221 = vld [vmem:[%s2208 + $0x18] sm:$0x1]
        %v2222 = vsel %vm2211, 0, %v2221
        %2223 = vst [vmem:[%s2208 + $0x18] sm:$0x1] %v2222
        %v2224 = vld [vmem:[%s2208 + $0x20] sm:$0x1]
        %v2225 = vsel %vm2211, 0, %v2224
        %2226 = vst [vmem:[%s2208 + $0x20] sm:$0x1] %v2225
        %v2227 = vld [vmem:[%s2208 + $0x28] sm:$0x1]
        %v2228 = vsel %vm2211, 0, %v2227
        %2229 = vst [vmem:[%s2208 + $0x28] sm:$0x1] %v2228
        %v2230 = vld [vmem:[%s2208 + $0x30] sm:$0x1]
        %v2231 = vsel %vm2211, 0, %v2230
        %2232 = vst [vmem:[%s2208 + $0x30] sm:$0x1] %v2231
        %v2233 = vld [vmem:[%s2208 + $0x38] sm:$0x1]
        %v2234 = vsel %vm2211, 0, %v2233
        %2235 = vst [vmem:[%s2208 + $0x38] sm:$0x1] %v2234
        %v2236 = vld [vmem:[%s2208 + $0x50] sm:$0x1]
        %v2237 = vsel %vm2211, 0, %v2236
        %2238 = vst [vmem:[%s2208 + $0x50] sm:$0x1] %v2237
        %v2239 = vld [vmem:[%s2208 + $0x58] sm:$0x1]
        %v2240 = vsel %vm2211, 0, %v2239
        %2241 = vst [vmem:[%s2208 + $0x58] sm:$0x1] %v2240
        %v2242 = vld [vmem:[%s2208 + $0x60] sm:$0x1]
        %v2243 = vsel %vm2211, 0, %v2242
        %2244 = vst [vmem:[%s2208 + $0x60] sm:$0x1] %v2243
        %v2245 = vld [vmem:[%s2208 + $0x68] sm:$0x1]
        %v2246 = vsel %vm2211, 0, %v2245
        %2247 = vst [vmem:[%s2208 + $0x68] sm:$0x1] %v2246
        %v2248 = vld [vmem:[%s2208 + $0x70] sm:$0x1]
        %v2249 = vsel %vm2211, 0, %v2248
        %2250 = vst [vmem:[%s2208 + $0x70] sm:$0x1] %v2249
        %v2251 = vld [vmem:[%s2208 + $0x78] sm:$0x1]
        %v2252 = vsel %vm2211, 0, %v2251
        %2253 = vst [vmem:[%s2208 + $0x78] sm:$0x1] %v2252
        %v2254 = vld [vmem:[%s2208 + $0x80] sm:$0x1]
        %v2255 = vsel %vm2211, 0, %v2254
        %2256 = vst [vmem:[%s2208 + $0x80] sm:$0x1] %v2255
        %v2257 = vld [vmem:[%s2208 + $0x88] sm:$0x1]
        %v2258 = vsel %vm2211, 0, %v2257
        %2259 = vst [vmem:[%s2208 + $0x88] sm:$0x1] %v2258
        %v2260 = vld [vmem:[%s2208 + $0xa0] sm:$0x1]
        %v2261 = vsel %vm2211, 0, %v2260
        %2262 = vst [vmem:[%s2208 + $0xa0] sm:$0x1] %v2261
        %v2263 = vld [vmem:[%s2208 + $0xa8] sm:$0x1]
        %v2264 = vsel %vm2211, 0, %v2263
        %2265 = vst [vmem:[%s2208 + $0xa8] sm:$0x1] %v2264
        %v2266 = vld [vmem:[%s2208 + $0xb0] sm:$0x1]
        %v2267 = vsel %vm2211, 0, %v2266
        %2268 = vst [vmem:[%s2208 + $0xb0] sm:$0x1] %v2267
        %v2269 = vld [vmem:[%s2208 + $0xb8] sm:$0x1]
        %v2270 = vsel %vm2211, 0, %v2269
        %2271 = vst [vmem:[%s2208 + $0xb8] sm:$0x1] %v2270
        %v2272 = vld [vmem:[%s2208 + $0xc0] sm:$0x1]
        %v2273 = vsel %vm2211, 0, %v2272
        %2274 = vst [vmem:[%s2208 + $0xc0] sm:$0x1] %v2273
        %v2275 = vld [vmem:[%s2208 + $0xc8] sm:$0x1]
        %v2276 = vsel %vm2211, 0, %v2275
        %2277 = vst [vmem:[%s2208 + $0xc8] sm:$0x1] %v2276
        %v2278 = vld [vmem:[%s2208 + $0xd0] sm:$0x1]
        %v2279 = vsel %vm2211, 0, %v2278
        %2280 = vst [vmem:[%s2208 + $0xd0] sm:$0x1] %v2279
        %v2281 = vld [vmem:[%s2208 + $0xd8] sm:$0x1]
        %v2282 = vsel %vm2211, 0, %v2281
        %2283 = vst [vmem:[%s2208 + $0xd8] sm:$0x1] %v2282
        %v2284 = vld [vmem:[%s2208 + $0xf0] sm:$0x1]
        %v2285 = vsel %vm2211, 0, %v2284
        %2286 = vst [vmem:[%s2208 + $0xf0] sm:$0x1] %v2285
        %v2287 = vld [vmem:[%s2208 + $0xf8] sm:$0x1]
        %v2288 = vsel %vm2211, 0, %v2287
        %2289 = vst [vmem:[%s2208 + $0xf8] sm:$0x1] %v2288
        %v2290 = vld [vmem:[%s2208 + $0x100] sm:$0x1]
        %v2291 = vsel %vm2211, 0, %v2290
        %2292 = vst [vmem:[%s2208 + $0x100] sm:$0x1] %v2291
        %v2293 = vld [vmem:[%s2208 + $0x108] sm:$0x1]
        %v2294 = vsel %vm2211, 0, %v2293
        %2295 = vst [vmem:[%s2208 + $0x108] sm:$0x1] %v2294
        %v2296 = vld [vmem:[%s2208 + $0x110] sm:$0x1]
        %v2297 = vsel %vm2211, 0, %v2296
        %2298 = vst [vmem:[%s2208 + $0x110] sm:$0x1] %v2297
        %v2299 = vld [vmem:[%s2208 + $0x118] sm:$0x1]
        %v2300 = vsel %vm2211, 0, %v2299
        %2301 = vst [vmem:[%s2208 + $0x118] sm:$0x1] %v2300
        %v2302 = vld [vmem:[%s2208 + $0x120] sm:$0x1]
        %v2303 = vsel %vm2211, 0, %v2302
        %2304 = vst [vmem:[%s2208 + $0x120] sm:$0x1] %v2303
        %v2305 = vld [vmem:[%s2208 + $0x128] sm:$0x1]
        %v2306 = vsel %vm2211, 0, %v2305
        %2307 = vst [vmem:[%s2208 + $0x128] sm:$0x1] %v2306
        %vm2308 = vsmask.f32 7938
        %vm2309 = vmand %vm2209, %vm2308
        %v2310 = vld [vmem:[%s2208 + $0x4] sm:$0x1]
        %v2311 = vsel %vm2309, 0, %v2310
        %2312 = vst [vmem:[%s2208 + $0x4] sm:$0x1] %v2311
        %v2313 = vld [vmem:[%s2208 + $0xc] sm:$0x1]
        %v2314 = vsel %vm2309, 0, %v2313
        %2315 = vst [vmem:[%s2208 + $0xc] sm:$0x1] %v2314
        %v2316 = vld [vmem:[%s2208 + $0x14] sm:$0x1]
        %v2317 = vsel %vm2309, 0, %v2316
        %2318 = vst [vmem:[%s2208 + $0x14] sm:$0x1] %v2317
        %v2319 = vld [vmem:[%s2208 + $0x1c] sm:$0x1]
        %v2320 = vsel %vm2309, 0, %v2319
        %2321 = vst [vmem:[%s2208 + $0x1c] sm:$0x1] %v2320
        %v2322 = vld [vmem:[%s2208 + $0x24] sm:$0x1]
        %v2323 = vsel %vm2309, 0, %v2322
        %2324 = vst [vmem:[%s2208 + $0x24] sm:$0x1] %v2323
        %v2325 = vld [vmem:[%s2208 + $0x2c] sm:$0x1]
        %v2326 = vsel %vm2309, 0, %v2325
        %2327 = vst [vmem:[%s2208 + $0x2c] sm:$0x1] %v2326
        %v2328 = vld [vmem:[%s2208 + $0x34] sm:$0x1]
        %v2329 = vsel %vm2309, 0, %v2328
        %2330 = vst [vmem:[%s2208 + $0x34] sm:$0x1] %v2329
        %v2331 = vld [vmem:[%s2208 + $0x3c] sm:$0x1]
        %v2332 = vsel %vm2309, 0, %v2331
        %2333 = vst [vmem:[%s2208 + $0x3c] sm:$0x1] %v2332
        %v2334 = vld [vmem:[%s2208 + $0x54] sm:$0x1]
        %v2335 = vsel %vm2309, 0, %v2334
        %2336 = vst [vmem:[%s2208 + $0x54] sm:$0x1] %v2335
        %v2337 = vld [vmem:[%s2208 + $0x5c] sm:$0x1]
        %v2338 = vsel %vm2309, 0, %v2337
        %2339 = vst [vmem:[%s2208 + $0x5c] sm:$0x1] %v2338
        %v2340 = vld [vmem:[%s2208 + $0x64] sm:$0x1]
        %v2341 = vsel %vm2309, 0, %v2340
        %2342 = vst [vmem:[%s2208 + $0x64] sm:$0x1] %v2341
        %v2343 = vld [vmem:[%s2208 + $0x6c] sm:$0x1]
        %v2344 = vsel %vm2309, 0, %v2343
        %2345 = vst [vmem:[%s2208 + $0x6c] sm:$0x1] %v2344
        %v2346 = vld [vmem:[%s2208 + $0x74] sm:$0x1]
        %v2347 = vsel %vm2309, 0, %v2346
        %2348 = vst [vmem:[%s2208 + $0x74] sm:$0x1] %v2347
        %v2349 = vld [vmem:[%s2208 + $0x7c] sm:$0x1]
        %v2350 = vsel %vm2309, 0, %v2349
        %2351 = vst [vmem:[%s2208 + $0x7c] sm:$0x1] %v2350
        %v2352 = vld [vmem:[%s2208 + $0x84] sm:$0x1]
        %v2353 = vsel %vm2309, 0, %v2352
        %2354 = vst [vmem:[%s2208 + $0x84] sm:$0x1] %v2353
        %v2355 = vld [vmem:[%s2208 + $0x8c] sm:$0x1]
        %v2356 = vsel %vm2309, 0, %v2355
        %2357 = vst [vmem:[%s2208 + $0x8c] sm:$0x1] %v2356
        %v2358 = vld [vmem:[%s2208 + $0xa4] sm:$0x1]
        %v2359 = vsel %vm2309, 0, %v2358
        %2360 = vst [vmem:[%s2208 + $0xa4] sm:$0x1] %v2359
        %v2361 = vld [vmem:[%s2208 + $0xac] sm:$0x1]
        %v2362 = vsel %vm2309, 0, %v2361
        %2363 = vst [vmem:[%s2208 + $0xac] sm:$0x1] %v2362
        %v2364 = vld [vmem:[%s2208 + $0xb4] sm:$0x1]
        %v2365 = vsel %vm2309, 0, %v2364
        %2366 = vst [vmem:[%s2208 + $0xb4] sm:$0x1] %v2365
        %v2367 = vld [vmem:[%s2208 + $0xbc] sm:$0x1]
        %v2368 = vsel %vm2309, 0, %v2367
        %2369 = vst [vmem:[%s2208 + $0xbc] sm:$0x1] %v2368
        %v2370 = vld [vmem:[%s2208 + $0xc4] sm:$0x1]
        %v2371 = vsel %vm2309, 0, %v2370
        %2372 = vst [vmem:[%s2208 + $0xc4] sm:$0x1] %v2371
        %v2373 = vld [vmem:[%s2208 + $0xcc] sm:$0x1]
        %v2374 = vsel %vm2309, 0, %v2373
        %2375 = vst [vmem:[%s2208 + $0xcc] sm:$0x1] %v2374
        %v2376 = vld [vmem:[%s2208 + $0xd4] sm:$0x1]
        %v2377 = vsel %vm2309, 0, %v2376
        %2378 = vst [vmem:[%s2208 + $0xd4] sm:$0x1] %v2377
        %v2379 = vld [vmem:[%s2208 + $0xdc] sm:$0x1]
        %v2380 = vsel %vm2309, 0, %v2379
        %2381 = vst [vmem:[%s2208 + $0xdc] sm:$0x1] %v2380
        %v2382 = vld [vmem:[%s2208 + $0xf4] sm:$0x1]
        %v2383 = vsel %vm2309, 0, %v2382
        %2384 = vst [vmem:[%s2208 + $0xf4] sm:$0x1] %v2383
        %v2385 = vld [vmem:[%s2208 + $0xfc] sm:$0x1]
        %v2386 = vsel %vm2309, 0, %v2385
        %2387 = vst [vmem:[%s2208 + $0xfc] sm:$0x1] %v2386
        %v2388 = vld [vmem:[%s2208 + $0x104] sm:$0x1]
        %v2389 = vsel %vm2309, 0, %v2388
        %2390 = vst [vmem:[%s2208 + $0x104] sm:$0x1] %v2389
        %v2391 = vld [vmem:[%s2208 + $0x10c] sm:$0x1]
        %v2392 = vsel %vm2309, 0, %v2391
        %2393 = vst [vmem:[%s2208 + $0x10c] sm:$0x1] %v2392
        %v2394 = vld [vmem:[%s2208 + $0x114] sm:$0x1]
        %v2395 = vsel %vm2309, 0, %v2394
        %2396 = vst [vmem:[%s2208 + $0x114] sm:$0x1] %v2395
        %v2397 = vld [vmem:[%s2208 + $0x11c] sm:$0x1]
        %v2398 = vsel %vm2309, 0, %v2397
        %2399 = vst [vmem:[%s2208 + $0x11c] sm:$0x1] %v2398
        %v2400 = vld [vmem:[%s2208 + $0x124] sm:$0x1]
        %v2401 = vsel %vm2309, 0, %v2400
        %2402 = vst [vmem:[%s2208 + $0x124] sm:$0x1] %v2401
        %v2403 = vld [vmem:[%s2208 + $0x12c] sm:$0x1]
        %v2404 = vsel %vm2309, 0, %v2403
        %2405 = vst [vmem:[%s2208 + $0x12c] sm:$0x1] %v2404
        %v2406 = vpack.c.bf16 %v2159, %v2159
        %v2407 = vpack.c.bf16 %v2160, %v2160
        %v2408 = vpack.c.bf16 %v2161, %v2161
        %v2409 = vpack.c.bf16 %v2162, %v2162
        %v2410 = vpack.c.bf16 %v2163, %v2163
        %v2411 = vpack.c.bf16 %v2164, %v2164
        %v2412 = vpack.c.bf16 %v2165, %v2165
        %v2413 = vpack.c.bf16 %v2166, %v2166
        %v2414 = vpack.c.bf16 %v2167, %v2167
        %v2415 = vpack.c.bf16 %v2168, %v2168
        %v2416 = vpack.c.bf16 %v2169, %v2169
        %v2417 = vpack.c.bf16 %v2170, %v2170
        %v2418 = vpack.c.bf16 %v2171, %v2171
        %v2419 = vpack.c.bf16 %v2172, %v2172
        %v2420 = vpack.c.bf16 %v2173, %v2173
        %v2421 = vpack.c.bf16 %v2174, %v2174
        %v2422 = vpack.c.bf16 %v2175, %v2175
        %v2423 = vpack.c.bf16 %v2176, %v2176
        %v2424 = vpack.c.bf16 %v2177, %v2177
        %v2425 = vpack.c.bf16 %v2178, %v2178
        %v2426 = vpack.c.bf16 %v2179, %v2179
        %v2427 = vpack.c.bf16 %v2180, %v2180
        %v2428 = vpack.c.bf16 %v2181, %v2181
        %v2429 = vpack.c.bf16 %v2182, %v2182
        %v2430 = vpack.c.bf16 %v2183, %v2183
        %v2431 = vpack.c.bf16 %v2184, %v2184
        %v2432 = vpack.c.bf16 %v2185, %v2185
        %v2433 = vpack.c.bf16 %v2186, %v2186
        %v2434 = vpack.c.bf16 %v2187, %v2187
        %v2435 = vpack.c.bf16 %v2188, %v2188
        %v2436 = vpack.c.bf16 %v2189, %v2189
        %v2437 = vpack.c.bf16 %v2190, %v2190
        %v2470 = vunpack.c.l.b16 %v2406
        %v2471 = vunpack.c.l.b16 %v2407
        %v2472 = vunpack.c.l.b16 %v2408
        %v2473 = vunpack.c.l.b16 %v2409
        %v2474 = vunpack.c.l.b16 %v2410
        %v2475 = vunpack.c.l.b16 %v2411
        %v2476 = vunpack.c.l.b16 %v2412
        %v2477 = vunpack.c.l.b16 %v2413
        %v2478 = vunpack.c.l.b16 %v2414
        %v2479 = vunpack.c.l.b16 %v2415
        %v2480 = vunpack.c.l.b16 %v2416
        %v2481 = vunpack.c.l.b16 %v2417
        %v2482 = vunpack.c.l.b16 %v2418
        %v2483 = vunpack.c.l.b16 %v2419
        %v2484 = vunpack.c.l.b16 %v2420
        %v2485 = vunpack.c.l.b16 %v2421
        %v2486 = vunpack.c.l.b16 %v2422
        %v2487 = vunpack.c.l.b16 %v2423
        %v2488 = vunpack.c.l.b16 %v2424
        %v2489 = vunpack.c.l.b16 %v2425
        %v2490 = vunpack.c.l.b16 %v2426
        %v2491 = vunpack.c.l.b16 %v2427
        %v2492 = vunpack.c.l.b16 %v2428
        %v2493 = vunpack.c.l.b16 %v2429
        %v2494 = vunpack.c.l.b16 %v2430
        %v2495 = vunpack.c.l.b16 %v2431
        %v2496 = vunpack.c.l.b16 %v2432
        %v2497 = vunpack.c.l.b16 %v2433
        %v2498 = vunpack.c.l.b16 %v2434
        %v2499 = vunpack.c.l.b16 %v2435
        %v2500 = vunpack.c.l.b16 %v2436
        %v2501 = vunpack.c.l.b16 %v2437
        %v2502 = vpack.c.b16 %v2470, %v2470
        %v2503 = vpack.c.b16 %v2471, %v2471
        %v2504 = vpack.c.b16 %v2472, %v2472
        %v2505 = vpack.c.b16 %v2473, %v2473
        %v2506 = vpack.c.b16 %v2474, %v2474
        %v2507 = vpack.c.b16 %v2475, %v2475
        %v2508 = vpack.c.b16 %v2476, %v2476
        %v2509 = vpack.c.b16 %v2477, %v2477
        %v2510 = vpack.c.b16 %v2478, %v2478
        %v2511 = vpack.c.b16 %v2479, %v2479
        %v2512 = vpack.c.b16 %v2480, %v2480
        %v2513 = vpack.c.b16 %v2481, %v2481
        %v2514 = vpack.c.b16 %v2482, %v2482
        %v2515 = vpack.c.b16 %v2483, %v2483
        %v2516 = vpack.c.b16 %v2484, %v2484
        %v2517 = vpack.c.b16 %v2485, %v2485
        %v2518 = vpack.c.b16 %v2486, %v2486
        %v2519 = vpack.c.b16 %v2487, %v2487
        %v2520 = vpack.c.b16 %v2488, %v2488
        %v2521 = vpack.c.b16 %v2489, %v2489
        %v2522 = vpack.c.b16 %v2490, %v2490
        %v2523 = vpack.c.b16 %v2491, %v2491
        %v2524 = vpack.c.b16 %v2492, %v2492
        %v2525 = vpack.c.b16 %v2493, %v2493
        %v2526 = vpack.c.b16 %v2494, %v2494
        %v2527 = vpack.c.b16 %v2495, %v2495
        %v2528 = vpack.c.b16 %v2496, %v2496
        %v2529 = vpack.c.b16 %v2497, %v2497
        %v2530 = vpack.c.b16 %v2498, %v2498
        %v2531 = vpack.c.b16 %v2499, %v2499
        %v2532 = vpack.c.b16 %v2500, %v2500
        %v2533 = vpack.c.b16 %v2501, %v2501
        %v2535 = vshrl.u32 %v2502, 16
        %v2537 = vrot.slane %v2535, 7
        %v2538 = vshll.u32 %v2502, 16
        %v2540 = vor.u32 %v2537, %v2538
        %v2541 = vrot.slane %v2537, 4
        %v2543 = vshrl.u32 %v2503, 16
        %v2545 = vrot.slane %v2543, 7
        %v2546 = vshll.u32 %v2503, 16
        %v2548 = vor.u32 %v2545, %v2546
        %v2549 = vrot.slane %v2545, 4
        %v2551 = vshrl.u32 %v2504, 16
        %v2553 = vrot.slane %v2551, 7
        %v2554 = vshll.u32 %v2504, 16
        %v2556 = vor.u32 %v2553, %v2554
        %v2557 = vrot.slane %v2553, 4
        %v2559 = vshrl.u32 %v2505, 16
        %v2561 = vrot.slane %v2559, 7
        %v2562 = vshll.u32 %v2505, 16
        %v2564 = vor.u32 %v2561, %v2562
        %v2565 = vrot.slane %v2561, 4
        %v2567 = vshrl.u32 %v2506, 16
        %v2569 = vrot.slane %v2567, 7
        %v2570 = vshll.u32 %v2506, 16
        %v2572 = vor.u32 %v2569, %v2570
        %v2573 = vrot.slane %v2569, 4
        %v2575 = vshrl.u32 %v2507, 16
        %v2577 = vrot.slane %v2575, 7
        %v2578 = vshll.u32 %v2507, 16
        %v2580 = vor.u32 %v2577, %v2578
        %v2581 = vrot.slane %v2577, 4
        %v2583 = vshrl.u32 %v2508, 16
        %v2585 = vrot.slane %v2583, 7
        %v2586 = vshll.u32 %v2508, 16
        %v2588 = vor.u32 %v2585, %v2586
        %v2589 = vrot.slane %v2585, 4
        %v2591 = vshrl.u32 %v2509, 16
        %v2593 = vrot.slane %v2591, 7
        %v2594 = vshll.u32 %v2509, 16
        %v2596 = vor.u32 %v2593, %v2594
        %v2597 = vrot.slane %v2593, 4
        %v2599 = vshrl.u32 %v2510, 16
        %v2601 = vrot.slane %v2599, 7
        %v2602 = vshll.u32 %v2510, 16
        %v2604 = vor.u32 %v2601, %v2602
        %v2605 = vrot.slane %v2601, 4
        %v2607 = vshrl.u32 %v2511, 16
        %v2609 = vrot.slane %v2607, 7
        %v2610 = vshll.u32 %v2511, 16
        %v2612 = vor.u32 %v2609, %v2610
        %v2613 = vrot.slane %v2609, 4
        %v2615 = vshrl.u32 %v2512, 16
        %v2617 = vrot.slane %v2615, 7
        %v2618 = vshll.u32 %v2512, 16
        %v2620 = vor.u32 %v2617, %v2618
        %v2621 = vrot.slane %v2617, 4
        %v2623 = vshrl.u32 %v2513, 16
        %v2625 = vrot.slane %v2623, 7
        %v2626 = vshll.u32 %v2513, 16
        %v2628 = vor.u32 %v2625, %v2626
        %v2629 = vrot.slane %v2625, 4
        %v2631 = vshrl.u32 %v2514, 16
        %v2633 = vrot.slane %v2631, 7
        %v2634 = vshll.u32 %v2514, 16
        %v2636 = vor.u32 %v2633, %v2634
        %v2637 = vrot.slane %v2633, 4
        %v2639 = vshrl.u32 %v2515, 16
        %v2641 = vrot.slane %v2639, 7
        %v2642 = vshll.u32 %v2515, 16
        %v2644 = vor.u32 %v2641, %v2642
        %v2645 = vrot.slane %v2641, 4
        %v2647 = vshrl.u32 %v2516, 16
        %v2649 = vrot.slane %v2647, 7
        %v2650 = vshll.u32 %v2516, 16
        %v2652 = vor.u32 %v2649, %v2650
        %v2653 = vrot.slane %v2649, 4
        %v2655 = vshrl.u32 %v2517, 16
        %v2657 = vrot.slane %v2655, 7
        %v2658 = vshll.u32 %v2517, 16
        %v2660 = vor.u32 %v2657, %v2658
        %v2661 = vrot.slane %v2657, 4
        %v2663 = vshrl.u32 %v2518, 16
        %v2665 = vrot.slane %v2663, 7
        %v2666 = vshll.u32 %v2518, 16
        %v2668 = vor.u32 %v2665, %v2666
        %v2669 = vrot.slane %v2665, 4
        %v2671 = vshrl.u32 %v2519, 16
        %v2673 = vrot.slane %v2671, 7
        %v2674 = vshll.u32 %v2519, 16
        %v2676 = vor.u32 %v2673, %v2674
        %v2677 = vrot.slane %v2673, 4
        %v2679 = vshrl.u32 %v2520, 16
        %v2681 = vrot.slane %v2679, 7
        %v2682 = vshll.u32 %v2520, 16
        %v2684 = vor.u32 %v2681, %v2682
        %v2685 = vrot.slane %v2681, 4
        %v2687 = vshrl.u32 %v2521, 16
        %v2689 = vrot.slane %v2687, 7
        %v2690 = vshll.u32 %v2521, 16
        %v2692 = vor.u32 %v2689, %v2690
        %v2693 = vrot.slane %v2689, 4
        %v2695 = vshrl.u32 %v2522, 16
        %v2697 = vrot.slane %v2695, 7
        %v2698 = vshll.u32 %v2522, 16
        %v2700 = vor.u32 %v2697, %v2698
        %v2701 = vrot.slane %v2697, 4
        %v2703 = vshrl.u32 %v2523, 16
        %v2705 = vrot.slane %v2703, 7
        %v2706 = vshll.u32 %v2523, 16
        %v2708 = vor.u32 %v2705, %v2706
        %v2709 = vrot.slane %v2705, 4
        %v2711 = vshrl.u32 %v2524, 16
        %v2713 = vrot.slane %v2711, 7
        %v2714 = vshll.u32 %v2524, 16
        %v2716 = vor.u32 %v2713, %v2714
        %v2717 = vrot.slane %v2713, 4
        %v2719 = vshrl.u32 %v2525, 16
        %v2721 = vrot.slane %v2719, 7
        %v2722 = vshll.u32 %v2525, 16
        %v2724 = vor.u32 %v2721, %v2722
        %v2725 = vrot.slane %v2721, 4
        %v2727 = vshrl.u32 %v2526, 16
        %v2729 = vrot.slane %v2727, 7
        %v2730 = vshll.u32 %v2526, 16
        %v2732 = vor.u32 %v2729, %v2730
        %v2733 = vrot.slane %v2729, 4
        %v2735 = vshrl.u32 %v2527, 16
        %v2737 = vrot.slane %v2735, 7
        %v2738 = vshll.u32 %v2527, 16
        %v2740 = vor.u32 %v2737, %v2738
        %v2741 = vrot.slane %v2737, 4
        %v2743 = vshrl.u32 %v2528, 16
        %v2745 = vrot.slane %v2743, 7
        %v2746 = vshll.u32 %v2528, 16
        %v2748 = vor.u32 %v2745, %v2746
        %v2749 = vrot.slane %v2745, 4
        %v2751 = vshrl.u32 %v2529, 16
        %v2753 = vrot.slane %v2751, 7
        %v2754 = vshll.u32 %v2529, 16
        %v2756 = vor.u32 %v2753, %v2754
        %v2757 = vrot.slane %v2753, 4
        %v2759 = vshrl.u32 %v2530, 16
        %v2761 = vrot.slane %v2759, 7
        %v2762 = vshll.u32 %v2530, 16
        %v2764 = vor.u32 %v2761, %v2762
        %v2765 = vrot.slane %v2761, 4
        %v2767 = vshrl.u32 %v2531, 16
        %v2769 = vrot.slane %v2767, 7
        %v2770 = vshll.u32 %v2531, 16
        %v2772 = vor.u32 %v2769, %v2770
        %v2773 = vrot.slane %v2769, 4
        %v2775 = vshrl.u32 %v2532, 16
        %v2777 = vrot.slane %v2775, 7
        %v2778 = vshll.u32 %v2532, 16
        %v2780 = vor.u32 %v2777, %v2778
        %v2781 = vrot.slane %v2777, 4
        %v2783 = vshrl.u32 %v2533, 16
        %v2785 = vrot.slane %v2783, 7
        %v2786 = vshll.u32 %v2533, 16
        %v2788 = vor.u32 %v2785, %v2786
        %v2789 = vrot.slane %v2785, 4
        %vm2854 = vcmask 1043456
        %vm2855 = vmand %vm2854, %vm2308
        %v2856 = vld [vmem:[%s2208] sm:$0xf]
        %v2857 = vsel %vm2855, %v2540, %v2856
        %2858 = vst [vmem:[%s2208] sm:$0xf] %v2857
        %v2859 = vld [vmem:[%s2208 + $0x4] sm:$0x1]
        %v2860 = vsel %vm2211, %v2541, %v2859
        %2861 = vst [vmem:[%s2208 + $0x4] sm:$0x1] %v2860
        %v2862 = vld [vmem:[%s2208 + $0x8] sm:$0xf]
        %v2863 = vsel %vm2855, %v2548, %v2862
        %2864 = vst [vmem:[%s2208 + $0x8] sm:$0xf] %v2863
        %v2865 = vld [vmem:[%s2208 + $0xc] sm:$0x1]
        %v2866 = vsel %vm2211, %v2549, %v2865
        %2867 = vst [vmem:[%s2208 + $0xc] sm:$0x1] %v2866
        %v2868 = vld [vmem:[%s2208 + $0x10] sm:$0xf]
        %v2869 = vsel %vm2855, %v2556, %v2868
        %2870 = vst [vmem:[%s2208 + $0x10] sm:$0xf] %v2869
        %v2871 = vld [vmem:[%s2208 + $0x14] sm:$0x1]
        %v2872 = vsel %vm2211, %v2557, %v2871
        %2873 = vst [vmem:[%s2208 + $0x14] sm:$0x1] %v2872
        %v2874 = vld [vmem:[%s2208 + $0x18] sm:$0xf]
        %v2875 = vsel %vm2855, %v2564, %v2874
        %2876 = vst [vmem:[%s2208 + $0x18] sm:$0xf] %v2875
        %v2877 = vld [vmem:[%s2208 + $0x1c] sm:$0x1]
        %v2878 = vsel %vm2211, %v2565, %v2877
        %2879 = vst [vmem:[%s2208 + $0x1c] sm:$0x1] %v2878
        %v2880 = vld [vmem:[%s2208 + $0x20] sm:$0xf]
        %v2881 = vsel %vm2855, %v2572, %v2880
        %2882 = vst [vmem:[%s2208 + $0x20] sm:$0xf] %v2881
        %v2883 = vld [vmem:[%s2208 + $0x24] sm:$0x1]
        %v2884 = vsel %vm2211, %v2573, %v2883
        %2885 = vst [vmem:[%s2208 + $0x24] sm:$0x1] %v2884
        %v2886 = vld [vmem:[%s2208 + $0x28] sm:$0xf]
        %v2887 = vsel %vm2855, %v2580, %v2886
        %2888 = vst [vmem:[%s2208 + $0x28] sm:$0xf] %v2887
        %v2889 = vld [vmem:[%s2208 + $0x2c] sm:$0x1]
        %v2890 = vsel %vm2211, %v2581, %v2889
        %2891 = vst [vmem:[%s2208 + $0x2c] sm:$0x1] %v2890
        %v2892 = vld [vmem:[%s2208 + $0x30] sm:$0xf]
        %v2893 = vsel %vm2855, %v2588, %v2892
        %2894 = vst [vmem:[%s2208 + $0x30] sm:$0xf] %v2893
        %v2895 = vld [vmem:[%s2208 + $0x34] sm:$0x1]
        %v2896 = vsel %vm2211, %v2589, %v2895
        %2897 = vst [vmem:[%s2208 + $0x34] sm:$0x1] %v2896
        %v2898 = vld [vmem:[%s2208 + $0x38] sm:$0xf]
        %v2899 = vsel %vm2855, %v2596, %v2898
        %2900 = vst [vmem:[%s2208 + $0x38] sm:$0xf] %v2899
        %v2901 = vld [vmem:[%s2208 + $0x3c] sm:$0x1]
        %v2902 = vsel %vm2211, %v2597, %v2901
        %2903 = vst [vmem:[%s2208 + $0x3c] sm:$0x1] %v2902
        %v2904 = vld [vmem:[%s2208 + $0x50] sm:$0xf]
        %v2905 = vsel %vm2855, %v2604, %v2904
        %2906 = vst [vmem:[%s2208 + $0x50] sm:$0xf] %v2905
        %v2907 = vld [vmem:[%s2208 + $0x54] sm:$0x1]
        %v2908 = vsel %vm2211, %v2605, %v2907
        %2909 = vst [vmem:[%s2208 + $0x54] sm:$0x1] %v2908
        %v2910 = vld [vmem:[%s2208 + $0x58] sm:$0xf]
        %v2911 = vsel %vm2855, %v2612, %v2910
        %2912 = vst [vmem:[%s2208 + $0x58] sm:$0xf] %v2911
        %v2913 = vld [vmem:[%s2208 + $0x5c] sm:$0x1]
        %v2914 = vsel %vm2211, %v2613, %v2913
        %2915 = vst [vmem:[%s2208 + $0x5c] sm:$0x1] %v2914
        %v2916 = vld [vmem:[%s2208 + $0x60] sm:$0xf]
        %v2917 = vsel %vm2855, %v2620, %v2916
        %2918 = vst [vmem:[%s2208 + $0x60] sm:$0xf] %v2917
        %v2919 = vld [vmem:[%s2208 + $0x64] sm:$0x1]
        %v2920 = vsel %vm2211, %v2621, %v2919
        %2921 = vst [vmem:[%s2208 + $0x64] sm:$0x1] %v2920
        %v2922 = vld [vmem:[%s2208 + $0x68] sm:$0xf]
        %v2923 = vsel %vm2855, %v2628, %v2922
        %2924 = vst [vmem:[%s2208 + $0x68] sm:$0xf] %v2923
        %v2925 = vld [vmem:[%s2208 + $0x6c] sm:$0x1]
        %v2926 = vsel %vm2211, %v2629, %v2925
        %2927 = vst [vmem:[%s2208 + $0x6c] sm:$0x1] %v2926
        %v2928 = vld [vmem:[%s2208 + $0x70] sm:$0xf]
        %v2929 = vsel %vm2855, %v2636, %v2928
        %2930 = vst [vmem:[%s2208 + $0x70] sm:$0xf] %v2929
        %v2931 = vld [vmem:[%s2208 + $0x74] sm:$0x1]
        %v2932 = vsel %vm2211, %v2637, %v2931
        %2933 = vst [vmem:[%s2208 + $0x74] sm:$0x1] %v2932
        %v2934 = vld [vmem:[%s2208 + $0x78] sm:$0xf]
        %v2935 = vsel %vm2855, %v2644, %v2934
        %2936 = vst [vmem:[%s2208 + $0x78] sm:$0xf] %v2935
        %v2937 = vld [vmem:[%s2208 + $0x7c] sm:$0x1]
        %v2938 = vsel %vm2211, %v2645, %v2937
        %2939 = vst [vmem:[%s2208 + $0x7c] sm:$0x1] %v2938
        %v2940 = vld [vmem:[%s2208 + $0x80] sm:$0xf]
        %v2941 = vsel %vm2855, %v2652, %v2940
        %2942 = vst [vmem:[%s2208 + $0x80] sm:$0xf] %v2941
        %v2943 = vld [vmem:[%s2208 + $0x84] sm:$0x1]
        %v2944 = vsel %vm2211, %v2653, %v2943
        %2945 = vst [vmem:[%s2208 + $0x84] sm:$0x1] %v2944
        %v2946 = vld [vmem:[%s2208 + $0x88] sm:$0xf]
        %v2947 = vsel %vm2855, %v2660, %v2946
        %2948 = vst [vmem:[%s2208 + $0x88] sm:$0xf] %v2947
        %v2949 = vld [vmem:[%s2208 + $0x8c] sm:$0x1]
        %v2950 = vsel %vm2211, %v2661, %v2949
        %2951 = vst [vmem:[%s2208 + $0x8c] sm:$0x1] %v2950
        %v2952 = vld [vmem:[%s2208 + $0xa0] sm:$0xf]
        %v2953 = vsel %vm2855, %v2668, %v2952
        %2954 = vst [vmem:[%s2208 + $0xa0] sm:$0xf] %v2953
        %v2955 = vld [vmem:[%s2208 + $0xa4] sm:$0x1]
        %v2956 = vsel %vm2211, %v2669, %v2955
        %2957 = vst [vmem:[%s2208 + $0xa4] sm:$0x1] %v2956
        %v2958 = vld [vmem:[%s2208 + $0xa8] sm:$0xf]
        %v2959 = vsel %vm2855, %v2676, %v2958
        %2960 = vst [vmem:[%s2208 + $0xa8] sm:$0xf] %v2959
        %v2961 = vld [vmem:[%s2208 + $0xac] sm:$0x1]
        %v2962 = vsel %vm2211, %v2677, %v2961
        %2963 = vst [vmem:[%s2208 + $0xac] sm:$0x1] %v2962
        %v2964 = vld [vmem:[%s2208 + $0xb0] sm:$0xf]
        %v2965 = vsel %vm2855, %v2684, %v2964
        %2966 = vst [vmem:[%s2208 + $0xb0] sm:$0xf] %v2965
        %v2967 = vld [vmem:[%s2208 + $0xb4] sm:$0x1]
        %v2968 = vsel %vm2211, %v2685, %v2967
        %2969 = vst [vmem:[%s2208 + $0xb4] sm:$0x1] %v2968
        %v2970 = vld [vmem:[%s2208 + $0xb8] sm:$0xf]
        %v2971 = vsel %vm2855, %v2692, %v2970
        %2972 = vst [vmem:[%s2208 + $0xb8] sm:$0xf] %v2971
        %v2973 = vld [vmem:[%s2208 + $0xbc] sm:$0x1]
        %v2974 = vsel %vm2211, %v2693, %v2973
        %2975 = vst [vmem:[%s2208 + $0xbc] sm:$0x1] %v2974
        %v2976 = vld [vmem:[%s2208 + $0xc0] sm:$0xf]
        %v2977 = vsel %vm2855, %v2700, %v2976
        %2978 = vst [vmem:[%s2208 + $0xc0] sm:$0xf] %v2977
        %v2979 = vld [vmem:[%s2208 + $0xc4] sm:$0x1]
        %v2980 = vsel %vm2211, %v2701, %v2979
        %2981 = vst [vmem:[%s2208 + $0xc4] sm:$0x1] %v2980
        %v2982 = vld [vmem:[%s2208 + $0xc8] sm:$0xf]
        %v2983 = vsel %vm2855, %v2708, %v2982
        %2984 = vst [vmem:[%s2208 + $0xc8] sm:$0xf] %v2983
        %v2985 = vld [vmem:[%s2208 + $0xcc] sm:$0x1]
        %v2986 = vsel %vm2211, %v2709, %v2985
        %2987 = vst [vmem:[%s2208 + $0xcc] sm:$0x1] %v2986
        %v2988 = vld [vmem:[%s2208 + $0xd0] sm:$0xf]
        %v2989 = vsel %vm2855, %v2716, %v2988
        %2990 = vst [vmem:[%s2208 + $0xd0] sm:$0xf] %v2989
        %v2991 = vld [vmem:[%s2208 + $0xd4] sm:$0x1]
        %v2992 = vsel %vm2211, %v2717, %v2991
        %2993 = vst [vmem:[%s2208 + $0xd4] sm:$0x1] %v2992
        %v2994 = vld [vmem:[%s2208 + $0xd8] sm:$0xf]
        %v2995 = vsel %vm2855, %v2724, %v2994
        %2996 = vst [vmem:[%s2208 + $0xd8] sm:$0xf] %v2995
        %v2997 = vld [vmem:[%s2208 + $0xdc] sm:$0x1]
        %v2998 = vsel %vm2211, %v2725, %v2997
        %2999 = vst [vmem:[%s2208 + $0xdc] sm:$0x1] %v2998
        %v3000 = vld [vmem:[%s2208 + $0xf0] sm:$0xf]
        %v3001 = vsel %vm2855, %v2732, %v3000
        %3002 = vst [vmem:[%s2208 + $0xf0] sm:$0xf] %v3001
        %v3003 = vld [vmem:[%s2208 + $0xf4] sm:$0x1]
        %v3004 = vsel %vm2211, %v2733, %v3003
        %3005 = vst [vmem:[%s2208 + $0xf4] sm:$0x1] %v3004
        %v3006 = vld [vmem:[%s2208 + $0xf8] sm:$0xf]
        %v3007 = vsel %vm2855, %v2740, %v3006
        %3008 = vst [vmem:[%s2208 + $0xf8] sm:$0xf] %v3007
        %v3009 = vld [vmem:[%s2208 + $0xfc] sm:$0x1]
        %v3010 = vsel %vm2211, %v2741, %v3009
        %3011 = vst [vmem:[%s2208 + $0xfc] sm:$0x1] %v3010
        %v3012 = vld [vmem:[%s2208 + $0x100] sm:$0xf]
        %v3013 = vsel %vm2855, %v2748, %v3012
        %3014 = vst [vmem:[%s2208 + $0x100] sm:$0xf] %v3013
        %v3015 = vld [vmem:[%s2208 + $0x104] sm:$0x1]
        %v3016 = vsel %vm2211, %v2749, %v3015
        %3017 = vst [vmem:[%s2208 + $0x104] sm:$0x1] %v3016
        %v3018 = vld [vmem:[%s2208 + $0x108] sm:$0xf]
        %v3019 = vsel %vm2855, %v2756, %v3018
        %3020 = vst [vmem:[%s2208 + $0x108] sm:$0xf] %v3019
        %v3021 = vld [vmem:[%s2208 + $0x10c] sm:$0x1]
        %v3022 = vsel %vm2211, %v2757, %v3021
        %3023 = vst [vmem:[%s2208 + $0x10c] sm:$0x1] %v3022
        %v3024 = vld [vmem:[%s2208 + $0x110] sm:$0xf]
        %v3025 = vsel %vm2855, %v2764, %v3024
        %3026 = vst [vmem:[%s2208 + $0x110] sm:$0xf] %v3025
        %v3027 = vld [vmem:[%s2208 + $0x114] sm:$0x1]
        %v3028 = vsel %vm2211, %v2765, %v3027
        %3029 = vst [vmem:[%s2208 + $0x114] sm:$0x1] %v3028
        %v3030 = vld [vmem:[%s2208 + $0x118] sm:$0xf]
        %v3031 = vsel %vm2855, %v2772, %v3030
        %3032 = vst [vmem:[%s2208 + $0x118] sm:$0xf] %v3031
        %v3033 = vld [vmem:[%s2208 + $0x11c] sm:$0x1]
        %v3034 = vsel %vm2211, %v2773, %v3033
        %3035 = vst [vmem:[%s2208 + $0x11c] sm:$0x1] %v3034
        %v3036 = vld [vmem:[%s2208 + $0x120] sm:$0xf]
        %v3037 = vsel %vm2855, %v2780, %v3036
        %3038 = vst [vmem:[%s2208 + $0x120] sm:$0xf] %v3037
        %v3039 = vld [vmem:[%s2208 + $0x124] sm:$0x1]
        %v3040 = vsel %vm2211, %v2781, %v3039
        %3041 = vst [vmem:[%s2208 + $0x124] sm:$0x1] %v3040
        %v3042 = vld [vmem:[%s2208 + $0x128] sm:$0xf]
        %v3043 = vsel %vm2855, %v2788, %v3042
        %3044 = vst [vmem:[%s2208 + $0x128] sm:$0xf] %v3043
        %v3045 = vld [vmem:[%s2208 + $0x12c] sm:$0x1]
        %v3046 = vsel %vm2211, %v2789, %v3045
        %3047 = vst [vmem:[%s2208 + $0x12c] sm:$0x1] %v3046
        %v3048 = vld [vmem:[#allocation2] sm:$0xf]
        %v3049 = vld [vmem:[#allocation2 + $0x8] sm:$0xf]
        %v3050 = vld [vmem:[#allocation2 + $0x10] sm:$0xf]
        %v3051 = vld [vmem:[#allocation2 + $0x18] sm:$0xf]
        %v3052 = vld [vmem:[#allocation2 + $0x20] sm:$0xf]
        %v3053 = vld [vmem:[#allocation2 + $0x28] sm:$0xf]
        %v3054 = vld [vmem:[#allocation2 + $0x30] sm:$0xf]
        %v3055 = vld [vmem:[#allocation2 + $0x38] sm:$0xf]
        %v3056 = vld [vmem:[#allocation2 + $0x50] sm:$0xf]
        %v3057 = vld [vmem:[#allocation2 + $0x58] sm:$0xf]
        %v3058 = vld [vmem:[#allocation2 + $0x60] sm:$0xf]
        %v3059 = vld [vmem:[#allocation2 + $0x68] sm:$0xf]
        %v3060 = vld [vmem:[#allocation2 + $0x70] sm:$0xf]
        %v3061 = vld [vmem:[#allocation2 + $0x78] sm:$0xf]
        %v3062 = vld [vmem:[#allocation2 + $0x80] sm:$0xf]
        %v3063 = vld [vmem:[#allocation2 + $0x88] sm:$0xf]
        %v3064 = vld [vmem:[#allocation2 + $0xa0] sm:$0xf]
        %v3065 = vld [vmem:[#allocation2 + $0xa8] sm:$0xf]
        %v3066 = vld [vmem:[#allocation2 + $0xb0] sm:$0xf]
        %v3067 = vld [vmem:[#allocation2 + $0xb8] sm:$0xf]
        %v3068 = vld [vmem:[#allocation2 + $0xc0] sm:$0xf]
        %v3069 = vld [vmem:[#allocation2 + $0xc8] sm:$0xf]
        %v3070 = vld [vmem:[#allocation2 + $0xd0] sm:$0xf]
        %v3071 = vld [vmem:[#allocation2 + $0xd8] sm:$0xf]
        %v3072 = vld [vmem:[#allocation2 + $0xf0] sm:$0xf]
        %v3073 = vld [vmem:[#allocation2 + $0xf8] sm:$0xf]
        %v3074 = vld [vmem:[#allocation2 + $0x100] sm:$0xf]
        %v3075 = vld [vmem:[#allocation2 + $0x108] sm:$0xf]
        %v3076 = vld [vmem:[#allocation2 + $0x110] sm:$0xf]
        %v3077 = vld [vmem:[#allocation2 + $0x118] sm:$0xf]
        %v3078 = vld [vmem:[#allocation2 + $0x120] sm:$0xf]
        %v3079 = vld [vmem:[#allocation2 + $0x128] sm:$0xf]
        %v3080 = vld [vmem:[#allocation2 + $0x4] sm:$0x1]
        %v3081 = vld [vmem:[#allocation2 + $0xc] sm:$0x1]
        %v3082 = vld [vmem:[#allocation2 + $0x14] sm:$0x1]
        %v3083 = vld [vmem:[#allocation2 + $0x1c] sm:$0x1]
        %v3084 = vld [vmem:[#allocation2 + $0x24] sm:$0x1]
        %v3085 = vld [vmem:[#allocation2 + $0x2c] sm:$0x1]
        %v3086 = vld [vmem:[#allocation2 + $0x34] sm:$0x1]
        %v3087 = vld [vmem:[#allocation2 + $0x3c] sm:$0x1]
        %v3088 = vld [vmem:[#allocation2 + $0x54] sm:$0x1]
        %v3089 = vld [vmem:[#allocation2 + $0x5c] sm:$0x1]
        %v3090 = vld [vmem:[#allocation2 + $0x64] sm:$0x1]
        %v3091 = vld [vmem:[#allocation2 + $0x6c] sm:$0x1]
        %v3092 = vld [vmem:[#allocation2 + $0x74] sm:$0x1]
        %v3093 = vld [vmem:[#allocation2 + $0x7c] sm:$0x1]
        %v3094 = vld [vmem:[#allocation2 + $0x84] sm:$0x1]
        %v3095 = vld [vmem:[#allocation2 + $0x8c] sm:$0x1]
        %v3096 = vld [vmem:[#allocation2 + $0xa4] sm:$0x1]
        %v3097 = vld [vmem:[#allocation2 + $0xac] sm:$0x1]
        %v3098 = vld [vmem:[#allocation2 + $0xb4] sm:$0x1]
        %v3099 = vld [vmem:[#allocation2 + $0xbc] sm:$0x1]
        %v3100 = vld [vmem:[#allocation2 + $0xc4] sm:$0x1]
        %v3101 = vld [vmem:[#allocation2 + $0xcc] sm:$0x1]
        %v3102 = vld [vmem:[#allocation2 + $0xd4] sm:$0x1]
        %v3103 = vld [vmem:[#allocation2 + $0xdc] sm:$0x1]
        %v3104 = vld [vmem:[#allocation2 + $0xf4] sm:$0x1]
        %v3105 = vld [vmem:[#allocation2 + $0xfc] sm:$0x1]
        %v3106 = vld [vmem:[#allocation2 + $0x104] sm:$0x1]
        %v3107 = vld [vmem:[#allocation2 + $0x10c] sm:$0x1]
        %v3108 = vld [vmem:[#allocation2 + $0x114] sm:$0x1]
        %v3109 = vld [vmem:[#allocation2 + $0x11c] sm:$0x1]
        %v3110 = vld [vmem:[#allocation2 + $0x124] sm:$0x1]
        %v3111 = vld [vmem:[#allocation2 + $0x12c] sm:$0x1]
        %vm3112 = vsmask.f32 3328
        %vm3113 = vsmask.f32 7440
        %vm3114 = vmor %vm3112, %vm3113
        %v3116 = vshrl.u32 %v3048, 16
        %v3118 = vrot.slane %v3116, 4
        %v3119 = vshll.u32 %v3048, 16
        %v3121 = vrot.slane %v3119, 5
        %v3122 = vor.u32 %v3118, %v3121
        %v3123 = vrot.slane %v3122, 4
        %v3125 = vshll.u32 %v3080, 16
        %v3127 = vrot.slane %v3125, 5
        %v3128 = vsel %vm3114, %v3123, %v3127
        %v3130 = vshrl.u32 %v3049, 16
        %v3132 = vrot.slane %v3130, 4
        %v3133 = vshll.u32 %v3049, 16
        %v3135 = vrot.slane %v3133, 5
        %v3136 = vor.u32 %v3132, %v3135
        %v3137 = vrot.slane %v3136, 4
        %v3139 = vshll.u32 %v3081, 16
        %v3141 = vrot.slane %v3139, 5
        %v3142 = vsel %vm3114, %v3137, %v3141
        %v3144 = vshrl.u32 %v3050, 16
        %v3146 = vrot.slane %v3144, 4
        %v3147 = vshll.u32 %v3050, 16
        %v3149 = vrot.slane %v3147, 5
        %v3150 = vor.u32 %v3146, %v3149
        %v3151 = vrot.slane %v3150, 4
        %v3153 = vshll.u32 %v3082, 16
        %v3155 = vrot.slane %v3153, 5
        %v3156 = vsel %vm3114, %v3151, %v3155
        %v3158 = vshrl.u32 %v3051, 16
        %v3160 = vrot.slane %v3158, 4
        %v3161 = vshll.u32 %v3051, 16
        %v3163 = vrot.slane %v3161, 5
        %v3164 = vor.u32 %v3160, %v3163
        %v3165 = vrot.slane %v3164, 4
        %v3167 = vshll.u32 %v3083, 16
        %v3169 = vrot.slane %v3167, 5
        %v3170 = vsel %vm3114, %v3165, %v3169
        %v3172 = vshrl.u32 %v3052, 16
        %v3174 = vrot.slane %v3172, 4
        %v3175 = vshll.u32 %v3052, 16
        %v3177 = vrot.slane %v3175, 5
        %v3178 = vor.u32 %v3174, %v3177
        %v3179 = vrot.slane %v3178, 4
        %v3181 = vshll.u32 %v3084, 16
        %v3183 = vrot.slane %v3181, 5
        %v3184 = vsel %vm3114, %v3179, %v3183
        %v3186 = vshrl.u32 %v3053, 16
        %v3188 = vrot.slane %v3186, 4
        %v3189 = vshll.u32 %v3053, 16
        %v3191 = vrot.slane %v3189, 5
        %v3192 = vor.u32 %v3188, %v3191
        %v3193 = vrot.slane %v3192, 4
        %v3195 = vshll.u32 %v3085, 16
        %v3197 = vrot.slane %v3195, 5
        %v3198 = vsel %vm3114, %v3193, %v3197
        %v3200 = vshrl.u32 %v3054, 16
        %v3202 = vrot.slane %v3200, 4
        %v3203 = vshll.u32 %v3054, 16
        %v3205 = vrot.slane %v3203, 5
        %v3206 = vor.u32 %v3202, %v3205
        %v3207 = vrot.slane %v3206, 4
        %v3209 = vshll.u32 %v3086, 16
        %v3211 = vrot.slane %v3209, 5
        %v3212 = vsel %vm3114, %v3207, %v3211
        %v3214 = vshrl.u32 %v3055, 16
        %v3216 = vrot.slane %v3214, 4
        %v3217 = vshll.u32 %v3055, 16
        %v3219 = vrot.slane %v3217, 5
        %v3220 = vor.u32 %v3216, %v3219
        %v3221 = vrot.slane %v3220, 4
        %v3223 = vshll.u32 %v3087, 16
        %v3225 = vrot.slane %v3223, 5
        %v3226 = vsel %vm3114, %v3221, %v3225
        %v3228 = vshrl.u32 %v3056, 16
        %v3230 = vrot.slane %v3228, 4
        %v3231 = vshll.u32 %v3056, 16
        %v3233 = vrot.slane %v3231, 5
        %v3234 = vor.u32 %v3230, %v3233
        %v3235 = vrot.slane %v3234, 4
        %v3237 = vshll.u32 %v3088, 16
        %v3239 = vrot.slane %v3237, 5
        %v3240 = vsel %vm3114, %v3235, %v3239
        %v3242 = vshrl.u32 %v3057, 16
        %v3244 = vrot.slane %v3242, 4
        %v3245 = vshll.u32 %v3057, 16
        %v3247 = vrot.slane %v3245, 5
        %v3248 = vor.u32 %v3244, %v3247
        %v3249 = vrot.slane %v3248, 4
        %v3251 = vshll.u32 %v3089, 16
        %v3253 = vrot.slane %v3251, 5
        %v3254 = vsel %vm3114, %v3249, %v3253
        %v3256 = vshrl.u32 %v3058, 16
        %v3258 = vrot.slane %v3256, 4
        %v3259 = vshll.u32 %v3058, 16
        %v3261 = vrot.slane %v3259, 5
        %v3262 = vor.u32 %v3258, %v3261
        %v3263 = vrot.slane %v3262, 4
        %v3265 = vshll.u32 %v3090, 16
        %v3267 = vrot.slane %v3265, 5
        %v3268 = vsel %vm3114, %v3263, %v3267
        %v3270 = vshrl.u32 %v3059, 16
        %v3272 = vrot.slane %v3270, 4
        %v3273 = vshll.u32 %v3059, 16
        %v3275 = vrot.slane %v3273, 5
        %v3276 = vor.u32 %v3272, %v3275
        %v3277 = vrot.slane %v3276, 4
        %v3279 = vshll.u32 %v3091, 16
        %v3281 = vrot.slane %v3279, 5
        %v3282 = vsel %vm3114, %v3277, %v3281
        %v3284 = vshrl.u32 %v3060, 16
        %v3286 = vrot.slane %v3284, 4
        %v3287 = vshll.u32 %v3060, 16
        %v3289 = vrot.slane %v3287, 5
        %v3290 = vor.u32 %v3286, %v3289
        %v3291 = vrot.slane %v3290, 4
        %v3293 = vshll.u32 %v3092, 16
        %v3295 = vrot.slane %v3293, 5
        %v3296 = vsel %vm3114, %v3291, %v3295
        %v3298 = vshrl.u32 %v3061, 16
        %v3300 = vrot.slane %v3298, 4
        %v3301 = vshll.u32 %v3061, 16
        %v3303 = vrot.slane %v3301, 5
        %v3304 = vor.u32 %v3300, %v3303
        %v3305 = vrot.slane %v3304, 4
        %v3307 = vshll.u32 %v3093, 16
        %v3309 = vrot.slane %v3307, 5
        %v3310 = vsel %vm3114, %v3305, %v3309
        %v3312 = vshrl.u32 %v3062, 16
        %v3314 = vrot.slane %v3312, 4
        %v3315 = vshll.u32 %v3062, 16
        %v3317 = vrot.slane %v3315, 5
        %v3318 = vor.u32 %v3314, %v3317
        %v3319 = vrot.slane %v3318, 4
        %v3321 = vshll.u32 %v3094, 16
        %v3323 = vrot.slane %v3321, 5
        %v3324 = vsel %vm3114, %v3319, %v3323
        %v3326 = vshrl.u32 %v3063, 16
        %v3328 = vrot.slane %v3326, 4
        %v3329 = vshll.u32 %v3063, 16
        %v3331 = vrot.slane %v3329, 5
        %v3332 = vor.u32 %v3328, %v3331
        %v3333 = vrot.slane %v3332, 4
        %v3335 = vshll.u32 %v3095, 16
        %v3337 = vrot.slane %v3335, 5
        %v3338 = vsel %vm3114, %v3333, %v3337
        %v3340 = vshrl.u32 %v3064, 16
        %v3342 = vrot.slane %v3340, 4
        %v3343 = vshll.u32 %v3064, 16
        %v3345 = vrot.slane %v3343, 5
        %v3346 = vor.u32 %v3342, %v3345
        %v3347 = vrot.slane %v3346, 4
        %v3349 = vshll.u32 %v3096, 16
        %v3351 = vrot.slane %v3349, 5
        %v3352 = vsel %vm3114, %v3347, %v3351
        %v3354 = vshrl.u32 %v3065, 16
        %v3356 = vrot.slane %v3354, 4
        %v3357 = vshll.u32 %v3065, 16
        %v3359 = vrot.slane %v3357, 5
        %v3360 = vor.u32 %v3356, %v3359
        %v3361 = vrot.slane %v3360, 4
        %v3363 = vshll.u32 %v3097, 16
        %v3365 = vrot.slane %v3363, 5
        %v3366 = vsel %vm3114, %v3361, %v3365
        %v3368 = vshrl.u32 %v3066, 16
        %v3370 = vrot.slane %v3368, 4
        %v3371 = vshll.u32 %v3066, 16
        %v3373 = vrot.slane %v3371, 5
        %v3374 = vor.u32 %v3370, %v3373
        %v3375 = vrot.slane %v3374, 4
        %v3377 = vshll.u32 %v3098, 16
        %v3379 = vrot.slane %v3377, 5
        %v3380 = vsel %vm3114, %v3375, %v3379
        %v3382 = vshrl.u32 %v3067, 16
        %v3384 = vrot.slane %v3382, 4
        %v3385 = vshll.u32 %v3067, 16
        %v3387 = vrot.slane %v3385, 5
        %v3388 = vor.u32 %v3384, %v3387
        %v3389 = vrot.slane %v3388, 4
        %v3391 = vshll.u32 %v3099, 16
        %v3393 = vrot.slane %v3391, 5
        %v3394 = vsel %vm3114, %v3389, %v3393
        %v3396 = vshrl.u32 %v3068, 16
        %v3398 = vrot.slane %v3396, 4
        %v3399 = vshll.u32 %v3068, 16
        %v3401 = vrot.slane %v3399, 5
        %v3402 = vor.u32 %v3398, %v3401
        %v3403 = vrot.slane %v3402, 4
        %v3405 = vshll.u32 %v3100, 16
        %v3407 = vrot.slane %v3405, 5
        %v3408 = vsel %vm3114, %v3403, %v3407
        %v3410 = vshrl.u32 %v3069, 16
        %v3412 = vrot.slane %v3410, 4
        %v3413 = vshll.u32 %v3069, 16
        %v3415 = vrot.slane %v3413, 5
        %v3416 = vor.u32 %v3412, %v3415
        %v3417 = vrot.slane %v3416, 4
        %v3419 = vshll.u32 %v3101, 16
        %v3421 = vrot.slane %v3419, 5
        %v3422 = vsel %vm3114, %v3417, %v3421
        %v3424 = vshrl.u32 %v3070, 16
        %v3426 = vrot.slane %v3424, 4
        %v3427 = vshll.u32 %v3070, 16
        %v3429 = vrot.slane %v3427, 5
        %v3430 = vor.u32 %v3426, %v3429
        %v3431 = vrot.slane %v3430, 4
        %v3433 = vshll.u32 %v3102, 16
        %v3435 = vrot.slane %v3433, 5
        %v3436 = vsel %vm3114, %v3431, %v3435
        %v3438 = vshrl.u32 %v3071, 16
        %v3440 = vrot.slane %v3438, 4
        %v3441 = vshll.u32 %v3071, 16
        %v3443 = vrot.slane %v3441, 5
        %v3444 = vor.u32 %v3440, %v3443
        %v3445 = vrot.slane %v3444, 4
        %v3447 = vshll.u32 %v3103, 16
        %v3449 = vrot.slane %v3447, 5
        %v3450 = vsel %vm3114, %v3445, %v3449
        %v3452 = vshrl.u32 %v3072, 16
        %v3454 = vrot.slane %v3452, 4
        %v3455 = vshll.u32 %v3072, 16
        %v3457 = vrot.slane %v3455, 5
        %v3458 = vor.u32 %v3454, %v3457
        %v3459 = vrot.slane %v3458, 4
        %v3461 = vshll.u32 %v3104, 16
        %v3463 = vrot.slane %v3461, 5
        %v3464 = vsel %vm3114, %v3459, %v3463
        %v3466 = vshrl.u32 %v3073, 16
        %v3468 = vrot.slane %v3466, 4
        %v3469 = vshll.u32 %v3073, 16
        %v3471 = vrot.slane %v3469, 5
        %v3472 = vor.u32 %v3468, %v3471
        %v3473 = vrot.slane %v3472, 4
        %v3475 = vshll.u32 %v3105, 16
        %v3477 = vrot.slane %v3475, 5
        %v3478 = vsel %vm3114, %v3473, %v3477
        %v3480 = vshrl.u32 %v3074, 16
        %v3482 = vrot.slane %v3480, 4
        %v3483 = vshll.u32 %v3074, 16
        %v3485 = vrot.slane %v3483, 5
        %v3486 = vor.u32 %v3482, %v3485
        %v3487 = vrot.slane %v3486, 4
        %v3489 = vshll.u32 %v3106, 16
        %v3491 = vrot.slane %v3489, 5
        %v3492 = vsel %vm3114, %v3487, %v3491
        %v3494 = vshrl.u32 %v3075, 16
        %v3496 = vrot.slane %v3494, 4
        %v3497 = vshll.u32 %v3075, 16
        %v3499 = vrot.slane %v3497, 5
        %v3500 = vor.u32 %v3496, %v3499
        %v3501 = vrot.slane %v3500, 4
        %v3503 = vshll.u32 %v3107, 16
        %v3505 = vrot.slane %v3503, 5
        %v3506 = vsel %vm3114, %v3501, %v3505
        %v3508 = vshrl.u32 %v3076, 16
        %v3510 = vrot.slane %v3508, 4
        %v3511 = vshll.u32 %v3076, 16
        %v3513 = vrot.slane %v3511, 5
        %v3514 = vor.u32 %v3510, %v3513
        %v3515 = vrot.slane %v3514, 4
        %v3517 = vshll.u32 %v3108, 16
        %v3519 = vrot.slane %v3517, 5
        %v3520 = vsel %vm3114, %v3515, %v3519
        %v3522 = vshrl.u32 %v3077, 16
        %v3524 = vrot.slane %v3522, 4
        %v3525 = vshll.u32 %v3077, 16
        %v3527 = vrot.slane %v3525, 5
        %v3528 = vor.u32 %v3524, %v3527
        %v3529 = vrot.slane %v3528, 4
        %v3531 = vshll.u32 %v3109, 16
        %v3533 = vrot.slane %v3531, 5
        %v3534 = vsel %vm3114, %v3529, %v3533
        %v3536 = vshrl.u32 %v3078, 16
        %v3538 = vrot.slane %v3536, 4
        %v3539 = vshll.u32 %v3078, 16
        %v3541 = vrot.slane %v3539, 5
        %v3542 = vor.u32 %v3538, %v3541
        %v3543 = vrot.slane %v3542, 4
        %v3545 = vshll.u32 %v3110, 16
        %v3547 = vrot.slane %v3545, 5
        %v3548 = vsel %vm3114, %v3543, %v3547
        %v3550 = vshrl.u32 %v3079, 16
        %v3552 = vrot.slane %v3550, 4
        %v3553 = vshll.u32 %v3079, 16
        %v3555 = vrot.slane %v3553, 5
        %v3556 = vor.u32 %v3552, %v3555
        %v3557 = vrot.slane %v3556, 4
        %v3559 = vshll.u32 %v3111, 16
        %v3561 = vrot.slane %v3559, 5
        %v3562 = vsel %vm3114, %v3557, %v3561
        %v3563 = vld [vmem:[#allocation2] sm:$0xe]
        %v3564 = vld [vmem:[#allocation2 + $0x8] sm:$0xe]
        %v3565 = vld [vmem:[#allocation2 + $0x10] sm:$0xe]
        %v3566 = vld [vmem:[#allocation2 + $0x18] sm:$0xe]
        %v3567 = vld [vmem:[#allocation2 + $0x20] sm:$0xe]
        %v3568 = vld [vmem:[#allocation2 + $0x28] sm:$0xe]
        %v3569 = vld [vmem:[#allocation2 + $0x30] sm:$0xe]
        %v3570 = vld [vmem:[#allocation2 + $0x38] sm:$0xe]
        %v3571 = vld [vmem:[#allocation2 + $0x50] sm:$0xe]
        %v3572 = vld [vmem:[#allocation2 + $0x58] sm:$0xe]
        %v3573 = vld [vmem:[#allocation2 + $0x60] sm:$0xe]
        %v3574 = vld [vmem:[#allocation2 + $0x68] sm:$0xe]
        %v3575 = vld [vmem:[#allocation2 + $0x70] sm:$0xe]
        %v3576 = vld [vmem:[#allocation2 + $0x78] sm:$0xe]
        %v3577 = vld [vmem:[#allocation2 + $0x80] sm:$0xe]
        %v3578 = vld [vmem:[#allocation2 + $0x88] sm:$0xe]
        %v3579 = vld [vmem:[#allocation2 + $0xa0] sm:$0xe]
        %v3580 = vld [vmem:[#allocation2 + $0xa8] sm:$0xe]
        %v3581 = vld [vmem:[#allocation2 + $0xb0] sm:$0xe]
        %v3582 = vld [vmem:[#allocation2 + $0xb8] sm:$0xe]
        %v3583 = vld [vmem:[#allocation2 + $0xc0] sm:$0xe]
        %v3584 = vld [vmem:[#allocation2 + $0xc8] sm:$0xe]
        %v3585 = vld [vmem:[#allocation2 + $0xd0] sm:$0xe]
        %v3586 = vld [vmem:[#allocation2 + $0xd8] sm:$0xe]
        %v3587 = vld [vmem:[#allocation2 + $0xf0] sm:$0xe]
        %v3588 = vld [vmem:[#allocation2 + $0xf8] sm:$0xe]
        %v3589 = vld [vmem:[#allocation2 + $0x100] sm:$0xe]
        %v3590 = vld [vmem:[#allocation2 + $0x108] sm:$0xe]
        %v3591 = vld [vmem:[#allocation2 + $0x110] sm:$0xe]
        %v3592 = vld [vmem:[#allocation2 + $0x118] sm:$0xe]
        %v3593 = vld [vmem:[#allocation2 + $0x120] sm:$0xe]
        %v3594 = vld [vmem:[#allocation2 + $0x128] sm:$0xe]
        %vm3659 = vcmask 1042432
        %vm3660 = vcmask 1046532
        %vm3661 = vmor %vm3659, %vm3660
        %v3662 = vrot.slane %v3563, 5
        %v3663 = vrot.slane %v3662, 4
        %v3664 = vrot.slane %v3080, 5
        %v3665 = vsel %vm3661, %v3663, %v3664
        %v3666 = vrot.slane %v3564, 5
        %v3667 = vrot.slane %v3666, 4
        %v3668 = vrot.slane %v3081, 5
        %v3669 = vsel %vm3661, %v3667, %v3668
        %v3670 = vrot.slane %v3565, 5
        %v3671 = vrot.slane %v3670, 4
        %v3672 = vrot.slane %v3082, 5
        %v3673 = vsel %vm3661, %v3671, %v3672
        %v3674 = vrot.slane %v3566, 5
        %v3675 = vrot.slane %v3674, 4
        %v3676 = vrot.slane %v3083, 5
        %v3677 = vsel %vm3661, %v3675, %v3676
        %v3678 = vrot.slane %v3567, 5
        %v3679 = vrot.slane %v3678, 4
        %v3680 = vrot.slane %v3084, 5
        %v3681 = vsel %vm3661, %v3679, %v3680
        %v3682 = vrot.slane %v3568, 5
        %v3683 = vrot.slane %v3682, 4
        %v3684 = vrot.slane %v3085, 5
        %v3685 = vsel %vm3661, %v3683, %v3684
        %v3686 = vrot.slane %v3569, 5
        %v3687 = vrot.slane %v3686, 4
        %v3688 = vrot.slane %v3086, 5
        %v3689 = vsel %vm3661, %v3687, %v3688
        %v3690 = vrot.slane %v3570, 5
        %v3691 = vrot.slane %v3690, 4
        %v3692 = vrot.slane %v3087, 5
        %v3693 = vsel %vm3661, %v3691, %v3692
        %v3694 = vrot.slane %v3571, 5
        %v3695 = vrot.slane %v3694, 4
        %v3696 = vrot.slane %v3088, 5
        %v3697 = vsel %vm3661, %v3695, %v3696
        %v3698 = vrot.slane %v3572, 5
        %v3699 = vrot.slane %v3698, 4
        %v3700 = vrot.slane %v3089, 5
        %v3701 = vsel %vm3661, %v3699, %v3700
        %v3702 = vrot.slane %v3573, 5
        %v3703 = vrot.slane %v3702, 4
        %v3704 = vrot.slane %v3090, 5
        %v3705 = vsel %vm3661, %v3703, %v3704
        %v3706 = vrot.slane %v3574, 5
        %v3707 = vrot.slane %v3706, 4
        %v3708 = vrot.slane %v3091, 5
        %v3709 = vsel %vm3661, %v3707, %v3708
        %v3710 = vrot.slane %v3575, 5
        %v3711 = vrot.slane %v3710, 4
        %v3712 = vrot.slane %v3092, 5
        %v3713 = vsel %vm3661, %v3711, %v3712
        %v3714 = vrot.slane %v3576, 5
        %v3715 = vrot.slane %v3714, 4
        %v3716 = vrot.slane %v3093, 5
        %v3717 = vsel %vm3661, %v3715, %v3716
        %v3718 = vrot.slane %v3577, 5
        %v3719 = vrot.slane %v3718, 4
        %v3720 = vrot.slane %v3094, 5
        %v3721 = vsel %vm3661, %v3719, %v3720
        %v3722 = vrot.slane %v3578, 5
        %v3723 = vrot.slane %v3722, 4
        %v3724 = vrot.slane %v3095, 5
        %v3725 = vsel %vm3661, %v3723, %v3724
        %v3726 = vrot.slane %v3579, 5
        %v3727 = vrot.slane %v3726, 4
        %v3728 = vrot.slane %v3096, 5
        %v3729 = vsel %vm3661, %v3727, %v3728
        %v3730 = vrot.slane %v3580, 5
        %v3731 = vrot.slane %v3730, 4
        %v3732 = vrot.slane %v3097, 5
        %v3733 = vsel %vm3661, %v3731, %v3732
        %v3734 = vrot.slane %v3581, 5
        %v3735 = vrot.slane %v3734, 4
        %v3736 = vrot.slane %v3098, 5
        %v3737 = vsel %vm3661, %v3735, %v3736
        %v3738 = vrot.slane %v3582, 5
        %v3739 = vrot.slane %v3738, 4
        %v3740 = vrot.slane %v3099, 5
        %v3741 = vsel %vm3661, %v3739, %v3740
        %v3742 = vrot.slane %v3583, 5
        %v3743 = vrot.slane %v3742, 4
        %v3744 = vrot.slane %v3100, 5
        %v3745 = vsel %vm3661, %v3743, %v3744
        %v3746 = vrot.slane %v3584, 5
        %v3747 = vrot.slane %v3746, 4
        %v3748 = vrot.slane %v3101, 5
        %v3749 = vsel %vm3661, %v3747, %v3748
        %v3750 = vrot.slane %v3585, 5
        %v3751 = vrot.slane %v3750, 4
        %v3752 = vrot.slane %v3102, 5
        %v3753 = vsel %vm3661, %v3751, %v3752
        %v3754 = vrot.slane %v3586, 5
        %v3755 = vrot.slane %v3754, 4
        %v3756 = vrot.slane %v3103, 5
        %v3757 = vsel %vm3661, %v3755, %v3756
        %v3758 = vrot.slane %v3587, 5
        %v3759 = vrot.slane %v3758, 4
        %v3760 = vrot.slane %v3104, 5
        %v3761 = vsel %vm3661, %v3759, %v3760
        %v3762 = vrot.slane %v3588, 5
        %v3763 = vrot.slane %v3762, 4
        %v3764 = vrot.slane %v3105, 5
        %v3765 = vsel %vm3661, %v3763, %v3764
        %v3766 = vrot.slane %v3589, 5
        %v3767 = vrot.slane %v3766, 4
        %v3768 = vrot.slane %v3106, 5
        %v3769 = vsel %vm3661, %v3767, %v3768
        %v3770 = vrot.slane %v3590, 5
        %v3771 = vrot.slane %v3770, 4
        %v3772 = vrot.slane %v3107, 5
        %v3773 = vsel %vm3661, %v3771, %v3772
        %v3774 = vrot.slane %v3591, 5
        %v3775 = vrot.slane %v3774, 4
        %v3776 = vrot.slane %v3108, 5
        %v3777 = vsel %vm3661, %v3775, %v3776
        %v3778 = vrot.slane %v3592, 5
        %v3779 = vrot.slane %v3778, 4
        %v3780 = vrot.slane %v3109, 5
        %v3781 = vsel %vm3661, %v3779, %v3780
        %v3782 = vrot.slane %v3593, 5
        %v3783 = vrot.slane %v3782, 4
        %v3784 = vrot.slane %v3110, 5
        %v3785 = vsel %vm3661, %v3783, %v3784
        %v3786 = vrot.slane %v3594, 5
        %v3787 = vrot.slane %v3786, 4
        %v3788 = vrot.slane %v3111, 5
        %v3789 = vsel %vm3661, %v3787, %v3788
        %v3790 = vld [vmem:[%s2208] sm:$0xf]
        %v3791 = vld [vmem:[%s2208 + $0x8] sm:$0xf]
        %v3792 = vld [vmem:[%s2208 + $0x10] sm:$0xf]
        %v3793 = vld [vmem:[%s2208 + $0x18] sm:$0xf]
        %v3794 = vld [vmem:[%s2208 + $0x20] sm:$0xf]
        %v3795 = vld [vmem:[%s2208 + $0x28] sm:$0xf]
        %v3796 = vld [vmem:[%s2208 + $0x30] sm:$0xf]
        %v3797 = vld [vmem:[%s2208 + $0x38] sm:$0xf]
        %v3798 = vld [vmem:[%s2208 + $0x50] sm:$0xf]
        %v3799 = vld [vmem:[%s2208 + $0x58] sm:$0xf]
        %v3800 = vld [vmem:[%s2208 + $0x60] sm:$0xf]
        %v3801 = vld [vmem:[%s2208 + $0x68] sm:$0xf]
        %v3802 = vld [vmem:[%s2208 + $0x70] sm:$0xf]
        %v3803 = vld [vmem:[%s2208 + $0x78] sm:$0xf]
        %v3804 = vld [vmem:[%s2208 + $0x80] sm:$0xf]
        %v3805 = vld [vmem:[%s2208 + $0x88] sm:$0xf]
        %v3806 = vld [vmem:[%s2208 + $0xa0] sm:$0xf]
        %v3807 = vld [vmem:[%s2208 + $0xa8] sm:$0xf]
        %v3808 = vld [vmem:[%s2208 + $0xb0] sm:$0xf]
        %v3809 = vld [vmem:[%s2208 + $0xb8] sm:$0xf]
        %v3810 = vld [vmem:[%s2208 + $0xc0] sm:$0xf]
        %v3811 = vld [vmem:[%s2208 + $0xc8] sm:$0xf]
        %v3812 = vld [vmem:[%s2208 + $0xd0] sm:$0xf]
        %v3813 = vld [vmem:[%s2208 + $0xd8] sm:$0xf]
        %v3814 = vld [vmem:[%s2208 + $0xf0] sm:$0xf]
        %v3815 = vld [vmem:[%s2208 + $0xf8] sm:$0xf]
        %v3816 = vld [vmem:[%s2208 + $0x100] sm:$0xf]
        %v3817 = vld [vmem:[%s2208 + $0x108] sm:$0xf]
        %v3818 = vld [vmem:[%s2208 + $0x110] sm:$0xf]
        %v3819 = vld [vmem:[%s2208 + $0x118] sm:$0xf]
        %v3820 = vld [vmem:[%s2208 + $0x120] sm:$0xf]
        %v3821 = vld [vmem:[%s2208 + $0x128] sm:$0xf]
        %v3822 = vld [vmem:[%s2208 + $0x4] sm:$0x1]
        %v3823 = vld [vmem:[%s2208 + $0xc] sm:$0x1]
        %v3824 = vld [vmem:[%s2208 + $0x14] sm:$0x1]
        %v3825 = vld [vmem:[%s2208 + $0x1c] sm:$0x1]
        %v3826 = vld [vmem:[%s2208 + $0x24] sm:$0x1]
        %v3827 = vld [vmem:[%s2208 + $0x2c] sm:$0x1]
        %v3828 = vld [vmem:[%s2208 + $0x34] sm:$0x1]
        %v3829 = vld [vmem:[%s2208 + $0x3c] sm:$0x1]
        %v3830 = vld [vmem:[%s2208 + $0x54] sm:$0x1]
        %v3831 = vld [vmem:[%s2208 + $0x5c] sm:$0x1]
        %v3832 = vld [vmem:[%s2208 + $0x64] sm:$0x1]
        %v3833 = vld [vmem:[%s2208 + $0x6c] sm:$0x1]
        %v3834 = vld [vmem:[%s2208 + $0x74] sm:$0x1]
        %v3835 = vld [vmem:[%s2208 + $0x7c] sm:$0x1]
        %v3836 = vld [vmem:[%s2208 + $0x84] sm:$0x1]
        %v3837 = vld [vmem:[%s2208 + $0x8c] sm:$0x1]
        %v3838 = vld [vmem:[%s2208 + $0xa4] sm:$0x1]
        %v3839 = vld [vmem:[%s2208 + $0xac] sm:$0x1]
        %v3840 = vld [vmem:[%s2208 + $0xb4] sm:$0x1]
        %v3841 = vld [vmem:[%s2208 + $0xbc] sm:$0x1]
        %v3842 = vld [vmem:[%s2208 + $0xc4] sm:$0x1]
        %v3843 = vld [vmem:[%s2208 + $0xcc] sm:$0x1]
        %v3844 = vld [vmem:[%s2208 + $0xd4] sm:$0x1]
        %v3845 = vld [vmem:[%s2208 + $0xdc] sm:$0x1]
        %v3846 = vld [vmem:[%s2208 + $0xf4] sm:$0x1]
        %v3847 = vld [vmem:[%s2208 + $0xfc] sm:$0x1]
        %v3848 = vld [vmem:[%s2208 + $0x104] sm:$0x1]
        %v3849 = vld [vmem:[%s2208 + $0x10c] sm:$0x1]
        %v3850 = vld [vmem:[%s2208 + $0x114] sm:$0x1]
        %v3851 = vld [vmem:[%s2208 + $0x11c] sm:$0x1]
        %v3852 = vld [vmem:[%s2208 + $0x124] sm:$0x1]
        %v3853 = vld [vmem:[%s2208 + $0x12c] sm:$0x1]
        %v3855 = vshrl.u32 %v3790, 16
        %v3857 = vrot.slane %v3855, 4
        %v3858 = vshll.u32 %v3790, 16
        %v3860 = vrot.slane %v3858, 5
        %v3861 = vor.u32 %v3857, %v3860
        %v3862 = vrot.slane %v3861, 4
        %v3864 = vshll.u32 %v3822, 16
        %v3866 = vrot.slane %v3864, 5
        %v3867 = vsel %vm3114, %v3862, %v3866
        %v3869 = vshrl.u32 %v3791, 16
        %v3871 = vrot.slane %v3869, 4
        %v3872 = vshll.u32 %v3791, 16
        %v3874 = vrot.slane %v3872, 5
        %v3875 = vor.u32 %v3871, %v3874
        %v3876 = vrot.slane %v3875, 4
        %v3878 = vshll.u32 %v3823, 16
        %v3880 = vrot.slane %v3878, 5
        %v3881 = vsel %vm3114, %v3876, %v3880
        %v3883 = vshrl.u32 %v3792, 16
        %v3885 = vrot.slane %v3883, 4
        %v3886 = vshll.u32 %v3792, 16
        %v3888 = vrot.slane %v3886, 5
        %v3889 = vor.u32 %v3885, %v3888
        %v3890 = vrot.slane %v3889, 4
        %v3892 = vshll.u32 %v3824, 16
        %v3894 = vrot.slane %v3892, 5
        %v3895 = vsel %vm3114, %v3890, %v3894
        %v3897 = vshrl.u32 %v3793, 16
        %v3899 = vrot.slane %v3897, 4
        %v3900 = vshll.u32 %v3793, 16
        %v3902 = vrot.slane %v3900, 5
        %v3903 = vor.u32 %v3899, %v3902
        %v3904 = vrot.slane %v3903, 4
        %v3906 = vshll.u32 %v3825, 16
        %v3908 = vrot.slane %v3906, 5
        %v3909 = vsel %vm3114, %v3904, %v3908
        %v3911 = vshrl.u32 %v3794, 16
        %v3913 = vrot.slane %v3911, 4
        %v3914 = vshll.u32 %v3794, 16
        %v3916 = vrot.slane %v3914, 5
        %v3917 = vor.u32 %v3913, %v3916
        %v3918 = vrot.slane %v3917, 4
        %v3920 = vshll.u32 %v3826, 16
        %v3922 = vrot.slane %v3920, 5
        %v3923 = vsel %vm3114, %v3918, %v3922
        %v3925 = vshrl.u32 %v3795, 16
        %v3927 = vrot.slane %v3925, 4
        %v3928 = vshll.u32 %v3795, 16
        %v3930 = vrot.slane %v3928, 5
        %v3931 = vor.u32 %v3927, %v3930
        %v3932 = vrot.slane %v3931, 4
        %v3934 = vshll.u32 %v3827, 16
        %v3936 = vrot.slane %v3934, 5
        %v3937 = vsel %vm3114, %v3932, %v3936
        %v3939 = vshrl.u32 %v3796, 16
        %v3941 = vrot.slane %v3939, 4
        %v3942 = vshll.u32 %v3796, 16
        %v3944 = vrot.slane %v3942, 5
        %v3945 = vor.u32 %v3941, %v3944
        %v3946 = vrot.slane %v3945, 4
        %v3948 = vshll.u32 %v3828, 16
        %v3950 = vrot.slane %v3948, 5
        %v3951 = vsel %vm3114, %v3946, %v3950
        %v3953 = vshrl.u32 %v3797, 16
        %v3955 = vrot.slane %v3953, 4
        %v3956 = vshll.u32 %v3797, 16
        %v3958 = vrot.slane %v3956, 5
        %v3959 = vor.u32 %v3955, %v3958
        %v3960 = vrot.slane %v3959, 4
        %v3962 = vshll.u32 %v3829, 16
        %v3964 = vrot.slane %v3962, 5
        %v3965 = vsel %vm3114, %v3960, %v3964
        %v3967 = vshrl.u32 %v3798, 16
        %v3969 = vrot.slane %v3967, 4
        %v3970 = vshll.u32 %v3798, 16
        %v3972 = vrot.slane %v3970, 5
        %v3973 = vor.u32 %v3969, %v3972
        %v3974 = vrot.slane %v3973, 4
        %v3976 = vshll.u32 %v3830, 16
        %v3978 = vrot.slane %v3976, 5
        %v3979 = vsel %vm3114, %v3974, %v3978
        %v3981 = vshrl.u32 %v3799, 16
        %v3983 = vrot.slane %v3981, 4
        %v3984 = vshll.u32 %v3799, 16
        %v3986 = vrot.slane %v3984, 5
        %v3987 = vor.u32 %v3983, %v3986
        %v3988 = vrot.slane %v3987, 4
        %v3990 = vshll.u32 %v3831, 16
        %v3992 = vrot.slane %v3990, 5
        %v3993 = vsel %vm3114, %v3988, %v3992
        %v3995 = vshrl.u32 %v3800, 16
        %v3997 = vrot.slane %v3995, 4
        %v3998 = vshll.u32 %v3800, 16
        %v4000 = vrot.slane %v3998, 5
        %v4001 = vor.u32 %v3997, %v4000
        %v4002 = vrot.slane %v4001, 4
        %v4004 = vshll.u32 %v3832, 16
        %v4006 = vrot.slane %v4004, 5
        %v4007 = vsel %vm3114, %v4002, %v4006
        %v4009 = vshrl.u32 %v3801, 16
        %v4011 = vrot.slane %v4009, 4
        %v4012 = vshll.u32 %v3801, 16
        %v4014 = vrot.slane %v4012, 5
        %v4015 = vor.u32 %v4011, %v4014
        %v4016 = vrot.slane %v4015, 4
        %v4018 = vshll.u32 %v3833, 16
        %v4020 = vrot.slane %v4018, 5
        %v4021 = vsel %vm3114, %v4016, %v4020
        %v4023 = vshrl.u32 %v3802, 16
        %v4025 = vrot.slane %v4023, 4
        %v4026 = vshll.u32 %v3802, 16
        %v4028 = vrot.slane %v4026, 5
        %v4029 = vor.u32 %v4025, %v4028
        %v4030 = vrot.slane %v4029, 4
        %v4032 = vshll.u32 %v3834, 16
        %v4034 = vrot.slane %v4032, 5
        %v4035 = vsel %vm3114, %v4030, %v4034
        %v4037 = vshrl.u32 %v3803, 16
        %v4039 = vrot.slane %v4037, 4
        %v4040 = vshll.u32 %v3803, 16
        %v4042 = vrot.slane %v4040, 5
        %v4043 = vor.u32 %v4039, %v4042
        %v4044 = vrot.slane %v4043, 4
        %v4046 = vshll.u32 %v3835, 16
        %v4048 = vrot.slane %v4046, 5
        %v4049 = vsel %vm3114, %v4044, %v4048
        %v4051 = vshrl.u32 %v3804, 16
        %v4053 = vrot.slane %v4051, 4
        %v4054 = vshll.u32 %v3804, 16
        %v4056 = vrot.slane %v4054, 5
        %v4057 = vor.u32 %v4053, %v4056
        %v4058 = vrot.slane %v4057, 4
        %v4060 = vshll.u32 %v3836, 16
        %v4062 = vrot.slane %v4060, 5
        %v4063 = vsel %vm3114, %v4058, %v4062
        %v4065 = vshrl.u32 %v3805, 16
        %v4067 = vrot.slane %v4065, 4
        %v4068 = vshll.u32 %v3805, 16
        %v4070 = vrot.slane %v4068, 5
        %v4071 = vor.u32 %v4067, %v4070
        %v4072 = vrot.slane %v4071, 4
        %v4074 = vshll.u32 %v3837, 16
        %v4076 = vrot.slane %v4074, 5
        %v4077 = vsel %vm3114, %v4072, %v4076
        %v4079 = vshrl.u32 %v3806, 16
        %v4081 = vrot.slane %v4079, 4
        %v4082 = vshll.u32 %v3806, 16
        %v4084 = vrot.slane %v4082, 5
        %v4085 = vor.u32 %v4081, %v4084
        %v4086 = vrot.slane %v4085, 4
        %v4088 = vshll.u32 %v3838, 16
        %v4090 = vrot.slane %v4088, 5
        %v4091 = vsel %vm3114, %v4086, %v4090
        %v4093 = vshrl.u32 %v3807, 16
        %v4095 = vrot.slane %v4093, 4
        %v4096 = vshll.u32 %v3807, 16
        %v4098 = vrot.slane %v4096, 5
        %v4099 = vor.u32 %v4095, %v4098
        %v4100 = vrot.slane %v4099, 4
        %v4102 = vshll.u32 %v3839, 16
        %v4104 = vrot.slane %v4102, 5
        %v4105 = vsel %vm3114, %v4100, %v4104
        %v4107 = vshrl.u32 %v3808, 16
        %v4109 = vrot.slane %v4107, 4
        %v4110 = vshll.u32 %v3808, 16
        %v4112 = vrot.slane %v4110, 5
        %v4113 = vor.u32 %v4109, %v4112
        %v4114 = vrot.slane %v4113, 4
        %v4116 = vshll.u32 %v3840, 16
        %v4118 = vrot.slane %v4116, 5
        %v4119 = vsel %vm3114, %v4114, %v4118
        %v4121 = vshrl.u32 %v3809, 16
        %v4123 = vrot.slane %v4121, 4
        %v4124 = vshll.u32 %v3809, 16
        %v4126 = vrot.slane %v4124, 5
        %v4127 = vor.u32 %v4123, %v4126
        %v4128 = vrot.slane %v4127, 4
        %v4130 = vshll.u32 %v3841, 16
        %v4132 = vrot.slane %v4130, 5
        %v4133 = vsel %vm3114, %v4128, %v4132
        %v4135 = vshrl.u32 %v3810, 16
        %v4137 = vrot.slane %v4135, 4
        %v4138 = vshll.u32 %v3810, 16
        %v4140 = vrot.slane %v4138, 5
        %v4141 = vor.u32 %v4137, %v4140
        %v4142 = vrot.slane %v4141, 4
        %v4144 = vshll.u32 %v3842, 16
        %v4146 = vrot.slane %v4144, 5
        %v4147 = vsel %vm3114, %v4142, %v4146
        %v4149 = vshrl.u32 %v3811, 16
        %v4151 = vrot.slane %v4149, 4
        %v4152 = vshll.u32 %v3811, 16
        %v4154 = vrot.slane %v4152, 5
        %v4155 = vor.u32 %v4151, %v4154
        %v4156 = vrot.slane %v4155, 4
        %v4158 = vshll.u32 %v3843, 16
        %v4160 = vrot.slane %v4158, 5
        %v4161 = vsel %vm3114, %v4156, %v4160
        %v4163 = vshrl.u32 %v3812, 16
        %v4165 = vrot.slane %v4163, 4
        %v4166 = vshll.u32 %v3812, 16
        %v4168 = vrot.slane %v4166, 5
        %v4169 = vor.u32 %v4165, %v4168
        %v4170 = vrot.slane %v4169, 4
        %v4172 = vshll.u32 %v3844, 16
        %v4174 = vrot.slane %v4172, 5
        %v4175 = vsel %vm3114, %v4170, %v4174
        %v4177 = vshrl.u32 %v3813, 16
        %v4179 = vrot.slane %v4177, 4
        %v4180 = vshll.u32 %v3813, 16
        %v4182 = vrot.slane %v4180, 5
        %v4183 = vor.u32 %v4179, %v4182
        %v4184 = vrot.slane %v4183, 4
        %v4186 = vshll.u32 %v3845, 16
        %v4188 = vrot.slane %v4186, 5
        %v4189 = vsel %vm3114, %v4184, %v4188
        %v4191 = vshrl.u32 %v3814, 16
        %v4193 = vrot.slane %v4191, 4
        %v4194 = vshll.u32 %v3814, 16
        %v4196 = vrot.slane %v4194, 5
        %v4197 = vor.u32 %v4193, %v4196
        %v4198 = vrot.slane %v4197, 4
        %v4200 = vshll.u32 %v3846, 16
        %v4202 = vrot.slane %v4200, 5
        %v4203 = vsel %vm3114, %v4198, %v4202
        %v4205 = vshrl.u32 %v3815, 16
        %v4207 = vrot.slane %v4205, 4
        %v4208 = vshll.u32 %v3815, 16
        %v4210 = vrot.slane %v4208, 5
        %v4211 = vor.u32 %v4207, %v4210
        %v4212 = vrot.slane %v4211, 4
        %v4214 = vshll.u32 %v3847, 16
        %v4216 = vrot.slane %v4214, 5
        %v4217 = vsel %vm3114, %v4212, %v4216
        %v4219 = vshrl.u32 %v3816, 16
        %v4221 = vrot.slane %v4219, 4
        %v4222 = vshll.u32 %v3816, 16
        %v4224 = vrot.slane %v4222, 5
        %v4225 = vor.u32 %v4221, %v4224
        %v4226 = vrot.slane %v4225, 4
        %v4228 = vshll.u32 %v3848, 16
        %v4230 = vrot.slane %v4228, 5
        %v4231 = vsel %vm3114, %v4226, %v4230
        %v4233 = vshrl.u32 %v3817, 16
        %v4235 = vrot.slane %v4233, 4
        %v4236 = vshll.u32 %v3817, 16
        %v4238 = vrot.slane %v4236, 5
        %v4239 = vor.u32 %v4235, %v4238
        %v4240 = vrot.slane %v4239, 4
        %v4242 = vshll.u32 %v3849, 16
        %v4244 = vrot.slane %v4242, 5
        %v4245 = vsel %vm3114, %v4240, %v4244
        %v4247 = vshrl.u32 %v3818, 16
        %v4249 = vrot.slane %v4247, 4
        %v4250 = vshll.u32 %v3818, 16
        %v4252 = vrot.slane %v4250, 5
        %v4253 = vor.u32 %v4249, %v4252
        %v4254 = vrot.slane %v4253, 4
        %v4256 = vshll.u32 %v3850, 16
        %v4258 = vrot.slane %v4256, 5
        %v4259 = vsel %vm3114, %v4254, %v4258
        %v4261 = vshrl.u32 %v3819, 16
        %v4263 = vrot.slane %v4261, 4
        %v4264 = vshll.u32 %v3819, 16
        %v4266 = vrot.slane %v4264, 5
        %v4267 = vor.u32 %v4263, %v4266
        %v4268 = vrot.slane %v4267, 4
        %v4270 = vshll.u32 %v3851, 16
        %v4272 = vrot.slane %v4270, 5
        %v4273 = vsel %vm3114, %v4268, %v4272
        %v4275 = vshrl.u32 %v3820, 16
        %v4277 = vrot.slane %v4275, 4
        %v4278 = vshll.u32 %v3820, 16
        %v4280 = vrot.slane %v4278, 5
        %v4281 = vor.u32 %v4277, %v4280
        %v4282 = vrot.slane %v4281, 4
        %v4284 = vshll.u32 %v3852, 16
        %v4286 = vrot.slane %v4284, 5
        %v4287 = vsel %vm3114, %v4282, %v4286
        %v4289 = vshrl.u32 %v3821, 16
        %v4291 = vrot.slane %v4289, 4
        %v4292 = vshll.u32 %v3821, 16
        %v4294 = vrot.slane %v4292, 5
        %v4295 = vor.u32 %v4291, %v4294
        %v4296 = vrot.slane %v4295, 4
        %v4298 = vshll.u32 %v3853, 16
        %v4300 = vrot.slane %v4298, 5
        %v4301 = vsel %vm3114, %v4296, %v4300
        %v4302 = vld [vmem:[%s2208] sm:$0xe]
        %v4303 = vld [vmem:[%s2208 + $0x8] sm:$0xe]
        %v4304 = vld [vmem:[%s2208 + $0x10] sm:$0xe]
        %v4305 = vld [vmem:[%s2208 + $0x18] sm:$0xe]
        %v4306 = vld [vmem:[%s2208 + $0x20] sm:$0xe]
        %v4307 = vld [vmem:[%s2208 + $0x28] sm:$0xe]
        %v4308 = vld [vmem:[%s2208 + $0x30] sm:$0xe]
        %v4309 = vld [vmem:[%s2208 + $0x38] sm:$0xe]
        %v4310 = vld [vmem:[%s2208 + $0x50] sm:$0xe]
        %v4311 = vld [vmem:[%s2208 + $0x58] sm:$0xe]
        %v4312 = vld [vmem:[%s2208 + $0x60] sm:$0xe]
        %v4313 = vld [vmem:[%s2208 + $0x68] sm:$0xe]
        %v4314 = vld [vmem:[%s2208 + $0x70] sm:$0xe]
        %v4315 = vld [vmem:[%s2208 + $0x78] sm:$0xe]
        %v4316 = vld [vmem:[%s2208 + $0x80] sm:$0xe]
        %v4317 = vld [vmem:[%s2208 + $0x88] sm:$0xe]
        %v4318 = vld [vmem:[%s2208 + $0xa0] sm:$0xe]
        %v4319 = vld [vmem:[%s2208 + $0xa8] sm:$0xe]
        %v4320 = vld [vmem:[%s2208 + $0xb0] sm:$0xe]
        %v4321 = vld [vmem:[%s2208 + $0xb8] sm:$0xe]
        %v4322 = vld [vmem:[%s2208 + $0xc0] sm:$0xe]
        %v4323 = vld [vmem:[%s2208 + $0xc8] sm:$0xe]
        %v4324 = vld [vmem:[%s2208 + $0xd0] sm:$0xe]
        %v4325 = vld [vmem:[%s2208 + $0xd8] sm:$0xe]
        %v4326 = vld [vmem:[%s2208 + $0xf0] sm:$0xe]
        %v4327 = vld [vmem:[%s2208 + $0xf8] sm:$0xe]
        %v4328 = vld [vmem:[%s2208 + $0x100] sm:$0xe]
        %v4329 = vld [vmem:[%s2208 + $0x108] sm:$0xe]
        %v4330 = vld [vmem:[%s2208 + $0x110] sm:$0xe]
        %v4331 = vld [vmem:[%s2208 + $0x118] sm:$0xe]
        %v4332 = vld [vmem:[%s2208 + $0x120] sm:$0xe]
        %v4333 = vld [vmem:[%s2208 + $0x128] sm:$0xe]
        %v4398 = vrot.slane %v4302, 5
        %v4399 = vrot.slane %v4398, 4
        %v4400 = vrot.slane %v3822, 5
        %v4401 = vsel %vm3661, %v4399, %v4400
        %v4402 = vrot.slane %v4303, 5
        %v4403 = vrot.slane %v4402, 4
        %v4404 = vrot.slane %v3823, 5
        %v4405 = vsel %vm3661, %v4403, %v4404
        %v4406 = vrot.slane %v4304, 5
        %v4407 = vrot.slane %v4406, 4
        %v4408 = vrot.slane %v3824, 5
        %v4409 = vsel %vm3661, %v4407, %v4408
        %v4410 = vrot.slane %v4305, 5
        %v4411 = vrot.slane %v4410, 4
        %v4412 = vrot.slane %v3825, 5
        %v4413 = vsel %vm3661, %v4411, %v4412
        %v4414 = vrot.slane %v4306, 5
        %v4415 = vrot.slane %v4414, 4
        %v4416 = vrot.slane %v3826, 5
        %v4417 = vsel %vm3661, %v4415, %v4416
        %v4418 = vrot.slane %v4307, 5
        %v4419 = vrot.slane %v4418, 4
        %v4420 = vrot.slane %v3827, 5
        %v4421 = vsel %vm3661, %v4419, %v4420
        %v4422 = vrot.slane %v4308, 5
        %v4423 = vrot.slane %v4422, 4
        %v4424 = vrot.slane %v3828, 5
        %v4425 = vsel %vm3661, %v4423, %v4424
        %v4426 = vrot.slane %v4309, 5
        %v4427 = vrot.slane %v4426, 4
        %v4428 = vrot.slane %v3829, 5
        %v4429 = vsel %vm3661, %v4427, %v4428
        %v4430 = vrot.slane %v4310, 5
        %v4431 = vrot.slane %v4430, 4
        %v4432 = vrot.slane %v3830, 5
        %v4433 = vsel %vm3661, %v4431, %v4432
        %v4434 = vrot.slane %v4311, 5
        %v4435 = vrot.slane %v4434, 4
        %v4436 = vrot.slane %v3831, 5
        %v4437 = vsel %vm3661, %v4435, %v4436
        %v4438 = vrot.slane %v4312, 5
        %v4439 = vrot.slane %v4438, 4
        %v4440 = vrot.slane %v3832, 5
        %v4441 = vsel %vm3661, %v4439, %v4440
        %v4442 = vrot.slane %v4313, 5
        %v4443 = vrot.slane %v4442, 4
        %v4444 = vrot.slane %v3833, 5
        %v4445 = vsel %vm3661, %v4443, %v4444
        %v4446 = vrot.slane %v4314, 5
        %v4447 = vrot.slane %v4446, 4
        %v4448 = vrot.slane %v3834, 5
        %v4449 = vsel %vm3661, %v4447, %v4448
        %v4450 = vrot.slane %v4315, 5
        %v4451 = vrot.slane %v4450, 4
        %v4452 = vrot.slane %v3835, 5
        %v4453 = vsel %vm3661, %v4451, %v4452
        %v4454 = vrot.slane %v4316, 5
        %v4455 = vrot.slane %v4454, 4
        %v4456 = vrot.slane %v3836, 5
        %v4457 = vsel %vm3661, %v4455, %v4456
        %v4458 = vrot.slane %v4317, 5
        %v4459 = vrot.slane %v4458, 4
        %v4460 = vrot.slane %v3837, 5
        %v4461 = vsel %vm3661, %v4459, %v4460
        %v4462 = vrot.slane %v4318, 5
        %v4463 = vrot.slane %v4462, 4
        %v4464 = vrot.slane %v3838, 5
        %v4465 = vsel %vm3661, %v4463, %v4464
        %v4466 = vrot.slane %v4319, 5
        %v4467 = vrot.slane %v4466, 4
        %v4468 = vrot.slane %v3839, 5
        %v4469 = vsel %vm3661, %v4467, %v4468
        %v4470 = vrot.slane %v4320, 5
        %v4471 = vrot.slane %v4470, 4
        %v4472 = vrot.slane %v3840, 5
        %v4473 = vsel %vm3661, %v4471, %v4472
        %v4474 = vrot.slane %v4321, 5
        %v4475 = vrot.slane %v4474, 4
        %v4476 = vrot.slane %v3841, 5
        %v4477 = vsel %vm3661, %v4475, %v4476
        %v4478 = vrot.slane %v4322, 5
        %v4479 = vrot.slane %v4478, 4
        %v4480 = vrot.slane %v3842, 5
        %v4481 = vsel %vm3661, %v4479, %v4480
        %v4482 = vrot.slane %v4323, 5
        %v4483 = vrot.slane %v4482, 4
        %v4484 = vrot.slane %v3843, 5
        %v4485 = vsel %vm3661, %v4483, %v4484
        %v4486 = vrot.slane %v4324, 5
        %v4487 = vrot.slane %v4486, 4
        %v4488 = vrot.slane %v3844, 5
        %v4489 = vsel %vm3661, %v4487, %v4488
        %v4490 = vrot.slane %v4325, 5
        %v4491 = vrot.slane %v4490, 4
        %v4492 = vrot.slane %v3845, 5
        %v4493 = vsel %vm3661, %v4491, %v4492
        %v4494 = vrot.slane %v4326, 5
        %v4495 = vrot.slane %v4494, 4
        %v4496 = vrot.slane %v3846, 5
        %v4497 = vsel %vm3661, %v4495, %v4496
        %v4498 = vrot.slane %v4327, 5
        %v4499 = vrot.slane %v4498, 4
        %v4500 = vrot.slane %v3847, 5
        %v4501 = vsel %vm3661, %v4499, %v4500
        %v4502 = vrot.slane %v4328, 5
        %v4503 = vrot.slane %v4502, 4
        %v4504 = vrot.slane %v3848, 5
        %v4505 = vsel %vm3661, %v4503, %v4504
        %v4506 = vrot.slane %v4329, 5
        %v4507 = vrot.slane %v4506, 4
        %v4508 = vrot.slane %v3849, 5
        %v4509 = vsel %vm3661, %v4507, %v4508
        %v4510 = vrot.slane %v4330, 5
        %v4511 = vrot.slane %v4510, 4
        %v4512 = vrot.slane %v3850, 5
        %v4513 = vsel %vm3661, %v4511, %v4512
        %v4514 = vrot.slane %v4331, 5
        %v4515 = vrot.slane %v4514, 4
        %v4516 = vrot.slane %v3851, 5
        %v4517 = vsel %vm3661, %v4515, %v4516
        %v4518 = vrot.slane %v4332, 5
        %v4519 = vrot.slane %v4518, 4
        %v4520 = vrot.slane %v3852, 5
        %v4521 = vsel %vm3661, %v4519, %v4520
        %v4522 = vrot.slane %v4333, 5
        %v4523 = vrot.slane %v4522, 4
        %v4524 = vrot.slane %v3853, 5
        %v4525 = vsel %vm3661, %v4523, %v4524
        %s4526 = scalar_lea.vmem [#allocation2], 16
        %v4527 = vld [vmem:[%s4526] sm:$0xf]
        %v4528 = vld [vmem:[%s4526 + $0x8] sm:$0xf]
        %v4529 = vld [vmem:[%s4526 + $0x10] sm:$0xf]
        %v4530 = vld [vmem:[%s4526 + $0x18] sm:$0xf]
        %v4531 = vld [vmem:[%s4526 + $0x20] sm:$0xf]
        %v4532 = vld [vmem:[%s4526 + $0x28] sm:$0xf]
        %v4533 = vld [vmem:[%s4526 + $0x30] sm:$0xf]
        %v4534 = vld [vmem:[%s4526 + $0x38] sm:$0xf]
        %v4535 = vld [vmem:[%s4526 + $0x50] sm:$0xf]
        %v4536 = vld [vmem:[%s4526 + $0x58] sm:$0xf]
        %v4537 = vld [vmem:[%s4526 + $0x60] sm:$0xf]
        %v4538 = vld [vmem:[%s4526 + $0x68] sm:$0xf]
        %v4539 = vld [vmem:[%s4526 + $0x70] sm:$0xf]
        %v4540 = vld [vmem:[%s4526 + $0x78] sm:$0xf]
        %v4541 = vld [vmem:[%s4526 + $0x80] sm:$0xf]
        %v4542 = vld [vmem:[%s4526 + $0x88] sm:$0xf]
        %v4543 = vld [vmem:[%s4526 + $0xa0] sm:$0xf]
        %v4544 = vld [vmem:[%s4526 + $0xa8] sm:$0xf]
        %v4545 = vld [vmem:[%s4526 + $0xb0] sm:$0xf]
        %v4546 = vld [vmem:[%s4526 + $0xb8] sm:$0xf]
        %v4547 = vld [vmem:[%s4526 + $0xc0] sm:$0xf]
        %v4548 = vld [vmem:[%s4526 + $0xc8] sm:$0xf]
        %v4549 = vld [vmem:[%s4526 + $0xd0] sm:$0xf]
        %v4550 = vld [vmem:[%s4526 + $0xd8] sm:$0xf]
        %v4551 = vld [vmem:[%s4526 + $0xf0] sm:$0xf]
        %v4552 = vld [vmem:[%s4526 + $0xf8] sm:$0xf]
        %v4553 = vld [vmem:[%s4526 + $0x100] sm:$0xf]
        %v4554 = vld [vmem:[%s4526 + $0x108] sm:$0xf]
        %v4555 = vld [vmem:[%s4526 + $0x110] sm:$0xf]
        %v4556 = vld [vmem:[%s4526 + $0x118] sm:$0xf]
        %v4557 = vld [vmem:[%s4526 + $0x120] sm:$0xf]
        %v4558 = vld [vmem:[%s4526 + $0x128] sm:$0xf]
        %v4559 = vld [vmem:[%s4526 + $0x4] sm:$0x1]
        %v4560 = vld [vmem:[%s4526 + $0xc] sm:$0x1]
        %v4561 = vld [vmem:[%s4526 + $0x14] sm:$0x1]
        %v4562 = vld [vmem:[%s4526 + $0x1c] sm:$0x1]
        %v4563 = vld [vmem:[%s4526 + $0x24] sm:$0x1]
        %v4564 = vld [vmem:[%s4526 + $0x2c] sm:$0x1]
        %v4565 = vld [vmem:[%s4526 + $0x34] sm:$0x1]
        %v4566 = vld [vmem:[%s4526 + $0x3c] sm:$0x1]
        %v4567 = vld [vmem:[%s4526 + $0x54] sm:$0x1]
        %v4568 = vld [vmem:[%s4526 + $0x5c] sm:$0x1]
        %v4569 = vld [vmem:[%s4526 + $0x64] sm:$0x1]
        %v4570 = vld [vmem:[%s4526 + $0x6c] sm:$0x1]
        %v4571 = vld [vmem:[%s4526 + $0x74] sm:$0x1]
        %v4572 = vld [vmem:[%s4526 + $0x7c] sm:$0x1]
        %v4573 = vld [vmem:[%s4526 + $0x84] sm:$0x1]
        %v4574 = vld [vmem:[%s4526 + $0x8c] sm:$0x1]
        %v4575 = vld [vmem:[%s4526 + $0xa4] sm:$0x1]
        %v4576 = vld [vmem:[%s4526 + $0xac] sm:$0x1]
        %v4577 = vld [vmem:[%s4526 + $0xb4] sm:$0x1]
        %v4578 = vld [vmem:[%s4526 + $0xbc] sm:$0x1]
        %v4579 = vld [vmem:[%s4526 + $0xc4] sm:$0x1]
        %v4580 = vld [vmem:[%s4526 + $0xcc] sm:$0x1]
        %v4581 = vld [vmem:[%s4526 + $0xd4] sm:$0x1]
        %v4582 = vld [vmem:[%s4526 + $0xdc] sm:$0x1]
        %v4583 = vld [vmem:[%s4526 + $0xf4] sm:$0x1]
        %v4584 = vld [vmem:[%s4526 + $0xfc] sm:$0x1]
        %v4585 = vld [vmem:[%s4526 + $0x104] sm:$0x1]
        %v4586 = vld [vmem:[%s4526 + $0x10c] sm:$0x1]
        %v4587 = vld [vmem:[%s4526 + $0x114] sm:$0x1]
        %v4588 = vld [vmem:[%s4526 + $0x11c] sm:$0x1]
        %v4589 = vld [vmem:[%s4526 + $0x124] sm:$0x1]
        %v4590 = vld [vmem:[%s4526 + $0x12c] sm:$0x1]
        %v4592 = vshrl.u32 %v4527, 16
        %v4594 = vrot.slane %v4592, 4
        %v4595 = vshll.u32 %v4527, 16
        %v4597 = vrot.slane %v4595, 5
        %v4598 = vor.u32 %v4594, %v4597
        %v4599 = vrot.slane %v4598, 4
        %v4601 = vshll.u32 %v4559, 16
        %v4603 = vrot.slane %v4601, 5
        %v4604 = vsel %vm3114, %v4599, %v4603
        %v4606 = vshrl.u32 %v4528, 16
        %v4608 = vrot.slane %v4606, 4
        %v4609 = vshll.u32 %v4528, 16
        %v4611 = vrot.slane %v4609, 5
        %v4612 = vor.u32 %v4608, %v4611
        %v4613 = vrot.slane %v4612, 4
        %v4615 = vshll.u32 %v4560, 16
        %v4617 = vrot.slane %v4615, 5
        %v4618 = vsel %vm3114, %v4613, %v4617
        %v4620 = vshrl.u32 %v4529, 16
        %v4622 = vrot.slane %v4620, 4
        %v4623 = vshll.u32 %v4529, 16
        %v4625 = vrot.slane %v4623, 5
        %v4626 = vor.u32 %v4622, %v4625
        %v4627 = vrot.slane %v4626, 4
        %v4629 = vshll.u32 %v4561, 16
        %v4631 = vrot.slane %v4629, 5
        %v4632 = vsel %vm3114, %v4627, %v4631
        %v4634 = vshrl.u32 %v4530, 16
        %v4636 = vrot.slane %v4634, 4
        %v4637 = vshll.u32 %v4530, 16
        %v4639 = vrot.slane %v4637, 5
        %v4640 = vor.u32 %v4636, %v4639
        %v4641 = vrot.slane %v4640, 4
        %v4643 = vshll.u32 %v4562, 16
        %v4645 = vrot.slane %v4643, 5
        %v4646 = vsel %vm3114, %v4641, %v4645
        %v4648 = vshrl.u32 %v4531, 16
        %v4650 = vrot.slane %v4648, 4
        %v4651 = vshll.u32 %v4531, 16
        %v4653 = vrot.slane %v4651, 5
        %v4654 = vor.u32 %v4650, %v4653
        %v4655 = vrot.slane %v4654, 4
        %v4657 = vshll.u32 %v4563, 16
        %v4659 = vrot.slane %v4657, 5
        %v4660 = vsel %vm3114, %v4655, %v4659
        %v4662 = vshrl.u32 %v4532, 16
        %v4664 = vrot.slane %v4662, 4
        %v4665 = vshll.u32 %v4532, 16
        %v4667 = vrot.slane %v4665, 5
        %v4668 = vor.u32 %v4664, %v4667
        %v4669 = vrot.slane %v4668, 4
        %v4671 = vshll.u32 %v4564, 16
        %v4673 = vrot.slane %v4671, 5
        %v4674 = vsel %vm3114, %v4669, %v4673
        %v4676 = vshrl.u32 %v4533, 16
        %v4678 = vrot.slane %v4676, 4
        %v4679 = vshll.u32 %v4533, 16
        %v4681 = vrot.slane %v4679, 5
        %v4682 = vor.u32 %v4678, %v4681
        %v4683 = vrot.slane %v4682, 4
        %v4685 = vshll.u32 %v4565, 16
        %v4687 = vrot.slane %v4685, 5
        %v4688 = vsel %vm3114, %v4683, %v4687
        %v4690 = vshrl.u32 %v4534, 16
        %v4692 = vrot.slane %v4690, 4
        %v4693 = vshll.u32 %v4534, 16
        %v4695 = vrot.slane %v4693, 5
        %v4696 = vor.u32 %v4692, %v4695
        %v4697 = vrot.slane %v4696, 4
        %v4699 = vshll.u32 %v4566, 16
        %v4701 = vrot.slane %v4699, 5
        %v4702 = vsel %vm3114, %v4697, %v4701
        %v4704 = vshrl.u32 %v4535, 16
        %v4706 = vrot.slane %v4704, 4
        %v4707 = vshll.u32 %v4535, 16
        %v4709 = vrot.slane %v4707, 5
        %v4710 = vor.u32 %v4706, %v4709
        %v4711 = vrot.slane %v4710, 4
        %v4713 = vshll.u32 %v4567, 16
        %v4715 = vrot.slane %v4713, 5
        %v4716 = vsel %vm3114, %v4711, %v4715
        %v4718 = vshrl.u32 %v4536, 16
        %v4720 = vrot.slane %v4718, 4
        %v4721 = vshll.u32 %v4536, 16
        %v4723 = vrot.slane %v4721, 5
        %v4724 = vor.u32 %v4720, %v4723
        %v4725 = vrot.slane %v4724, 4
        %v4727 = vshll.u32 %v4568, 16
        %v4729 = vrot.slane %v4727, 5
        %v4730 = vsel %vm3114, %v4725, %v4729
        %v4732 = vshrl.u32 %v4537, 16
        %v4734 = vrot.slane %v4732, 4
        %v4735 = vshll.u32 %v4537, 16
        %v4737 = vrot.slane %v4735, 5
        %v4738 = vor.u32 %v4734, %v4737
        %v4739 = vrot.slane %v4738, 4
        %v4741 = vshll.u32 %v4569, 16
        %v4743 = vrot.slane %v4741, 5
        %v4744 = vsel %vm3114, %v4739, %v4743
        %v4746 = vshrl.u32 %v4538, 16
        %v4748 = vrot.slane %v4746, 4
        %v4749 = vshll.u32 %v4538, 16
        %v4751 = vrot.slane %v4749, 5
        %v4752 = vor.u32 %v4748, %v4751
        %v4753 = vrot.slane %v4752, 4
        %v4755 = vshll.u32 %v4570, 16
        %v4757 = vrot.slane %v4755, 5
        %v4758 = vsel %vm3114, %v4753, %v4757
        %v4760 = vshrl.u32 %v4539, 16
        %v4762 = vrot.slane %v4760, 4
        %v4763 = vshll.u32 %v4539, 16
        %v4765 = vrot.slane %v4763, 5
        %v4766 = vor.u32 %v4762, %v4765
        %v4767 = vrot.slane %v4766, 4
        %v4769 = vshll.u32 %v4571, 16
        %v4771 = vrot.slane %v4769, 5
        %v4772 = vsel %vm3114, %v4767, %v4771
        %v4774 = vshrl.u32 %v4540, 16
        %v4776 = vrot.slane %v4774, 4
        %v4777 = vshll.u32 %v4540, 16
        %v4779 = vrot.slane %v4777, 5
        %v4780 = vor.u32 %v4776, %v4779
        %v4781 = vrot.slane %v4780, 4
        %v4783 = vshll.u32 %v4572, 16
        %v4785 = vrot.slane %v4783, 5
        %v4786 = vsel %vm3114, %v4781, %v4785
        %v4788 = vshrl.u32 %v4541, 16
        %v4790 = vrot.slane %v4788, 4
        %v4791 = vshll.u32 %v4541, 16
        %v4793 = vrot.slane %v4791, 5
        %v4794 = vor.u32 %v4790, %v4793
        %v4795 = vrot.slane %v4794, 4
        %v4797 = vshll.u32 %v4573, 16
        %v4799 = vrot.slane %v4797, 5
        %v4800 = vsel %vm3114, %v4795, %v4799
        %v4802 = vshrl.u32 %v4542, 16
        %v4804 = vrot.slane %v4802, 4
        %v4805 = vshll.u32 %v4542, 16
        %v4807 = vrot.slane %v4805, 5
        %v4808 = vor.u32 %v4804, %v4807
        %v4809 = vrot.slane %v4808, 4
        %v4811 = vshll.u32 %v4574, 16
        %v4813 = vrot.slane %v4811, 5
        %v4814 = vsel %vm3114, %v4809, %v4813
        %v4816 = vshrl.u32 %v4543, 16
        %v4818 = vrot.slane %v4816, 4
        %v4819 = vshll.u32 %v4543, 16
        %v4821 = vrot.slane %v4819, 5
        %v4822 = vor.u32 %v4818, %v4821
        %v4823 = vrot.slane %v4822, 4
        %v4825 = vshll.u32 %v4575, 16
        %v4827 = vrot.slane %v4825, 5
        %v4828 = vsel %vm3114, %v4823, %v4827
        %v4830 = vshrl.u32 %v4544, 16
        %v4832 = vrot.slane %v4830, 4
        %v4833 = vshll.u32 %v4544, 16
        %v4835 = vrot.slane %v4833, 5
        %v4836 = vor.u32 %v4832, %v4835
        %v4837 = vrot.slane %v4836, 4
        %v4839 = vshll.u32 %v4576, 16
        %v4841 = vrot.slane %v4839, 5
        %v4842 = vsel %vm3114, %v4837, %v4841
        %v4844 = vshrl.u32 %v4545, 16
        %v4846 = vrot.slane %v4844, 4
        %v4847 = vshll.u32 %v4545, 16
        %v4849 = vrot.slane %v4847, 5
        %v4850 = vor.u32 %v4846, %v4849
        %v4851 = vrot.slane %v4850, 4
        %v4853 = vshll.u32 %v4577, 16
        %v4855 = vrot.slane %v4853, 5
        %v4856 = vsel %vm3114, %v4851, %v4855
        %v4858 = vshrl.u32 %v4546, 16
        %v4860 = vrot.slane %v4858, 4
        %v4861 = vshll.u32 %v4546, 16
        %v4863 = vrot.slane %v4861, 5
        %v4864 = vor.u32 %v4860, %v4863
        %v4865 = vrot.slane %v4864, 4
        %v4867 = vshll.u32 %v4578, 16
        %v4869 = vrot.slane %v4867, 5
        %v4870 = vsel %vm3114, %v4865, %v4869
        %v4872 = vshrl.u32 %v4547, 16
        %v4874 = vrot.slane %v4872, 4
        %v4875 = vshll.u32 %v4547, 16
        %v4877 = vrot.slane %v4875, 5
        %v4878 = vor.u32 %v4874, %v4877
        %v4879 = vrot.slane %v4878, 4
        %v4881 = vshll.u32 %v4579, 16
        %v4883 = vrot.slane %v4881, 5
        %v4884 = vsel %vm3114, %v4879, %v4883
        %v4886 = vshrl.u32 %v4548, 16
        %v4888 = vrot.slane %v4886, 4
        %v4889 = vshll.u32 %v4548, 16
        %v4891 = vrot.slane %v4889, 5
        %v4892 = vor.u32 %v4888, %v4891
        %v4893 = vrot.slane %v4892, 4
        %v4895 = vshll.u32 %v4580, 16
        %v4897 = vrot.slane %v4895, 5
        %v4898 = vsel %vm3114, %v4893, %v4897
        %v4900 = vshrl.u32 %v4549, 16
        %v4902 = vrot.slane %v4900, 4
        %v4903 = vshll.u32 %v4549, 16
        %v4905 = vrot.slane %v4903, 5
        %v4906 = vor.u32 %v4902, %v4905
        %v4907 = vrot.slane %v4906, 4
        %v4909 = vshll.u32 %v4581, 16
        %v4911 = vrot.slane %v4909, 5
        %v4912 = vsel %vm3114, %v4907, %v4911
        %v4914 = vshrl.u32 %v4550, 16
        %v4916 = vrot.slane %v4914, 4
        %v4917 = vshll.u32 %v4550, 16
        %v4919 = vrot.slane %v4917, 5
        %v4920 = vor.u32 %v4916, %v4919
        %v4921 = vrot.slane %v4920, 4
        %v4923 = vshll.u32 %v4582, 16
        %v4925 = vrot.slane %v4923, 5
        %v4926 = vsel %vm3114, %v4921, %v4925
        %v4928 = vshrl.u32 %v4551, 16
        %v4930 = vrot.slane %v4928, 4
        %v4931 = vshll.u32 %v4551, 16
        %v4933 = vrot.slane %v4931, 5
        %v4934 = vor.u32 %v4930, %v4933
        %v4935 = vrot.slane %v4934, 4
        %v4937 = vshll.u32 %v4583, 16
        %v4939 = vrot.slane %v4937, 5
        %v4940 = vsel %vm3114, %v4935, %v4939
        %v4942 = vshrl.u32 %v4552, 16
        %v4944 = vrot.slane %v4942, 4
        %v4945 = vshll.u32 %v4552, 16
        %v4947 = vrot.slane %v4945, 5
        %v4948 = vor.u32 %v4944, %v4947
        %v4949 = vrot.slane %v4948, 4
        %v4951 = vshll.u32 %v4584, 16
        %v4953 = vrot.slane %v4951, 5
        %v4954 = vsel %vm3114, %v4949, %v4953
        %v4956 = vshrl.u32 %v4553, 16
        %v4958 = vrot.slane %v4956, 4
        %v4959 = vshll.u32 %v4553, 16
        %v4961 = vrot.slane %v4959, 5
        %v4962 = vor.u32 %v4958, %v4961
        %v4963 = vrot.slane %v4962, 4
        %v4965 = vshll.u32 %v4585, 16
        %v4967 = vrot.slane %v4965, 5
        %v4968 = vsel %vm3114, %v4963, %v4967
        %v4970 = vshrl.u32 %v4554, 16
        %v4972 = vrot.slane %v4970, 4
        %v4973 = vshll.u32 %v4554, 16
        %v4975 = vrot.slane %v4973, 5
        %v4976 = vor.u32 %v4972, %v4975
        %v4977 = vrot.slane %v4976, 4
        %v4979 = vshll.u32 %v4586, 16
        %v4981 = vrot.slane %v4979, 5
        %v4982 = vsel %vm3114, %v4977, %v4981
        %v4984 = vshrl.u32 %v4555, 16
        %v4986 = vrot.slane %v4984, 4
        %v4987 = vshll.u32 %v4555, 16
        %v4989 = vrot.slane %v4987, 5
        %v4990 = vor.u32 %v4986, %v4989
        %v4991 = vrot.slane %v4990, 4
        %v4993 = vshll.u32 %v4587, 16
        %v4995 = vrot.slane %v4993, 5
        %v4996 = vsel %vm3114, %v4991, %v4995
        %v4998 = vshrl.u32 %v4556, 16
        %v5000 = vrot.slane %v4998, 4
        %v5001 = vshll.u32 %v4556, 16
        %v5003 = vrot.slane %v5001, 5
        %v5004 = vor.u32 %v5000, %v5003
        %v5005 = vrot.slane %v5004, 4
        %v5007 = vshll.u32 %v4588, 16
        %v5009 = vrot.slane %v5007, 5
        %v5010 = vsel %vm3114, %v5005, %v5009
        %v5012 = vshrl.u32 %v4557, 16
        %v5014 = vrot.slane %v5012, 4
        %v5015 = vshll.u32 %v4557, 16
        %v5017 = vrot.slane %v5015, 5
        %v5018 = vor.u32 %v5014, %v5017
        %v5019 = vrot.slane %v5018, 4
        %v5021 = vshll.u32 %v4589, 16
        %v5023 = vrot.slane %v5021, 5
        %v5024 = vsel %vm3114, %v5019, %v5023
        %v5026 = vshrl.u32 %v4558, 16
        %v5028 = vrot.slane %v5026, 4
        %v5029 = vshll.u32 %v4558, 16
        %v5031 = vrot.slane %v5029, 5
        %v5032 = vor.u32 %v5028, %v5031
        %v5033 = vrot.slane %v5032, 4
        %v5035 = vshll.u32 %v4590, 16
        %v5037 = vrot.slane %v5035, 5
        %v5038 = vsel %vm3114, %v5033, %v5037
        %v5039 = vld [vmem:[%s4526] sm:$0xe]
        %v5040 = vld [vmem:[%s4526 + $0x8] sm:$0xe]
        %v5041 = vld [vmem:[%s4526 + $0x10] sm:$0xe]
        %v5042 = vld [vmem:[%s4526 + $0x18] sm:$0xe]
        %v5043 = vld [vmem:[%s4526 + $0x20] sm:$0xe]
        %v5044 = vld [vmem:[%s4526 + $0x28] sm:$0xe]
        %v5045 = vld [vmem:[%s4526 + $0x30] sm:$0xe]
        %v5046 = vld [vmem:[%s4526 + $0x38] sm:$0xe]
        %v5047 = vld [vmem:[%s4526 + $0x50] sm:$0xe]
        %v5048 = vld [vmem:[%s4526 + $0x58] sm:$0xe]
        %v5049 = vld [vmem:[%s4526 + $0x60] sm:$0xe]
        %v5050 = vld [vmem:[%s4526 + $0x68] sm:$0xe]
        %v5051 = vld [vmem:[%s4526 + $0x70] sm:$0xe]
        %v5052 = vld [vmem:[%s4526 + $0x78] sm:$0xe]
        %v5053 = vld [vmem:[%s4526 + $0x80] sm:$0xe]
        %v5054 = vld [vmem:[%s4526 + $0x88] sm:$0xe]
        %v5055 = vld [vmem:[%s4526 + $0xa0] sm:$0xe]
        %v5056 = vld [vmem:[%s4526 + $0xa8] sm:$0xe]
        %v5057 = vld [vmem:[%s4526 + $0xb0] sm:$0xe]
        %v5058 = vld [vmem:[%s4526 + $0xb8] sm:$0xe]
        %v5059 = vld [vmem:[%s4526 + $0xc0] sm:$0xe]
        %v5060 = vld [vmem:[%s4526 + $0xc8] sm:$0xe]
        %v5061 = vld [vmem:[%s4526 + $0xd0] sm:$0xe]
        %v5062 = vld [vmem:[%s4526 + $0xd8] sm:$0xe]
        %v5063 = vld [vmem:[%s4526 + $0xf0] sm:$0xe]
        %v5064 = vld [vmem:[%s4526 + $0xf8] sm:$0xe]
        %v5065 = vld [vmem:[%s4526 + $0x100] sm:$0xe]
        %v5066 = vld [vmem:[%s4526 + $0x108] sm:$0xe]
        %v5067 = vld [vmem:[%s4526 + $0x110] sm:$0xe]
        %v5068 = vld [vmem:[%s4526 + $0x118] sm:$0xe]
        %v5069 = vld [vmem:[%s4526 + $0x120] sm:$0xe]
        %v5070 = vld [vmem:[%s4526 + $0x128] sm:$0xe]
        %v5135 = vrot.slane %v5039, 5
        %v5136 = vrot.slane %v5135, 4
        %v5137 = vrot.slane %v4559, 5
        %v5138 = vsel %vm3661, %v5136, %v5137
        %v5139 = vrot.slane %v5040, 5
        %v5140 = vrot.slane %v5139, 4
        %v5141 = vrot.slane %v4560, 5
        %v5142 = vsel %vm3661, %v5140, %v5141
        %v5143 = vrot.slane %v5041, 5
        %v5144 = vrot.slane %v5143, 4
        %v5145 = vrot.slane %v4561, 5
        %v5146 = vsel %vm3661, %v5144, %v5145
        %v5147 = vrot.slane %v5042, 5
        %v5148 = vrot.slane %v5147, 4
        %v5149 = vrot.slane %v4562, 5
        %v5150 = vsel %vm3661, %v5148, %v5149
        %v5151 = vrot.slane %v5043, 5
        %v5152 = vrot.slane %v5151, 4
        %v5153 = vrot.slane %v4563, 5
        %v5154 = vsel %vm3661, %v5152, %v5153
        %v5155 = vrot.slane %v5044, 5
        %v5156 = vrot.slane %v5155, 4
        %v5157 = vrot.slane %v4564, 5
        %v5158 = vsel %vm3661, %v5156, %v5157
        %v5159 = vrot.slane %v5045, 5
        %v5160 = vrot.slane %v5159, 4
        %v5161 = vrot.slane %v4565, 5
        %v5162 = vsel %vm3661, %v5160, %v5161
        %v5163 = vrot.slane %v5046, 5
        %v5164 = vrot.slane %v5163, 4
        %v5165 = vrot.slane %v4566, 5
        %v5166 = vsel %vm3661, %v5164, %v5165
        %v5167 = vrot.slane %v5047, 5
        %v5168 = vrot.slane %v5167, 4
        %v5169 = vrot.slane %v4567, 5
        %v5170 = vsel %vm3661, %v5168, %v5169
        %v5171 = vrot.slane %v5048, 5
        %v5172 = vrot.slane %v5171, 4
        %v5173 = vrot.slane %v4568, 5
        %v5174 = vsel %vm3661, %v5172, %v5173
        %v5175 = vrot.slane %v5049, 5
        %v5176 = vrot.slane %v5175, 4
        %v5177 = vrot.slane %v4569, 5
        %v5178 = vsel %vm3661, %v5176, %v5177
        %v5179 = vrot.slane %v5050, 5
        %v5180 = vrot.slane %v5179, 4
        %v5181 = vrot.slane %v4570, 5
        %v5182 = vsel %vm3661, %v5180, %v5181
        %v5183 = vrot.slane %v5051, 5
        %v5184 = vrot.slane %v5183, 4
        %v5185 = vrot.slane %v4571, 5
        %v5186 = vsel %vm3661, %v5184, %v5185
        %v5187 = vrot.slane %v5052, 5
        %v5188 = vrot.slane %v5187, 4
        %v5189 = vrot.slane %v4572, 5
        %v5190 = vsel %vm3661, %v5188, %v5189
        %v5191 = vrot.slane %v5053, 5
        %v5192 = vrot.slane %v5191, 4
        %v5193 = vrot.slane %v4573, 5
        %v5194 = vsel %vm3661, %v5192, %v5193
        %v5195 = vrot.slane %v5054, 5
        %v5196 = vrot.slane %v5195, 4
        %v5197 = vrot.slane %v4574, 5
        %v5198 = vsel %vm3661, %v5196, %v5197
        %v5199 = vrot.slane %v5055, 5
        %v5200 = vrot.slane %v5199, 4
        %v5201 = vrot.slane %v4575, 5
        %v5202 = vsel %vm3661, %v5200, %v5201
        %v5203 = vrot.slane %v5056, 5
        %v5204 = vrot.slane %v5203, 4
        %v5205 = vrot.slane %v4576, 5
        %v5206 = vsel %vm3661, %v5204, %v5205
        %v5207 = vrot.slane %v5057, 5
        %v5208 = vrot.slane %v5207, 4
        %v5209 = vrot.slane %v4577, 5
        %v5210 = vsel %vm3661, %v5208, %v5209
        %v5211 = vrot.slane %v5058, 5
        %v5212 = vrot.slane %v5211, 4
        %v5213 = vrot.slane %v4578, 5
        %v5214 = vsel %vm3661, %v5212, %v5213
        %v5215 = vrot.slane %v5059, 5
        %v5216 = vrot.slane %v5215, 4
        %v5217 = vrot.slane %v4579, 5
        %v5218 = vsel %vm3661, %v5216, %v5217
        %v5219 = vrot.slane %v5060, 5
        %v5220 = vrot.slane %v5219, 4
        %v5221 = vrot.slane %v4580, 5
        %v5222 = vsel %vm3661, %v5220, %v5221
        %v5223 = vrot.slane %v5061, 5
        %v5224 = vrot.slane %v5223, 4
        %v5225 = vrot.slane %v4581, 5
        %v5226 = vsel %vm3661, %v5224, %v5225
        %v5227 = vrot.slane %v5062, 5
        %v5228 = vrot.slane %v5227, 4
        %v5229 = vrot.slane %v4582, 5
        %v5230 = vsel %vm3661, %v5228, %v5229
        %v5231 = vrot.slane %v5063, 5
        %v5232 = vrot.slane %v5231, 4
        %v5233 = vrot.slane %v4583, 5
        %v5234 = vsel %vm3661, %v5232, %v5233
        %v5235 = vrot.slane %v5064, 5
        %v5236 = vrot.slane %v5235, 4
        %v5237 = vrot.slane %v4584, 5
        %v5238 = vsel %vm3661, %v5236, %v5237
        %v5239 = vrot.slane %v5065, 5
        %v5240 = vrot.slane %v5239, 4
        %v5241 = vrot.slane %v4585, 5
        %v5242 = vsel %vm3661, %v5240, %v5241
        %v5243 = vrot.slane %v5066, 5
        %v5244 = vrot.slane %v5243, 4
        %v5245 = vrot.slane %v4586, 5
        %v5246 = vsel %vm3661, %v5244, %v5245
        %v5247 = vrot.slane %v5067, 5
        %v5248 = vrot.slane %v5247, 4
        %v5249 = vrot.slane %v4587, 5
        %v5250 = vsel %vm3661, %v5248, %v5249
        %v5251 = vrot.slane %v5068, 5
        %v5252 = vrot.slane %v5251, 4
        %v5253 = vrot.slane %v4588, 5
        %v5254 = vsel %vm3661, %v5252, %v5253
        %v5255 = vrot.slane %v5069, 5
        %v5256 = vrot.slane %v5255, 4
        %v5257 = vrot.slane %v4589, 5
        %v5258 = vsel %vm3661, %v5256, %v5257
        %v5259 = vrot.slane %v5070, 5
        %v5260 = vrot.slane %v5259, 4
        %v5261 = vrot.slane %v4590, 5
        %v5262 = vsel %vm3661, %v5260, %v5261
        %v5295 = vunpack.c.l.b16 %v3048
        %v5296 = vunpack.c.l.b16 %v3049
        %v5297 = vunpack.c.l.b16 %v3050
        %v5298 = vunpack.c.l.b16 %v3051
        %v5299 = vunpack.c.l.b16 %v3052
        %v5300 = vunpack.c.l.b16 %v3053
        %v5301 = vunpack.c.l.b16 %v3054
        %v5302 = vunpack.c.l.b16 %v3055
        %v5303 = vunpack.c.l.b16 %v3056
        %v5304 = vunpack.c.l.b16 %v3057
        %v5305 = vunpack.c.l.b16 %v3058
        %v5306 = vunpack.c.l.b16 %v3059
        %v5307 = vunpack.c.l.b16 %v3060
        %v5308 = vunpack.c.l.b16 %v3061
        %v5309 = vunpack.c.l.b16 %v3062
        %v5310 = vunpack.c.l.b16 %v3063
        %v5311 = vunpack.c.l.b16 %v3064
        %v5312 = vunpack.c.l.b16 %v3065
        %v5313 = vunpack.c.l.b16 %v3066
        %v5314 = vunpack.c.l.b16 %v3067
        %v5315 = vunpack.c.l.b16 %v3068
        %v5316 = vunpack.c.l.b16 %v3069
        %v5317 = vunpack.c.l.b16 %v3070
        %v5318 = vunpack.c.l.b16 %v3071
        %v5319 = vunpack.c.l.b16 %v3072
        %v5320 = vunpack.c.l.b16 %v3073
        %v5321 = vunpack.c.l.b16 %v3074
        %v5322 = vunpack.c.l.b16 %v3075
        %v5323 = vunpack.c.l.b16 %v3076
        %v5324 = vunpack.c.l.b16 %v3077
        %v5325 = vunpack.c.l.b16 %v3078
        %v5326 = vunpack.c.l.b16 %v3079
        %v5327 = vpack.c.b16 %v5296, %v5295
        %v5328 = vpack.c.b16 %v5298, %v5297
        %v5329 = vpack.c.b16 %v5300, %v5299
        %v5330 = vpack.c.b16 %v5302, %v5301
        %v5331 = vpack.c.b16 %v5304, %v5303
        %v5332 = vpack.c.b16 %v5306, %v5305
        %v5333 = vpack.c.b16 %v5308, %v5307
        %v5334 = vpack.c.b16 %v5310, %v5309
        %v5335 = vpack.c.b16 %v5312, %v5311
        %v5336 = vpack.c.b16 %v5314, %v5313
        %v5337 = vpack.c.b16 %v5316, %v5315
        %v5338 = vpack.c.b16 %v5318, %v5317
        %v5339 = vpack.c.b16 %v5320, %v5319
        %v5340 = vpack.c.b16 %v5322, %v5321
        %v5341 = vpack.c.b16 %v5324, %v5323
        %v5342 = vpack.c.b16 %v5326, %v5325
        %v5359 = vunpack.c.l.b16 %v3128
        %v5360 = vunpack.c.l.b16 %v3142
        %v5361 = vunpack.c.l.b16 %v3156
        %v5362 = vunpack.c.l.b16 %v3170
        %v5363 = vunpack.c.l.b16 %v3184
        %v5364 = vunpack.c.l.b16 %v3198
        %v5365 = vunpack.c.l.b16 %v3212
        %v5366 = vunpack.c.l.b16 %v3226
        %v5367 = vunpack.c.l.b16 %v3240
        %v5368 = vunpack.c.l.b16 %v3254
        %v5369 = vunpack.c.l.b16 %v3268
        %v5370 = vunpack.c.l.b16 %v3282
        %v5371 = vunpack.c.l.b16 %v3296
        %v5372 = vunpack.c.l.b16 %v3310
        %v5373 = vunpack.c.l.b16 %v3324
        %v5374 = vunpack.c.l.b16 %v3338
        %v5375 = vunpack.c.l.b16 %v3352
        %v5376 = vunpack.c.l.b16 %v3366
        %v5377 = vunpack.c.l.b16 %v3380
        %v5378 = vunpack.c.l.b16 %v3394
        %v5379 = vunpack.c.l.b16 %v3408
        %v5380 = vunpack.c.l.b16 %v3422
        %v5381 = vunpack.c.l.b16 %v3436
        %v5382 = vunpack.c.l.b16 %v3450
        %v5383 = vunpack.c.l.b16 %v3464
        %v5384 = vunpack.c.l.b16 %v3478
        %v5385 = vunpack.c.l.b16 %v3492
        %v5386 = vunpack.c.l.b16 %v3506
        %v5387 = vunpack.c.l.b16 %v3520
        %v5388 = vunpack.c.l.b16 %v3534
        %v5389 = vunpack.c.l.b16 %v3548
        %v5390 = vunpack.c.l.b16 %v3562
        %v5391 = vpack.c.b16 %v5360, %v5359
        %v5392 = vpack.c.b16 %v5362, %v5361
        %v5393 = vpack.c.b16 %v5364, %v5363
        %v5394 = vpack.c.b16 %v5366, %v5365
        %v5395 = vpack.c.b16 %v5368, %v5367
        %v5396 = vpack.c.b16 %v5370, %v5369
        %v5397 = vpack.c.b16 %v5372, %v5371
        %v5398 = vpack.c.b16 %v5374, %v5373
        %v5399 = vpack.c.b16 %v5376, %v5375
        %v5400 = vpack.c.b16 %v5378, %v5377
        %v5401 = vpack.c.b16 %v5380, %v5379
        %v5402 = vpack.c.b16 %v5382, %v5381
        %v5403 = vpack.c.b16 %v5384, %v5383
        %v5404 = vpack.c.b16 %v5386, %v5385
        %v5405 = vpack.c.b16 %v5388, %v5387
        %v5406 = vpack.c.b16 %v5390, %v5389
        %v5423 = vunpack.c.l.b16 %v3665
        %v5424 = vunpack.c.l.b16 %v3669
        %v5425 = vunpack.c.l.b16 %v3673
        %v5426 = vunpack.c.l.b16 %v3677
        %v5427 = vunpack.c.l.b16 %v3681
        %v5428 = vunpack.c.l.b16 %v3685
        %v5429 = vunpack.c.l.b16 %v3689
        %v5430 = vunpack.c.l.b16 %v3693
        %v5431 = vunpack.c.l.b16 %v3697
        %v5432 = vunpack.c.l.b16 %v3701
        %v5433 = vunpack.c.l.b16 %v3705
        %v5434 = vunpack.c.l.b16 %v3709
        %v5435 = vunpack.c.l.b16 %v3713
        %v5436 = vunpack.c.l.b16 %v3717
        %v5437 = vunpack.c.l.b16 %v3721
        %v5438 = vunpack.c.l.b16 %v3725
        %v5439 = vunpack.c.l.b16 %v3729
        %v5440 = vunpack.c.l.b16 %v3733
        %v5441 = vunpack.c.l.b16 %v3737
        %v5442 = vunpack.c.l.b16 %v3741
        %v5443 = vunpack.c.l.b16 %v3745
        %v5444 = vunpack.c.l.b16 %v3749
        %v5445 = vunpack.c.l.b16 %v3753
        %v5446 = vunpack.c.l.b16 %v3757
        %v5447 = vunpack.c.l.b16 %v3761
        %v5448 = vunpack.c.l.b16 %v3765
        %v5449 = vunpack.c.l.b16 %v3769
        %v5450 = vunpack.c.l.b16 %v3773
        %v5451 = vunpack.c.l.b16 %v3777
        %v5452 = vunpack.c.l.b16 %v3781
        %v5453 = vunpack.c.l.b16 %v3785
        %v5454 = vunpack.c.l.b16 %v3789
        %v5455 = vpack.c.b16 %v5424, %v5423
        %v5456 = vpack.c.b16 %v5426, %v5425
        %v5457 = vpack.c.b16 %v5428, %v5427
        %v5458 = vpack.c.b16 %v5430, %v5429
        %v5459 = vpack.c.b16 %v5432, %v5431
        %v5460 = vpack.c.b16 %v5434, %v5433
        %v5461 = vpack.c.b16 %v5436, %v5435
        %v5462 = vpack.c.b16 %v5438, %v5437
        %v5463 = vpack.c.b16 %v5440, %v5439
        %v5464 = vpack.c.b16 %v5442, %v5441
        %v5465 = vpack.c.b16 %v5444, %v5443
        %v5466 = vpack.c.b16 %v5446, %v5445
        %v5467 = vpack.c.b16 %v5448, %v5447
        %v5468 = vpack.c.b16 %v5450, %v5449
        %v5469 = vpack.c.b16 %v5452, %v5451
        %v5470 = vpack.c.b16 %v5454, %v5453
        %v5519 = vunpack.c.l.b16 %v3790
        %v5520 = vunpack.c.l.b16 %v3791
        %v5521 = vunpack.c.l.b16 %v3792
        %v5522 = vunpack.c.l.b16 %v3793
        %v5523 = vunpack.c.l.b16 %v3794
        %v5524 = vunpack.c.l.b16 %v3795
        %v5525 = vunpack.c.l.b16 %v3796
        %v5526 = vunpack.c.l.b16 %v3797
        %v5527 = vunpack.c.l.b16 %v3798
        %v5528 = vunpack.c.l.b16 %v3799
        %v5529 = vunpack.c.l.b16 %v3800
        %v5530 = vunpack.c.l.b16 %v3801
        %v5531 = vunpack.c.l.b16 %v3802
        %v5532 = vunpack.c.l.b16 %v3803
        %v5533 = vunpack.c.l.b16 %v3804
        %v5534 = vunpack.c.l.b16 %v3805
        %v5535 = vunpack.c.l.b16 %v3806
        %v5536 = vunpack.c.l.b16 %v3807
        %v5537 = vunpack.c.l.b16 %v3808
        %v5538 = vunpack.c.l.b16 %v3809
        %v5539 = vunpack.c.l.b16 %v3810
        %v5540 = vunpack.c.l.b16 %v3811
        %v5541 = vunpack.c.l.b16 %v3812
        %v5542 = vunpack.c.l.b16 %v3813
        %v5543 = vunpack.c.l.b16 %v3814
        %v5544 = vunpack.c.l.b16 %v3815
        %v5545 = vunpack.c.l.b16 %v3816
        %v5546 = vunpack.c.l.b16 %v3817
        %v5547 = vunpack.c.l.b16 %v3818
        %v5548 = vunpack.c.l.b16 %v3819
        %v5549 = vunpack.c.l.b16 %v3820
        %v5550 = vunpack.c.l.b16 %v3821
        %v5551 = vpack.c.b16 %v5520, %v5519
        %v5552 = vpack.c.b16 %v5522, %v5521
        %v5553 = vpack.c.b16 %v5524, %v5523
        %v5554 = vpack.c.b16 %v5526, %v5525
        %v5555 = vpack.c.b16 %v5528, %v5527
        %v5556 = vpack.c.b16 %v5530, %v5529
        %v5557 = vpack.c.b16 %v5532, %v5531
        %v5558 = vpack.c.b16 %v5534, %v5533
        %v5559 = vpack.c.b16 %v5536, %v5535
        %v5560 = vpack.c.b16 %v5538, %v5537
        %v5561 = vpack.c.b16 %v5540, %v5539
        %v5562 = vpack.c.b16 %v5542, %v5541
        %v5563 = vpack.c.b16 %v5544, %v5543
        %v5564 = vpack.c.b16 %v5546, %v5545
        %v5565 = vpack.c.b16 %v5548, %v5547
        %v5566 = vpack.c.b16 %v5550, %v5549
        %v5583 = vunpack.c.l.b16 %v3867
        %v5584 = vunpack.c.l.b16 %v3881
        %v5585 = vunpack.c.l.b16 %v3895
        %v5586 = vunpack.c.l.b16 %v3909
        %v5587 = vunpack.c.l.b16 %v3923
        %v5588 = vunpack.c.l.b16 %v3937
        %v5589 = vunpack.c.l.b16 %v3951
        %v5590 = vunpack.c.l.b16 %v3965
        %v5591 = vunpack.c.l.b16 %v3979
        %v5592 = vunpack.c.l.b16 %v3993
        %v5593 = vunpack.c.l.b16 %v4007
        %v5594 = vunpack.c.l.b16 %v4021
        %v5595 = vunpack.c.l.b16 %v4035
        %v5596 = vunpack.c.l.b16 %v4049
        %v5597 = vunpack.c.l.b16 %v4063
        %v5598 = vunpack.c.l.b16 %v4077
        %v5599 = vunpack.c.l.b16 %v4091
        %v5600 = vunpack.c.l.b16 %v4105
        %v5601 = vunpack.c.l.b16 %v4119
        %v5602 = vunpack.c.l.b16 %v4133
        %v5603 = vunpack.c.l.b16 %v4147
        %v5604 = vunpack.c.l.b16 %v4161
        %v5605 = vunpack.c.l.b16 %v4175
        %v5606 = vunpack.c.l.b16 %v4189
        %v5607 = vunpack.c.l.b16 %v4203
        %v5608 = vunpack.c.l.b16 %v4217
        %v5609 = vunpack.c.l.b16 %v4231
        %v5610 = vunpack.c.l.b16 %v4245
        %v5611 = vunpack.c.l.b16 %v4259
        %v5612 = vunpack.c.l.b16 %v4273
        %v5613 = vunpack.c.l.b16 %v4287
        %v5614 = vunpack.c.l.b16 %v4301
        %v5615 = vpack.c.b16 %v5584, %v5583
        %v5616 = vpack.c.b16 %v5586, %v5585
        %v5617 = vpack.c.b16 %v5588, %v5587
        %v5618 = vpack.c.b16 %v5590, %v5589
        %v5619 = vpack.c.b16 %v5592, %v5591
        %v5620 = vpack.c.b16 %v5594, %v5593
        %v5621 = vpack.c.b16 %v5596, %v5595
        %v5622 = vpack.c.b16 %v5598, %v5597
        %v5623 = vpack.c.b16 %v5600, %v5599
        %v5624 = vpack.c.b16 %v5602, %v5601
        %v5625 = vpack.c.b16 %v5604, %v5603
        %v5626 = vpack.c.b16 %v5606, %v5605
        %v5627 = vpack.c.b16 %v5608, %v5607
        %v5628 = vpack.c.b16 %v5610, %v5609
        %v5629 = vpack.c.b16 %v5612, %v5611
        %v5630 = vpack.c.b16 %v5614, %v5613
        %v5647 = vunpack.c.l.b16 %v4401
        %v5648 = vunpack.c.l.b16 %v4405
        %v5649 = vunpack.c.l.b16 %v4409
        %v5650 = vunpack.c.l.b16 %v4413
        %v5651 = vunpack.c.l.b16 %v4417
        %v5652 = vunpack.c.l.b16 %v4421
        %v5653 = vunpack.c.l.b16 %v4425
        %v5654 = vunpack.c.l.b16 %v4429
        %v5655 = vunpack.c.l.b16 %v4433
        %v5656 = vunpack.c.l.b16 %v4437
        %v5657 = vunpack.c.l.b16 %v4441
        %v5658 = vunpack.c.l.b16 %v4445
        %v5659 = vunpack.c.l.b16 %v4449
        %v5660 = vunpack.c.l.b16 %v4453
        %v5661 = vunpack.c.l.b16 %v4457
        %v5662 = vunpack.c.l.b16 %v4461
        %v5663 = vunpack.c.l.b16 %v4465
        %v5664 = vunpack.c.l.b16 %v4469
        %v5665 = vunpack.c.l.b16 %v4473
        %v5666 = vunpack.c.l.b16 %v4477
        %v5667 = vunpack.c.l.b16 %v4481
        %v5668 = vunpack.c.l.b16 %v4485
        %v5669 = vunpack.c.l.b16 %v4489
        %v5670 = vunpack.c.l.b16 %v4493
        %v5671 = vunpack.c.l.b16 %v4497
        %v5672 = vunpack.c.l.b16 %v4501
        %v5673 = vunpack.c.l.b16 %v4505
        %v5674 = vunpack.c.l.b16 %v4509
        %v5675 = vunpack.c.l.b16 %v4513
        %v5676 = vunpack.c.l.b16 %v4517
        %v5677 = vunpack.c.l.b16 %v4521
        %v5678 = vunpack.c.l.b16 %v4525
        %v5679 = vpack.c.b16 %v5648, %v5647
        %v5680 = vpack.c.b16 %v5650, %v5649
        %v5681 = vpack.c.b16 %v5652, %v5651
        %v5682 = vpack.c.b16 %v5654, %v5653
        %v5683 = vpack.c.b16 %v5656, %v5655
        %v5684 = vpack.c.b16 %v5658, %v5657
        %v5685 = vpack.c.b16 %v5660, %v5659
        %v5686 = vpack.c.b16 %v5662, %v5661
        %v5687 = vpack.c.b16 %v5664, %v5663
        %v5688 = vpack.c.b16 %v5666, %v5665
        %v5689 = vpack.c.b16 %v5668, %v5667
        %v5690 = vpack.c.b16 %v5670, %v5669
        %v5691 = vpack.c.b16 %v5672, %v5671
        %v5692 = vpack.c.b16 %v5674, %v5673
        %v5693 = vpack.c.b16 %v5676, %v5675
        %v5694 = vpack.c.b16 %v5678, %v5677
        %v5743 = vunpack.c.l.b16 %v4527
        %v5744 = vunpack.c.l.b16 %v4528
        %v5745 = vunpack.c.l.b16 %v4529
        %v5746 = vunpack.c.l.b16 %v4530
        %v5747 = vunpack.c.l.b16 %v4531
        %v5748 = vunpack.c.l.b16 %v4532
        %v5749 = vunpack.c.l.b16 %v4533
        %v5750 = vunpack.c.l.b16 %v4534
        %v5751 = vunpack.c.l.b16 %v4535
        %v5752 = vunpack.c.l.b16 %v4536
        %v5753 = vunpack.c.l.b16 %v4537
        %v5754 = vunpack.c.l.b16 %v4538
        %v5755 = vunpack.c.l.b16 %v4539
        %v5756 = vunpack.c.l.b16 %v4540
        %v5757 = vunpack.c.l.b16 %v4541
        %v5758 = vunpack.c.l.b16 %v4542
        %v5759 = vunpack.c.l.b16 %v4543
        %v5760 = vunpack.c.l.b16 %v4544
        %v5761 = vunpack.c.l.b16 %v4545
        %v5762 = vunpack.c.l.b16 %v4546
        %v5763 = vunpack.c.l.b16 %v4547
        %v5764 = vunpack.c.l.b16 %v4548
        %v5765 = vunpack.c.l.b16 %v4549
        %v5766 = vunpack.c.l.b16 %v4550
        %v5767 = vunpack.c.l.b16 %v4551
        %v5768 = vunpack.c.l.b16 %v4552
        %v5769 = vunpack.c.l.b16 %v4553
        %v5770 = vunpack.c.l.b16 %v4554
        %v5771 = vunpack.c.l.b16 %v4555
        %v5772 = vunpack.c.l.b16 %v4556
        %v5773 = vunpack.c.l.b16 %v4557
        %v5774 = vunpack.c.l.b16 %v4558
        %v5775 = vpack.c.b16 %v5744, %v5743
        %v5776 = vpack.c.b16 %v5746, %v5745
        %v5777 = vpack.c.b16 %v5748, %v5747
        %v5778 = vpack.c.b16 %v5750, %v5749
        %v5779 = vpack.c.b16 %v5752, %v5751
        %v5780 = vpack.c.b16 %v5754, %v5753
        %v5781 = vpack.c.b16 %v5756, %v5755
        %v5782 = vpack.c.b16 %v5758, %v5757
        %v5783 = vpack.c.b16 %v5760, %v5759
        %v5784 = vpack.c.b16 %v5762, %v5761
        %v5785 = vpack.c.b16 %v5764, %v5763
        %v5786 = vpack.c.b16 %v5766, %v5765
        %v5787 = vpack.c.b16 %v5768, %v5767
        %v5788 = vpack.c.b16 %v5770, %v5769
        %v5789 = vpack.c.b16 %v5772, %v5771
        %v5790 = vpack.c.b16 %v5774, %v5773
        %v5807 = vunpack.c.l.b16 %v4604
        %v5808 = vunpack.c.l.b16 %v4618
        %v5809 = vunpack.c.l.b16 %v4632
        %v5810 = vunpack.c.l.b16 %v4646
        %v5811 = vunpack.c.l.b16 %v4660
        %v5812 = vunpack.c.l.b16 %v4674
        %v5813 = vunpack.c.l.b16 %v4688
        %v5814 = vunpack.c.l.b16 %v4702
        %v5815 = vunpack.c.l.b16 %v4716
        %v5816 = vunpack.c.l.b16 %v4730
        %v5817 = vunpack.c.l.b16 %v4744
        %v5818 = vunpack.c.l.b16 %v4758
        %v5819 = vunpack.c.l.b16 %v4772
        %v5820 = vunpack.c.l.b16 %v4786
        %v5821 = vunpack.c.l.b16 %v4800
        %v5822 = vunpack.c.l.b16 %v4814
        %v5823 = vunpack.c.l.b16 %v4828
        %v5824 = vunpack.c.l.b16 %v4842
        %v5825 = vunpack.c.l.b16 %v4856
        %v5826 = vunpack.c.l.b16 %v4870
        %v5827 = vunpack.c.l.b16 %v4884
        %v5828 = vunpack.c.l.b16 %v4898
        %v5829 = vunpack.c.l.b16 %v4912
        %v5830 = vunpack.c.l.b16 %v4926
        %v5831 = vunpack.c.l.b16 %v4940
        %v5832 = vunpack.c.l.b16 %v4954
        %v5833 = vunpack.c.l.b16 %v4968
        %v5834 = vunpack.c.l.b16 %v4982
        %v5835 = vunpack.c.l.b16 %v4996
        %v5836 = vunpack.c.l.b16 %v5010
        %v5837 = vunpack.c.l.b16 %v5024
        %v5838 = vunpack.c.l.b16 %v5038
        %v5839 = vpack.c.b16 %v5808, %v5807
        %v5840 = vpack.c.b16 %v5810, %v5809
        %v5841 = vpack.c.b16 %v5812, %v5811
        %v5842 = vpack.c.b16 %v5814, %v5813
        %v5843 = vpack.c.b16 %v5816, %v5815
        %v5844 = vpack.c.b16 %v5818, %v5817
        %v5845 = vpack.c.b16 %v5820, %v5819
        %v5846 = vpack.c.b16 %v5822, %v5821
        %v5847 = vpack.c.b16 %v5824, %v5823
        %v5848 = vpack.c.b16 %v5826, %v5825
        %v5849 = vpack.c.b16 %v5828, %v5827
        %v5850 = vpack.c.b16 %v5830, %v5829
        %v5851 = vpack.c.b16 %v5832, %v5831
        %v5852 = vpack.c.b16 %v5834, %v5833
        %v5853 = vpack.c.b16 %v5836, %v5835
        %v5854 = vpack.c.b16 %v5838, %v5837
        %v5871 = vunpack.c.l.b16 %v5138
        %v5872 = vunpack.c.l.b16 %v5142
        %v5873 = vunpack.c.l.b16 %v5146
        %v5874 = vunpack.c.l.b16 %v5150
        %v5875 = vunpack.c.l.b16 %v5154
        %v5876 = vunpack.c.l.b16 %v5158
        %v5877 = vunpack.c.l.b16 %v5162
        %v5878 = vunpack.c.l.b16 %v5166
        %v5879 = vunpack.c.l.b16 %v5170
        %v5880 = vunpack.c.l.b16 %v5174
        %v5881 = vunpack.c.l.b16 %v5178
        %v5882 = vunpack.c.l.b16 %v5182
        %v5883 = vunpack.c.l.b16 %v5186
        %v5884 = vunpack.c.l.b16 %v5190
        %v5885 = vunpack.c.l.b16 %v5194
        %v5886 = vunpack.c.l.b16 %v5198
        %v5887 = vunpack.c.l.b16 %v5202
        %v5888 = vunpack.c.l.b16 %v5206
        %v5889 = vunpack.c.l.b16 %v5210
        %v5890 = vunpack.c.l.b16 %v5214
        %v5891 = vunpack.c.l.b16 %v5218
        %v5892 = vunpack.c.l.b16 %v5222
        %v5893 = vunpack.c.l.b16 %v5226
        %v5894 = vunpack.c.l.b16 %v5230
        %v5895 = vunpack.c.l.b16 %v5234
        %v5896 = vunpack.c.l.b16 %v5238
        %v5897 = vunpack.c.l.b16 %v5242
        %v5898 = vunpack.c.l.b16 %v5246
        %v5899 = vunpack.c.l.b16 %v5250
        %v5900 = vunpack.c.l.b16 %v5254
        %v5901 = vunpack.c.l.b16 %v5258
        %v5902 = vunpack.c.l.b16 %v5262
        %v5903 = vpack.c.b16 %v5872, %v5871
        %v5904 = vpack.c.b16 %v5874, %v5873
        %v5905 = vpack.c.b16 %v5876, %v5875
        %v5906 = vpack.c.b16 %v5878, %v5877
        %v5907 = vpack.c.b16 %v5880, %v5879
        %v5908 = vpack.c.b16 %v5882, %v5881
        %v5909 = vpack.c.b16 %v5884, %v5883
        %v5910 = vpack.c.b16 %v5886, %v5885
        %v5911 = vpack.c.b16 %v5888, %v5887
        %v5912 = vpack.c.b16 %v5890, %v5889
        %v5913 = vpack.c.b16 %v5892, %v5891
        %v5914 = vpack.c.b16 %v5894, %v5893
        %v5915 = vpack.c.b16 %v5896, %v5895
        %v5916 = vpack.c.b16 %v5898, %v5897
        %v5917 = vpack.c.b16 %v5900, %v5899
        %v5918 = vpack.c.b16 %v5902, %v5901
        %v5935 = vld [vmem:[#allocation9] sm:$0xf]
        %v5936 = vld [vmem:[#allocation9 + $0x4] sm:$0xf]
        %v5937 = vld [vmem:[#allocation9 + $0x8] sm:$0xf]
        %v5938 = vld [vmem:[#allocation9 + $0xc] sm:$0xf]
        %v5939 = vld [vmem:[#allocation9 + $0x10] sm:$0xf]
        %v5940 = vld [vmem:[#allocation9 + $0x14] sm:$0xf]
        %v5941 = vld [vmem:[#allocation9 + $0x18] sm:$0xf]
        %v5942 = vld [vmem:[#allocation9 + $0x1c] sm:$0xf]
        %v5943 = vld [vmem:[#allocation9 + $0x20] sm:$0xf]
        %v5944 = vld [vmem:[#allocation9 + $0x24] sm:$0xf]
        %v5945 = vld [vmem:[#allocation9 + $0x28] sm:$0xf]
        %v5946 = vld [vmem:[#allocation9 + $0x2c] sm:$0xf]
        %v5947 = vld [vmem:[#allocation9 + $0x30] sm:$0xf]
        %v5948 = vld [vmem:[#allocation9 + $0x34] sm:$0xf]
        %v5949 = vld [vmem:[#allocation9 + $0x38] sm:$0xf]
        %v5950 = vld [vmem:[#allocation9 + $0x3c] sm:$0xf]
        %v5951 = vld [vmem:[#allocation9 + $0x40] sm:$0xf]
        %v5952 = vld [vmem:[#allocation9 + $0x44] sm:$0xf]
        %v5953 = vld [vmem:[#allocation9 + $0x48] sm:$0xf]
        %v5954 = vld [vmem:[#allocation9 + $0x4c] sm:$0xf]
        %v5955 = vld [vmem:[#allocation9 + $0x50] sm:$0xf]
        %v5956 = vld [vmem:[#allocation9 + $0x54] sm:$0xf]
        %v5957 = vld [vmem:[#allocation9 + $0x58] sm:$0xf]
        %v5958 = vld [vmem:[#allocation9 + $0x5c] sm:$0xf]
        %v5959 = vld [vmem:[#allocation9 + $0x60] sm:$0xf]
        %v5960 = vld [vmem:[#allocation9 + $0x64] sm:$0xf]
        %v5961 = vld [vmem:[#allocation9 + $0x68] sm:$0xf]
        %v5962 = vld [vmem:[#allocation9 + $0x6c] sm:$0xf]
        %v5963 = vld [vmem:[#allocation9 + $0x70] sm:$0xf]
        %v5964 = vld [vmem:[#allocation9 + $0x74] sm:$0xf]
        %v5965 = vld [vmem:[#allocation9 + $0x78] sm:$0xf]
        %v5966 = vld [vmem:[#allocation9 + $0x7c] sm:$0xf]
        %v5967 = vld [vmem:[#allocation9 + $0x80] sm:$0xf]
        %v5968 = vld [vmem:[#allocation9 + $0x84] sm:$0xf]
        %v5969 = vld [vmem:[#allocation9 + $0x88] sm:$0xf]
        %v5970 = vld [vmem:[#allocation9 + $0x8c] sm:$0xf]
        %v5971 = vld [vmem:[#allocation9 + $0x90] sm:$0xf]
        %v5972 = vld [vmem:[#allocation9 + $0x94] sm:$0xf]
        %v5973 = vld [vmem:[#allocation9 + $0x98] sm:$0xf]
        %v5974 = vld [vmem:[#allocation9 + $0x9c] sm:$0xf]
        %v5975 = vld [vmem:[#allocation9 + $0xa0] sm:$0xf]
        %v5976 = vld [vmem:[#allocation9 + $0xa4] sm:$0xf]
        %v5977 = vld [vmem:[#allocation9 + $0xa8] sm:$0xf]
        %v5978 = vld [vmem:[#allocation9 + $0xac] sm:$0xf]
        %v5979 = vld [vmem:[#allocation9 + $0xb0] sm:$0xf]
        %v5980 = vld [vmem:[#allocation9 + $0xb4] sm:$0xf]
        %v5981 = vld [vmem:[#allocation9 + $0xb8] sm:$0xf]
        %v5982 = vld [vmem:[#allocation9 + $0xbc] sm:$0xf]
        %v5983 = vld [vmem:[#allocation9 + $0xc0] sm:$0xf]
        %v5984 = vld [vmem:[#allocation9 + $0xc4] sm:$0xf]
        %v5985 = vld [vmem:[#allocation9 + $0xc8] sm:$0xf]
        %v5986 = vld [vmem:[#allocation9 + $0xcc] sm:$0xf]
        %v5987 = vld [vmem:[#allocation9 + $0xd0] sm:$0xf]
        %v5988 = vld [vmem:[#allocation9 + $0xd4] sm:$0xf]
        %v5989 = vld [vmem:[#allocation9 + $0xd8] sm:$0xf]
        %v5990 = vld [vmem:[#allocation9 + $0xdc] sm:$0xf]
        %v5991 = vld [vmem:[#allocation9 + $0xe0] sm:$0xf]
        %v5992 = vld [vmem:[#allocation9 + $0xe4] sm:$0xf]
        %v5993 = vld [vmem:[#allocation9 + $0xe8] sm:$0xf]
        %v5994 = vld [vmem:[#allocation9 + $0xec] sm:$0xf]
        %v5995 = vld [vmem:[#allocation9 + $0xf0] sm:$0xf]
        %v5996 = vld [vmem:[#allocation9 + $0xf4] sm:$0xf]
        %v5997 = vld [vmem:[#allocation9 + $0xf8] sm:$0xf]
        %v5998 = vld [vmem:[#allocation9 + $0xfc] sm:$0xf]
        %v5999 = vld [vmem:[#allocation9 + $0x100] sm:$0xf]
        %v6000 = vld [vmem:[#allocation9 + $0x104] sm:$0xf]
        %v6001 = vld [vmem:[#allocation9 + $0x108] sm:$0xf]
        %v6002 = vld [vmem:[#allocation9 + $0x10c] sm:$0xf]
        %v6003 = vld [vmem:[#allocation9 + $0x110] sm:$0xf]
        %v6004 = vld [vmem:[#allocation9 + $0x114] sm:$0xf]
        %v6005 = vld [vmem:[#allocation9 + $0x118] sm:$0xf]
        %v6006 = vld [vmem:[#allocation9 + $0x11c] sm:$0xf]
        %v6007 = vld [vmem:[#allocation9 + $0x120] sm:$0xf]
        %v6008 = vld [vmem:[#allocation9 + $0x124] sm:$0xf]
        %v6009 = vld [vmem:[#allocation9 + $0x128] sm:$0xf]
        %v6010 = vld [vmem:[#allocation9 + $0x12c] sm:$0xf]
        %v6011 = vld [vmem:[#allocation9 + $0x130] sm:$0xf]
        %v6012 = vld [vmem:[#allocation9 + $0x134] sm:$0xf]
        %v6013 = vld [vmem:[#allocation9 + $0x138] sm:$0xf]
        %v6014 = vld [vmem:[#allocation9 + $0x13c] sm:$0xf]
        %v6015 = vld [vmem:[#allocation9 + $0x140] sm:$0xf]
        %v6016 = vld [vmem:[#allocation9 + $0x144] sm:$0xf]
        %v6017 = vld [vmem:[#allocation9 + $0x148] sm:$0xf]
        %v6018 = vld [vmem:[#allocation9 + $0x14c] sm:$0xf]
        %v6019 = vld [vmem:[#allocation9 + $0x150] sm:$0xf]
        %v6020 = vld [vmem:[#allocation9 + $0x154] sm:$0xf]
        %v6021 = vld [vmem:[#allocation9 + $0x158] sm:$0xf]
        %v6022 = vld [vmem:[#allocation9 + $0x15c] sm:$0xf]
        %v6023 = vld [vmem:[#allocation9 + $0x160] sm:$0xf]
        %v6024 = vld [vmem:[#allocation9 + $0x164] sm:$0xf]
        %v6025 = vld [vmem:[#allocation9 + $0x168] sm:$0xf]
        %v6026 = vld [vmem:[#allocation9 + $0x16c] sm:$0xf]
        %v6027 = vld [vmem:[#allocation9 + $0x170] sm:$0xf]
        %v6028 = vld [vmem:[#allocation9 + $0x174] sm:$0xf]
        %v6029 = vld [vmem:[#allocation9 + $0x178] sm:$0xf]
        %v6030 = vld [vmem:[#allocation9 + $0x17c] sm:$0xf]
        %v6031 = vld [vmem:[#allocation9 + $0x180] sm:$0xf]
        %v6032 = vld [vmem:[#allocation9 + $0x184] sm:$0xf]
        %v6033 = vld [vmem:[#allocation9 + $0x188] sm:$0xf]
        %v6034 = vld [vmem:[#allocation9 + $0x18c] sm:$0xf]
        %v6035 = vld [vmem:[#allocation9 + $0x190] sm:$0xf]
        %v6036 = vld [vmem:[#allocation9 + $0x194] sm:$0xf]
        %v6037 = vld [vmem:[#allocation9 + $0x198] sm:$0xf]
        %v6038 = vld [vmem:[#allocation9 + $0x19c] sm:$0xf]
        %v6039 = vld [vmem:[#allocation9 + $0x1a0] sm:$0xf]
        %v6040 = vld [vmem:[#allocation9 + $0x1a4] sm:$0xf]
        %v6041 = vld [vmem:[#allocation9 + $0x1a8] sm:$0xf]
        %v6042 = vld [vmem:[#allocation9 + $0x1ac] sm:$0xf]
        %v6043 = vld [vmem:[#allocation9 + $0x1b0] sm:$0xf]
        %v6044 = vld [vmem:[#allocation9 + $0x1b4] sm:$0xf]
        %v6045 = vld [vmem:[#allocation9 + $0x1b8] sm:$0xf]
        %v6046 = vld [vmem:[#allocation9 + $0x1bc] sm:$0xf]
        %v6047 = vld [vmem:[#allocation9 + $0x1c0] sm:$0xf]
        %v6048 = vld [vmem:[#allocation9 + $0x1c4] sm:$0xf]
        %v6049 = vld [vmem:[#allocation9 + $0x1c8] sm:$0xf]
        %v6050 = vld [vmem:[#allocation9 + $0x1cc] sm:$0xf]
        %v6051 = vld [vmem:[#allocation9 + $0x1d0] sm:$0xf]
        %v6052 = vld [vmem:[#allocation9 + $0x1d4] sm:$0xf]
        %v6053 = vld [vmem:[#allocation9 + $0x1d8] sm:$0xf]
        %v6054 = vld [vmem:[#allocation9 + $0x1dc] sm:$0xf]
        %v6055 = vld [vmem:[#allocation9 + $0x1e0] sm:$0xf]
        %v6056 = vld [vmem:[#allocation9 + $0x1e4] sm:$0xf]
        %v6057 = vld [vmem:[#allocation9 + $0x1e8] sm:$0xf]
        %v6058 = vld [vmem:[#allocation9 + $0x1ec] sm:$0xf]
        %v6059 = vld [vmem:[#allocation9 + $0x1f0] sm:$0xf]
        %v6060 = vld [vmem:[#allocation9 + $0x1f4] sm:$0xf]
        %v6061 = vld [vmem:[#allocation9 + $0x1f8] sm:$0xf]
        %v6062 = vld [vmem:[#allocation9 + $0x1fc] sm:$0xf]
        %v6063 = vld [vmem:[#allocation9 + $0x200] sm:$0xf]
        %v6064 = vld [vmem:[#allocation9 + $0x204] sm:$0xf]
        %v6065 = vld [vmem:[#allocation9 + $0x208] sm:$0xf]
        %v6066 = vld [vmem:[#allocation9 + $0x20c] sm:$0xf]
        %v6067 = vld [vmem:[#allocation9 + $0x210] sm:$0xf]
        %v6068 = vld [vmem:[#allocation9 + $0x214] sm:$0xf]
        %v6069 = vld [vmem:[#allocation9 + $0x218] sm:$0xf]
        %v6070 = vld [vmem:[#allocation9 + $0x21c] sm:$0xf]
        %v6071 = vld [vmem:[#allocation9 + $0x220] sm:$0xf]
        %v6072 = vld [vmem:[#allocation9 + $0x224] sm:$0xf]
        %v6073 = vld [vmem:[#allocation9 + $0x228] sm:$0xf]
        %v6074 = vld [vmem:[#allocation9 + $0x22c] sm:$0xf]
        %v6075 = vld [vmem:[#allocation9 + $0x230] sm:$0xf]
        %v6076 = vld [vmem:[#allocation9 + $0x234] sm:$0xf]
        %v6077 = vld [vmem:[#allocation9 + $0x238] sm:$0xf]
        %v6078 = vld [vmem:[#allocation9 + $0x23c] sm:$0xf]
        %v6223 = vunpack.c.l.b16 %v5935
        %v6224 = vunpack.c.l.b16 %v5936
        %v6225 = vunpack.c.l.b16 %v5937
        %v6226 = vunpack.c.l.b16 %v5938
        %v6227 = vunpack.c.l.b16 %v5939
        %v6228 = vunpack.c.l.b16 %v5940
        %v6229 = vunpack.c.l.b16 %v5941
        %v6230 = vunpack.c.l.b16 %v5942
        %v6231 = vunpack.c.l.b16 %v5943
        %v6232 = vunpack.c.l.b16 %v5944
        %v6233 = vunpack.c.l.b16 %v5945
        %v6234 = vunpack.c.l.b16 %v5946
        %v6235 = vunpack.c.l.b16 %v5947
        %v6236 = vunpack.c.l.b16 %v5948
        %v6237 = vunpack.c.l.b16 %v5949
        %v6238 = vunpack.c.l.b16 %v5950
        %v6239 = vunpack.c.l.b16 %v5951
        %v6240 = vunpack.c.l.b16 %v5952
        %v6241 = vunpack.c.l.b16 %v5953
        %v6242 = vunpack.c.l.b16 %v5954
        %v6243 = vunpack.c.l.b16 %v5955
        %v6244 = vunpack.c.l.b16 %v5956
        %v6245 = vunpack.c.l.b16 %v5957
        %v6246 = vunpack.c.l.b16 %v5958
        %v6247 = vunpack.c.l.b16 %v5959
        %v6248 = vunpack.c.l.b16 %v5960
        %v6249 = vunpack.c.l.b16 %v5961
        %v6250 = vunpack.c.l.b16 %v5962
        %v6251 = vunpack.c.l.b16 %v5963
        %v6252 = vunpack.c.l.b16 %v5964
        %v6253 = vunpack.c.l.b16 %v5965
        %v6254 = vunpack.c.l.b16 %v5966
        %v6255 = vunpack.c.l.b16 %v5967
        %v6256 = vunpack.c.l.b16 %v5968
        %v6257 = vunpack.c.l.b16 %v5969
        %v6258 = vunpack.c.l.b16 %v5970
        %v6259 = vunpack.c.l.b16 %v5971
        %v6260 = vunpack.c.l.b16 %v5972
        %v6261 = vunpack.c.l.b16 %v5973
        %v6262 = vunpack.c.l.b16 %v5974
        %v6263 = vunpack.c.l.b16 %v5975
        %v6264 = vunpack.c.l.b16 %v5976
        %v6265 = vunpack.c.l.b16 %v5977
        %v6266 = vunpack.c.l.b16 %v5978
        %v6267 = vunpack.c.l.b16 %v5979
        %v6268 = vunpack.c.l.b16 %v5980
        %v6269 = vunpack.c.l.b16 %v5981
        %v6270 = vunpack.c.l.b16 %v5982
        %v6271 = vunpack.c.l.b16 %v5983
        %v6272 = vunpack.c.l.b16 %v5984
        %v6273 = vunpack.c.l.b16 %v5985
        %v6274 = vunpack.c.l.b16 %v5986
        %v6275 = vunpack.c.l.b16 %v5987
        %v6276 = vunpack.c.l.b16 %v5988
        %v6277 = vunpack.c.l.b16 %v5989
        %v6278 = vunpack.c.l.b16 %v5990
        %v6279 = vunpack.c.l.b16 %v5991
        %v6280 = vunpack.c.l.b16 %v5992
        %v6281 = vunpack.c.l.b16 %v5993
        %v6282 = vunpack.c.l.b16 %v5994
        %v6283 = vunpack.c.l.b16 %v5995
        %v6284 = vunpack.c.l.b16 %v5996
        %v6285 = vunpack.c.l.b16 %v5997
        %v6286 = vunpack.c.l.b16 %v5998
        %v6287 = vunpack.c.l.b16 %v5999
        %v6288 = vunpack.c.l.b16 %v6000
        %v6289 = vunpack.c.l.b16 %v6001
        %v6290 = vunpack.c.l.b16 %v6002
        %v6291 = vunpack.c.l.b16 %v6003
        %v6292 = vunpack.c.l.b16 %v6004
        %v6293 = vunpack.c.l.b16 %v6005
        %v6294 = vunpack.c.l.b16 %v6006
        %v6295 = vunpack.c.l.b16 %v6007
        %v6296 = vunpack.c.l.b16 %v6008
        %v6297 = vunpack.c.l.b16 %v6009
        %v6298 = vunpack.c.l.b16 %v6010
        %v6299 = vunpack.c.l.b16 %v6011
        %v6300 = vunpack.c.l.b16 %v6012
        %v6301 = vunpack.c.l.b16 %v6013
        %v6302 = vunpack.c.l.b16 %v6014
        %v6303 = vunpack.c.l.b16 %v6015
        %v6304 = vunpack.c.l.b16 %v6016
        %v6305 = vunpack.c.l.b16 %v6017
        %v6306 = vunpack.c.l.b16 %v6018
        %v6307 = vunpack.c.l.b16 %v6019
        %v6308 = vunpack.c.l.b16 %v6020
        %v6309 = vunpack.c.l.b16 %v6021
        %v6310 = vunpack.c.l.b16 %v6022
        %v6311 = vunpack.c.l.b16 %v6023
        %v6312 = vunpack.c.l.b16 %v6024
        %v6313 = vunpack.c.l.b16 %v6025
        %v6314 = vunpack.c.l.b16 %v6026
        %v6315 = vunpack.c.l.b16 %v6027
        %v6316 = vunpack.c.l.b16 %v6028
        %v6317 = vunpack.c.l.b16 %v6029
        %v6318 = vunpack.c.l.b16 %v6030
        %v6319 = vunpack.c.l.b16 %v6031
        %v6320 = vunpack.c.l.b16 %v6032
        %v6321 = vunpack.c.l.b16 %v6033
        %v6322 = vunpack.c.l.b16 %v6034
        %v6323 = vunpack.c.l.b16 %v6035
        %v6324 = vunpack.c.l.b16 %v6036
        %v6325 = vunpack.c.l.b16 %v6037
        %v6326 = vunpack.c.l.b16 %v6038
        %v6327 = vunpack.c.l.b16 %v6039
        %v6328 = vunpack.c.l.b16 %v6040
        %v6329 = vunpack.c.l.b16 %v6041
        %v6330 = vunpack.c.l.b16 %v6042
        %v6331 = vunpack.c.l.b16 %v6043
        %v6332 = vunpack.c.l.b16 %v6044
        %v6333 = vunpack.c.l.b16 %v6045
        %v6334 = vunpack.c.l.b16 %v6046
        %v6335 = vunpack.c.l.b16 %v6047
        %v6336 = vunpack.c.l.b16 %v6048
        %v6337 = vunpack.c.l.b16 %v6049
        %v6338 = vunpack.c.l.b16 %v6050
        %v6339 = vunpack.c.l.b16 %v6051
        %v6340 = vunpack.c.l.b16 %v6052
        %v6341 = vunpack.c.l.b16 %v6053
        %v6342 = vunpack.c.l.b16 %v6054
        %v6343 = vunpack.c.l.b16 %v6055
        %v6344 = vunpack.c.l.b16 %v6056
        %v6345 = vunpack.c.l.b16 %v6057
        %v6346 = vunpack.c.l.b16 %v6058
        %v6347 = vunpack.c.l.b16 %v6059
        %v6348 = vunpack.c.l.b16 %v6060
        %v6349 = vunpack.c.l.b16 %v6061
        %v6350 = vunpack.c.l.b16 %v6062
        %v6351 = vunpack.c.l.b16 %v6063
        %v6352 = vunpack.c.l.b16 %v6064
        %v6353 = vunpack.c.l.b16 %v6065
        %v6354 = vunpack.c.l.b16 %v6066
        %v6355 = vunpack.c.l.b16 %v6067
        %v6356 = vunpack.c.l.b16 %v6068
        %v6357 = vunpack.c.l.b16 %v6069
        %v6358 = vunpack.c.l.b16 %v6070
        %v6359 = vunpack.c.l.b16 %v6071
        %v6360 = vunpack.c.l.b16 %v6072
        %v6361 = vunpack.c.l.b16 %v6073
        %v6362 = vunpack.c.l.b16 %v6074
        %v6363 = vunpack.c.l.b16 %v6075
        %v6364 = vunpack.c.l.b16 %v6076
        %v6365 = vunpack.c.l.b16 %v6077
        %v6366 = vunpack.c.l.b16 %v6078
        %v6367 = vpack.c.b16 %v6224, %v6223
        %v6368 = vpack.c.b16 %v6226, %v6225
        %v6369 = vpack.c.b16 %v6228, %v6227
        %v6370 = vpack.c.b16 %v6230, %v6229
        %v6371 = vpack.c.b16 %v6232, %v6231
        %v6372 = vpack.c.b16 %v6234, %v6233
        %v6373 = vpack.c.b16 %v6236, %v6235
        %v6374 = vpack.c.b16 %v6238, %v6237
        %v6375 = vpack.c.b16 %v6240, %v6239
        %v6376 = vpack.c.b16 %v6242, %v6241
        %v6377 = vpack.c.b16 %v6244, %v6243
        %v6378 = vpack.c.b16 %v6246, %v6245
        %v6379 = vpack.c.b16 %v6248, %v6247
        %v6380 = vpack.c.b16 %v6250, %v6249
        %v6381 = vpack.c.b16 %v6252, %v6251
        %v6382 = vpack.c.b16 %v6254, %v6253
        %v6383 = vpack.c.b16 %v6256, %v6255
        %v6384 = vpack.c.b16 %v6258, %v6257
        %v6385 = vpack.c.b16 %v6260, %v6259
        %v6386 = vpack.c.b16 %v6262, %v6261
        %v6387 = vpack.c.b16 %v6264, %v6263
        %v6388 = vpack.c.b16 %v6266, %v6265
        %v6389 = vpack.c.b16 %v6268, %v6267
        %v6390 = vpack.c.b16 %v6270, %v6269
        %v6391 = vpack.c.b16 %v6272, %v6271
        %v6392 = vpack.c.b16 %v6274, %v6273
        %v6393 = vpack.c.b16 %v6276, %v6275
        %v6394 = vpack.c.b16 %v6278, %v6277
        %v6395 = vpack.c.b16 %v6280, %v6279
        %v6396 = vpack.c.b16 %v6282, %v6281
        %v6397 = vpack.c.b16 %v6284, %v6283
        %v6398 = vpack.c.b16 %v6286, %v6285
        %v6399 = vpack.c.b16 %v6288, %v6287
        %v6400 = vpack.c.b16 %v6290, %v6289
        %v6401 = vpack.c.b16 %v6292, %v6291
        %v6402 = vpack.c.b16 %v6294, %v6293
        %v6403 = vpack.c.b16 %v6296, %v6295
        %v6404 = vpack.c.b16 %v6298, %v6297
        %v6405 = vpack.c.b16 %v6300, %v6299
        %v6406 = vpack.c.b16 %v6302, %v6301
        %v6407 = vpack.c.b16 %v6304, %v6303
        %v6408 = vpack.c.b16 %v6306, %v6305
        %v6409 = vpack.c.b16 %v6308, %v6307
        %v6410 = vpack.c.b16 %v6310, %v6309
        %v6411 = vpack.c.b16 %v6312, %v6311
        %v6412 = vpack.c.b16 %v6314, %v6313
        %v6413 = vpack.c.b16 %v6316, %v6315
        %v6414 = vpack.c.b16 %v6318, %v6317
        %v6415 = vpack.c.b16 %v6320, %v6319
        %v6416 = vpack.c.b16 %v6322, %v6321
        %v6417 = vpack.c.b16 %v6324, %v6323
        %v6418 = vpack.c.b16 %v6326, %v6325
        %v6419 = vpack.c.b16 %v6328, %v6327
        %v6420 = vpack.c.b16 %v6330, %v6329
        %v6421 = vpack.c.b16 %v6332, %v6331
        %v6422 = vpack.c.b16 %v6334, %v6333
        %v6423 = vpack.c.b16 %v6336, %v6335
        %v6424 = vpack.c.b16 %v6338, %v6337
        %v6425 = vpack.c.b16 %v6340, %v6339
        %v6426 = vpack.c.b16 %v6342, %v6341
        %v6427 = vpack.c.b16 %v6344, %v6343
        %v6428 = vpack.c.b16 %v6346, %v6345
        %v6429 = vpack.c.b16 %v6348, %v6347
        %v6430 = vpack.c.b16 %v6350, %v6349
        %v6431 = vpack.c.b16 %v6352, %v6351
        %v6432 = vpack.c.b16 %v6354, %v6353
        %v6433 = vpack.c.b16 %v6356, %v6355
        %v6434 = vpack.c.b16 %v6358, %v6357
        %v6435 = vpack.c.b16 %v6360, %v6359
        %v6436 = vpack.c.b16 %v6362, %v6361
        %v6437 = vpack.c.b16 %v6364, %v6363
        %v6438 = vpack.c.b16 %v6366, %v6365
        %6511 = vmatprep.subr.bf16.mxu0 0
        %6512 = vmatpush1.bf16.msra.mxu0 %v6374
        %6513 = vmatprep.subr.bf16.mxu0 0
        %6514 = vmatpush1.bf16.msra.mxu0 %v6373
        %6515 = vmatprep.subr.bf16.mxu0 0
        %6516 = vmatpush1.bf16.msra.mxu0 %v6372
        %6517 = vmatprep.subr.bf16.mxu0 0
        %6518 = vmatpush1.bf16.msra.mxu0 %v6371
        %6519 = vmatprep.subr.bf16.mxu0 0
        %6520 = vmatpush1.bf16.msra.mxu0 %v6370
        %6521 = vmatprep.subr.bf16.mxu0 0
        %6522 = vmatpush1.bf16.msra.mxu0 %v6369
        %6523 = vmatprep.subr.bf16.mxu0 0
        %6524 = vmatpush1.bf16.msra.mxu0 %v6368
        %6525 = vmatprep.subr.bf16.mxu0 0
        %6526 = vmatpush1.bf16.msra.mxu0 %v6367
        %6527 = vmatprep.subr.bf16.mxu0 0
        %6528 = vmatpush2.bf16.msra.mxu0 %v6382
        %6529 = vmatprep.subr.bf16.mxu0 0
        %6530 = vmatpush2.bf16.msra.mxu0 %v6381
        %6531 = vmatprep.subr.bf16.mxu0 0
        %6532 = vmatpush2.bf16.msra.mxu0 %v6380
        %6533 = vmatprep.subr.bf16.mxu0 0
        %6534 = vmatpush2.bf16.msra.mxu0 %v6379
        %6535 = vmatprep.subr.bf16.mxu0 0
        %6536 = vmatpush2.bf16.msra.mxu0 %v6378
        %6537 = vmatprep.subr.bf16.mxu0 0
        %6538 = vmatpush2.bf16.msra.mxu0 %v6377
        %6539 = vmatprep.subr.bf16.mxu0 0
        %6540 = vmatpush2.bf16.msra.mxu0 %v6376
        %6541 = vmatprep.subr.bf16.mxu0 0
        %6542 = vmatpush2.bf16.msra.mxu0 %v6375
        %6543 = vmatprep.mubr.bf16.mxu0 %v5391
        %6544 = vmatmul.mubr.bf16.gmra.mxu0 %v5327
        %v6545 = vpop.f32.mrf.mxu0
        %v6546 = vadd.f32 0.0, %v6545
        %v6547 = vpop.f32.mrf.mxu0
        %v6548 = vpop.f32.mrf.mxu0
        %v6549 = vadd.f32 0.0, %v6548
        %v6550 = vpop.f32.mrf.mxu0
        %6551 = vmatprep.mubr.bf16.mxu0 %v5392
        %6552 = vmatmul.mubr.bf16.gmra.mxu0 %v5328
        %v6553 = vpop.f32.mrf.mxu0
        %v6554 = vadd.f32 0.0, %v6553
        %v6555 = vpop.f32.mrf.mxu0
        %v6556 = vpop.f32.mrf.mxu0
        %v6557 = vadd.f32 0.0, %v6556
        %v6558 = vpop.f32.mrf.mxu0
        %6559 = vmatprep.mubr.bf16.mxu0 %v5393
        %6560 = vmatmul.mubr.bf16.gmra.mxu0 %v5329
        %v6561 = vpop.f32.mrf.mxu0
        %v6562 = vadd.f32 0.0, %v6561
        %v6563 = vpop.f32.mrf.mxu0
        %v6564 = vpop.f32.mrf.mxu0
        %v6565 = vadd.f32 0.0, %v6564
        %v6566 = vpop.f32.mrf.mxu0
        %6567 = vmatprep.mubr.bf16.mxu0 %v5394
        %6568 = vmatmul.mubr.bf16.gmra.mxu0 %v5330
        %v6569 = vpop.f32.mrf.mxu0
        %v6570 = vadd.f32 0.0, %v6569
        %v6571 = vpop.f32.mrf.mxu0
        %v6572 = vpop.f32.mrf.mxu0
        %v6573 = vadd.f32 0.0, %v6572
        %v6574 = vpop.f32.mrf.mxu0
        %6575 = vmatprep.mubr.bf16.mxu0 %v5395
        %6576 = vmatmul.mubr.bf16.gmra.mxu0 %v5331
        %v6577 = vpop.f32.mrf.mxu0
        %v6578 = vadd.f32 0.0, %v6577
        %v6579 = vpop.f32.mrf.mxu0
        %v6580 = vpop.f32.mrf.mxu0
        %v6581 = vadd.f32 0.0, %v6580
        %v6582 = vpop.f32.mrf.mxu0
        %6583 = vmatprep.mubr.bf16.mxu0 %v5396
        %6584 = vmatmul.mubr.bf16.gmra.mxu0 %v5332
        %v6585 = vpop.f32.mrf.mxu0
        %v6586 = vadd.f32 0.0, %v6585
        %v6587 = vpop.f32.mrf.mxu0
        %v6588 = vpop.f32.mrf.mxu0
        %v6589 = vadd.f32 0.0, %v6588
        %v6590 = vpop.f32.mrf.mxu0
        %6591 = vmatprep.mubr.bf16.mxu0 %v5397
        %6592 = vmatmul.mubr.bf16.gmra.mxu0 %v5333
        %v6593 = vpop.f32.mrf.mxu0
        %v6594 = vadd.f32 0.0, %v6593
        %v6595 = vpop.f32.mrf.mxu0
        %v6596 = vpop.f32.mrf.mxu0
        %v6597 = vadd.f32 0.0, %v6596
        %v6598 = vpop.f32.mrf.mxu0
        %6599 = vmatprep.mubr.bf16.mxu0 %v5398
        %6600 = vmatmul.mubr.bf16.gmra.mxu0 %v5334
        %v6601 = vpop.f32.mrf.mxu0
        %v6602 = vadd.f32 0.0, %v6601
        %v6603 = vpop.f32.mrf.mxu0
        %v6604 = vpop.f32.mrf.mxu0
        %v6605 = vadd.f32 0.0, %v6604
        %v6606 = vpop.f32.mrf.mxu0
        %6607 = vmatprep.mubr.bf16.mxu0 %v5399
        %6608 = vmatmul.mubr.bf16.gmra.mxu0 %v5335
        %v6609 = vpop.f32.mrf.mxu0
        %v6610 = vadd.f32 0.0, %v6609
        %v6611 = vpop.f32.mrf.mxu0
        %v6612 = vpop.f32.mrf.mxu0
        %v6613 = vadd.f32 0.0, %v6612
        %v6614 = vpop.f32.mrf.mxu0
        %6615 = vmatprep.mubr.bf16.mxu0 %v5400
        %6616 = vmatmul.mubr.bf16.gmra.mxu0 %v5336
        %v6617 = vpop.f32.mrf.mxu0
        %v6618 = vadd.f32 0.0, %v6617
        %v6619 = vpop.f32.mrf.mxu0
        %v6620 = vpop.f32.mrf.mxu0
        %v6621 = vadd.f32 0.0, %v6620
        %v6622 = vpop.f32.mrf.mxu0
        %6623 = vmatprep.mubr.bf16.mxu0 %v5401
        %6624 = vmatmul.mubr.bf16.gmra.mxu0 %v5337
        %v6625 = vpop.f32.mrf.mxu0
        %v6626 = vadd.f32 0.0, %v6625
        %v6627 = vpop.f32.mrf.mxu0
        %v6628 = vpop.f32.mrf.mxu0
        %v6629 = vadd.f32 0.0, %v6628
        %v6630 = vpop.f32.mrf.mxu0
        %6631 = vmatprep.mubr.bf16.mxu0 %v5402
        %6632 = vmatmul.mubr.bf16.gmra.mxu0 %v5338
        %v6633 = vpop.f32.mrf.mxu0
        %v6634 = vadd.f32 0.0, %v6633
        %v6635 = vpop.f32.mrf.mxu0
        %v6636 = vpop.f32.mrf.mxu0
        %v6637 = vadd.f32 0.0, %v6636
        %v6638 = vpop.f32.mrf.mxu0
        %6639 = vmatprep.mubr.bf16.mxu0 %v5403
        %6640 = vmatmul.mubr.bf16.gmra.mxu0 %v5339
        %v6641 = vpop.f32.mrf.mxu0
        %v6642 = vadd.f32 0.0, %v6641
        %v6643 = vpop.f32.mrf.mxu0
        %v6644 = vpop.f32.mrf.mxu0
        %v6645 = vadd.f32 0.0, %v6644
        %v6646 = vpop.f32.mrf.mxu0
        %6647 = vmatprep.mubr.bf16.mxu0 %v5404
        %6648 = vmatmul.mubr.bf16.gmra.mxu0 %v5340
        %v6649 = vpop.f32.mrf.mxu0
        %v6650 = vadd.f32 0.0, %v6649
        %v6651 = vpop.f32.mrf.mxu0
        %v6652 = vpop.f32.mrf.mxu0
        %v6653 = vadd.f32 0.0, %v6652
        %v6654 = vpop.f32.mrf.mxu0
        %6655 = vmatprep.mubr.bf16.mxu0 %v5405
        %6656 = vmatmul.mubr.bf16.gmra.mxu0 %v5341
        %v6657 = vpop.f32.mrf.mxu0
        %v6658 = vadd.f32 0.0, %v6657
        %v6659 = vpop.f32.mrf.mxu0
        %v6660 = vpop.f32.mrf.mxu0
        %v6661 = vadd.f32 0.0, %v6660
        %v6662 = vpop.f32.mrf.mxu0
        %6663 = vmatprep.mubr.bf16.mxu0 %v5406
        %6664 = vmatmul.mubr.bf16.gmra.mxu0 %v5342
        %v6665 = vpop.f32.mrf.mxu0
        %v6666 = vadd.f32 0.0, %v6665
        %v6667 = vpop.f32.mrf.mxu0
        %v6668 = vpop.f32.mrf.mxu0
        %v6669 = vadd.f32 0.0, %v6668
        %v6670 = vpop.f32.mrf.mxu0
        %6671 = vdwg.mxu0
        %6672 = vmatprep.subr.bf16.mxu0 0
        %6673 = vmatpush1.bf16.msra.mxu0 %v6390
        %6674 = vmatprep.subr.bf16.mxu0 0
        %6675 = vmatpush1.bf16.msra.mxu0 %v6389
        %6676 = vmatprep.subr.bf16.mxu0 0
        %6677 = vmatpush1.bf16.msra.mxu0 %v6388
        %6678 = vmatprep.subr.bf16.mxu0 0
        %6679 = vmatpush1.bf16.msra.mxu0 %v6387
        %6680 = vmatprep.subr.bf16.mxu0 0
        %6681 = vmatpush1.bf16.msra.mxu0 %v6386
        %6682 = vmatprep.subr.bf16.mxu0 0
        %6683 = vmatpush1.bf16.msra.mxu0 %v6385
        %6684 = vmatprep.subr.bf16.mxu0 0
        %6685 = vmatpush1.bf16.msra.mxu0 %v6384
        %6686 = vmatprep.subr.bf16.mxu0 0
        %6687 = vmatpush1.bf16.msra.mxu0 %v6383
        %6688 = vmatprep.subr.bf16.mxu0 0
        %6689 = vmatpush2.bf16.msra.mxu0 %v6398
        %6690 = vmatprep.subr.bf16.mxu0 0
        %6691 = vmatpush2.bf16.msra.mxu0 %v6397
        %6692 = vmatprep.subr.bf16.mxu0 0
        %6693 = vmatpush2.bf16.msra.mxu0 %v6396
        %6694 = vmatprep.subr.bf16.mxu0 0
        %6695 = vmatpush2.bf16.msra.mxu0 %v6395
        %6696 = vmatprep.subr.bf16.mxu0 0
        %6697 = vmatpush2.bf16.msra.mxu0 %v6394
        %6698 = vmatprep.subr.bf16.mxu0 0
        %6699 = vmatpush2.bf16.msra.mxu0 %v6393
        %6700 = vmatprep.subr.bf16.mxu0 0
        %6701 = vmatpush2.bf16.msra.mxu0 %v6392
        %6702 = vmatprep.subr.bf16.mxu0 0
        %6703 = vmatpush2.bf16.msra.mxu0 %v6391
        %6704 = vmatprep.mubr.bf16.mxu0 %v5551
        %6705 = vmatmul.mubr.bf16.gmra.mxu0 %v5455
        %v6706 = vpop.f32.mrf.mxu0
        %v6707 = vadd.f32 %v6546, %v6706
        %v6708 = vpop.f32.mrf.mxu0
        %v6709 = vpop.f32.mrf.mxu0
        %v6710 = vadd.f32 %v6549, %v6709
        %v6711 = vpop.f32.mrf.mxu0
        %6712 = vmatprep.mubr.bf16.mxu0 %v5552
        %6713 = vmatmul.mubr.bf16.gmra.mxu0 %v5456
        %v6714 = vpop.f32.mrf.mxu0
        %v6715 = vadd.f32 %v6554, %v6714
        %v6716 = vpop.f32.mrf.mxu0
        %v6717 = vpop.f32.mrf.mxu0
        %v6718 = vadd.f32 %v6557, %v6717
        %v6719 = vpop.f32.mrf.mxu0
        %6720 = vmatprep.mubr.bf16.mxu0 %v5553
        %6721 = vmatmul.mubr.bf16.gmra.mxu0 %v5457
        %v6722 = vpop.f32.mrf.mxu0
        %v6723 = vadd.f32 %v6562, %v6722
        %v6724 = vpop.f32.mrf.mxu0
        %v6725 = vpop.f32.mrf.mxu0
        %v6726 = vadd.f32 %v6565, %v6725
        %v6727 = vpop.f32.mrf.mxu0
        %6728 = vmatprep.mubr.bf16.mxu0 %v5554
        %6729 = vmatmul.mubr.bf16.gmra.mxu0 %v5458
        %v6730 = vpop.f32.mrf.mxu0
        %v6731 = vadd.f32 %v6570, %v6730
        %v6732 = vpop.f32.mrf.mxu0
        %v6733 = vpop.f32.mrf.mxu0
        %v6734 = vadd.f32 %v6573, %v6733
        %v6735 = vpop.f32.mrf.mxu0
        %6736 = vmatprep.mubr.bf16.mxu0 %v5555
        %6737 = vmatmul.mubr.bf16.gmra.mxu0 %v5459
        %v6738 = vpop.f32.mrf.mxu0
        %v6739 = vadd.f32 %v6578, %v6738
        %v6740 = vpop.f32.mrf.mxu0
        %v6741 = vpop.f32.mrf.mxu0
        %v6742 = vadd.f32 %v6581, %v6741
        %v6743 = vpop.f32.mrf.mxu0
        %6744 = vmatprep.mubr.bf16.mxu0 %v5556
        %6745 = vmatmul.mubr.bf16.gmra.mxu0 %v5460
        %v6746 = vpop.f32.mrf.mxu0
        %v6747 = vadd.f32 %v6586, %v6746
        %v6748 = vpop.f32.mrf.mxu0
        %v6749 = vpop.f32.mrf.mxu0
        %v6750 = vadd.f32 %v6589, %v6749
        %v6751 = vpop.f32.mrf.mxu0
        %6752 = vmatprep.mubr.bf16.mxu0 %v5557
        %6753 = vmatmul.mubr.bf16.gmra.mxu0 %v5461
        %v6754 = vpop.f32.mrf.mxu0
        %v6755 = vadd.f32 %v6594, %v6754
        %v6756 = vpop.f32.mrf.mxu0
        %v6757 = vpop.f32.mrf.mxu0
        %v6758 = vadd.f32 %v6597, %v6757
        %v6759 = vpop.f32.mrf.mxu0
        %6760 = vmatprep.mubr.bf16.mxu0 %v5558
        %6761 = vmatmul.mubr.bf16.gmra.mxu0 %v5462
        %v6762 = vpop.f32.mrf.mxu0
        %v6763 = vadd.f32 %v6602, %v6762
        %v6764 = vpop.f32.mrf.mxu0
        %v6765 = vpop.f32.mrf.mxu0
        %v6766 = vadd.f32 %v6605, %v6765
        %v6767 = vpop.f32.mrf.mxu0
        %6768 = vmatprep.mubr.bf16.mxu0 %v5559
        %6769 = vmatmul.mubr.bf16.gmra.mxu0 %v5463
        %v6770 = vpop.f32.mrf.mxu0
        %v6771 = vadd.f32 %v6610, %v6770
        %v6772 = vpop.f32.mrf.mxu0
        %v6773 = vpop.f32.mrf.mxu0
        %v6774 = vadd.f32 %v6613, %v6773
        %v6775 = vpop.f32.mrf.mxu0
        %6776 = vmatprep.mubr.bf16.mxu0 %v5560
        %6777 = vmatmul.mubr.bf16.gmra.mxu0 %v5464
        %v6778 = vpop.f32.mrf.mxu0
        %v6779 = vadd.f32 %v6618, %v6778
        %v6780 = vpop.f32.mrf.mxu0
        %v6781 = vpop.f32.mrf.mxu0
        %v6782 = vadd.f32 %v6621, %v6781
        %v6783 = vpop.f32.mrf.mxu0
        %6784 = vmatprep.mubr.bf16.mxu0 %v5561
        %6785 = vmatmul.mubr.bf16.gmra.mxu0 %v5465
        %v6786 = vpop.f32.mrf.mxu0
        %v6787 = vadd.f32 %v6626, %v6786
        %v6788 = vpop.f32.mrf.mxu0
        %v6789 = vpop.f32.mrf.mxu0
        %v6790 = vadd.f32 %v6629, %v6789
        %v6791 = vpop.f32.mrf.mxu0
        %6792 = vmatprep.mubr.bf16.mxu0 %v5562
        %6793 = vmatmul.mubr.bf16.gmra.mxu0 %v5466
        %v6794 = vpop.f32.mrf.mxu0
        %v6795 = vadd.f32 %v6634, %v6794
        %v6796 = vpop.f32.mrf.mxu0
        %v6797 = vpop.f32.mrf.mxu0
        %v6798 = vadd.f32 %v6637, %v6797
        %v6799 = vpop.f32.mrf.mxu0
        %6800 = vmatprep.mubr.bf16.mxu0 %v5563
        %6801 = vmatmul.mubr.bf16.gmra.mxu0 %v5467
        %v6802 = vpop.f32.mrf.mxu0
        %v6803 = vadd.f32 %v6642, %v6802
        %v6804 = vpop.f32.mrf.mxu0
        %v6805 = vpop.f32.mrf.mxu0
        %v6806 = vadd.f32 %v6645, %v6805
        %v6807 = vpop.f32.mrf.mxu0
        %6808 = vmatprep.mubr.bf16.mxu0 %v5564
        %6809 = vmatmul.mubr.bf16.gmra.mxu0 %v5468
        %v6810 = vpop.f32.mrf.mxu0
        %v6811 = vadd.f32 %v6650, %v6810
        %v6812 = vpop.f32.mrf.mxu0
        %v6813 = vpop.f32.mrf.mxu0
        %v6814 = vadd.f32 %v6653, %v6813
        %v6815 = vpop.f32.mrf.mxu0
        %6816 = vmatprep.mubr.bf16.mxu0 %v5565
        %6817 = vmatmul.mubr.bf16.gmra.mxu0 %v5469
        %v6818 = vpop.f32.mrf.mxu0
        %v6819 = vadd.f32 %v6658, %v6818
        %v6820 = vpop.f32.mrf.mxu0
        %v6821 = vpop.f32.mrf.mxu0
        %v6822 = vadd.f32 %v6661, %v6821
        %v6823 = vpop.f32.mrf.mxu0
        %6824 = vmatprep.mubr.bf16.mxu0 %v5566
        %6825 = vmatmul.mubr.bf16.gmra.mxu0 %v5470
        %v6826 = vpop.f32.mrf.mxu0
        %v6827 = vadd.f32 %v6666, %v6826
        %v6828 = vpop.f32.mrf.mxu0
        %v6829 = vpop.f32.mrf.mxu0
        %v6830 = vadd.f32 %v6669, %v6829
        %v6831 = vpop.f32.mrf.mxu0
        %6832 = vdwg.mxu0
        %6833 = vmatprep.subr.bf16.mxu0 0
        %6834 = vmatpush1.bf16.msra.mxu0 %v6406
        %6835 = vmatprep.subr.bf16.mxu0 0
        %6836 = vmatpush1.bf16.msra.mxu0 %v6405
        %6837 = vmatprep.subr.bf16.mxu0 0
        %6838 = vmatpush1.bf16.msra.mxu0 %v6404
        %6839 = vmatprep.subr.bf16.mxu0 0
        %6840 = vmatpush1.bf16.msra.mxu0 %v6403
        %6841 = vmatprep.subr.bf16.mxu0 0
        %6842 = vmatpush1.bf16.msra.mxu0 %v6402
        %6843 = vmatprep.subr.bf16.mxu0 0
        %6844 = vmatpush1.bf16.msra.mxu0 %v6401
        %6845 = vmatprep.subr.bf16.mxu0 0
        %6846 = vmatpush1.bf16.msra.mxu0 %v6400
        %6847 = vmatprep.subr.bf16.mxu0 0
        %6848 = vmatpush1.bf16.msra.mxu0 %v6399
        %6849 = vmatprep.subr.bf16.mxu0 0
        %6850 = vmatpush2.bf16.msra.mxu0 %v6414
        %6851 = vmatprep.subr.bf16.mxu0 0
        %6852 = vmatpush2.bf16.msra.mxu0 %v6413
        %6853 = vmatprep.subr.bf16.mxu0 0
        %6854 = vmatpush2.bf16.msra.mxu0 %v6412
        %6855 = vmatprep.subr.bf16.mxu0 0
        %6856 = vmatpush2.bf16.msra.mxu0 %v6411
        %6857 = vmatprep.subr.bf16.mxu0 0
        %6858 = vmatpush2.bf16.msra.mxu0 %v6410
        %6859 = vmatprep.subr.bf16.mxu0 0
        %6860 = vmatpush2.bf16.msra.mxu0 %v6409
        %6861 = vmatprep.subr.bf16.mxu0 0
        %6862 = vmatpush2.bf16.msra.mxu0 %v6408
        %6863 = vmatprep.subr.bf16.mxu0 0
        %6864 = vmatpush2.bf16.msra.mxu0 %v6407
        %6865 = vmatprep.mubr.bf16.mxu0 %v5679
        %6866 = vmatmul.mubr.bf16.gmra.mxu0 %v5615
        %v6867 = vpop.f32.mrf.mxu0
        %v6868 = vadd.f32 %v6707, %v6867
        %v6869 = vpop.f32.mrf.mxu0
        %v6870 = vpop.f32.mrf.mxu0
        %v6871 = vadd.f32 %v6710, %v6870
        %v6872 = vpop.f32.mrf.mxu0
        %6873 = vmatprep.mubr.bf16.mxu0 %v5680
        %6874 = vmatmul.mubr.bf16.gmra.mxu0 %v5616
        %v6875 = vpop.f32.mrf.mxu0
        %v6876 = vadd.f32 %v6715, %v6875
        %v6877 = vpop.f32.mrf.mxu0
        %v6878 = vpop.f32.mrf.mxu0
        %v6879 = vadd.f32 %v6718, %v6878
        %v6880 = vpop.f32.mrf.mxu0
        %6881 = vmatprep.mubr.bf16.mxu0 %v5681
        %6882 = vmatmul.mubr.bf16.gmra.mxu0 %v5617
        %v6883 = vpop.f32.mrf.mxu0
        %v6884 = vadd.f32 %v6723, %v6883
        %v6885 = vpop.f32.mrf.mxu0
        %v6886 = vpop.f32.mrf.mxu0
        %v6887 = vadd.f32 %v6726, %v6886
        %v6888 = vpop.f32.mrf.mxu0
        %6889 = vmatprep.mubr.bf16.mxu0 %v5682
        %6890 = vmatmul.mubr.bf16.gmra.mxu0 %v5618
        %v6891 = vpop.f32.mrf.mxu0
        %v6892 = vadd.f32 %v6731, %v6891
        %v6893 = vpop.f32.mrf.mxu0
        %v6894 = vpop.f32.mrf.mxu0
        %v6895 = vadd.f32 %v6734, %v6894
        %v6896 = vpop.f32.mrf.mxu0
        %6897 = vmatprep.mubr.bf16.mxu0 %v5683
        %6898 = vmatmul.mubr.bf16.gmra.mxu0 %v5619
        %v6899 = vpop.f32.mrf.mxu0
        %v6900 = vadd.f32 %v6739, %v6899
        %v6901 = vpop.f32.mrf.mxu0
        %v6902 = vpop.f32.mrf.mxu0
        %v6903 = vadd.f32 %v6742, %v6902
        %v6904 = vpop.f32.mrf.mxu0
        %6905 = vmatprep.mubr.bf16.mxu0 %v5684
        %6906 = vmatmul.mubr.bf16.gmra.mxu0 %v5620
        %v6907 = vpop.f32.mrf.mxu0
        %v6908 = vadd.f32 %v6747, %v6907
        %v6909 = vpop.f32.mrf.mxu0
        %v6910 = vpop.f32.mrf.mxu0
        %v6911 = vadd.f32 %v6750, %v6910
        %v6912 = vpop.f32.mrf.mxu0
        %6913 = vmatprep.mubr.bf16.mxu0 %v5685
        %6914 = vmatmul.mubr.bf16.gmra.mxu0 %v5621
        %v6915 = vpop.f32.mrf.mxu0
        %v6916 = vadd.f32 %v6755, %v6915
        %v6917 = vpop.f32.mrf.mxu0
        %v6918 = vpop.f32.mrf.mxu0
        %v6919 = vadd.f32 %v6758, %v6918
        %v6920 = vpop.f32.mrf.mxu0
        %6921 = vmatprep.mubr.bf16.mxu0 %v5686
        %6922 = vmatmul.mubr.bf16.gmra.mxu0 %v5622
        %v6923 = vpop.f32.mrf.mxu0
        %v6924 = vadd.f32 %v6763, %v6923
        %v6925 = vpop.f32.mrf.mxu0
        %v6926 = vpop.f32.mrf.mxu0
        %v6927 = vadd.f32 %v6766, %v6926
        %v6928 = vpop.f32.mrf.mxu0
        %6929 = vmatprep.mubr.bf16.mxu0 %v5687
        %6930 = vmatmul.mubr.bf16.gmra.mxu0 %v5623
        %v6931 = vpop.f32.mrf.mxu0
        %v6932 = vadd.f32 %v6771, %v6931
        %v6933 = vpop.f32.mrf.mxu0
        %v6934 = vpop.f32.mrf.mxu0
        %v6935 = vadd.f32 %v6774, %v6934
        %v6936 = vpop.f32.mrf.mxu0
        %6937 = vmatprep.mubr.bf16.mxu0 %v5688
        %6938 = vmatmul.mubr.bf16.gmra.mxu0 %v5624
        %v6939 = vpop.f32.mrf.mxu0
        %v6940 = vadd.f32 %v6779, %v6939
        %v6941 = vpop.f32.mrf.mxu0
        %v6942 = vpop.f32.mrf.mxu0
        %v6943 = vadd.f32 %v6782, %v6942
        %v6944 = vpop.f32.mrf.mxu0
        %6945 = vmatprep.mubr.bf16.mxu0 %v5689
        %6946 = vmatmul.mubr.bf16.gmra.mxu0 %v5625
        %v6947 = vpop.f32.mrf.mxu0
        %v6948 = vadd.f32 %v6787, %v6947
        %v6949 = vpop.f32.mrf.mxu0
        %v6950 = vpop.f32.mrf.mxu0
        %v6951 = vadd.f32 %v6790, %v6950
        %v6952 = vpop.f32.mrf.mxu0
        %6953 = vmatprep.mubr.bf16.mxu0 %v5690
        %6954 = vmatmul.mubr.bf16.gmra.mxu0 %v5626
        %v6955 = vpop.f32.mrf.mxu0
        %v6956 = vadd.f32 %v6795, %v6955
        %v6957 = vpop.f32.mrf.mxu0
        %v6958 = vpop.f32.mrf.mxu0
        %v6959 = vadd.f32 %v6798, %v6958
        %v6960 = vpop.f32.mrf.mxu0
        %6961 = vmatprep.mubr.bf16.mxu0 %v5691
        %6962 = vmatmul.mubr.bf16.gmra.mxu0 %v5627
        %v6963 = vpop.f32.mrf.mxu0
        %v6964 = vadd.f32 %v6803, %v6963
        %v6965 = vpop.f32.mrf.mxu0
        %v6966 = vpop.f32.mrf.mxu0
        %v6967 = vadd.f32 %v6806, %v6966
        %v6968 = vpop.f32.mrf.mxu0
        %6969 = vmatprep.mubr.bf16.mxu0 %v5692
        %6970 = vmatmul.mubr.bf16.gmra.mxu0 %v5628
        %v6971 = vpop.f32.mrf.mxu0
        %v6972 = vadd.f32 %v6811, %v6971
        %v6973 = vpop.f32.mrf.mxu0
        %v6974 = vpop.f32.mrf.mxu0
        %v6975 = vadd.f32 %v6814, %v6974
        %v6976 = vpop.f32.mrf.mxu0
        %6977 = vmatprep.mubr.bf16.mxu0 %v5693
        %6978 = vmatmul.mubr.bf16.gmra.mxu0 %v5629
        %v6979 = vpop.f32.mrf.mxu0
        %v6980 = vadd.f32 %v6819, %v6979
        %v6981 = vpop.f32.mrf.mxu0
        %v6982 = vpop.f32.mrf.mxu0
        %v6983 = vadd.f32 %v6822, %v6982
        %v6984 = vpop.f32.mrf.mxu0
        %6985 = vmatprep.mubr.bf16.mxu0 %v5694
        %6986 = vmatmul.mubr.bf16.gmra.mxu0 %v5630
        %v6987 = vpop.f32.mrf.mxu0
        %v6988 = vadd.f32 %v6827, %v6987
        %v6989 = vpop.f32.mrf.mxu0
        %v6990 = vpop.f32.mrf.mxu0
        %v6991 = vadd.f32 %v6830, %v6990
        %v6992 = vpop.f32.mrf.mxu0
        %6993 = vdwg.mxu0
        %6994 = vmatprep.subr.bf16.mxu0 0
        %6995 = vmatpush1.bf16.msra.mxu0 %v6422
        %6996 = vmatprep.subr.bf16.mxu0 0
        %6997 = vmatpush1.bf16.msra.mxu0 %v6421
        %6998 = vmatprep.subr.bf16.mxu0 0
        %6999 = vmatpush1.bf16.msra.mxu0 %v6420
        %7000 = vmatprep.subr.bf16.mxu0 0
        %7001 = vmatpush1.bf16.msra.mxu0 %v6419
        %7002 = vmatprep.subr.bf16.mxu0 0
        %7003 = vmatpush1.bf16.msra.mxu0 %v6418
        %7004 = vmatprep.subr.bf16.mxu0 0
        %7005 = vmatpush1.bf16.msra.mxu0 %v6417
        %7006 = vmatprep.subr.bf16.mxu0 0
        %7007 = vmatpush1.bf16.msra.mxu0 %v6416
        %7008 = vmatprep.subr.bf16.mxu0 0
        %7009 = vmatpush1.bf16.msra.mxu0 %v6415
        %7010 = vmatprep.subr.bf16.mxu0 0
        %7011 = vmatpush2.bf16.msra.mxu0 %v6430
        %7012 = vmatprep.subr.bf16.mxu0 0
        %7013 = vmatpush2.bf16.msra.mxu0 %v6429
        %7014 = vmatprep.subr.bf16.mxu0 0
        %7015 = vmatpush2.bf16.msra.mxu0 %v6428
        %7016 = vmatprep.subr.bf16.mxu0 0
        %7017 = vmatpush2.bf16.msra.mxu0 %v6427
        %7018 = vmatprep.subr.bf16.mxu0 0
        %7019 = vmatpush2.bf16.msra.mxu0 %v6426
        %7020 = vmatprep.subr.bf16.mxu0 0
        %7021 = vmatpush2.bf16.msra.mxu0 %v6425
        %7022 = vmatprep.subr.bf16.mxu0 0
        %7023 = vmatpush2.bf16.msra.mxu0 %v6424
        %7024 = vmatprep.subr.bf16.mxu0 0
        %7025 = vmatpush2.bf16.msra.mxu0 %v6423
        %7026 = vmatprep.mubr.bf16.mxu0 %v5839
        %7027 = vmatmul.mubr.bf16.gmra.mxu0 %v5775
        %v7028 = vpop.f32.mrf.mxu0
        %v7029 = vadd.f32 %v6868, %v7028
        %v7030 = vpop.f32.mrf.mxu0
        %v7031 = vpop.f32.mrf.mxu0
        %v7032 = vadd.f32 %v6871, %v7031
        %v7033 = vpop.f32.mrf.mxu0
        %7034 = vmatprep.mubr.bf16.mxu0 %v5840
        %7035 = vmatmul.mubr.bf16.gmra.mxu0 %v5776
        %v7036 = vpop.f32.mrf.mxu0
        %v7037 = vadd.f32 %v6876, %v7036
        %v7038 = vpop.f32.mrf.mxu0
        %v7039 = vpop.f32.mrf.mxu0
        %v7040 = vadd.f32 %v6879, %v7039
        %v7041 = vpop.f32.mrf.mxu0
        %7042 = vmatprep.mubr.bf16.mxu0 %v5841
        %7043 = vmatmul.mubr.bf16.gmra.mxu0 %v5777
        %v7044 = vpop.f32.mrf.mxu0
        %v7045 = vadd.f32 %v6884, %v7044
        %v7046 = vpop.f32.mrf.mxu0
        %v7047 = vpop.f32.mrf.mxu0
        %v7048 = vadd.f32 %v6887, %v7047
        %v7049 = vpop.f32.mrf.mxu0
        %7050 = vmatprep.mubr.bf16.mxu0 %v5842
        %7051 = vmatmul.mubr.bf16.gmra.mxu0 %v5778
        %v7052 = vpop.f32.mrf.mxu0
        %v7053 = vadd.f32 %v6892, %v7052
        %v7054 = vpop.f32.mrf.mxu0
        %v7055 = vpop.f32.mrf.mxu0
        %v7056 = vadd.f32 %v6895, %v7055
        %v7057 = vpop.f32.mrf.mxu0
        %7058 = vmatprep.mubr.bf16.mxu0 %v5843
        %7059 = vmatmul.mubr.bf16.gmra.mxu0 %v5779
        %v7060 = vpop.f32.mrf.mxu0
        %v7061 = vadd.f32 %v6900, %v7060
        %v7062 = vpop.f32.mrf.mxu0
        %v7063 = vpop.f32.mrf.mxu0
        %v7064 = vadd.f32 %v6903, %v7063
        %v7065 = vpop.f32.mrf.mxu0
        %7066 = vmatprep.mubr.bf16.mxu0 %v5844
        %7067 = vmatmul.mubr.bf16.gmra.mxu0 %v5780
        %v7068 = vpop.f32.mrf.mxu0
        %v7069 = vadd.f32 %v6908, %v7068
        %v7070 = vpop.f32.mrf.mxu0
        %v7071 = vpop.f32.mrf.mxu0
        %v7072 = vadd.f32 %v6911, %v7071
        %v7073 = vpop.f32.mrf.mxu0
        %7074 = vmatprep.mubr.bf16.mxu0 %v5845
        %7075 = vmatmul.mubr.bf16.gmra.mxu0 %v5781
        %v7076 = vpop.f32.mrf.mxu0
        %v7077 = vadd.f32 %v6916, %v7076
        %v7078 = vpop.f32.mrf.mxu0
        %v7079 = vpop.f32.mrf.mxu0
        %v7080 = vadd.f32 %v6919, %v7079
        %v7081 = vpop.f32.mrf.mxu0
        %7082 = vmatprep.mubr.bf16.mxu0 %v5846
        %7083 = vmatmul.mubr.bf16.gmra.mxu0 %v5782
        %v7084 = vpop.f32.mrf.mxu0
        %v7085 = vadd.f32 %v6924, %v7084
        %v7086 = vpop.f32.mrf.mxu0
        %v7087 = vpop.f32.mrf.mxu0
        %v7088 = vadd.f32 %v6927, %v7087
        %v7089 = vpop.f32.mrf.mxu0
        %7090 = vmatprep.mubr.bf16.mxu0 %v5847
        %7091 = vmatmul.mubr.bf16.gmra.mxu0 %v5783
        %v7092 = vpop.f32.mrf.mxu0
        %v7093 = vadd.f32 %v6932, %v7092
        %v7094 = vpop.f32.mrf.mxu0
        %v7095 = vpop.f32.mrf.mxu0
        %v7096 = vadd.f32 %v6935, %v7095
        %v7097 = vpop.f32.mrf.mxu0
        %7098 = vmatprep.mubr.bf16.mxu0 %v5848
        %7099 = vmatmul.mubr.bf16.gmra.mxu0 %v5784
        %v7100 = vpop.f32.mrf.mxu0
        %v7101 = vadd.f32 %v6940, %v7100
        %v7102 = vpop.f32.mrf.mxu0
        %v7103 = vpop.f32.mrf.mxu0
        %v7104 = vadd.f32 %v6943, %v7103
        %v7105 = vpop.f32.mrf.mxu0
        %7106 = vmatprep.mubr.bf16.mxu0 %v5849
        %7107 = vmatmul.mubr.bf16.gmra.mxu0 %v5785
        %v7108 = vpop.f32.mrf.mxu0
        %v7109 = vadd.f32 %v6948, %v7108
        %v7110 = vpop.f32.mrf.mxu0
        %v7111 = vpop.f32.mrf.mxu0
        %v7112 = vadd.f32 %v6951, %v7111
        %v7113 = vpop.f32.mrf.mxu0
        %7114 = vmatprep.mubr.bf16.mxu0 %v5850
        %7115 = vmatmul.mubr.bf16.gmra.mxu0 %v5786
        %v7116 = vpop.f32.mrf.mxu0
        %v7117 = vadd.f32 %v6956, %v7116
        %v7118 = vpop.f32.mrf.mxu0
        %v7119 = vpop.f32.mrf.mxu0
        %v7120 = vadd.f32 %v6959, %v7119
        %v7121 = vpop.f32.mrf.mxu0
        %7122 = vmatprep.mubr.bf16.mxu0 %v5851
        %7123 = vmatmul.mubr.bf16.gmra.mxu0 %v5787
        %v7124 = vpop.f32.mrf.mxu0
        %v7125 = vadd.f32 %v6964, %v7124
        %v7126 = vpop.f32.mrf.mxu0
        %v7127 = vpop.f32.mrf.mxu0
        %v7128 = vadd.f32 %v6967, %v7127
        %v7129 = vpop.f32.mrf.mxu0
        %7130 = vmatprep.mubr.bf16.mxu0 %v5852
        %7131 = vmatmul.mubr.bf16.gmra.mxu0 %v5788
        %v7132 = vpop.f32.mrf.mxu0
        %v7133 = vadd.f32 %v6972, %v7132
        %v7134 = vpop.f32.mrf.mxu0
        %v7135 = vpop.f32.mrf.mxu0
        %v7136 = vadd.f32 %v6975, %v7135
        %v7137 = vpop.f32.mrf.mxu0
        %7138 = vmatprep.mubr.bf16.mxu0 %v5853
        %7139 = vmatmul.mubr.bf16.gmra.mxu0 %v5789
        %v7140 = vpop.f32.mrf.mxu0
        %v7141 = vadd.f32 %v6980, %v7140
        %v7142 = vpop.f32.mrf.mxu0
        %v7143 = vpop.f32.mrf.mxu0
        %v7144 = vadd.f32 %v6983, %v7143
        %v7145 = vpop.f32.mrf.mxu0
        %7146 = vmatprep.mubr.bf16.mxu0 %v5854
        %7147 = vmatmul.mubr.bf16.gmra.mxu0 %v5790
        %v7148 = vpop.f32.mrf.mxu0
        %v7149 = vadd.f32 %v6988, %v7148
        %v7150 = vpop.f32.mrf.mxu0
        %v7151 = vpop.f32.mrf.mxu0
        %v7152 = vadd.f32 %v6991, %v7151
        %v7153 = vpop.f32.mrf.mxu0
        %7154 = vdwg.mxu0
        %7155 = vmatprep.subr.bf16.mxu0 0
        %7156 = vmatpush1.bf16.msra.mxu0 %v6438
        %7157 = vmatprep.subr.bf16.mxu0 0
        %7158 = vmatpush1.bf16.msra.mxu0 %v6437
        %7159 = vmatprep.subr.bf16.mxu0 0
        %7160 = vmatpush1.bf16.msra.mxu0 %v6436
        %7161 = vmatprep.subr.bf16.mxu0 0
        %7162 = vmatpush1.bf16.msra.mxu0 %v6435
        %7163 = vmatprep.subr.bf16.mxu0 0
        %7164 = vmatpush1.bf16.msra.mxu0 %v6434
        %7165 = vmatprep.subr.bf16.mxu0 0
        %7166 = vmatpush1.bf16.msra.mxu0 %v6433
        %7167 = vmatprep.subr.bf16.mxu0 0
        %7168 = vmatpush1.bf16.msra.mxu0 %v6432
        %7169 = vmatprep.subr.bf16.mxu0 0
        %7170 = vmatpush1.bf16.msra.mxu0 %v6431
        %7171 = vmatprep.subr.bf16.mxu0 0
        %7172 = vmatpush2.bf16.msra.mxu0 0
        %7173 = vmatprep.subr.bf16.mxu0 0
        %7174 = vmatpush2.bf16.msra.mxu0 0
        %7175 = vmatprep.subr.bf16.mxu0 0
        %7176 = vmatpush2.bf16.msra.mxu0 0
        %7177 = vmatprep.subr.bf16.mxu0 0
        %7178 = vmatpush2.bf16.msra.mxu0 0
        %7179 = vmatprep.subr.bf16.mxu0 0
        %7180 = vmatpush2.bf16.msra.mxu0 0
        %7181 = vmatprep.subr.bf16.mxu0 0
        %7182 = vmatpush2.bf16.msra.mxu0 0
        %7183 = vmatprep.subr.bf16.mxu0 0
        %7184 = vmatpush2.bf16.msra.mxu0 0
        %7185 = vmatprep.subr.bf16.mxu0 0
        %7186 = vmatpush2.bf16.msra.mxu0 0
        %7187 = vmatprep.mubr.bf16.mxu0 0
        %7188 = vmatmul.mubr.bf16.gmra.mxu0 %v5903
        %v7189 = vpop.f32.mrf.mxu0
        %v7190 = vadd.f32 %v7029, %v7189
        %v7191 = vpop.f32.mrf.mxu0
        %v7192 = vpop.f32.mrf.mxu0
        %v7193 = vadd.f32 %v7032, %v7192
        %v7194 = vpop.f32.mrf.mxu0
        %7195 = vmatprep.mubr.bf16.mxu0 0
        %7196 = vmatmul.mubr.bf16.gmra.mxu0 %v5904
        %v7197 = vpop.f32.mrf.mxu0
        %v7198 = vadd.f32 %v7037, %v7197
        %v7199 = vpop.f32.mrf.mxu0
        %v7200 = vpop.f32.mrf.mxu0
        %v7201 = vadd.f32 %v7040, %v7200
        %v7202 = vpop.f32.mrf.mxu0
        %7203 = vmatprep.mubr.bf16.mxu0 0
        %7204 = vmatmul.mubr.bf16.gmra.mxu0 %v5905
        %v7205 = vpop.f32.mrf.mxu0
        %v7206 = vadd.f32 %v7045, %v7205
        %v7207 = vpop.f32.mrf.mxu0
        %v7208 = vpop.f32.mrf.mxu0
        %v7209 = vadd.f32 %v7048, %v7208
        %v7210 = vpop.f32.mrf.mxu0
        %7211 = vmatprep.mubr.bf16.mxu0 0
        %7212 = vmatmul.mubr.bf16.gmra.mxu0 %v5906
        %v7213 = vpop.f32.mrf.mxu0
        %v7214 = vadd.f32 %v7053, %v7213
        %v7215 = vpop.f32.mrf.mxu0
        %v7216 = vpop.f32.mrf.mxu0
        %v7217 = vadd.f32 %v7056, %v7216
        %v7218 = vpop.f32.mrf.mxu0
        %7219 = vmatprep.mubr.bf16.mxu0 0
        %7220 = vmatmul.mubr.bf16.gmra.mxu0 %v5907
        %v7221 = vpop.f32.mrf.mxu0
        %v7222 = vadd.f32 %v7061, %v7221
        %v7223 = vpop.f32.mrf.mxu0
        %v7224 = vpop.f32.mrf.mxu0
        %v7225 = vadd.f32 %v7064, %v7224
        %v7226 = vpop.f32.mrf.mxu0
        %7227 = vmatprep.mubr.bf16.mxu0 0
        %7228 = vmatmul.mubr.bf16.gmra.mxu0 %v5908
        %v7229 = vpop.f32.mrf.mxu0
        %v7230 = vadd.f32 %v7069, %v7229
        %v7231 = vpop.f32.mrf.mxu0
        %v7232 = vpop.f32.mrf.mxu0
        %v7233 = vadd.f32 %v7072, %v7232
        %v7234 = vpop.f32.mrf.mxu0
        %7235 = vmatprep.mubr.bf16.mxu0 0
        %7236 = vmatmul.mubr.bf16.gmra.mxu0 %v5909
        %v7237 = vpop.f32.mrf.mxu0
        %v7238 = vadd.f32 %v7077, %v7237
        %v7239 = vpop.f32.mrf.mxu0
        %v7240 = vpop.f32.mrf.mxu0
        %v7241 = vadd.f32 %v7080, %v7240
        %v7242 = vpop.f32.mrf.mxu0
        %7243 = vmatprep.mubr.bf16.mxu0 0
        %7244 = vmatmul.mubr.bf16.gmra.mxu0 %v5910
        %v7245 = vpop.f32.mrf.mxu0
        %v7246 = vadd.f32 %v7085, %v7245
        %v7247 = vpop.f32.mrf.mxu0
        %v7248 = vpop.f32.mrf.mxu0
        %v7249 = vadd.f32 %v7088, %v7248
        %v7250 = vpop.f32.mrf.mxu0
        %7251 = vmatprep.mubr.bf16.mxu0 0
        %7252 = vmatmul.mubr.bf16.gmra.mxu0 %v5911
        %v7253 = vpop.f32.mrf.mxu0
        %v7254 = vadd.f32 %v7093, %v7253
        %v7255 = vpop.f32.mrf.mxu0
        %v7256 = vpop.f32.mrf.mxu0
        %v7257 = vadd.f32 %v7096, %v7256
        %v7258 = vpop.f32.mrf.mxu0
        %7259 = vmatprep.mubr.bf16.mxu0 0
        %7260 = vmatmul.mubr.bf16.gmra.mxu0 %v5912
        %v7261 = vpop.f32.mrf.mxu0
        %v7262 = vadd.f32 %v7101, %v7261
        %v7263 = vpop.f32.mrf.mxu0
        %v7264 = vpop.f32.mrf.mxu0
        %v7265 = vadd.f32 %v7104, %v7264
        %v7266 = vpop.f32.mrf.mxu0
        %7267 = vmatprep.mubr.bf16.mxu0 0
        %7268 = vmatmul.mubr.bf16.gmra.mxu0 %v5913
        %v7269 = vpop.f32.mrf.mxu0
        %v7270 = vadd.f32 %v7109, %v7269
        %v7271 = vpop.f32.mrf.mxu0
        %v7272 = vpop.f32.mrf.mxu0
        %v7273 = vadd.f32 %v7112, %v7272
        %v7274 = vpop.f32.mrf.mxu0
        %7275 = vmatprep.mubr.bf16.mxu0 0
        %7276 = vmatmul.mubr.bf16.gmra.mxu0 %v5914
        %v7277 = vpop.f32.mrf.mxu0
        %v7278 = vadd.f32 %v7117, %v7277
        %v7279 = vpop.f32.mrf.mxu0
        %v7280 = vpop.f32.mrf.mxu0
        %v7281 = vadd.f32 %v7120, %v7280
        %v7282 = vpop.f32.mrf.mxu0
        %7283 = vmatprep.mubr.bf16.mxu0 0
        %7284 = vmatmul.mubr.bf16.gmra.mxu0 %v5915
        %v7285 = vpop.f32.mrf.mxu0
        %v7286 = vadd.f32 %v7125, %v7285
        %v7287 = vpop.f32.mrf.mxu0
        %v7288 = vpop.f32.mrf.mxu0
        %v7289 = vadd.f32 %v7128, %v7288
        %v7290 = vpop.f32.mrf.mxu0
        %7291 = vmatprep.mubr.bf16.mxu0 0
        %7292 = vmatmul.mubr.bf16.gmra.mxu0 %v5916
        %v7293 = vpop.f32.mrf.mxu0
        %v7294 = vadd.f32 %v7133, %v7293
        %v7295 = vpop.f32.mrf.mxu0
        %v7296 = vpop.f32.mrf.mxu0
        %v7297 = vadd.f32 %v7136, %v7296
        %v7298 = vpop.f32.mrf.mxu0
        %7299 = vmatprep.mubr.bf16.mxu0 0
        %7300 = vmatmul.mubr.bf16.gmra.mxu0 %v5917
        %v7301 = vpop.f32.mrf.mxu0
        %v7302 = vadd.f32 %v7141, %v7301
        %v7303 = vpop.f32.mrf.mxu0
        %v7304 = vpop.f32.mrf.mxu0
        %v7305 = vadd.f32 %v7144, %v7304
        %v7306 = vpop.f32.mrf.mxu0
        %7307 = vmatprep.mubr.bf16.mxu0 0
        %7308 = vmatmul.mubr.bf16.gmra.mxu0 %v5918
        %v7309 = vpop.f32.mrf.mxu0
        %v7310 = vadd.f32 %v7149, %v7309
        %v7311 = vpop.f32.mrf.mxu0
        %v7312 = vpop.f32.mrf.mxu0
        %v7313 = vadd.f32 %v7152, %v7312
        %v7314 = vpop.f32.mrf.mxu0
        %7315 = vdwg.mxu0
        %v7316 = vld [vmem:[#allocation11] sm:$0x1]
        %v7318 = vlaneseq
        %v7319 = vshrl.u32 %v7318, 7
        %v7320 = vsub.s32 0, %v7319
        %v7321 = vrot.slane %v7316, %v7320
        %v7323 = vmul.f32 %v7190, %v7321
        %v7324 = vmul.f32 %v7193, %v7321
        %v7325 = vmul.f32 %v7198, %v7321
        %v7326 = vmul.f32 %v7201, %v7321
        %v7327 = vmul.f32 %v7206, %v7321
        %v7328 = vmul.f32 %v7209, %v7321
        %v7329 = vmul.f32 %v7214, %v7321
        %v7330 = vmul.f32 %v7217, %v7321
        %v7331 = vmul.f32 %v7222, %v7321
        %v7332 = vmul.f32 %v7225, %v7321
        %v7333 = vmul.f32 %v7230, %v7321
        %v7334 = vmul.f32 %v7233, %v7321
        %v7335 = vmul.f32 %v7238, %v7321
        %v7336 = vmul.f32 %v7241, %v7321
        %v7337 = vmul.f32 %v7246, %v7321
        %v7338 = vmul.f32 %v7249, %v7321
        %v7339 = vmul.f32 %v7254, %v7321
        %v7340 = vmul.f32 %v7257, %v7321
        %v7341 = vmul.f32 %v7262, %v7321
        %v7342 = vmul.f32 %v7265, %v7321
        %v7343 = vmul.f32 %v7270, %v7321
        %v7344 = vmul.f32 %v7273, %v7321
        %v7345 = vmul.f32 %v7278, %v7321
        %v7346 = vmul.f32 %v7281, %v7321
        %v7347 = vmul.f32 %v7286, %v7321
        %v7348 = vmul.f32 %v7289, %v7321
        %v7349 = vmul.f32 %v7294, %v7321
        %v7350 = vmul.f32 %v7297, %v7321
        %v7351 = vmul.f32 %v7302, %v7321
        %v7352 = vmul.f32 %v7305, %v7321
        %v7353 = vmul.f32 %v7310, %v7321
        %v7354 = vmul.f32 %v7313, %v7321
        %v7355 = vld [vmem:[%s6] sm:$0x1]
        %v7357 = vlaneseq
        %v7358 = vshrl.u32 %v7357, 7
        %v7359 = vsub.s32 0, %v7358
        %v7360 = vrot.slane %v7355, %v7359
        %v7362 = vadd.f32 %v7323, %v7360
        %v7363 = vadd.f32 %v7324, %v7360
        %v7364 = vadd.f32 %v7325, %v7360
        %v7365 = vadd.f32 %v7326, %v7360
        %v7366 = vadd.f32 %v7327, %v7360
        %v7367 = vadd.f32 %v7328, %v7360
        %v7368 = vadd.f32 %v7329, %v7360
        %v7369 = vadd.f32 %v7330, %v7360
        %v7370 = vadd.f32 %v7331, %v7360
        %v7371 = vadd.f32 %v7332, %v7360
        %v7372 = vadd.f32 %v7333, %v7360
        %v7373 = vadd.f32 %v7334, %v7360
        %v7374 = vadd.f32 %v7335, %v7360
        %v7375 = vadd.f32 %v7336, %v7360
        %v7376 = vadd.f32 %v7337, %v7360
        %v7377 = vadd.f32 %v7338, %v7360
        %v7378 = vadd.f32 %v7339, %v7360
        %v7379 = vadd.f32 %v7340, %v7360
        %v7380 = vadd.f32 %v7341, %v7360
        %v7381 = vadd.f32 %v7342, %v7360
        %v7382 = vadd.f32 %v7343, %v7360
        %v7383 = vadd.f32 %v7344, %v7360
        %v7384 = vadd.f32 %v7345, %v7360
        %v7385 = vadd.f32 %v7346, %v7360
        %v7386 = vadd.f32 %v7347, %v7360
        %v7387 = vadd.f32 %v7348, %v7360
        %v7388 = vadd.f32 %v7349, %v7360
        %v7389 = vadd.f32 %v7350, %v7360
        %v7390 = vadd.f32 %v7351, %v7360
        %v7391 = vadd.f32 %v7352, %v7360
        %v7392 = vadd.f32 %v7353, %v7360
        %v7393 = vadd.f32 %v7354, %v7360
        %v7394 = vmax.f32 %v7362, 0.0
        %v7395 = vmax.f32 %v7363, 0.0
        %v7396 = vmax.f32 %v7364, 0.0
        %v7397 = vmax.f32 %v7365, 0.0
        %v7398 = vmax.f32 %v7366, 0.0
        %v7399 = vmax.f32 %v7367, 0.0
        %v7400 = vmax.f32 %v7368, 0.0
        %v7401 = vmax.f32 %v7369, 0.0
        %v7402 = vmax.f32 %v7370, 0.0
        %v7403 = vmax.f32 %v7371, 0.0
        %v7404 = vmax.f32 %v7372, 0.0
        %v7405 = vmax.f32 %v7373, 0.0
        %v7406 = vmax.f32 %v7374, 0.0
        %v7407 = vmax.f32 %v7375, 0.0
        %v7408 = vmax.f32 %v7376, 0.0
        %v7409 = vmax.f32 %v7377, 0.0
        %v7410 = vmax.f32 %v7378, 0.0
        %v7411 = vmax.f32 %v7379, 0.0
        %v7412 = vmax.f32 %v7380, 0.0
        %v7413 = vmax.f32 %v7381, 0.0
        %v7414 = vmax.f32 %v7382, 0.0
        %v7415 = vmax.f32 %v7383, 0.0
        %v7416 = vmax.f32 %v7384, 0.0
        %v7417 = vmax.f32 %v7385, 0.0
        %v7418 = vmax.f32 %v7386, 0.0
        %v7419 = vmax.f32 %v7387, 0.0
        %v7420 = vmax.f32 %v7388, 0.0
        %v7421 = vmax.f32 %v7389, 0.0
        %v7422 = vmax.f32 %v7390, 0.0
        %v7423 = vmax.f32 %v7391, 0.0
        %v7424 = vmax.f32 %v7392, 0.0
        %v7425 = vmax.f32 %v7393, 0.0
        %v7426 = vpack.c.bf16 %v7395, %v7394
        %v7427 = vpack.c.bf16 %v7397, %v7396
        %v7428 = vpack.c.bf16 %v7399, %v7398
        %v7429 = vpack.c.bf16 %v7401, %v7400
        %v7430 = vpack.c.bf16 %v7403, %v7402
        %v7431 = vpack.c.bf16 %v7405, %v7404
        %v7432 = vpack.c.bf16 %v7407, %v7406
        %v7433 = vpack.c.bf16 %v7409, %v7408
        %v7434 = vpack.c.bf16 %v7411, %v7410
        %v7435 = vpack.c.bf16 %v7413, %v7412
        %v7436 = vpack.c.bf16 %v7415, %v7414
        %v7437 = vpack.c.bf16 %v7417, %v7416
        %v7438 = vpack.c.bf16 %v7419, %v7418
        %v7439 = vpack.c.bf16 %v7421, %v7420
        %v7440 = vpack.c.bf16 %v7423, %v7422
        %v7441 = vpack.c.bf16 %v7425, %v7424
        %v7442 = vld [vmem:[#allocation12] sm:$0xff]
        %v7443 = vld [vmem:[#allocation12 + $0x8] sm:$0xff]
        %v7444 = vld [vmem:[#allocation12 + $0x10] sm:$0xff]
        %v7445 = vld [vmem:[#allocation12 + $0x18] sm:$0xff]
        %v7446 = vld [vmem:[#allocation12 + $0x20] sm:$0xff]
        %v7447 = vld [vmem:[#allocation12 + $0x28] sm:$0xff]
        %v7448 = vld [vmem:[#allocation12 + $0x30] sm:$0xff]
        %v7449 = vld [vmem:[#allocation12 + $0x38] sm:$0xff]
        %v7450 = vld [vmem:[#allocation12 + $0x40] sm:$0xff]
        %v7451 = vld [vmem:[#allocation12 + $0x48] sm:$0xff]
        %v7452 = vld [vmem:[#allocation12 + $0x50] sm:$0xff]
        %v7453 = vld [vmem:[#allocation12 + $0x58] sm:$0xff]
        %v7454 = vld [vmem:[#allocation12 + $0x60] sm:$0xff]
        %v7455 = vld [vmem:[#allocation12 + $0x68] sm:$0xff]
        %v7456 = vld [vmem:[#allocation12 + $0x70] sm:$0xff]
        %v7457 = vld [vmem:[#allocation12 + $0x78] sm:$0xff]
        %v7458 = vld [vmem:[#allocation12 + $0x80] sm:$0xff]
        %v7459 = vld [vmem:[#allocation12 + $0x88] sm:$0xff]
        %v7460 = vld [vmem:[#allocation12 + $0x90] sm:$0xff]
        %v7461 = vld [vmem:[#allocation12 + $0x98] sm:$0xff]
        %v7462 = vld [vmem:[#allocation12 + $0xa0] sm:$0xff]
        %v7463 = vld [vmem:[#allocation12 + $0xa8] sm:$0xff]
        %v7464 = vld [vmem:[#allocation12 + $0xb0] sm:$0xff]
        %v7465 = vld [vmem:[#allocation12 + $0xb8] sm:$0xff]
        %v7466 = vld [vmem:[#allocation12 + $0xc0] sm:$0xff]
        %v7467 = vld [vmem:[#allocation12 + $0xc8] sm:$0xff]
        %v7468 = vld [vmem:[#allocation12 + $0xd0] sm:$0xff]
        %v7469 = vld [vmem:[#allocation12 + $0xd8] sm:$0xff]
        %v7470 = vld [vmem:[#allocation12 + $0xe0] sm:$0xff]
        %v7471 = vld [vmem:[#allocation12 + $0xe8] sm:$0xff]
        %v7472 = vld [vmem:[#allocation12 + $0xf0] sm:$0xff]
        %v7473 = vld [vmem:[#allocation12 + $0xf8] sm:$0xff]
        %v7506 = vunpack.c.l.b16 %v7442
        %v7507 = vunpack.c.h.b16 %v7442
        %v7508 = vunpack.c.l.b16 %v7443
        %v7509 = vunpack.c.h.b16 %v7443
        %v7510 = vunpack.c.l.b16 %v7444
        %v7511 = vunpack.c.h.b16 %v7444
        %v7512 = vunpack.c.l.b16 %v7445
        %v7513 = vunpack.c.h.b16 %v7445
        %v7514 = vunpack.c.l.b16 %v7446
        %v7515 = vunpack.c.h.b16 %v7446
        %v7516 = vunpack.c.l.b16 %v7447
        %v7517 = vunpack.c.h.b16 %v7447
        %v7518 = vunpack.c.l.b16 %v7448
        %v7519 = vunpack.c.h.b16 %v7448
        %v7520 = vunpack.c.l.b16 %v7449
        %v7521 = vunpack.c.h.b16 %v7449
        %v7522 = vunpack.c.l.b16 %v7450
        %v7523 = vunpack.c.h.b16 %v7450
        %v7524 = vunpack.c.l.b16 %v7451
        %v7525 = vunpack.c.h.b16 %v7451
        %v7526 = vunpack.c.l.b16 %v7452
        %v7527 = vunpack.c.h.b16 %v7452
        %v7528 = vunpack.c.l.b16 %v7453
        %v7529 = vunpack.c.h.b16 %v7453
        %v7530 = vunpack.c.l.b16 %v7454
        %v7531 = vunpack.c.h.b16 %v7454
        %v7532 = vunpack.c.l.b16 %v7455
        %v7533 = vunpack.c.h.b16 %v7455
        %v7534 = vunpack.c.l.b16 %v7456
        %v7535 = vunpack.c.h.b16 %v7456
        %v7536 = vunpack.c.l.b16 %v7457
        %v7537 = vunpack.c.h.b16 %v7457
        %v7538 = vunpack.c.l.b16 %v7458
        %v7539 = vunpack.c.h.b16 %v7458
        %v7540 = vunpack.c.l.b16 %v7459
        %v7541 = vunpack.c.h.b16 %v7459
        %v7542 = vunpack.c.l.b16 %v7460
        %v7543 = vunpack.c.h.b16 %v7460
        %v7544 = vunpack.c.l.b16 %v7461
        %v7545 = vunpack.c.h.b16 %v7461
        %v7546 = vunpack.c.l.b16 %v7462
        %v7547 = vunpack.c.h.b16 %v7462
        %v7548 = vunpack.c.l.b16 %v7463
        %v7549 = vunpack.c.h.b16 %v7463
        %v7550 = vunpack.c.l.b16 %v7464
        %v7551 = vunpack.c.h.b16 %v7464
        %v7552 = vunpack.c.l.b16 %v7465
        %v7553 = vunpack.c.h.b16 %v7465
        %v7554 = vunpack.c.l.b16 %v7466
        %v7555 = vunpack.c.h.b16 %v7466
        %v7556 = vunpack.c.l.b16 %v7467
        %v7557 = vunpack.c.h.b16 %v7467
        %v7558 = vunpack.c.l.b16 %v7468
        %v7559 = vunpack.c.h.b16 %v7468
        %v7560 = vunpack.c.l.b16 %v7469
        %v7561 = vunpack.c.h.b16 %v7469
        %v7562 = vunpack.c.l.b16 %v7470
        %v7563 = vunpack.c.h.b16 %v7470
        %v7564 = vunpack.c.l.b16 %v7471
        %v7565 = vunpack.c.h.b16 %v7471
        %v7566 = vunpack.c.l.b16 %v7472
        %v7567 = vunpack.c.h.b16 %v7472
        %v7568 = vunpack.c.l.b16 %v7473
        %v7569 = vunpack.c.h.b16 %v7473
        %v7570 = vpack.c.b16 %v7510, %v7506
        %v7571 = vpack.c.b16 %v7511, %v7507
        %v7572 = vpack.c.b16 %v7512, %v7508
        %v7573 = vpack.c.b16 %v7513, %v7509
        %v7574 = vpack.c.b16 %v7518, %v7514
        %v7575 = vpack.c.b16 %v7519, %v7515
        %v7576 = vpack.c.b16 %v7520, %v7516
        %v7577 = vpack.c.b16 %v7521, %v7517
        %v7578 = vpack.c.b16 %v7526, %v7522
        %v7579 = vpack.c.b16 %v7527, %v7523
        %v7580 = vpack.c.b16 %v7528, %v7524
        %v7581 = vpack.c.b16 %v7529, %v7525
        %v7582 = vpack.c.b16 %v7534, %v7530
        %v7583 = vpack.c.b16 %v7535, %v7531
        %v7584 = vpack.c.b16 %v7536, %v7532
        %v7585 = vpack.c.b16 %v7537, %v7533
        %v7586 = vpack.c.b16 %v7542, %v7538
        %v7587 = vpack.c.b16 %v7543, %v7539
        %v7588 = vpack.c.b16 %v7544, %v7540
        %v7589 = vpack.c.b16 %v7545, %v7541
        %v7590 = vpack.c.b16 %v7550, %v7546
        %v7591 = vpack.c.b16 %v7551, %v7547
        %v7592 = vpack.c.b16 %v7552, %v7548
        %v7593 = vpack.c.b16 %v7553, %v7549
        %v7594 = vpack.c.b16 %v7558, %v7554
        %v7595 = vpack.c.b16 %v7559, %v7555
        %v7596 = vpack.c.b16 %v7560, %v7556
        %v7597 = vpack.c.b16 %v7561, %v7557
        %v7598 = vpack.c.b16 %v7566, %v7562
        %v7599 = vpack.c.b16 %v7567, %v7563
        %v7600 = vpack.c.b16 %v7568, %v7564
        %v7601 = vpack.c.b16 %v7569, %v7565
        %7634 = vmatprep.subr.bf16.mxu0 %v7599
        %7635 = vmatpush1.bf16.msra.mxu0 %v7598
        %7636 = vmatprep.subr.bf16.mxu0 %v7595
        %7637 = vmatpush1.bf16.msra.mxu0 %v7594
        %7638 = vmatprep.subr.bf16.mxu0 %v7591
        %7639 = vmatpush1.bf16.msra.mxu0 %v7590
        %7640 = vmatprep.subr.bf16.mxu0 %v7587
        %7641 = vmatpush1.bf16.msra.mxu0 %v7586
        %7642 = vmatprep.subr.bf16.mxu0 %v7583
        %7643 = vmatpush1.bf16.msra.mxu0 %v7582
        %7644 = vmatprep.subr.bf16.mxu0 %v7579
        %7645 = vmatpush1.bf16.msra.mxu0 %v7578
        %7646 = vmatprep.subr.bf16.mxu0 %v7575
        %7647 = vmatpush1.bf16.msra.mxu0 %v7574
        %7648 = vmatprep.subr.bf16.mxu0 %v7571
        %7649 = vmatpush1.bf16.msra.mxu0 %v7570
        %7650 = vmatprep.subr.bf16.mxu0 0
        %7651 = vmatpush2.bf16.msra.mxu0 0
        %7652 = vmatprep.subr.bf16.mxu0 0
        %7653 = vmatpush2.bf16.msra.mxu0 0
        %7654 = vmatprep.subr.bf16.mxu0 0
        %7655 = vmatpush2.bf16.msra.mxu0 0
        %7656 = vmatprep.subr.bf16.mxu0 0
        %7657 = vmatpush2.bf16.msra.mxu0 0
        %7658 = vmatprep.subr.bf16.mxu0 0
        %7659 = vmatpush2.bf16.msra.mxu0 0
        %7660 = vmatprep.subr.bf16.mxu0 0
        %7661 = vmatpush2.bf16.msra.mxu0 0
        %7662 = vmatprep.subr.bf16.mxu0 0
        %7663 = vmatpush2.bf16.msra.mxu0 0
        %7664 = vmatprep.subr.bf16.mxu0 0
        %7665 = vmatpush2.bf16.msra.mxu0 0
        %7666 = vmatprep.mubr.bf16.mxu0 0
        %7667 = vmatmul.mubr.bf16.gmra.mxu0 %v7426
        %v7668 = vpop.f32.mrf.mxu0
        %v7669 = vadd.f32 0.0, %v7668
        %v7670 = vpop.f32.mrf.mxu0
        %v7671 = vadd.f32 0.0, %v7670
        %v7672 = vpop.f32.mrf.mxu0
        %v7673 = vadd.f32 0.0, %v7672
        %v7674 = vpop.f32.mrf.mxu0
        %v7675 = vadd.f32 0.0, %v7674
        %7676 = vmatprep.mubr.bf16.mxu0 0
        %7677 = vmatmul.mubr.bf16.gmra.mxu0 %v7427
        %v7678 = vpop.f32.mrf.mxu0
        %v7679 = vadd.f32 0.0, %v7678
        %v7680 = vpop.f32.mrf.mxu0
        %v7681 = vadd.f32 0.0, %v7680
        %v7682 = vpop.f32.mrf.mxu0
        %v7683 = vadd.f32 0.0, %v7682
        %v7684 = vpop.f32.mrf.mxu0
        %v7685 = vadd.f32 0.0, %v7684
        %7686 = vmatprep.mubr.bf16.mxu0 0
        %7687 = vmatmul.mubr.bf16.gmra.mxu0 %v7428
        %v7688 = vpop.f32.mrf.mxu0
        %v7689 = vadd.f32 0.0, %v7688
        %v7690 = vpop.f32.mrf.mxu0
        %v7691 = vadd.f32 0.0, %v7690
        %v7692 = vpop.f32.mrf.mxu0
        %v7693 = vadd.f32 0.0, %v7692
        %v7694 = vpop.f32.mrf.mxu0
        %v7695 = vadd.f32 0.0, %v7694
        %7696 = vmatprep.mubr.bf16.mxu0 0
        %7697 = vmatmul.mubr.bf16.gmra.mxu0 %v7429
        %v7698 = vpop.f32.mrf.mxu0
        %v7699 = vadd.f32 0.0, %v7698
        %v7700 = vpop.f32.mrf.mxu0
        %v7701 = vadd.f32 0.0, %v7700
        %v7702 = vpop.f32.mrf.mxu0
        %v7703 = vadd.f32 0.0, %v7702
        %v7704 = vpop.f32.mrf.mxu0
        %v7705 = vadd.f32 0.0, %v7704
        %7706 = vmatprep.mubr.bf16.mxu0 0
        %7707 = vmatmul.mubr.bf16.gmra.mxu0 %v7430
        %v7708 = vpop.f32.mrf.mxu0
        %v7709 = vadd.f32 0.0, %v7708
        %v7710 = vpop.f32.mrf.mxu0
        %v7711 = vadd.f32 0.0, %v7710
        %v7712 = vpop.f32.mrf.mxu0
        %v7713 = vadd.f32 0.0, %v7712
        %v7714 = vpop.f32.mrf.mxu0
        %v7715 = vadd.f32 0.0, %v7714
        %7716 = vmatprep.mubr.bf16.mxu0 0
        %7717 = vmatmul.mubr.bf16.gmra.mxu0 %v7431
        %v7718 = vpop.f32.mrf.mxu0
        %v7719 = vadd.f32 0.0, %v7718
        %v7720 = vpop.f32.mrf.mxu0
        %v7721 = vadd.f32 0.0, %v7720
        %v7722 = vpop.f32.mrf.mxu0
        %v7723 = vadd.f32 0.0, %v7722
        %v7724 = vpop.f32.mrf.mxu0
        %v7725 = vadd.f32 0.0, %v7724
        %7726 = vmatprep.mubr.bf16.mxu0 0
        %7727 = vmatmul.mubr.bf16.gmra.mxu0 %v7432
        %v7728 = vpop.f32.mrf.mxu0
        %v7729 = vadd.f32 0.0, %v7728
        %v7730 = vpop.f32.mrf.mxu0
        %v7731 = vadd.f32 0.0, %v7730
        %v7732 = vpop.f32.mrf.mxu0
        %v7733 = vadd.f32 0.0, %v7732
        %v7734 = vpop.f32.mrf.mxu0
        %v7735 = vadd.f32 0.0, %v7734
        %7736 = vmatprep.mubr.bf16.mxu0 0
        %7737 = vmatmul.mubr.bf16.gmra.mxu0 %v7433
        %v7738 = vpop.f32.mrf.mxu0
        %v7739 = vadd.f32 0.0, %v7738
        %v7740 = vpop.f32.mrf.mxu0
        %v7741 = vadd.f32 0.0, %v7740
        %v7742 = vpop.f32.mrf.mxu0
        %v7743 = vadd.f32 0.0, %v7742
        %v7744 = vpop.f32.mrf.mxu0
        %v7745 = vadd.f32 0.0, %v7744
        %7746 = vmatprep.mubr.bf16.mxu0 0
        %7747 = vmatmul.mubr.bf16.gmra.mxu0 %v7434
        %v7748 = vpop.f32.mrf.mxu0
        %v7749 = vadd.f32 0.0, %v7748
        %v7750 = vpop.f32.mrf.mxu0
        %v7751 = vadd.f32 0.0, %v7750
        %v7752 = vpop.f32.mrf.mxu0
        %v7753 = vadd.f32 0.0, %v7752
        %v7754 = vpop.f32.mrf.mxu0
        %v7755 = vadd.f32 0.0, %v7754
        %7756 = vmatprep.mubr.bf16.mxu0 0
        %7757 = vmatmul.mubr.bf16.gmra.mxu0 %v7435
        %v7758 = vpop.f32.mrf.mxu0
        %v7759 = vadd.f32 0.0, %v7758
        %v7760 = vpop.f32.mrf.mxu0
        %v7761 = vadd.f32 0.0, %v7760
        %v7762 = vpop.f32.mrf.mxu0
        %v7763 = vadd.f32 0.0, %v7762
        %v7764 = vpop.f32.mrf.mxu0
        %v7765 = vadd.f32 0.0, %v7764
        %7766 = vmatprep.mubr.bf16.mxu0 0
        %7767 = vmatmul.mubr.bf16.gmra.mxu0 %v7436
        %v7768 = vpop.f32.mrf.mxu0
        %v7769 = vadd.f32 0.0, %v7768
        %v7770 = vpop.f32.mrf.mxu0
        %v7771 = vadd.f32 0.0, %v7770
        %v7772 = vpop.f32.mrf.mxu0
        %v7773 = vadd.f32 0.0, %v7772
        %v7774 = vpop.f32.mrf.mxu0
        %v7775 = vadd.f32 0.0, %v7774
        %7776 = vmatprep.mubr.bf16.mxu0 0
        %7777 = vmatmul.mubr.bf16.gmra.mxu0 %v7437
        %v7778 = vpop.f32.mrf.mxu0
        %v7779 = vadd.f32 0.0, %v7778
        %v7780 = vpop.f32.mrf.mxu0
        %v7781 = vadd.f32 0.0, %v7780
        %v7782 = vpop.f32.mrf.mxu0
        %v7783 = vadd.f32 0.0, %v7782
        %v7784 = vpop.f32.mrf.mxu0
        %v7785 = vadd.f32 0.0, %v7784
        %7786 = vmatprep.mubr.bf16.mxu0 0
        %7787 = vmatmul.mubr.bf16.gmra.mxu0 %v7438
        %v7788 = vpop.f32.mrf.mxu0
        %v7789 = vadd.f32 0.0, %v7788
        %v7790 = vpop.f32.mrf.mxu0
        %v7791 = vadd.f32 0.0, %v7790
        %v7792 = vpop.f32.mrf.mxu0
        %v7793 = vadd.f32 0.0, %v7792
        %v7794 = vpop.f32.mrf.mxu0
        %v7795 = vadd.f32 0.0, %v7794
        %7796 = vmatprep.mubr.bf16.mxu0 0
        %7797 = vmatmul.mubr.bf16.gmra.mxu0 %v7439
        %v7798 = vpop.f32.mrf.mxu0
        %v7799 = vadd.f32 0.0, %v7798
        %v7800 = vpop.f32.mrf.mxu0
        %v7801 = vadd.f32 0.0, %v7800
        %v7802 = vpop.f32.mrf.mxu0
        %v7803 = vadd.f32 0.0, %v7802
        %v7804 = vpop.f32.mrf.mxu0
        %v7805 = vadd.f32 0.0, %v7804
        %7806 = vmatprep.mubr.bf16.mxu0 0
        %7807 = vmatmul.mubr.bf16.gmra.mxu0 %v7440
        %v7808 = vpop.f32.mrf.mxu0
        %v7809 = vadd.f32 0.0, %v7808
        %v7810 = vpop.f32.mrf.mxu0
        %v7811 = vadd.f32 0.0, %v7810
        %v7812 = vpop.f32.mrf.mxu0
        %v7813 = vadd.f32 0.0, %v7812
        %v7814 = vpop.f32.mrf.mxu0
        %v7815 = vadd.f32 0.0, %v7814
        %7816 = vmatprep.mubr.bf16.mxu0 0
        %7817 = vmatmul.mubr.bf16.gmra.mxu0 %v7441
        %v7818 = vpop.f32.mrf.mxu0
        %v7819 = vadd.f32 0.0, %v7818
        %v7820 = vpop.f32.mrf.mxu0
        %v7821 = vadd.f32 0.0, %v7820
        %v7822 = vpop.f32.mrf.mxu0
        %v7823 = vadd.f32 0.0, %v7822
        %v7824 = vpop.f32.mrf.mxu0
        %v7825 = vadd.f32 0.0, %v7824
        %7826 = vdwg.mxu0
        %7827 = vmatprep.subr.bf16.mxu0 %v7601
        %7828 = vmatpush1.bf16.msra.mxu0 %v7600
        %7829 = vmatprep.subr.bf16.mxu0 %v7597
        %7830 = vmatpush1.bf16.msra.mxu0 %v7596
        %7831 = vmatprep.subr.bf16.mxu0 %v7593
        %7832 = vmatpush1.bf16.msra.mxu0 %v7592
        %7833 = vmatprep.subr.bf16.mxu0 %v7589
        %7834 = vmatpush1.bf16.msra.mxu0 %v7588
        %7835 = vmatprep.subr.bf16.mxu0 %v7585
        %7836 = vmatpush1.bf16.msra.mxu0 %v7584
        %7837 = vmatprep.subr.bf16.mxu0 %v7581
        %7838 = vmatpush1.bf16.msra.mxu0 %v7580
        %7839 = vmatprep.subr.bf16.mxu0 %v7577
        %7840 = vmatpush1.bf16.msra.mxu0 %v7576
        %7841 = vmatprep.subr.bf16.mxu0 %v7573
        %7842 = vmatpush1.bf16.msra.mxu0 %v7572
        %7843 = vmatprep.subr.bf16.mxu0 0
        %7844 = vmatpush2.bf16.msra.mxu0 0
        %7845 = vmatprep.subr.bf16.mxu0 0
        %7846 = vmatpush2.bf16.msra.mxu0 0
        %7847 = vmatprep.subr.bf16.mxu0 0
        %7848 = vmatpush2.bf16.msra.mxu0 0
        %7849 = vmatprep.subr.bf16.mxu0 0
        %7850 = vmatpush2.bf16.msra.mxu0 0
        %7851 = vmatprep.subr.bf16.mxu0 0
        %7852 = vmatpush2.bf16.msra.mxu0 0
        %7853 = vmatprep.subr.bf16.mxu0 0
        %7854 = vmatpush2.bf16.msra.mxu0 0
        %7855 = vmatprep.subr.bf16.mxu0 0
        %7856 = vmatpush2.bf16.msra.mxu0 0
        %7857 = vmatprep.subr.bf16.mxu0 0
        %7858 = vmatpush2.bf16.msra.mxu0 0
        %7859 = vmatprep.mubr.bf16.mxu0 0
        %7860 = vmatmul.mubr.bf16.gmra.mxu0 %v7426
        %v7861 = vpop.f32.mrf.mxu0
        %v7862 = vadd.f32 0.0, %v7861
        %v7863 = vpop.f32.mrf.mxu0
        %v7864 = vadd.f32 0.0, %v7863
        %v7865 = vpop.f32.mrf.mxu0
        %v7866 = vadd.f32 0.0, %v7865
        %v7867 = vpop.f32.mrf.mxu0
        %v7868 = vadd.f32 0.0, %v7867
        %7869 = vmatprep.mubr.bf16.mxu0 0
        %7870 = vmatmul.mubr.bf16.gmra.mxu0 %v7427
        %v7871 = vpop.f32.mrf.mxu0
        %v7872 = vadd.f32 0.0, %v7871
        %v7873 = vpop.f32.mrf.mxu0
        %v7874 = vadd.f32 0.0, %v7873
        %v7875 = vpop.f32.mrf.mxu0
        %v7876 = vadd.f32 0.0, %v7875
        %v7877 = vpop.f32.mrf.mxu0
        %v7878 = vadd.f32 0.0, %v7877
        %7879 = vmatprep.mubr.bf16.mxu0 0
        %7880 = vmatmul.mubr.bf16.gmra.mxu0 %v7428
        %v7881 = vpop.f32.mrf.mxu0
        %v7882 = vadd.f32 0.0, %v7881
        %v7883 = vpop.f32.mrf.mxu0
        %v7884 = vadd.f32 0.0, %v7883
        %v7885 = vpop.f32.mrf.mxu0
        %v7886 = vadd.f32 0.0, %v7885
        %v7887 = vpop.f32.mrf.mxu0
        %v7888 = vadd.f32 0.0, %v7887
        %7889 = vmatprep.mubr.bf16.mxu0 0
        %7890 = vmatmul.mubr.bf16.gmra.mxu0 %v7429
        %v7891 = vpop.f32.mrf.mxu0
        %v7892 = vadd.f32 0.0, %v7891
        %v7893 = vpop.f32.mrf.mxu0
        %v7894 = vadd.f32 0.0, %v7893
        %v7895 = vpop.f32.mrf.mxu0
        %v7896 = vadd.f32 0.0, %v7895
        %v7897 = vpop.f32.mrf.mxu0
        %v7898 = vadd.f32 0.0, %v7897
        %7899 = vmatprep.mubr.bf16.mxu0 0
        %7900 = vmatmul.mubr.bf16.gmra.mxu0 %v7430
        %v7901 = vpop.f32.mrf.mxu0
        %v7902 = vadd.f32 0.0, %v7901
        %v7903 = vpop.f32.mrf.mxu0
        %v7904 = vadd.f32 0.0, %v7903
        %v7905 = vpop.f32.mrf.mxu0
        %v7906 = vadd.f32 0.0, %v7905
        %v7907 = vpop.f32.mrf.mxu0
        %v7908 = vadd.f32 0.0, %v7907
        %7909 = vmatprep.mubr.bf16.mxu0 0
        %7910 = vmatmul.mubr.bf16.gmra.mxu0 %v7431
        %v7911 = vpop.f32.mrf.mxu0
        %v7912 = vadd.f32 0.0, %v7911
        %v7913 = vpop.f32.mrf.mxu0
        %v7914 = vadd.f32 0.0, %v7913
        %v7915 = vpop.f32.mrf.mxu0
        %v7916 = vadd.f32 0.0, %v7915
        %v7917 = vpop.f32.mrf.mxu0
        %v7918 = vadd.f32 0.0, %v7917
        %7919 = vmatprep.mubr.bf16.mxu0 0
        %7920 = vmatmul.mubr.bf16.gmra.mxu0 %v7432
        %v7921 = vpop.f32.mrf.mxu0
        %v7922 = vadd.f32 0.0, %v7921
        %v7923 = vpop.f32.mrf.mxu0
        %v7924 = vadd.f32 0.0, %v7923
        %v7925 = vpop.f32.mrf.mxu0
        %v7926 = vadd.f32 0.0, %v7925
        %v7927 = vpop.f32.mrf.mxu0
        %v7928 = vadd.f32 0.0, %v7927
        %7929 = vmatprep.mubr.bf16.mxu0 0
        %7930 = vmatmul.mubr.bf16.gmra.mxu0 %v7433
        %v7931 = vpop.f32.mrf.mxu0
        %v7932 = vadd.f32 0.0, %v7931
        %v7933 = vpop.f32.mrf.mxu0
        %v7934 = vadd.f32 0.0, %v7933
        %v7935 = vpop.f32.mrf.mxu0
        %v7936 = vadd.f32 0.0, %v7935
        %v7937 = vpop.f32.mrf.mxu0
        %v7938 = vadd.f32 0.0, %v7937
        %7939 = vmatprep.mubr.bf16.mxu0 0
        %7940 = vmatmul.mubr.bf16.gmra.mxu0 %v7434
        %v7941 = vpop.f32.mrf.mxu0
        %v7942 = vadd.f32 0.0, %v7941
        %v7943 = vpop.f32.mrf.mxu0
        %v7944 = vadd.f32 0.0, %v7943
        %v7945 = vpop.f32.mrf.mxu0
        %v7946 = vadd.f32 0.0, %v7945
        %v7947 = vpop.f32.mrf.mxu0
        %v7948 = vadd.f32 0.0, %v7947
        %7949 = vmatprep.mubr.bf16.mxu0 0
        %7950 = vmatmul.mubr.bf16.gmra.mxu0 %v7435
        %v7951 = vpop.f32.mrf.mxu0
        %v7952 = vadd.f32 0.0, %v7951
        %v7953 = vpop.f32.mrf.mxu0
        %v7954 = vadd.f32 0.0, %v7953
        %v7955 = vpop.f32.mrf.mxu0
        %v7956 = vadd.f32 0.0, %v7955
        %v7957 = vpop.f32.mrf.mxu0
        %v7958 = vadd.f32 0.0, %v7957
        %7959 = vmatprep.mubr.bf16.mxu0 0
        %7960 = vmatmul.mubr.bf16.gmra.mxu0 %v7436
        %v7961 = vpop.f32.mrf.mxu0
        %v7962 = vadd.f32 0.0, %v7961
        %v7963 = vpop.f32.mrf.mxu0
        %v7964 = vadd.f32 0.0, %v7963
        %v7965 = vpop.f32.mrf.mxu0
        %v7966 = vadd.f32 0.0, %v7965
        %v7967 = vpop.f32.mrf.mxu0
        %v7968 = vadd.f32 0.0, %v7967
        %7969 = vmatprep.mubr.bf16.mxu0 0
        %7970 = vmatmul.mubr.bf16.gmra.mxu0 %v7437
        %v7971 = vpop.f32.mrf.mxu0
        %v7972 = vadd.f32 0.0, %v7971
        %v7973 = vpop.f32.mrf.mxu0
        %v7974 = vadd.f32 0.0, %v7973
        %v7975 = vpop.f32.mrf.mxu0
        %v7976 = vadd.f32 0.0, %v7975
        %v7977 = vpop.f32.mrf.mxu0
        %v7978 = vadd.f32 0.0, %v7977
        %7979 = vmatprep.mubr.bf16.mxu0 0
        %7980 = vmatmul.mubr.bf16.gmra.mxu0 %v7438
        %v7981 = vpop.f32.mrf.mxu0
        %v7982 = vadd.f32 0.0, %v7981
        %v7983 = vpop.f32.mrf.mxu0
        %v7984 = vadd.f32 0.0, %v7983
        %v7985 = vpop.f32.mrf.mxu0
        %v7986 = vadd.f32 0.0, %v7985
        %v7987 = vpop.f32.mrf.mxu0
        %v7988 = vadd.f32 0.0, %v7987
        %7989 = vmatprep.mubr.bf16.mxu0 0
        %7990 = vmatmul.mubr.bf16.gmra.mxu0 %v7439
        %v7991 = vpop.f32.mrf.mxu0
        %v7992 = vadd.f32 0.0, %v7991
        %v7993 = vpop.f32.mrf.mxu0
        %v7994 = vadd.f32 0.0, %v7993
        %v7995 = vpop.f32.mrf.mxu0
        %v7996 = vadd.f32 0.0, %v7995
        %v7997 = vpop.f32.mrf.mxu0
        %v7998 = vadd.f32 0.0, %v7997
        %7999 = vmatprep.mubr.bf16.mxu0 0
        %8000 = vmatmul.mubr.bf16.gmra.mxu0 %v7440
        %v8001 = vpop.f32.mrf.mxu0
        %v8002 = vadd.f32 0.0, %v8001
        %v8003 = vpop.f32.mrf.mxu0
        %v8004 = vadd.f32 0.0, %v8003
        %v8005 = vpop.f32.mrf.mxu0
        %v8006 = vadd.f32 0.0, %v8005
        %v8007 = vpop.f32.mrf.mxu0
        %v8008 = vadd.f32 0.0, %v8007
        %8009 = vmatprep.mubr.bf16.mxu0 0
        %8010 = vmatmul.mubr.bf16.gmra.mxu0 %v7441
        %v8011 = vpop.f32.mrf.mxu0
        %v8012 = vadd.f32 0.0, %v8011
        %v8013 = vpop.f32.mrf.mxu0
        %v8014 = vadd.f32 0.0, %v8013
        %v8015 = vpop.f32.mrf.mxu0
        %v8016 = vadd.f32 0.0, %v8015
        %v8017 = vpop.f32.mrf.mxu0
        %v8018 = vadd.f32 0.0, %v8017
        %8019 = vdwg.mxu0
        %v8020 = vld [vmem:[%s8] sm:$0xf]
        %v8022 = vlaneseq
        %v8023 = vshrl.u32 %v8022, 7
        %v8024 = vsub.s32 0, %v8023
        %v8025 = vrot.slane %v8020, %v8024
        %v8026 = vlaneseq
        %v8027 = vshrl.u32 %v8026, 7
        %v8028 = vsub.s32 1, %v8027
        %v8029 = vrot.slane %v8020, %v8028
        %v8030 = vlaneseq
        %v8031 = vshrl.u32 %v8030, 7
        %v8032 = vsub.s32 2, %v8031
        %v8033 = vrot.slane %v8020, %v8032
        %v8034 = vlaneseq
        %v8035 = vshrl.u32 %v8034, 7
        %v8036 = vsub.s32 3, %v8035
        %v8037 = vrot.slane %v8020, %v8036
        %v8042 = vmul.f32 %v7669, %v8025
        %v8043 = vmul.f32 %v7671, %v8029
        %v8044 = vmul.f32 %v7862, %v8033
        %v8045 = vmul.f32 %v7864, %v8037
        %v8046 = vmul.f32 %v7673, %v8025
        %v8047 = vmul.f32 %v7675, %v8029
        %v8048 = vmul.f32 %v7866, %v8033
        %v8049 = vmul.f32 %v7868, %v8037
        %v8050 = vmul.f32 %v7679, %v8025
        %v8051 = vmul.f32 %v7681, %v8029
        %v8052 = vmul.f32 %v7872, %v8033
        %v8053 = vmul.f32 %v7874, %v8037
        %v8054 = vmul.f32 %v7683, %v8025
        %v8055 = vmul.f32 %v7685, %v8029
        %v8056 = vmul.f32 %v7876, %v8033
        %v8057 = vmul.f32 %v7878, %v8037
        %v8058 = vmul.f32 %v7689, %v8025
        %v8059 = vmul.f32 %v7691, %v8029
        %v8060 = vmul.f32 %v7882, %v8033
        %v8061 = vmul.f32 %v7884, %v8037
        %v8062 = vmul.f32 %v7693, %v8025
        %v8063 = vmul.f32 %v7695, %v8029
        %v8064 = vmul.f32 %v7886, %v8033
        %v8065 = vmul.f32 %v7888, %v8037
        %v8066 = vmul.f32 %v7699, %v8025
        %v8067 = vmul.f32 %v7701, %v8029
        %v8068 = vmul.f32 %v7892, %v8033
        %v8069 = vmul.f32 %v7894, %v8037
        %v8070 = vmul.f32 %v7703, %v8025
        %v8071 = vmul.f32 %v7705, %v8029
        %v8072 = vmul.f32 %v7896, %v8033
        %v8073 = vmul.f32 %v7898, %v8037
        %v8074 = vmul.f32 %v7709, %v8025
        %v8075 = vmul.f32 %v7711, %v8029
        %v8076 = vmul.f32 %v7902, %v8033
        %v8077 = vmul.f32 %v7904, %v8037
        %v8078 = vmul.f32 %v7713, %v8025
        %v8079 = vmul.f32 %v7715, %v8029
        %v8080 = vmul.f32 %v7906, %v8033
        %v8081 = vmul.f32 %v7908, %v8037
        %v8082 = vmul.f32 %v7719, %v8025
        %v8083 = vmul.f32 %v7721, %v8029
        %v8084 = vmul.f32 %v7912, %v8033
        %v8085 = vmul.f32 %v7914, %v8037
        %v8086 = vmul.f32 %v7723, %v8025
        %v8087 = vmul.f32 %v7725, %v8029
        %v8088 = vmul.f32 %v7916, %v8033
        %v8089 = vmul.f32 %v7918, %v8037
        %v8090 = vmul.f32 %v7729, %v8025
        %v8091 = vmul.f32 %v7731, %v8029
        %v8092 = vmul.f32 %v7922, %v8033
        %v8093 = vmul.f32 %v7924, %v8037
        %v8094 = vmul.f32 %v7733, %v8025
        %v8095 = vmul.f32 %v7735, %v8029
        %v8096 = vmul.f32 %v7926, %v8033
        %v8097 = vmul.f32 %v7928, %v8037
        %v8098 = vmul.f32 %v7739, %v8025
        %v8099 = vmul.f32 %v7741, %v8029
        %v8100 = vmul.f32 %v7932, %v8033
        %v8101 = vmul.f32 %v7934, %v8037
        %v8102 = vmul.f32 %v7743, %v8025
        %v8103 = vmul.f32 %v7745, %v8029
        %v8104 = vmul.f32 %v7936, %v8033
        %v8105 = vmul.f32 %v7938, %v8037
        %v8106 = vmul.f32 %v7749, %v8025
        %v8107 = vmul.f32 %v7751, %v8029
        %v8108 = vmul.f32 %v7942, %v8033
        %v8109 = vmul.f32 %v7944, %v8037
        %v8110 = vmul.f32 %v7753, %v8025
        %v8111 = vmul.f32 %v7755, %v8029
        %v8112 = vmul.f32 %v7946, %v8033
        %v8113 = vmul.f32 %v7948, %v8037
        %v8114 = vmul.f32 %v7759, %v8025
        %v8115 = vmul.f32 %v7761, %v8029
        %v8116 = vmul.f32 %v7952, %v8033
        %v8117 = vmul.f32 %v7954, %v8037
        %v8118 = vmul.f32 %v7763, %v8025
        %v8119 = vmul.f32 %v7765, %v8029
        %v8120 = vmul.f32 %v7956, %v8033
        %v8121 = vmul.f32 %v7958, %v8037
        %v8122 = vmul.f32 %v7769, %v8025
        %v8123 = vmul.f32 %v7771, %v8029
        %v8124 = vmul.f32 %v7962, %v8033
        %v8125 = vmul.f32 %v7964, %v8037
        %v8126 = vmul.f32 %v7773, %v8025
        %v8127 = vmul.f32 %v7775, %v8029
        %v8128 = vmul.f32 %v7966, %v8033
        %v8129 = vmul.f32 %v7968, %v8037
        %v8130 = vmul.f32 %v7779, %v8025
        %v8131 = vmul.f32 %v7781, %v8029
        %v8132 = vmul.f32 %v7972, %v8033
        %v8133 = vmul.f32 %v7974, %v8037
        %v8134 = vmul.f32 %v7783, %v8025
        %v8135 = vmul.f32 %v7785, %v8029
        %v8136 = vmul.f32 %v7976, %v8033
        %v8137 = vmul.f32 %v7978, %v8037
        %v8138 = vmul.f32 %v7789, %v8025
        %v8139 = vmul.f32 %v7791, %v8029
        %v8140 = vmul.f32 %v7982, %v8033
        %v8141 = vmul.f32 %v7984, %v8037
        %v8142 = vmul.f32 %v7793, %v8025
        %v8143 = vmul.f32 %v7795, %v8029
        %v8144 = vmul.f32 %v7986, %v8033
        %v8145 = vmul.f32 %v7988, %v8037
        %v8146 = vmul.f32 %v7799, %v8025
        %v8147 = vmul.f32 %v7801, %v8029
        %v8148 = vmul.f32 %v7992, %v8033
        %v8149 = vmul.f32 %v7994, %v8037
        %v8150 = vmul.f32 %v7803, %v8025
        %v8151 = vmul.f32 %v7805, %v8029
        %v8152 = vmul.f32 %v7996, %v8033
        %v8153 = vmul.f32 %v7998, %v8037
        %v8154 = vmul.f32 %v7809, %v8025
        %v8155 = vmul.f32 %v7811, %v8029
        %v8156 = vmul.f32 %v8002, %v8033
        %v8157 = vmul.f32 %v8004, %v8037
        %v8158 = vmul.f32 %v7813, %v8025
        %v8159 = vmul.f32 %v7815, %v8029
        %v8160 = vmul.f32 %v8006, %v8033
        %v8161 = vmul.f32 %v8008, %v8037
        %v8162 = vmul.f32 %v7819, %v8025
        %v8163 = vmul.f32 %v7821, %v8029
        %v8164 = vmul.f32 %v8012, %v8033
        %v8165 = vmul.f32 %v8014, %v8037
        %v8166 = vmul.f32 %v7823, %v8025
        %v8167 = vmul.f32 %v7825, %v8029
        %v8168 = vmul.f32 %v8016, %v8033
        %v8169 = vmul.f32 %v8018, %v8037
        %v8170 = vld [vmem:[%s9] sm:$0xf]
        %v8172 = vlaneseq
        %v8173 = vshrl.u32 %v8172, 7
        %v8174 = vsub.s32 0, %v8173
        %v8175 = vrot.slane %v8170, %v8174
        %v8176 = vlaneseq
        %v8177 = vshrl.u32 %v8176, 7
        %v8178 = vsub.s32 1, %v8177
        %v8179 = vrot.slane %v8170, %v8178
        %v8180 = vlaneseq
        %v8181 = vshrl.u32 %v8180, 7
        %v8182 = vsub.s32 2, %v8181
        %v8183 = vrot.slane %v8170, %v8182
        %v8184 = vlaneseq
        %v8185 = vshrl.u32 %v8184, 7
        %v8186 = vsub.s32 3, %v8185
        %v8187 = vrot.slane %v8170, %v8186
        %v8192 = vadd.f32 %v8042, %v8175
        %v8193 = vadd.f32 %v8043, %v8179
        %v8194 = vadd.f32 %v8044, %v8183
        %v8195 = vadd.f32 %v8045, %v8187
        %v8196 = vadd.f32 %v8046, %v8175
        %v8197 = vadd.f32 %v8047, %v8179
        %v8198 = vadd.f32 %v8048, %v8183
        %v8199 = vadd.f32 %v8049, %v8187
        %v8200 = vadd.f32 %v8050, %v8175
        %v8201 = vadd.f32 %v8051, %v8179
        %v8202 = vadd.f32 %v8052, %v8183
        %v8203 = vadd.f32 %v8053, %v8187
        %v8204 = vadd.f32 %v8054, %v8175
        %v8205 = vadd.f32 %v8055, %v8179
        %v8206 = vadd.f32 %v8056, %v8183
        %v8207 = vadd.f32 %v8057, %v8187
        %v8208 = vadd.f32 %v8058, %v8175
        %v8209 = vadd.f32 %v8059, %v8179
        %v8210 = vadd.f32 %v8060, %v8183
        %v8211 = vadd.f32 %v8061, %v8187
        %v8212 = vadd.f32 %v8062, %v8175
        %v8213 = vadd.f32 %v8063, %v8179
        %v8214 = vadd.f32 %v8064, %v8183
        %v8215 = vadd.f32 %v8065, %v8187
        %v8216 = vadd.f32 %v8066, %v8175
        %v8217 = vadd.f32 %v8067, %v8179
        %v8218 = vadd.f32 %v8068, %v8183
        %v8219 = vadd.f32 %v8069, %v8187
        %v8220 = vadd.f32 %v8070, %v8175
        %v8221 = vadd.f32 %v8071, %v8179
        %v8222 = vadd.f32 %v8072, %v8183
        %v8223 = vadd.f32 %v8073, %v8187
        %v8224 = vadd.f32 %v8074, %v8175
        %v8225 = vadd.f32 %v8075, %v8179
        %v8226 = vadd.f32 %v8076, %v8183
        %v8227 = vadd.f32 %v8077, %v8187
        %v8228 = vadd.f32 %v8078, %v8175
        %v8229 = vadd.f32 %v8079, %v8179
        %v8230 = vadd.f32 %v8080, %v8183
        %v8231 = vadd.f32 %v8081, %v8187
        %v8232 = vadd.f32 %v8082, %v8175
        %v8233 = vadd.f32 %v8083, %v8179
        %v8234 = vadd.f32 %v8084, %v8183
        %v8235 = vadd.f32 %v8085, %v8187
        %v8236 = vadd.f32 %v8086, %v8175
        %v8237 = vadd.f32 %v8087, %v8179
        %v8238 = vadd.f32 %v8088, %v8183
        %v8239 = vadd.f32 %v8089, %v8187
        %v8240 = vadd.f32 %v8090, %v8175
        %v8241 = vadd.f32 %v8091, %v8179
        %v8242 = vadd.f32 %v8092, %v8183
        %v8243 = vadd.f32 %v8093, %v8187
        %v8244 = vadd.f32 %v8094, %v8175
        %v8245 = vadd.f32 %v8095, %v8179
        %v8246 = vadd.f32 %v8096, %v8183
        %v8247 = vadd.f32 %v8097, %v8187
        %v8248 = vadd.f32 %v8098, %v8175
        %v8249 = vadd.f32 %v8099, %v8179
        %v8250 = vadd.f32 %v8100, %v8183
        %v8251 = vadd.f32 %v8101, %v8187
        %v8252 = vadd.f32 %v8102, %v8175
        %v8253 = vadd.f32 %v8103, %v8179
        %v8254 = vadd.f32 %v8104, %v8183
        %v8255 = vadd.f32 %v8105, %v8187
        %v8256 = vadd.f32 %v8106, %v8175
        %v8257 = vadd.f32 %v8107, %v8179
        %v8258 = vadd.f32 %v8108, %v8183
        %v8259 = vadd.f32 %v8109, %v8187
        %v8260 = vadd.f32 %v8110, %v8175
        %v8261 = vadd.f32 %v8111, %v8179
        %v8262 = vadd.f32 %v8112, %v8183
        %v8263 = vadd.f32 %v8113, %v8187
        %v8264 = vadd.f32 %v8114, %v8175
        %v8265 = vadd.f32 %v8115, %v8179
        %v8266 = vadd.f32 %v8116, %v8183
        %v8267 = vadd.f32 %v8117, %v8187
        %v8268 = vadd.f32 %v8118, %v8175
        %v8269 = vadd.f32 %v8119, %v8179
        %v8270 = vadd.f32 %v8120, %v8183
        %v8271 = vadd.f32 %v8121, %v8187
        %v8272 = vadd.f32 %v8122, %v8175
        %v8273 = vadd.f32 %v8123, %v8179
        %v8274 = vadd.f32 %v8124, %v8183
        %v8275 = vadd.f32 %v8125, %v8187
        %v8276 = vadd.f32 %v8126, %v8175
        %v8277 = vadd.f32 %v8127, %v8179
        %v8278 = vadd.f32 %v8128, %v8183
        %v8279 = vadd.f32 %v8129, %v8187
        %v8280 = vadd.f32 %v8130, %v8175
        %v8281 = vadd.f32 %v8131, %v8179
        %v8282 = vadd.f32 %v8132, %v8183
        %v8283 = vadd.f32 %v8133, %v8187
        %v8284 = vadd.f32 %v8134, %v8175
        %v8285 = vadd.f32 %v8135, %v8179
        %v8286 = vadd.f32 %v8136, %v8183
        %v8287 = vadd.f32 %v8137, %v8187
        %v8288 = vadd.f32 %v8138, %v8175
        %v8289 = vadd.f32 %v8139, %v8179
        %v8290 = vadd.f32 %v8140, %v8183
        %v8291 = vadd.f32 %v8141, %v8187
        %v8292 = vadd.f32 %v8142, %v8175
        %v8293 = vadd.f32 %v8143, %v8179
        %v8294 = vadd.f32 %v8144, %v8183
        %v8295 = vadd.f32 %v8145, %v8187
        %v8296 = vadd.f32 %v8146, %v8175
        %v8297 = vadd.f32 %v8147, %v8179
        %v8298 = vadd.f32 %v8148, %v8183
        %v8299 = vadd.f32 %v8149, %v8187
        %v8300 = vadd.f32 %v8150, %v8175
        %v8301 = vadd.f32 %v8151, %v8179
        %v8302 = vadd.f32 %v8152, %v8183
        %v8303 = vadd.f32 %v8153, %v8187
        %v8304 = vadd.f32 %v8154, %v8175
        %v8305 = vadd.f32 %v8155, %v8179
        %v8306 = vadd.f32 %v8156, %v8183
        %v8307 = vadd.f32 %v8157, %v8187
        %v8308 = vadd.f32 %v8158, %v8175
        %v8309 = vadd.f32 %v8159, %v8179
        %v8310 = vadd.f32 %v8160, %v8183
        %v8311 = vadd.f32 %v8161, %v8187
        %v8312 = vadd.f32 %v8162, %v8175
        %v8313 = vadd.f32 %v8163, %v8179
        %v8314 = vadd.f32 %v8164, %v8183
        %v8315 = vadd.f32 %v8165, %v8187
        %v8316 = vadd.f32 %v8166, %v8175
        %v8317 = vadd.f32 %v8167, %v8179
        %v8318 = vadd.f32 %v8168, %v8183
        %v8319 = vadd.f32 %v8169, %v8187
        %v8320 = vadd.f32 %v8192, %v1999
        %v8321 = vadd.f32 %v8193, %v2000
        %v8322 = vadd.f32 %v8194, %v2001
        %v8323 = vadd.f32 %v8195, %v2002
        %v8324 = vadd.f32 %v8196, %v2004
        %v8325 = vadd.f32 %v8197, %v2005
        %v8326 = vadd.f32 %v8198, %v2006
        %v8327 = vadd.f32 %v8199, %v2007
        %v8328 = vadd.f32 %v8200, %v2009
        %v8329 = vadd.f32 %v8201, %v2010
        %v8330 = vadd.f32 %v8202, %v2011
        %v8331 = vadd.f32 %v8203, %v2012
        %v8332 = vadd.f32 %v8204, %v2014
        %v8333 = vadd.f32 %v8205, %v2015
        %v8334 = vadd.f32 %v8206, %v2016
        %v8335 = vadd.f32 %v8207, %v2017
        %v8336 = vadd.f32 %v8208, %v2019
        %v8337 = vadd.f32 %v8209, %v2020
        %v8338 = vadd.f32 %v8210, %v2021
        %v8339 = vadd.f32 %v8211, %v2022
        %v8340 = vadd.f32 %v8212, %v2024
        %v8341 = vadd.f32 %v8213, %v2025
        %v8342 = vadd.f32 %v8214, %v2026
        %v8343 = vadd.f32 %v8215, %v2027
        %v8344 = vadd.f32 %v8216, %v2029
        %v8345 = vadd.f32 %v8217, %v2030
        %v8346 = vadd.f32 %v8218, %v2031
        %v8347 = vadd.f32 %v8219, %v2032
        %v8348 = vadd.f32 %v8220, %v2034
        %v8349 = vadd.f32 %v8221, %v2035
        %v8350 = vadd.f32 %v8222, %v2036
        %v8351 = vadd.f32 %v8223, %v2037
        %v8352 = vadd.f32 %v8224, %v2039
        %v8353 = vadd.f32 %v8225, %v2040
        %v8354 = vadd.f32 %v8226, %v2041
        %v8355 = vadd.f32 %v8227, %v2042
        %v8356 = vadd.f32 %v8228, %v2044
        %v8357 = vadd.f32 %v8229, %v2045
        %v8358 = vadd.f32 %v8230, %v2046
        %v8359 = vadd.f32 %v8231, %v2047
        %v8360 = vadd.f32 %v8232, %v2049
        %v8361 = vadd.f32 %v8233, %v2050
        %v8362 = vadd.f32 %v8234, %v2051
        %v8363 = vadd.f32 %v8235, %v2052
        %v8364 = vadd.f32 %v8236, %v2054
        %v8365 = vadd.f32 %v8237, %v2055
        %v8366 = vadd.f32 %v8238, %v2056
        %v8367 = vadd.f32 %v8239, %v2057
        %v8368 = vadd.f32 %v8240, %v2059
        %v8369 = vadd.f32 %v8241, %v2060
        %v8370 = vadd.f32 %v8242, %v2061
        %v8371 = vadd.f32 %v8243, %v2062
        %v8372 = vadd.f32 %v8244, %v2064
        %v8373 = vadd.f32 %v8245, %v2065
        %v8374 = vadd.f32 %v8246, %v2066
        %v8375 = vadd.f32 %v8247, %v2067
        %v8376 = vadd.f32 %v8248, %v2069
        %v8377 = vadd.f32 %v8249, %v2070
        %v8378 = vadd.f32 %v8250, %v2071
        %v8379 = vadd.f32 %v8251, %v2072
        %v8380 = vadd.f32 %v8252, %v2074
        %v8381 = vadd.f32 %v8253, %v2075
        %v8382 = vadd.f32 %v8254, %v2076
        %v8383 = vadd.f32 %v8255, %v2077
        %v8384 = vadd.f32 %v8256, %v2079
        %v8385 = vadd.f32 %v8257, %v2080
        %v8386 = vadd.f32 %v8258, %v2081
        %v8387 = vadd.f32 %v8259, %v2082
        %v8388 = vadd.f32 %v8260, %v2084
        %v8389 = vadd.f32 %v8261, %v2085
        %v8390 = vadd.f32 %v8262, %v2086
        %v8391 = vadd.f32 %v8263, %v2087
        %v8392 = vadd.f32 %v8264, %v2089
        %v8393 = vadd.f32 %v8265, %v2090
        %v8394 = vadd.f32 %v8266, %v2091
        %v8395 = vadd.f32 %v8267, %v2092
        %v8396 = vadd.f32 %v8268, %v2094
        %v8397 = vadd.f32 %v8269, %v2095
        %v8398 = vadd.f32 %v8270, %v2096
        %v8399 = vadd.f32 %v8271, %v2097
        %v8400 = vadd.f32 %v8272, %v2099
        %v8401 = vadd.f32 %v8273, %v2100
        %v8402 = vadd.f32 %v8274, %v2101
        %v8403 = vadd.f32 %v8275, %v2102
        %v8404 = vadd.f32 %v8276, %v2104
        %v8405 = vadd.f32 %v8277, %v2105
        %v8406 = vadd.f32 %v8278, %v2106
        %v8407 = vadd.f32 %v8279, %v2107
        %v8408 = vadd.f32 %v8280, %v2109
        %v8409 = vadd.f32 %v8281, %v2110
        %v8410 = vadd.f32 %v8282, %v2111
        %v8411 = vadd.f32 %v8283, %v2112
        %v8412 = vadd.f32 %v8284, %v2114
        %v8413 = vadd.f32 %v8285, %v2115
        %v8414 = vadd.f32 %v8286, %v2116
        %v8415 = vadd.f32 %v8287, %v2117
        %v8416 = vadd.f32 %v8288, %v2119
        %v8417 = vadd.f32 %v8289, %v2120
        %v8418 = vadd.f32 %v8290, %v2121
        %v8419 = vadd.f32 %v8291, %v2122
        %v8420 = vadd.f32 %v8292, %v2124
        %v8421 = vadd.f32 %v8293, %v2125
        %v8422 = vadd.f32 %v8294, %v2126
        %v8423 = vadd.f32 %v8295, %v2127
        %v8424 = vadd.f32 %v8296, %v2129
        %v8425 = vadd.f32 %v8297, %v2130
        %v8426 = vadd.f32 %v8298, %v2131
        %v8427 = vadd.f32 %v8299, %v2132
        %v8428 = vadd.f32 %v8300, %v2134
        %v8429 = vadd.f32 %v8301, %v2135
        %v8430 = vadd.f32 %v8302, %v2136
        %v8431 = vadd.f32 %v8303, %v2137
        %v8432 = vadd.f32 %v8304, %v2139
        %v8433 = vadd.f32 %v8305, %v2140
        %v8434 = vadd.f32 %v8306, %v2141
        %v8435 = vadd.f32 %v8307, %v2142
        %v8436 = vadd.f32 %v8308, %v2144
        %v8437 = vadd.f32 %v8309, %v2145
        %v8438 = vadd.f32 %v8310, %v2146
        %v8439 = vadd.f32 %v8311, %v2147
        %v8440 = vadd.f32 %v8312, %v2149
        %v8441 = vadd.f32 %v8313, %v2150
        %v8442 = vadd.f32 %v8314, %v2151
        %v8443 = vadd.f32 %v8315, %v2152
        %v8444 = vadd.f32 %v8316, %v2154
        %v8445 = vadd.f32 %v8317, %v2155
        %v8446 = vadd.f32 %v8318, %v2156
        %v8447 = vadd.f32 %v8319, %v2157
        %v8448 = vmax.f32 %v8320, 0.0
        %v8449 = vmax.f32 %v8321, 0.0
        %v8450 = vmax.f32 %v8322, 0.0
        %v8451 = vmax.f32 %v8323, 0.0
        %v8452 = vmax.f32 %v8324, 0.0
        %v8453 = vmax.f32 %v8325, 0.0
        %v8454 = vmax.f32 %v8326, 0.0
        %v8455 = vmax.f32 %v8327, 0.0
        %v8456 = vmax.f32 %v8328, 0.0
        %v8457 = vmax.f32 %v8329, 0.0
        %v8458 = vmax.f32 %v8330, 0.0
        %v8459 = vmax.f32 %v8331, 0.0
        %v8460 = vmax.f32 %v8332, 0.0
        %v8461 = vmax.f32 %v8333, 0.0
        %v8462 = vmax.f32 %v8334, 0.0
        %v8463 = vmax.f32 %v8335, 0.0
        %v8464 = vmax.f32 %v8336, 0.0
        %v8465 = vmax.f32 %v8337, 0.0
        %v8466 = vmax.f32 %v8338, 0.0
        %v8467 = vmax.f32 %v8339, 0.0
        %v8468 = vmax.f32 %v8340, 0.0
        %v8469 = vmax.f32 %v8341, 0.0
        %v8470 = vmax.f32 %v8342, 0.0
        %v8471 = vmax.f32 %v8343, 0.0
        %v8472 = vmax.f32 %v8344, 0.0
        %v8473 = vmax.f32 %v8345, 0.0
        %v8474 = vmax.f32 %v8346, 0.0
        %v8475 = vmax.f32 %v8347, 0.0
        %v8476 = vmax.f32 %v8348, 0.0
        %v8477 = vmax.f32 %v8349, 0.0
        %v8478 = vmax.f32 %v8350, 0.0
        %v8479 = vmax.f32 %v8351, 0.0
        %v8480 = vmax.f32 %v8352, 0.0
        %v8481 = vmax.f32 %v8353, 0.0
        %v8482 = vmax.f32 %v8354, 0.0
        %v8483 = vmax.f32 %v8355, 0.0
        %v8484 = vmax.f32 %v8356, 0.0
        %v8485 = vmax.f32 %v8357, 0.0
        %v8486 = vmax.f32 %v8358, 0.0
        %v8487 = vmax.f32 %v8359, 0.0
        %v8488 = vmax.f32 %v8360, 0.0
        %v8489 = vmax.f32 %v8361, 0.0
        %v8490 = vmax.f32 %v8362, 0.0
        %v8491 = vmax.f32 %v8363, 0.0
        %v8492 = vmax.f32 %v8364, 0.0
        %v8493 = vmax.f32 %v8365, 0.0
        %v8494 = vmax.f32 %v8366, 0.0
        %v8495 = vmax.f32 %v8367, 0.0
        %v8496 = vmax.f32 %v8368, 0.0
        %v8497 = vmax.f32 %v8369, 0.0
        %v8498 = vmax.f32 %v8370, 0.0
        %v8499 = vmax.f32 %v8371, 0.0
        %v8500 = vmax.f32 %v8372, 0.0
        %v8501 = vmax.f32 %v8373, 0.0
        %v8502 = vmax.f32 %v8374, 0.0
        %v8503 = vmax.f32 %v8375, 0.0
        %v8504 = vmax.f32 %v8376, 0.0
        %v8505 = vmax.f32 %v8377, 0.0
        %v8506 = vmax.f32 %v8378, 0.0
        %v8507 = vmax.f32 %v8379, 0.0
        %v8508 = vmax.f32 %v8380, 0.0
        %v8509 = vmax.f32 %v8381, 0.0
        %v8510 = vmax.f32 %v8382, 0.0
        %v8511 = vmax.f32 %v8383, 0.0
        %v8512 = vmax.f32 %v8384, 0.0
        %v8513 = vmax.f32 %v8385, 0.0
        %v8514 = vmax.f32 %v8386, 0.0
        %v8515 = vmax.f32 %v8387, 0.0
        %v8516 = vmax.f32 %v8388, 0.0
        %v8517 = vmax.f32 %v8389, 0.0
        %v8518 = vmax.f32 %v8390, 0.0
        %v8519 = vmax.f32 %v8391, 0.0
        %v8520 = vmax.f32 %v8392, 0.0
        %v8521 = vmax.f32 %v8393, 0.0
        %v8522 = vmax.f32 %v8394, 0.0
        %v8523 = vmax.f32 %v8395, 0.0
        %v8524 = vmax.f32 %v8396, 0.0
        %v8525 = vmax.f32 %v8397, 0.0
        %v8526 = vmax.f32 %v8398, 0.0
        %v8527 = vmax.f32 %v8399, 0.0
        %v8528 = vmax.f32 %v8400, 0.0
        %v8529 = vmax.f32 %v8401, 0.0
        %v8530 = vmax.f32 %v8402, 0.0
        %v8531 = vmax.f32 %v8403, 0.0
        %v8532 = vmax.f32 %v8404, 0.0
        %v8533 = vmax.f32 %v8405, 0.0
        %v8534 = vmax.f32 %v8406, 0.0
        %v8535 = vmax.f32 %v8407, 0.0
        %v8536 = vmax.f32 %v8408, 0.0
        %v8537 = vmax.f32 %v8409, 0.0
        %v8538 = vmax.f32 %v8410, 0.0
        %v8539 = vmax.f32 %v8411, 0.0
        %v8540 = vmax.f32 %v8412, 0.0
        %v8541 = vmax.f32 %v8413, 0.0
        %v8542 = vmax.f32 %v8414, 0.0
        %v8543 = vmax.f32 %v8415, 0.0
        %v8544 = vmax.f32 %v8416, 0.0
        %v8545 = vmax.f32 %v8417, 0.0
        %v8546 = vmax.f32 %v8418, 0.0
        %v8547 = vmax.f32 %v8419, 0.0
        %v8548 = vmax.f32 %v8420, 0.0
        %v8549 = vmax.f32 %v8421, 0.0
        %v8550 = vmax.f32 %v8422, 0.0
        %v8551 = vmax.f32 %v8423, 0.0
        %v8552 = vmax.f32 %v8424, 0.0
        %v8553 = vmax.f32 %v8425, 0.0
        %v8554 = vmax.f32 %v8426, 0.0
        %v8555 = vmax.f32 %v8427, 0.0
        %v8556 = vmax.f32 %v8428, 0.0
        %v8557 = vmax.f32 %v8429, 0.0
        %v8558 = vmax.f32 %v8430, 0.0
        %v8559 = vmax.f32 %v8431, 0.0
        %v8560 = vmax.f32 %v8432, 0.0
        %v8561 = vmax.f32 %v8433, 0.0
        %v8562 = vmax.f32 %v8434, 0.0
        %v8563 = vmax.f32 %v8435, 0.0
        %v8564 = vmax.f32 %v8436, 0.0
        %v8565 = vmax.f32 %v8437, 0.0
        %v8566 = vmax.f32 %v8438, 0.0
        %v8567 = vmax.f32 %v8439, 0.0
        %v8568 = vmax.f32 %v8440, 0.0
        %v8569 = vmax.f32 %v8441, 0.0
        %v8570 = vmax.f32 %v8442, 0.0
        %v8571 = vmax.f32 %v8443, 0.0
        %v8572 = vmax.f32 %v8444, 0.0
        %v8573 = vmax.f32 %v8445, 0.0
        %v8574 = vmax.f32 %v8446, 0.0
        %v8575 = vmax.f32 %v8447, 0.0
        %v8576 = vadd.f32 %v8448, %v8452
        %v8577 = vadd.f32 %v8576, %v8456
        %v8578 = vadd.f32 %v8577, %v8460
        %v8579 = vadd.f32 %v8578, %v8464
        %v8580 = vadd.f32 %v8579, %v8468
        %v8581 = vadd.f32 %v8580, %v8472
        %v8582 = vadd.f32 %v8581, %v8476
        %v8583 = vrot.slane %v8582, 4
        %v8584 = vadd.f32 %v8582, %v8583
        %v8585 = vrot.slane %v8584, 2
        %v8586 = vadd.f32 %v8584, %v8585
        %v8587 = vrot.slane %v8586, 1
        %v8588 = vadd.f32 %v8586, %v8587
        %v8589 = vadd.f32 %v8449, %v8453
        %v8590 = vadd.f32 %v8589, %v8457
        %v8591 = vadd.f32 %v8590, %v8461
        %v8592 = vadd.f32 %v8591, %v8465
        %v8593 = vadd.f32 %v8592, %v8469
        %v8594 = vadd.f32 %v8593, %v8473
        %v8595 = vadd.f32 %v8594, %v8477
        %v8596 = vrot.slane %v8595, 4
        %v8597 = vadd.f32 %v8595, %v8596
        %v8598 = vrot.slane %v8597, 2
        %v8599 = vadd.f32 %v8597, %v8598
        %v8600 = vrot.slane %v8599, 1
        %v8601 = vadd.f32 %v8599, %v8600
        %v8602 = vadd.f32 %v8450, %v8454
        %v8603 = vadd.f32 %v8602, %v8458
        %v8604 = vadd.f32 %v8603, %v8462
        %v8605 = vadd.f32 %v8604, %v8466
        %v8606 = vadd.f32 %v8605, %v8470
        %v8607 = vadd.f32 %v8606, %v8474
        %v8608 = vadd.f32 %v8607, %v8478
        %v8609 = vrot.slane %v8608, 4
        %v8610 = vadd.f32 %v8608, %v8609
        %v8611 = vrot.slane %v8610, 2
        %v8612 = vadd.f32 %v8610, %v8611
        %v8613 = vrot.slane %v8612, 1
        %v8614 = vadd.f32 %v8612, %v8613
        %v8615 = vadd.f32 %v8451, %v8455
        %v8616 = vadd.f32 %v8615, %v8459
        %v8617 = vadd.f32 %v8616, %v8463
        %v8618 = vadd.f32 %v8617, %v8467
        %v8619 = vadd.f32 %v8618, %v8471
        %v8620 = vadd.f32 %v8619, %v8475
        %v8621 = vadd.f32 %v8620, %v8479
        %v8622 = vrot.slane %v8621, 4
        %v8623 = vadd.f32 %v8621, %v8622
        %v8624 = vrot.slane %v8623, 2
        %v8625 = vadd.f32 %v8623, %v8624
        %v8626 = vrot.slane %v8625, 1
        %v8627 = vadd.f32 %v8625, %v8626
        %v8628 = vadd.f32 %v8480, %v8484
        %v8629 = vadd.f32 %v8628, %v8488
        %v8630 = vadd.f32 %v8629, %v8492
        %v8631 = vadd.f32 %v8630, %v8496
        %v8632 = vadd.f32 %v8631, %v8500
        %v8633 = vadd.f32 %v8632, %v8504
        %v8634 = vadd.f32 %v8633, %v8508
        %v8635 = vrot.slane %v8634, 4
        %v8636 = vadd.f32 %v8634, %v8635
        %v8637 = vrot.slane %v8636, 2
        %v8638 = vadd.f32 %v8636, %v8637
        %v8639 = vrot.slane %v8638, 1
        %v8640 = vadd.f32 %v8638, %v8639
        %v8641 = vadd.f32 %v8481, %v8485
        %v8642 = vadd.f32 %v8641, %v8489
        %v8643 = vadd.f32 %v8642, %v8493
        %v8644 = vadd.f32 %v8643, %v8497
        %v8645 = vadd.f32 %v8644, %v8501
        %v8646 = vadd.f32 %v8645, %v8505
        %v8647 = vadd.f32 %v8646, %v8509
        %v8648 = vrot.slane %v8647, 4
        %v8649 = vadd.f32 %v8647, %v8648
        %v8650 = vrot.slane %v8649, 2
        %v8651 = vadd.f32 %v8649, %v8650
        %v8652 = vrot.slane %v8651, 1
        %v8653 = vadd.f32 %v8651, %v8652
        %v8654 = vadd.f32 %v8482, %v8486
        %v8655 = vadd.f32 %v8654, %v8490
        %v8656 = vadd.f32 %v8655, %v8494
        %v8657 = vadd.f32 %v8656, %v8498
        %v8658 = vadd.f32 %v8657, %v8502
        %v8659 = vadd.f32 %v8658, %v8506
        %v8660 = vadd.f32 %v8659, %v8510
        %v8661 = vrot.slane %v8660, 4
        %v8662 = vadd.f32 %v8660, %v8661
        %v8663 = vrot.slane %v8662, 2
        %v8664 = vadd.f32 %v8662, %v8663
        %v8665 = vrot.slane %v8664, 1
        %v8666 = vadd.f32 %v8664, %v8665
        %v8667 = vadd.f32 %v8483, %v8487
        %v8668 = vadd.f32 %v8667, %v8491
        %v8669 = vadd.f32 %v8668, %v8495
        %v8670 = vadd.f32 %v8669, %v8499
        %v8671 = vadd.f32 %v8670, %v8503
        %v8672 = vadd.f32 %v8671, %v8507
        %v8673 = vadd.f32 %v8672, %v8511
        %v8674 = vrot.slane %v8673, 4
        %v8675 = vadd.f32 %v8673, %v8674
        %v8676 = vrot.slane %v8675, 2
        %v8677 = vadd.f32 %v8675, %v8676
        %v8678 = vrot.slane %v8677, 1
        %v8679 = vadd.f32 %v8677, %v8678
        %v8680 = vadd.f32 %v8512, %v8516
        %v8681 = vadd.f32 %v8680, %v8520
        %v8682 = vadd.f32 %v8681, %v8524
        %v8683 = vadd.f32 %v8682, %v8528
        %v8684 = vadd.f32 %v8683, %v8532
        %v8685 = vadd.f32 %v8684, %v8536
        %v8686 = vadd.f32 %v8685, %v8540
        %v8687 = vrot.slane %v8686, 4
        %v8688 = vadd.f32 %v8686, %v8687
        %v8689 = vrot.slane %v8688, 2
        %v8690 = vadd.f32 %v8688, %v8689
        %v8691 = vrot.slane %v8690, 1
        %v8692 = vadd.f32 %v8690, %v8691
        %v8693 = vadd.f32 %v8513, %v8517
        %v8694 = vadd.f32 %v8693, %v8521
        %v8695 = vadd.f32 %v8694, %v8525
        %v8696 = vadd.f32 %v8695, %v8529
        %v8697 = vadd.f32 %v8696, %v8533
        %v8698 = vadd.f32 %v8697, %v8537
        %v8699 = vadd.f32 %v8698, %v8541
        %v8700 = vrot.slane %v8699, 4
        %v8701 = vadd.f32 %v8699, %v8700
        %v8702 = vrot.slane %v8701, 2
        %v8703 = vadd.f32 %v8701, %v8702
        %v8704 = vrot.slane %v8703, 1
        %v8705 = vadd.f32 %v8703, %v8704
        %v8706 = vadd.f32 %v8514, %v8518
        %v8707 = vadd.f32 %v8706, %v8522
        %v8708 = vadd.f32 %v8707, %v8526
        %v8709 = vadd.f32 %v8708, %v8530
        %v8710 = vadd.f32 %v8709, %v8534
        %v8711 = vadd.f32 %v8710, %v8538
        %v8712 = vadd.f32 %v8711, %v8542
        %v8713 = vrot.slane %v8712, 4
        %v8714 = vadd.f32 %v8712, %v8713
        %v8715 = vrot.slane %v8714, 2
        %v8716 = vadd.f32 %v8714, %v8715
        %v8717 = vrot.slane %v8716, 1
        %v8718 = vadd.f32 %v8716, %v8717
        %v8719 = vadd.f32 %v8515, %v8519
        %v8720 = vadd.f32 %v8719, %v8523
        %v8721 = vadd.f32 %v8720, %v8527
        %v8722 = vadd.f32 %v8721, %v8531
        %v8723 = vadd.f32 %v8722, %v8535
        %v8724 = vadd.f32 %v8723, %v8539
        %v8725 = vadd.f32 %v8724, %v8543
        %v8726 = vrot.slane %v8725, 4
        %v8727 = vadd.f32 %v8725, %v8726
        %v8728 = vrot.slane %v8727, 2
        %v8729 = vadd.f32 %v8727, %v8728
        %v8730 = vrot.slane %v8729, 1
        %v8731 = vadd.f32 %v8729, %v8730
        %v8732 = vadd.f32 %v8544, %v8548
        %v8733 = vadd.f32 %v8732, %v8552
        %v8734 = vadd.f32 %v8733, %v8556
        %v8735 = vadd.f32 %v8734, %v8560
        %v8736 = vadd.f32 %v8735, %v8564
        %v8737 = vadd.f32 %v8736, %v8568
        %v8738 = vadd.f32 %v8737, %v8572
        %v8739 = vrot.slane %v8738, 4
        %v8740 = vadd.f32 %v8738, %v8739
        %v8741 = vrot.slane %v8740, 2
        %v8742 = vadd.f32 %v8740, %v8741
        %v8743 = vrot.slane %v8742, 1
        %v8744 = vadd.f32 %v8742, %v8743
        %v8745 = vadd.f32 %v8545, %v8549
        %v8746 = vadd.f32 %v8745, %v8553
        %v8747 = vadd.f32 %v8746, %v8557
        %v8748 = vadd.f32 %v8747, %v8561
        %v8749 = vadd.f32 %v8748, %v8565
        %v8750 = vadd.f32 %v8749, %v8569
        %v8751 = vadd.f32 %v8750, %v8573
        %v8752 = vrot.slane %v8751, 4
        %v8753 = vadd.f32 %v8751, %v8752
        %v8754 = vrot.slane %v8753, 2
        %v8755 = vadd.f32 %v8753, %v8754
        %v8756 = vrot.slane %v8755, 1
        %v8757 = vadd.f32 %v8755, %v8756
        %v8758 = vadd.f32 %v8546, %v8550
        %v8759 = vadd.f32 %v8758, %v8554
        %v8760 = vadd.f32 %v8759, %v8558
        %v8761 = vadd.f32 %v8760, %v8562
        %v8762 = vadd.f32 %v8761, %v8566
        %v8763 = vadd.f32 %v8762, %v8570
        %v8764 = vadd.f32 %v8763, %v8574
        %v8765 = vrot.slane %v8764, 4
        %v8766 = vadd.f32 %v8764, %v8765
        %v8767 = vrot.slane %v8766, 2
        %v8768 = vadd.f32 %v8766, %v8767
        %v8769 = vrot.slane %v8768, 1
        %v8770 = vadd.f32 %v8768, %v8769
        %v8771 = vadd.f32 %v8547, %v8551
        %v8772 = vadd.f32 %v8771, %v8555
        %v8773 = vadd.f32 %v8772, %v8559
        %v8774 = vadd.f32 %v8773, %v8563
        %v8775 = vadd.f32 %v8774, %v8567
        %v8776 = vadd.f32 %v8775, %v8571
        %v8777 = vadd.f32 %v8776, %v8575
        %v8778 = vrot.slane %v8777, 4
        %v8779 = vadd.f32 %v8777, %v8778
        %v8780 = vrot.slane %v8779, 2
        %v8781 = vadd.f32 %v8779, %v8780
        %v8782 = vrot.slane %v8781, 1
        %v8783 = vadd.f32 %v8781, %v8782
        %v8784 = vrcp.pop 64.0
        %v8785 = vmul.f32 %v8588, %v8784
        %v8786 = vmul.f32 %v8601, %v8784
        %v8787 = vmul.f32 %v8614, %v8784
        %v8788 = vmul.f32 %v8627, %v8784
        %v8789 = vmul.f32 %v8640, %v8784
        %v8790 = vmul.f32 %v8653, %v8784
        %v8791 = vmul.f32 %v8666, %v8784
        %v8792 = vmul.f32 %v8679, %v8784
        %v8793 = vmul.f32 %v8692, %v8784
        %v8794 = vmul.f32 %v8705, %v8784
        %v8795 = vmul.f32 %v8718, %v8784
        %v8796 = vmul.f32 %v8731, %v8784
        %v8797 = vmul.f32 %v8744, %v8784
        %v8798 = vmul.f32 %v8757, %v8784
        %v8799 = vmul.f32 %v8770, %v8784
        %v8800 = vmul.f32 %v8783, %v8784
        %v8801 = vpack.c.bf16 %v8785, %v8785
        %v8802 = vpack.c.bf16 %v8786, %v8786
        %v8803 = vpack.c.bf16 %v8787, %v8787
        %v8804 = vpack.c.bf16 %v8788, %v8788
        %v8805 = vpack.c.bf16 %v8789, %v8789
        %v8806 = vpack.c.bf16 %v8790, %v8790
        %v8807 = vpack.c.bf16 %v8791, %v8791
        %v8808 = vpack.c.bf16 %v8792, %v8792
        %v8809 = vpack.c.bf16 %v8793, %v8793
        %v8810 = vpack.c.bf16 %v8794, %v8794
        %v8811 = vpack.c.bf16 %v8795, %v8795
        %v8812 = vpack.c.bf16 %v8796, %v8796
        %v8813 = vpack.c.bf16 %v8797, %v8797
        %v8814 = vpack.c.bf16 %v8798, %v8798
        %v8815 = vpack.c.bf16 %v8799, %v8799
        %v8816 = vpack.c.bf16 %v8800, %v8800
        %v8817 = vld [vmem:[#allocation14] sm:$0xf]
        %v8818 = vld [vmem:[#allocation14 + $0x4] sm:$0xf]
        %v8819 = vld [vmem:[#allocation14 + $0x8] sm:$0xf]
        %v8820 = vld [vmem:[#allocation14 + $0xc] sm:$0xf]
        %v8821 = vld [vmem:[#allocation14 + $0x10] sm:$0xf]
        %v8822 = vld [vmem:[#allocation14 + $0x14] sm:$0xf]
        %v8823 = vld [vmem:[#allocation14 + $0x18] sm:$0xf]
        %v8824 = vld [vmem:[#allocation14 + $0x1c] sm:$0xf]
        %v8825 = vld [vmem:[#allocation14 + $0x20] sm:$0xf]
        %v8826 = vld [vmem:[#allocation14 + $0x24] sm:$0xf]
        %v8827 = vld [vmem:[#allocation14 + $0x28] sm:$0xf]
        %v8828 = vld [vmem:[#allocation14 + $0x2c] sm:$0xf]
        %v8829 = vld [vmem:[#allocation14 + $0x30] sm:$0xf]
        %v8830 = vld [vmem:[#allocation14 + $0x34] sm:$0xf]
        %v8831 = vld [vmem:[#allocation14 + $0x38] sm:$0xf]
        %v8832 = vld [vmem:[#allocation14 + $0x3c] sm:$0xf]
        %v8833 = vld [vmem:[#allocation14 + $0x40] sm:$0xf]
        %v8834 = vld [vmem:[#allocation14 + $0x44] sm:$0xf]
        %v8835 = vld [vmem:[#allocation14 + $0x48] sm:$0xf]
        %v8836 = vld [vmem:[#allocation14 + $0x4c] sm:$0xf]
        %v8837 = vld [vmem:[#allocation14 + $0x50] sm:$0xf]
        %v8838 = vld [vmem:[#allocation14 + $0x54] sm:$0xf]
        %v8839 = vld [vmem:[#allocation14 + $0x58] sm:$0xf]
        %v8840 = vld [vmem:[#allocation14 + $0x5c] sm:$0xf]
        %v8841 = vld [vmem:[#allocation14 + $0x60] sm:$0xf]
        %v8842 = vld [vmem:[#allocation14 + $0x64] sm:$0xf]
        %v8843 = vld [vmem:[#allocation14 + $0x68] sm:$0xf]
        %v8844 = vld [vmem:[#allocation14 + $0x6c] sm:$0xf]
        %v8845 = vld [vmem:[#allocation14 + $0x70] sm:$0xf]
        %v8846 = vld [vmem:[#allocation14 + $0x74] sm:$0xf]
        %v8847 = vld [vmem:[#allocation14 + $0x78] sm:$0xf]
        %v8848 = vld [vmem:[#allocation14 + $0x7c] sm:$0xf]
        %v8849 = vld [vmem:[#allocation14 + $0x80] sm:$0xf]
        %v8850 = vld [vmem:[#allocation14 + $0x84] sm:$0xf]
        %v8851 = vld [vmem:[#allocation14 + $0x88] sm:$0xf]
        %v8852 = vld [vmem:[#allocation14 + $0x8c] sm:$0xf]
        %v8853 = vld [vmem:[#allocation14 + $0x90] sm:$0xf]
        %v8854 = vld [vmem:[#allocation14 + $0x94] sm:$0xf]
        %v8855 = vld [vmem:[#allocation14 + $0x98] sm:$0xf]
        %v8856 = vld [vmem:[#allocation14 + $0x9c] sm:$0xf]
        %v8857 = vld [vmem:[#allocation14 + $0xa0] sm:$0xf]
        %v8858 = vld [vmem:[#allocation14 + $0xa4] sm:$0xf]
        %v8859 = vld [vmem:[#allocation14 + $0xa8] sm:$0xf]
        %v8860 = vld [vmem:[#allocation14 + $0xac] sm:$0xf]
        %v8861 = vld [vmem:[#allocation14 + $0xb0] sm:$0xf]
        %v8862 = vld [vmem:[#allocation14 + $0xb4] sm:$0xf]
        %v8863 = vld [vmem:[#allocation14 + $0xb8] sm:$0xf]
        %v8864 = vld [vmem:[#allocation14 + $0xbc] sm:$0xf]
        %v8865 = vld [vmem:[#allocation14 + $0xc0] sm:$0xf]
        %v8866 = vld [vmem:[#allocation14 + $0xc4] sm:$0xf]
        %v8867 = vld [vmem:[#allocation14 + $0xc8] sm:$0xf]
        %v8868 = vld [vmem:[#allocation14 + $0xcc] sm:$0xf]
        %v8869 = vld [vmem:[#allocation14 + $0xd0] sm:$0xf]
        %v8870 = vld [vmem:[#allocation14 + $0xd4] sm:$0xf]
        %v8871 = vld [vmem:[#allocation14 + $0xd8] sm:$0xf]
        %v8872 = vld [vmem:[#allocation14 + $0xdc] sm:$0xf]
        %v8873 = vld [vmem:[#allocation14 + $0xe0] sm:$0xf]
        %v8874 = vld [vmem:[#allocation14 + $0xe4] sm:$0xf]
        %v8875 = vld [vmem:[#allocation14 + $0xe8] sm:$0xf]
        %v8876 = vld [vmem:[#allocation14 + $0xec] sm:$0xf]
        %v8877 = vld [vmem:[#allocation14 + $0xf0] sm:$0xf]
        %v8878 = vld [vmem:[#allocation14 + $0xf4] sm:$0xf]
        %v8879 = vld [vmem:[#allocation14 + $0xf8] sm:$0xf]
        %v8880 = vld [vmem:[#allocation14 + $0xfc] sm:$0xf]
        %v8897 = vunpack.c.l.b16 %v8801
        %v8898 = vunpack.c.l.b16 %v8802
        %v8899 = vunpack.c.l.b16 %v8803
        %v8900 = vunpack.c.l.b16 %v8804
        %v8901 = vunpack.c.l.b16 %v8805
        %v8902 = vunpack.c.l.b16 %v8806
        %v8903 = vunpack.c.l.b16 %v8807
        %v8904 = vunpack.c.l.b16 %v8808
        %v8905 = vunpack.c.l.b16 %v8809
        %v8906 = vunpack.c.l.b16 %v8810
        %v8907 = vunpack.c.l.b16 %v8811
        %v8908 = vunpack.c.l.b16 %v8812
        %v8909 = vunpack.c.l.b16 %v8813
        %v8910 = vunpack.c.l.b16 %v8814
        %v8911 = vunpack.c.l.b16 %v8815
        %v8912 = vunpack.c.l.b16 %v8816
        %vm8913 = vcmask 1041409
        %v8914 = vsel %vm8913, %v8901, %v8897
        %vm8915 = vcmask 1042434
        %v8916 = vsel %vm8915, %v8905, %v8914
        %vm8917 = vcmask 1043459
        %v8918 = vsel %vm8917, %v8909, %v8916
        %v8919 = vsel %vm8913, %v8902, %v8898
        %v8920 = vsel %vm8915, %v8906, %v8919
        %v8921 = vsel %vm8917, %v8910, %v8920
        %v8922 = vsel %vm8913, %v8903, %v8899
        %v8923 = vsel %vm8915, %v8907, %v8922
        %v8924 = vsel %vm8917, %v8911, %v8923
        %v8925 = vsel %vm8913, %v8904, %v8900
        %v8926 = vsel %vm8915, %v8908, %v8925
        %v8927 = vsel %vm8917, %v8912, %v8926
        %v8928 = vpack.c.b16 %v8918, %v8918
        %v8929 = vpack.c.b16 %v8921, %v8921
        %v8930 = vpack.c.b16 %v8924, %v8924
        %v8931 = vpack.c.b16 %v8927, %v8927
        %v9000 = vunpack.c.l.b16 %v8817
        %v9001 = vunpack.c.l.b16 %v8818
        %v9002 = vunpack.c.l.b16 %v8819
        %v9003 = vunpack.c.l.b16 %v8820
        %v9004 = vunpack.c.l.b16 %v8821
        %v9005 = vunpack.c.l.b16 %v8822
        %v9006 = vunpack.c.l.b16 %v8823
        %v9007 = vunpack.c.l.b16 %v8824
        %v9008 = vunpack.c.l.b16 %v8825
        %v9009 = vunpack.c.l.b16 %v8826
        %v9010 = vunpack.c.l.b16 %v8827
        %v9011 = vunpack.c.l.b16 %v8828
        %v9012 = vunpack.c.l.b16 %v8829
        %v9013 = vunpack.c.l.b16 %v8830
        %v9014 = vunpack.c.l.b16 %v8831
        %v9015 = vunpack.c.l.b16 %v8832
        %v9016 = vunpack.c.l.b16 %v8833
        %v9017 = vunpack.c.l.b16 %v8834
        %v9018 = vunpack.c.l.b16 %v8835
        %v9019 = vunpack.c.l.b16 %v8836
        %v9020 = vunpack.c.l.b16 %v8837
        %v9021 = vunpack.c.l.b16 %v8838
        %v9022 = vunpack.c.l.b16 %v8839
        %v9023 = vunpack.c.l.b16 %v8840
        %v9024 = vunpack.c.l.b16 %v8841
        %v9025 = vunpack.c.l.b16 %v8842
        %v9026 = vunpack.c.l.b16 %v8843
        %v9027 = vunpack.c.l.b16 %v8844
        %v9028 = vunpack.c.l.b16 %v8845
        %v9029 = vunpack.c.l.b16 %v8846
        %v9030 = vunpack.c.l.b16 %v8847
        %v9031 = vunpack.c.l.b16 %v8848
        %v9032 = vunpack.c.l.b16 %v8849
        %v9033 = vunpack.c.l.b16 %v8850
        %v9034 = vunpack.c.l.b16 %v8851
        %v9035 = vunpack.c.l.b16 %v8852
        %v9036 = vunpack.c.l.b16 %v8853
        %v9037 = vunpack.c.l.b16 %v8854
        %v9038 = vunpack.c.l.b16 %v8855
        %v9039 = vunpack.c.l.b16 %v8856
        %v9040 = vunpack.c.l.b16 %v8857
        %v9041 = vunpack.c.l.b16 %v8858
        %v9042 = vunpack.c.l.b16 %v8859
        %v9043 = vunpack.c.l.b16 %v8860
        %v9044 = vunpack.c.l.b16 %v8861
        %v9045 = vunpack.c.l.b16 %v8862
        %v9046 = vunpack.c.l.b16 %v8863
        %v9047 = vunpack.c.l.b16 %v8864
        %v9048 = vunpack.c.l.b16 %v8865
        %v9049 = vunpack.c.l.b16 %v8866
        %v9050 = vunpack.c.l.b16 %v8867
        %v9051 = vunpack.c.l.b16 %v8868
        %v9052 = vunpack.c.l.b16 %v8869
        %v9053 = vunpack.c.l.b16 %v8870
        %v9054 = vunpack.c.l.b16 %v8871
        %v9055 = vunpack.c.l.b16 %v8872
        %v9056 = vunpack.c.l.b16 %v8873
        %v9057 = vunpack.c.l.b16 %v8874
        %v9058 = vunpack.c.l.b16 %v8875
        %v9059 = vunpack.c.l.b16 %v8876
        %v9060 = vunpack.c.l.b16 %v8877
        %v9061 = vunpack.c.l.b16 %v8878
        %v9062 = vunpack.c.l.b16 %v8879
        %v9063 = vunpack.c.l.b16 %v8880
        %v9064 = vpack.c.b16 %v9001, %v9000
        %v9065 = vpack.c.b16 %v9003, %v9002
        %v9066 = vpack.c.b16 %v9005, %v9004
        %v9067 = vpack.c.b16 %v9007, %v9006
        %v9068 = vpack.c.b16 %v9009, %v9008
        %v9069 = vpack.c.b16 %v9011, %v9010
        %v9070 = vpack.c.b16 %v9013, %v9012
        %v9071 = vpack.c.b16 %v9015, %v9014
        %v9072 = vpack.c.b16 %v9017, %v9016
        %v9073 = vpack.c.b16 %v9019, %v9018
        %v9074 = vpack.c.b16 %v9021, %v9020
        %v9075 = vpack.c.b16 %v9023, %v9022
        %v9076 = vpack.c.b16 %v9025, %v9024
        %v9077 = vpack.c.b16 %v9027, %v9026
        %v9078 = vpack.c.b16 %v9029, %v9028
        %v9079 = vpack.c.b16 %v9031, %v9030
        %v9080 = vpack.c.b16 %v9033, %v9032
        %v9081 = vpack.c.b16 %v9035, %v9034
        %v9082 = vpack.c.b16 %v9037, %v9036
        %v9083 = vpack.c.b16 %v9039, %v9038
        %v9084 = vpack.c.b16 %v9041, %v9040
        %v9085 = vpack.c.b16 %v9043, %v9042
        %v9086 = vpack.c.b16 %v9045, %v9044
        %v9087 = vpack.c.b16 %v9047, %v9046
        %v9088 = vpack.c.b16 %v9049, %v9048
        %v9089 = vpack.c.b16 %v9051, %v9050
        %v9090 = vpack.c.b16 %v9053, %v9052
        %v9091 = vpack.c.b16 %v9055, %v9054
        %v9092 = vpack.c.b16 %v9057, %v9056
        %v9093 = vpack.c.b16 %v9059, %v9058
        %v9094 = vpack.c.b16 %v9061, %v9060
        %v9095 = vpack.c.b16 %v9063, %v9062
        %9128 = vmatprep.subr.bf16.mxu0 0
        %9129 = vmatpush1.bf16.msra.mxu0 %v9071
        %9130 = vmatprep.subr.bf16.mxu0 0
        %9131 = vmatpush1.bf16.msra.mxu0 %v9070
        %9132 = vmatprep.subr.bf16.mxu0 0
        %9133 = vmatpush1.bf16.msra.mxu0 %v9069
        %9134 = vmatprep.subr.bf16.mxu0 0
        %9135 = vmatpush1.bf16.msra.mxu0 %v9068
        %9136 = vmatprep.subr.bf16.mxu0 0
        %9137 = vmatpush1.bf16.msra.mxu0 %v9067
        %9138 = vmatprep.subr.bf16.mxu0 0
        %9139 = vmatpush1.bf16.msra.mxu0 %v9066
        %9140 = vmatprep.subr.bf16.mxu0 0
        %9141 = vmatpush1.bf16.msra.mxu0 %v9065
        %9142 = vmatprep.subr.bf16.mxu0 0
        %9143 = vmatpush1.bf16.msra.mxu0 %v9064
        %9144 = vmatprep.subr.bf16.mxu0 0
        %9145 = vmatpush2.bf16.msra.mxu0 %v9079
        %9146 = vmatprep.subr.bf16.mxu0 0
        %9147 = vmatpush2.bf16.msra.mxu0 %v9078
        %9148 = vmatprep.subr.bf16.mxu0 0
        %9149 = vmatpush2.bf16.msra.mxu0 %v9077
        %9150 = vmatprep.subr.bf16.mxu0 0
        %9151 = vmatpush2.bf16.msra.mxu0 %v9076
        %9152 = vmatprep.subr.bf16.mxu0 0
        %9153 = vmatpush2.bf16.msra.mxu0 %v9075
        %9154 = vmatprep.subr.bf16.mxu0 0
        %9155 = vmatpush2.bf16.msra.mxu0 %v9074
        %9156 = vmatprep.subr.bf16.mxu0 0
        %9157 = vmatpush2.bf16.msra.mxu0 %v9073
        %9158 = vmatprep.subr.bf16.mxu0 0
        %9159 = vmatpush2.bf16.msra.mxu0 %v9072
        %9160 = vmatprep.mubr.bf16.mxu0 %v8929
        %9161 = vmatmul.mubr.bf16.gmra.mxu0 %v8928
        %v9162 = vpop.f32.mrf.mxu0
        %v9163 = vadd.f32 0.0, %v9162
        %v9164 = vpop.f32.mrf.mxu0
        %v9165 = vpop.f32.mrf.mxu0
        %v9166 = vpop.f32.mrf.mxu0
        %9167 = vdwg.mxu0
        %9168 = vmatprep.subr.bf16.mxu0 0
        %9169 = vmatpush1.bf16.msra.mxu0 %v9087
        %9170 = vmatprep.subr.bf16.mxu0 0
        %9171 = vmatpush1.bf16.msra.mxu0 %v9086
        %9172 = vmatprep.subr.bf16.mxu0 0
        %9173 = vmatpush1.bf16.msra.mxu0 %v9085
        %9174 = vmatprep.subr.bf16.mxu0 0
        %9175 = vmatpush1.bf16.msra.mxu0 %v9084
        %9176 = vmatprep.subr.bf16.mxu0 0
        %9177 = vmatpush1.bf16.msra.mxu0 %v9083
        %9178 = vmatprep.subr.bf16.mxu0 0
        %9179 = vmatpush1.bf16.msra.mxu0 %v9082
        %9180 = vmatprep.subr.bf16.mxu0 0
        %9181 = vmatpush1.bf16.msra.mxu0 %v9081
        %9182 = vmatprep.subr.bf16.mxu0 0
        %9183 = vmatpush1.bf16.msra.mxu0 %v9080
        %9184 = vmatprep.subr.bf16.mxu0 0
        %9185 = vmatpush2.bf16.msra.mxu0 %v9095
        %9186 = vmatprep.subr.bf16.mxu0 0
        %9187 = vmatpush2.bf16.msra.mxu0 %v9094
        %9188 = vmatprep.subr.bf16.mxu0 0
        %9189 = vmatpush2.bf16.msra.mxu0 %v9093
        %9190 = vmatprep.subr.bf16.mxu0 0
        %9191 = vmatpush2.bf16.msra.mxu0 %v9092
        %9192 = vmatprep.subr.bf16.mxu0 0
        %9193 = vmatpush2.bf16.msra.mxu0 %v9091
        %9194 = vmatprep.subr.bf16.mxu0 0
        %9195 = vmatpush2.bf16.msra.mxu0 %v9090
        %9196 = vmatprep.subr.bf16.mxu0 0
        %9197 = vmatpush2.bf16.msra.mxu0 %v9089
        %9198 = vmatprep.subr.bf16.mxu0 0
        %9199 = vmatpush2.bf16.msra.mxu0 %v9088
        %9200 = vmatprep.mubr.bf16.mxu0 %v8931
        %9201 = vmatmul.mubr.bf16.gmra.mxu0 %v8930
        %v9202 = vpop.f32.mrf.mxu0
        %v9203 = vadd.f32 %v9163, %v9202
        %v9204 = vpop.f32.mrf.mxu0
        %v9205 = vpop.f32.mrf.mxu0
        %v9206 = vpop.f32.mrf.mxu0
        %9207 = vdwg.mxu0
        %v9208 = vmax.f32 %v9203, 0.0
        %v9209 = vpack.c.bf16 %v9208, %v9208
        %v9210 = vld [vmem:[#allocation15] sm:$0xff]
        %v9211 = vld [vmem:[#allocation15 + $0x8] sm:$0xff]
        %v9212 = vld [vmem:[#allocation15 + $0x10] sm:$0xff]
        %v9213 = vld [vmem:[#allocation15 + $0x18] sm:$0xff]
        %v9214 = vld [vmem:[#allocation15 + $0x20] sm:$0xff]
        %v9215 = vld [vmem:[#allocation15 + $0x28] sm:$0xff]
        %v9216 = vld [vmem:[#allocation15 + $0x30] sm:$0xff]
        %v9217 = vld [vmem:[#allocation15 + $0x38] sm:$0xff]
        %v9218 = vld [vmem:[#allocation15 + $0x40] sm:$0xff]
        %v9219 = vld [vmem:[#allocation15 + $0x48] sm:$0xff]
        %v9220 = vld [vmem:[#allocation15 + $0x50] sm:$0xff]
        %v9221 = vld [vmem:[#allocation15 + $0x58] sm:$0xff]
        %v9222 = vld [vmem:[#allocation15 + $0x60] sm:$0xff]
        %v9223 = vld [vmem:[#allocation15 + $0x68] sm:$0xff]
        %v9224 = vld [vmem:[#allocation15 + $0x70] sm:$0xff]
        %v9225 = vld [vmem:[#allocation15 + $0x78] sm:$0xff]
        %v9226 = vld [vmem:[#allocation15 + $0x80] sm:$0xff]
        %v9227 = vld [vmem:[#allocation15 + $0x88] sm:$0xff]
        %v9228 = vld [vmem:[#allocation15 + $0x90] sm:$0xff]
        %v9229 = vld [vmem:[#allocation15 + $0x98] sm:$0xff]
        %v9230 = vld [vmem:[#allocation15 + $0xa0] sm:$0xff]
        %v9231 = vld [vmem:[#allocation15 + $0xa8] sm:$0xff]
        %v9232 = vld [vmem:[#allocation15 + $0xb0] sm:$0xff]
        %v9233 = vld [vmem:[#allocation15 + $0xb8] sm:$0xff]
        %v9234 = vld [vmem:[#allocation15 + $0xc0] sm:$0xff]
        %v9235 = vld [vmem:[#allocation15 + $0xc8] sm:$0xff]
        %v9236 = vld [vmem:[#allocation15 + $0xd0] sm:$0xff]
        %v9237 = vld [vmem:[#allocation15 + $0xd8] sm:$0xff]
        %v9238 = vld [vmem:[#allocation15 + $0xe0] sm:$0xff]
        %v9239 = vld [vmem:[#allocation15 + $0xe8] sm:$0xff]
        %v9240 = vld [vmem:[#allocation15 + $0xf0] sm:$0xff]
        %v9241 = vld [vmem:[#allocation15 + $0xf8] sm:$0xff]
        %v9274 = vunpack.c.l.b16 %v9210
        %v9275 = vunpack.c.h.b16 %v9210
        %v9276 = vunpack.c.l.b16 %v9211
        %v9277 = vunpack.c.h.b16 %v9211
        %v9278 = vunpack.c.l.b16 %v9212
        %v9279 = vunpack.c.h.b16 %v9212
        %v9280 = vunpack.c.l.b16 %v9213
        %v9281 = vunpack.c.h.b16 %v9213
        %v9282 = vunpack.c.l.b16 %v9214
        %v9283 = vunpack.c.h.b16 %v9214
        %v9284 = vunpack.c.l.b16 %v9215
        %v9285 = vunpack.c.h.b16 %v9215
        %v9286 = vunpack.c.l.b16 %v9216
        %v9287 = vunpack.c.h.b16 %v9216
        %v9288 = vunpack.c.l.b16 %v9217
        %v9289 = vunpack.c.h.b16 %v9217
        %v9290 = vunpack.c.l.b16 %v9218
        %v9291 = vunpack.c.h.b16 %v9218
        %v9292 = vunpack.c.l.b16 %v9219
        %v9293 = vunpack.c.h.b16 %v9219
        %v9294 = vunpack.c.l.b16 %v9220
        %v9295 = vunpack.c.h.b16 %v9220
        %v9296 = vunpack.c.l.b16 %v9221
        %v9297 = vunpack.c.h.b16 %v9221
        %v9298 = vunpack.c.l.b16 %v9222
        %v9299 = vunpack.c.h.b16 %v9222
        %v9300 = vunpack.c.l.b16 %v9223
        %v9301 = vunpack.c.h.b16 %v9223
        %v9302 = vunpack.c.l.b16 %v9224
        %v9303 = vunpack.c.h.b16 %v9224
        %v9304 = vunpack.c.l.b16 %v9225
        %v9305 = vunpack.c.h.b16 %v9225
        %v9306 = vunpack.c.l.b16 %v9226
        %v9307 = vunpack.c.h.b16 %v9226
        %v9308 = vunpack.c.l.b16 %v9227
        %v9309 = vunpack.c.h.b16 %v9227
        %v9310 = vunpack.c.l.b16 %v9228
        %v9311 = vunpack.c.h.b16 %v9228
        %v9312 = vunpack.c.l.b16 %v9229
        %v9313 = vunpack.c.h.b16 %v9229
        %v9314 = vunpack.c.l.b16 %v9230
        %v9315 = vunpack.c.h.b16 %v9230
        %v9316 = vunpack.c.l.b16 %v9231
        %v9317 = vunpack.c.h.b16 %v9231
        %v9318 = vunpack.c.l.b16 %v9232
        %v9319 = vunpack.c.h.b16 %v9232
        %v9320 = vunpack.c.l.b16 %v9233
        %v9321 = vunpack.c.h.b16 %v9233
        %v9322 = vunpack.c.l.b16 %v9234
        %v9323 = vunpack.c.h.b16 %v9234
        %v9324 = vunpack.c.l.b16 %v9235
        %v9325 = vunpack.c.h.b16 %v9235
        %v9326 = vunpack.c.l.b16 %v9236
        %v9327 = vunpack.c.h.b16 %v9236
        %v9328 = vunpack.c.l.b16 %v9237
        %v9329 = vunpack.c.h.b16 %v9237
        %v9330 = vunpack.c.l.b16 %v9238
        %v9331 = vunpack.c.h.b16 %v9238
        %v9332 = vunpack.c.l.b16 %v9239
        %v9333 = vunpack.c.h.b16 %v9239
        %v9334 = vunpack.c.l.b16 %v9240
        %v9335 = vunpack.c.h.b16 %v9240
        %v9336 = vunpack.c.l.b16 %v9241
        %v9337 = vunpack.c.h.b16 %v9241
        %v9338 = vpack.c.b16 %v9278, %v9274
        %v9339 = vpack.c.b16 %v9279, %v9275
        %v9340 = vpack.c.b16 %v9280, %v9276
        %v9341 = vpack.c.b16 %v9281, %v9277
        %v9342 = vpack.c.b16 %v9286, %v9282
        %v9343 = vpack.c.b16 %v9287, %v9283
        %v9344 = vpack.c.b16 %v9288, %v9284
        %v9345 = vpack.c.b16 %v9289, %v9285
        %v9346 = vpack.c.b16 %v9294, %v9290
        %v9347 = vpack.c.b16 %v9295, %v9291
        %v9348 = vpack.c.b16 %v9296, %v9292
        %v9349 = vpack.c.b16 %v9297, %v9293
        %v9350 = vpack.c.b16 %v9302, %v9298
        %v9351 = vpack.c.b16 %v9303, %v9299
        %v9352 = vpack.c.b16 %v9304, %v9300
        %v9353 = vpack.c.b16 %v9305, %v9301
        %v9354 = vpack.c.b16 %v9310, %v9306
        %v9355 = vpack.c.b16 %v9311, %v9307
        %v9356 = vpack.c.b16 %v9312, %v9308
        %v9357 = vpack.c.b16 %v9313, %v9309
        %v9358 = vpack.c.b16 %v9318, %v9314
        %v9359 = vpack.c.b16 %v9319, %v9315
        %v9360 = vpack.c.b16 %v9320, %v9316
        %v9361 = vpack.c.b16 %v9321, %v9317
        %v9362 = vpack.c.b16 %v9326, %v9322
        %v9363 = vpack.c.b16 %v9327, %v9323
        %v9364 = vpack.c.b16 %v9328, %v9324
        %v9365 = vpack.c.b16 %v9329, %v9325
        %v9366 = vpack.c.b16 %v9334, %v9330
        %v9367 = vpack.c.b16 %v9335, %v9331
        %v9368 = vpack.c.b16 %v9336, %v9332
        %v9369 = vpack.c.b16 %v9337, %v9333
        %9402 = vmatprep.subr.bf16.mxu0 %v9367
        %9403 = vmatpush1.bf16.msra.mxu0 %v9366
        %9404 = vmatprep.subr.bf16.mxu0 %v9363
        %9405 = vmatpush1.bf16.msra.mxu0 %v9362
        %9406 = vmatprep.subr.bf16.mxu0 %v9359
        %9407 = vmatpush1.bf16.msra.mxu0 %v9358
        %9408 = vmatprep.subr.bf16.mxu0 %v9355
        %9409 = vmatpush1.bf16.msra.mxu0 %v9354
        %9410 = vmatprep.subr.bf16.mxu0 %v9351
        %9411 = vmatpush1.bf16.msra.mxu0 %v9350
        %9412 = vmatprep.subr.bf16.mxu0 %v9347
        %9413 = vmatpush1.bf16.msra.mxu0 %v9346
        %9414 = vmatprep.subr.bf16.mxu0 %v9343
        %9415 = vmatpush1.bf16.msra.mxu0 %v9342
        %9416 = vmatprep.subr.bf16.mxu0 %v9339
        %9417 = vmatpush1.bf16.msra.mxu0 %v9338
        %9418 = vmatprep.subr.bf16.mxu0 0
        %9419 = vmatpush2.bf16.msra.mxu0 0
        %9420 = vmatprep.subr.bf16.mxu0 0
        %9421 = vmatpush2.bf16.msra.mxu0 0
        %9422 = vmatprep.subr.bf16.mxu0 0
        %9423 = vmatpush2.bf16.msra.mxu0 0
        %9424 = vmatprep.subr.bf16.mxu0 0
        %9425 = vmatpush2.bf16.msra.mxu0 0
        %9426 = vmatprep.subr.bf16.mxu0 0
        %9427 = vmatpush2.bf16.msra.mxu0 0
        %9428 = vmatprep.subr.bf16.mxu0 0
        %9429 = vmatpush2.bf16.msra.mxu0 0
        %9430 = vmatprep.subr.bf16.mxu0 0
        %9431 = vmatpush2.bf16.msra.mxu0 0
        %9432 = vmatprep.subr.bf16.mxu0 0
        %9433 = vmatpush2.bf16.msra.mxu0 0
        %9434 = vmatprep.mubr.bf16.mxu0 0
        %9435 = vmatmul.mubr.bf16.gmra.mxu0 %v9209
        %v9436 = vpop.f32.mrf.mxu0
        %v9437 = vadd.f32 0.0, %v9436
        %v9438 = vpop.f32.mrf.mxu0
        %v9439 = vadd.f32 0.0, %v9438
        %v9440 = vpop.f32.mrf.mxu0
        %v9441 = vpop.f32.mrf.mxu0
        %9442 = vdwg.mxu0
        %9443 = vmatprep.subr.bf16.mxu0 %v9369
        %9444 = vmatpush1.bf16.msra.mxu0 %v9368
        %9445 = vmatprep.subr.bf16.mxu0 %v9365
        %9446 = vmatpush1.bf16.msra.mxu0 %v9364
        %9447 = vmatprep.subr.bf16.mxu0 %v9361
        %9448 = vmatpush1.bf16.msra.mxu0 %v9360
        %9449 = vmatprep.subr.bf16.mxu0 %v9357
        %9450 = vmatpush1.bf16.msra.mxu0 %v9356
        %9451 = vmatprep.subr.bf16.mxu0 %v9353
        %9452 = vmatpush1.bf16.msra.mxu0 %v9352
        %9453 = vmatprep.subr.bf16.mxu0 %v9349
        %9454 = vmatpush1.bf16.msra.mxu0 %v9348
        %9455 = vmatprep.subr.bf16.mxu0 %v9345
        %9456 = vmatpush1.bf16.msra.mxu0 %v9344
        %9457 = vmatprep.subr.bf16.mxu0 %v9341
        %9458 = vmatpush1.bf16.msra.mxu0 %v9340
        %9459 = vmatprep.subr.bf16.mxu0 0
        %9460 = vmatpush2.bf16.msra.mxu0 0
        %9461 = vmatprep.subr.bf16.mxu0 0
        %9462 = vmatpush2.bf16.msra.mxu0 0
        %9463 = vmatprep.subr.bf16.mxu0 0
        %9464 = vmatpush2.bf16.msra.mxu0 0
        %9465 = vmatprep.subr.bf16.mxu0 0
        %9466 = vmatpush2.bf16.msra.mxu0 0
        %9467 = vmatprep.subr.bf16.mxu0 0
        %9468 = vmatpush2.bf16.msra.mxu0 0
        %9469 = vmatprep.subr.bf16.mxu0 0
        %9470 = vmatpush2.bf16.msra.mxu0 0
        %9471 = vmatprep.subr.bf16.mxu0 0
        %9472 = vmatpush2.bf16.msra.mxu0 0
        %9473 = vmatprep.subr.bf16.mxu0 0
        %9474 = vmatpush2.bf16.msra.mxu0 0
        %9475 = vmatprep.mubr.bf16.mxu0 0
        %9476 = vmatmul.mubr.bf16.gmra.mxu0 %v9209
        %v9477 = vpop.f32.mrf.mxu0
        %v9478 = vadd.f32 0.0, %v9477
        %v9479 = vpop.f32.mrf.mxu0
        %v9480 = vadd.f32 0.0, %v9479
        %v9481 = vpop.f32.mrf.mxu0
        %v9482 = vpop.f32.mrf.mxu0
        %9483 = vdwg.mxu0
        %v9484 = vxor.u32 %v9437, 2147483648
        %v9485 = vxor.u32 %v9439, 2147483648
        %v9486 = vxor.u32 %v9478, 2147483648
        %v9487 = vxor.u32 %v9480, 2147483648
        %v9488 = vmul.f32 %v9484, 1.442695
        %v9489 = vpow.pop %v9488
        %v9490 = vmul.f32 %v9485, 1.442695
        %v9491 = vpow.pop %v9490
        %v9492 = vmul.f32 %v9486, 1.442695
        %v9493 = vpow.pop %v9492
        %v9494 = vmul.f32 %v9487, 1.442695
        %v9495 = vpow.pop %v9494
        %v9496 = vadd.f32 %v9489, 1.0
        %v9497 = vadd.f32 %v9491, 1.0
        %v9498 = vadd.f32 %v9493, 1.0
        %v9499 = vadd.f32 %v9495, 1.0
        %v9500 = vrcp.pop %v9496
        %v9501 = vmul.f32 1.0, %v9500
        %v9502 = vrcp.pop %v9497
        %v9503 = vmul.f32 1.0, %v9502
        %v9504 = vrcp.pop %v9498
        %v9505 = vmul.f32 1.0, %v9504
        %v9506 = vrcp.pop %v9499
        %v9507 = vmul.f32 1.0, %v9506
        %v9512 = vcombine.low %v9501, %v9503
        %v9513 = vcombine.low %v9505, %v9507
        %v9515 = vunpack.c.l.s4 1966171168
        %v9516 = vunpack.c.0.s8 %v9515
        %v9517 = vlaneseq
        %v9518 = vshrl.u32 %v9517, 7
        %v9519 = vsub.s32 %v9516, %v9518
        %v9520 = vrot.slane %v9512, %v9519
        %v9522 = vunpack.c.l.s4 1966171168
        %v9523 = vunpack.c.0.s8 %v9522
        %v9524 = vlaneseq
        %v9525 = vshrl.u32 %v9524, 7
        %v9526 = vsub.s32 %v9523, %v9525
        %v9527 = vrot.slane %v9513, %v9526
        %v9528 = vcombine.low %v9520, %v9527
        %v9529 = vcombine.high %v9520, %v9527
        %v9531 = vunpack.c.l.s4 1966171168
        %v9532 = vunpack.c.0.s8 %v9531
        %v9533 = vlaneseq
        %v9534 = vshrl.u32 %v9533, 7
        %v9535 = vsub.s32 %v9532, %v9534
        %v9536 = vrot.slane %v9528, %v9535
        %v9538 = vunpack.c.l.s4 1966171168
        %v9539 = vunpack.c.0.s8 %v9538
        %v9540 = vlaneseq
        %v9541 = vshrl.u32 %v9540, 7
        %v9542 = vsub.s32 %v9539, %v9541
        %v9543 = vrot.slane %v9529, %v9542
        %v9544 = vcombine.high %v9536, %v9536
        %v9545 = vcombine.high %v9543, %v9543
        %v9546 = vlaneseq
        %v9547 = vshrl.u32 %v9546, 7
        %v9548 = vsub.s32 0, %v9547
        %v9549 = vrot.slane %v9536, %v9548
        %v9550 = vlaneseq
        %v9551 = vshrl.u32 %v9550, 7
        %v9552 = vsub.s32 1, %v9551
        %v9553 = vrot.slane %v9536, %v9552
        %v9554 = vlaneseq
        %v9555 = vshrl.u32 %v9554, 7
        %v9556 = vsub.s32 2, %v9555
        %v9557 = vrot.slane %v9536, %v9556
        %v9558 = vlaneseq
        %v9559 = vshrl.u32 %v9558, 7
        %v9560 = vsub.s32 3, %v9559
        %v9561 = vrot.slane %v9536, %v9560
        %v9562 = vlaneseq
        %v9563 = vshrl.u32 %v9562, 7
        %v9564 = vsub.s32 0, %v9563
        %v9565 = vrot.slane %v9543, %v9564
        %v9566 = vlaneseq
        %v9567 = vshrl.u32 %v9566, 7
        %v9568 = vsub.s32 1, %v9567
        %v9569 = vrot.slane %v9543, %v9568
        %v9570 = vlaneseq
        %v9571 = vshrl.u32 %v9570, 7
        %v9572 = vsub.s32 2, %v9571
        %v9573 = vrot.slane %v9543, %v9572
        %v9574 = vlaneseq
        %v9575 = vshrl.u32 %v9574, 7
        %v9576 = vsub.s32 3, %v9575
        %v9577 = vrot.slane %v9543, %v9576
        %v9578 = vlaneseq
        %v9579 = vshrl.u32 %v9578, 7
        %v9580 = vsub.s32 0, %v9579
        %v9581 = vrot.slane %v9544, %v9580
        %v9582 = vlaneseq
        %v9583 = vshrl.u32 %v9582, 7
        %v9584 = vsub.s32 1, %v9583
        %v9585 = vrot.slane %v9544, %v9584
        %v9586 = vlaneseq
        %v9587 = vshrl.u32 %v9586, 7
        %v9588 = vsub.s32 2, %v9587
        %v9589 = vrot.slane %v9544, %v9588
        %v9590 = vlaneseq
        %v9591 = vshrl.u32 %v9590, 7
        %v9592 = vsub.s32 3, %v9591
        %v9593 = vrot.slane %v9544, %v9592
        %v9594 = vlaneseq
        %v9595 = vshrl.u32 %v9594, 7
        %v9596 = vsub.s32 0, %v9595
        %v9597 = vrot.slane %v9545, %v9596
        %v9598 = vlaneseq
        %v9599 = vshrl.u32 %v9598, 7
        %v9600 = vsub.s32 1, %v9599
        %v9601 = vrot.slane %v9545, %v9600
        %v9602 = vlaneseq
        %v9603 = vshrl.u32 %v9602, 7
        %v9604 = vsub.s32 2, %v9603
        %v9605 = vrot.slane %v9545, %v9604
        %v9606 = vlaneseq
        %v9607 = vshrl.u32 %v9606, 7
        %v9608 = vsub.s32 3, %v9607
        %v9609 = vrot.slane %v9545, %v9608
        %v9626 = vmul.f32 %v8448, %v9549
        %v9627 = vmul.f32 %v8449, %v9553
        %v9628 = vmul.f32 %v8450, %v9557
        %v9629 = vmul.f32 %v8451, %v9561
        %v9630 = vmul.f32 %v8452, %v9549
        %v9631 = vmul.f32 %v8453, %v9553
        %v9632 = vmul.f32 %v8454, %v9557
        %v9633 = vmul.f32 %v8455, %v9561
        %v9634 = vmul.f32 %v8456, %v9549
        %v9635 = vmul.f32 %v8457, %v9553
        %v9636 = vmul.f32 %v8458, %v9557
        %v9637 = vmul.f32 %v8459, %v9561
        %v9638 = vmul.f32 %v8460, %v9549
        %v9639 = vmul.f32 %v8461, %v9553
        %v9640 = vmul.f32 %v8462, %v9557
        %v9641 = vmul.f32 %v8463, %v9561
        %v9642 = vmul.f32 %v8464, %v9549
        %v9643 = vmul.f32 %v8465, %v9553
        %v9644 = vmul.f32 %v8466, %v9557
        %v9645 = vmul.f32 %v8467, %v9561
        %v9646 = vmul.f32 %v8468, %v9549
        %v9647 = vmul.f32 %v8469, %v9553
        %v9648 = vmul.f32 %v8470, %v9557
        %v9649 = vmul.f32 %v8471, %v9561
        %v9650 = vmul.f32 %v8472, %v9549
        %v9651 = vmul.f32 %v8473, %v9553
        %v9652 = vmul.f32 %v8474, %v9557
        %v9653 = vmul.f32 %v8475, %v9561
        %v9654 = vmul.f32 %v8476, %v9549
        %v9655 = vmul.f32 %v8477, %v9553
        %v9656 = vmul.f32 %v8478, %v9557
        %v9657 = vmul.f32 %v8479, %v9561
        %v9658 = vmul.f32 %v8480, %v9565
        %v9659 = vmul.f32 %v8481, %v9569
        %v9660 = vmul.f32 %v8482, %v9573
        %v9661 = vmul.f32 %v8483, %v9577
        %v9662 = vmul.f32 %v8484, %v9565
        %v9663 = vmul.f32 %v8485, %v9569
        %v9664 = vmul.f32 %v8486, %v9573
        %v9665 = vmul.f32 %v8487, %v9577
        %v9666 = vmul.f32 %v8488, %v9565
        %v9667 = vmul.f32 %v8489, %v9569
        %v9668 = vmul.f32 %v8490, %v9573
        %v9669 = vmul.f32 %v8491, %v9577
        %v9670 = vmul.f32 %v8492, %v9565
        %v9671 = vmul.f32 %v8493, %v9569
        %v9672 = vmul.f32 %v8494, %v9573
        %v9673 = vmul.f32 %v8495, %v9577
        %v9674 = vmul.f32 %v8496, %v9565
        %v9675 = vmul.f32 %v8497, %v9569
        %v9676 = vmul.f32 %v8498, %v9573
        %v9677 = vmul.f32 %v8499, %v9577
        %v9678 = vmul.f32 %v8500, %v9565
        %v9679 = vmul.f32 %v8501, %v9569
        %v9680 = vmul.f32 %v8502, %v9573
        %v9681 = vmul.f32 %v8503, %v9577
        %v9682 = vmul.f32 %v8504, %v9565
        %v9683 = vmul.f32 %v8505, %v9569
        %v9684 = vmul.f32 %v8506, %v9573
        %v9685 = vmul.f32 %v8507, %v9577
        %v9686 = vmul.f32 %v8508, %v9565
        %v9687 = vmul.f32 %v8509, %v9569
        %v9688 = vmul.f32 %v8510, %v9573
        %v9689 = vmul.f32 %v8511, %v9577
        %v9690 = vmul.f32 %v8512, %v9581
        %v9691 = vmul.f32 %v8513, %v9585
        %v9692 = vmul.f32 %v8514, %v9589
        %v9693 = vmul.f32 %v8515, %v9593
        %v9694 = vmul.f32 %v8516, %v9581
        %v9695 = vmul.f32 %v8517, %v9585
        %v9696 = vmul.f32 %v8518, %v9589
        %v9697 = vmul.f32 %v8519, %v9593
        %v9698 = vmul.f32 %v8520, %v9581
        %v9699 = vmul.f32 %v8521, %v9585
        %v9700 = vmul.f32 %v8522, %v9589
        %v9701 = vmul.f32 %v8523, %v9593
        %v9702 = vmul.f32 %v8524, %v9581
        %v9703 = vmul.f32 %v8525, %v9585
        %v9704 = vmul.f32 %v8526, %v9589
        %v9705 = vmul.f32 %v8527, %v9593
        %v9706 = vmul.f32 %v8528, %v9581
        %v9707 = vmul.f32 %v8529, %v9585
        %v9708 = vmul.f32 %v8530, %v9589
        %v9709 = vmul.f32 %v8531, %v9593
        %v9710 = vmul.f32 %v8532, %v9581
        %v9711 = vmul.f32 %v8533, %v9585
        %v9712 = vmul.f32 %v8534, %v9589
        %v9713 = vmul.f32 %v8535, %v9593
        %v9714 = vmul.f32 %v8536, %v9581
        %v9715 = vmul.f32 %v8537, %v9585
        %v9716 = vmul.f32 %v8538, %v9589
        %v9717 = vmul.f32 %v8539, %v9593
        %v9718 = vmul.f32 %v8540, %v9581
        %v9719 = vmul.f32 %v8541, %v9585
        %v9720 = vmul.f32 %v8542, %v9589
        %v9721 = vmul.f32 %v8543, %v9593
        %v9722 = vmul.f32 %v8544, %v9597
        %v9723 = vmul.f32 %v8545, %v9601
        %v9724 = vmul.f32 %v8546, %v9605
        %v9725 = vmul.f32 %v8547, %v9609
        %v9726 = vmul.f32 %v8548, %v9597
        %v9727 = vmul.f32 %v8549, %v9601
        %v9728 = vmul.f32 %v8550, %v9605
        %v9729 = vmul.f32 %v8551, %v9609
        %v9730 = vmul.f32 %v8552, %v9597
        %v9731 = vmul.f32 %v8553, %v9601
        %v9732 = vmul.f32 %v8554, %v9605
        %v9733 = vmul.f32 %v8555, %v9609
        %v9734 = vmul.f32 %v8556, %v9597
        %v9735 = vmul.f32 %v8557, %v9601
        %v9736 = vmul.f32 %v8558, %v9605
        %v9737 = vmul.f32 %v8559, %v9609
        %v9738 = vmul.f32 %v8560, %v9597
        %v9739 = vmul.f32 %v8561, %v9601
        %v9740 = vmul.f32 %v8562, %v9605
        %v9741 = vmul.f32 %v8563, %v9609
        %v9742 = vmul.f32 %v8564, %v9597
        %v9743 = vmul.f32 %v8565, %v9601
        %v9744 = vmul.f32 %v8566, %v9605
        %v9745 = vmul.f32 %v8567, %v9609
        %v9746 = vmul.f32 %v8568, %v9597
        %v9747 = vmul.f32 %v8569, %v9601
        %v9748 = vmul.f32 %v8570, %v9605
        %v9749 = vmul.f32 %v8571, %v9609
        %v9750 = vmul.f32 %v8572, %v9597
        %v9751 = vmul.f32 %v8573, %v9601
        %v9752 = vmul.f32 %v8574, %v9605
        %v9753 = vmul.f32 %v8575, %v9609
        %v9754 = vpack.c.bf16 %v9626, %v9626
        %v9755 = vpack.c.bf16 %v9627, %v9627
        %v9756 = vpack.c.bf16 %v9628, %v9628
        %v9757 = vpack.c.bf16 %v9629, %v9629
        %v9758 = vpack.c.bf16 %v9630, %v9630
        %v9759 = vpack.c.bf16 %v9631, %v9631
        %v9760 = vpack.c.bf16 %v9632, %v9632
        %v9761 = vpack.c.bf16 %v9633, %v9633
        %v9762 = vpack.c.bf16 %v9634, %v9634
        %v9763 = vpack.c.bf16 %v9635, %v9635
        %v9764 = vpack.c.bf16 %v9636, %v9636
        %v9765 = vpack.c.bf16 %v9637, %v9637
        %v9766 = vpack.c.bf16 %v9638, %v9638
        %v9767 = vpack.c.bf16 %v9639, %v9639
        %v9768 = vpack.c.bf16 %v9640, %v9640
        %v9769 = vpack.c.bf16 %v9641, %v9641
        %v9770 = vpack.c.bf16 %v9642, %v9642
        %v9771 = vpack.c.bf16 %v9643, %v9643
        %v9772 = vpack.c.bf16 %v9644, %v9644
        %v9773 = vpack.c.bf16 %v9645, %v9645
        %v9774 = vpack.c.bf16 %v9646, %v9646
        %v9775 = vpack.c.bf16 %v9647, %v9647
        %v9776 = vpack.c.bf16 %v9648, %v9648
        %v9777 = vpack.c.bf16 %v9649, %v9649
        %v9778 = vpack.c.bf16 %v9650, %v9650
        %v9779 = vpack.c.bf16 %v9651, %v9651
        %v9780 = vpack.c.bf16 %v9652, %v9652
        %v9781 = vpack.c.bf16 %v9653, %v9653
        %v9782 = vpack.c.bf16 %v9654, %v9654
        %v9783 = vpack.c.bf16 %v9655, %v9655
        %v9784 = vpack.c.bf16 %v9656, %v9656
        %v9785 = vpack.c.bf16 %v9657, %v9657
        %v9786 = vpack.c.bf16 %v9658, %v9658
        %v9787 = vpack.c.bf16 %v9659, %v9659
        %v9788 = vpack.c.bf16 %v9660, %v9660
        %v9789 = vpack.c.bf16 %v9661, %v9661
        %v9790 = vpack.c.bf16 %v9662, %v9662
        %v9791 = vpack.c.bf16 %v9663, %v9663
        %v9792 = vpack.c.bf16 %v9664, %v9664
        %v9793 = vpack.c.bf16 %v9665, %v9665
        %v9794 = vpack.c.bf16 %v9666, %v9666
        %v9795 = vpack.c.bf16 %v9667, %v9667
        %v9796 = vpack.c.bf16 %v9668, %v9668
        %v9797 = vpack.c.bf16 %v9669, %v9669
        %v9798 = vpack.c.bf16 %v9670, %v9670
        %v9799 = vpack.c.bf16 %v9671, %v9671
        %v9800 = vpack.c.bf16 %v9672, %v9672
        %v9801 = vpack.c.bf16 %v9673, %v9673
        %v9802 = vpack.c.bf16 %v9674, %v9674
        %v9803 = vpack.c.bf16 %v9675, %v9675
        %v9804 = vpack.c.bf16 %v9676, %v9676
        %v9805 = vpack.c.bf16 %v9677, %v9677
        %v9806 = vpack.c.bf16 %v9678, %v9678
        %v9807 = vpack.c.bf16 %v9679, %v9679
        %v9808 = vpack.c.bf16 %v9680, %v9680
        %v9809 = vpack.c.bf16 %v9681, %v9681
        %v9810 = vpack.c.bf16 %v9682, %v9682
        %v9811 = vpack.c.bf16 %v9683, %v9683
        %v9812 = vpack.c.bf16 %v9684, %v9684
        %v9813 = vpack.c.bf16 %v9685, %v9685
        %v9814 = vpack.c.bf16 %v9686, %v9686
        %v9815 = vpack.c.bf16 %v9687, %v9687
        %v9816 = vpack.c.bf16 %v9688, %v9688
        %v9817 = vpack.c.bf16 %v9689, %v9689
        %v9818 = vpack.c.bf16 %v9690, %v9690
        %v9819 = vpack.c.bf16 %v9691, %v9691
        %v9820 = vpack.c.bf16 %v9692, %v9692
        %v9821 = vpack.c.bf16 %v9693, %v9693
        %v9822 = vpack.c.bf16 %v9694, %v9694
        %v9823 = vpack.c.bf16 %v9695, %v9695
        %v9824 = vpack.c.bf16 %v9696, %v9696
        %v9825 = vpack.c.bf16 %v9697, %v9697
        %v9826 = vpack.c.bf16 %v9698, %v9698
        %v9827 = vpack.c.bf16 %v9699, %v9699
        %v9828 = vpack.c.bf16 %v9700, %v9700
        %v9829 = vpack.c.bf16 %v9701, %v9701
        %v9830 = vpack.c.bf16 %v9702, %v9702
        %v9831 = vpack.c.bf16 %v9703, %v9703
        %v9832 = vpack.c.bf16 %v9704, %v9704
        %v9833 = vpack.c.bf16 %v9705, %v9705
        %v9834 = vpack.c.bf16 %v9706, %v9706
        %v9835 = vpack.c.bf16 %v9707, %v9707
        %v9836 = vpack.c.bf16 %v9708, %v9708
        %v9837 = vpack.c.bf16 %v9709, %v9709
        %v9838 = vpack.c.bf16 %v9710, %v9710
        %v9839 = vpack.c.bf16 %v9711, %v9711
        %v9840 = vpack.c.bf16 %v9712, %v9712
        %v9841 = vpack.c.bf16 %v9713, %v9713
        %v9842 = vpack.c.bf16 %v9714, %v9714
        %v9843 = vpack.c.bf16 %v9715, %v9715
        %v9844 = vpack.c.bf16 %v9716, %v9716
        %v9845 = vpack.c.bf16 %v9717, %v9717
        %v9846 = vpack.c.bf16 %v9718, %v9718
        %v9847 = vpack.c.bf16 %v9719, %v9719
        %v9848 = vpack.c.bf16 %v9720, %v9720
        %v9849 = vpack.c.bf16 %v9721, %v9721
        %v9850 = vpack.c.bf16 %v9722, %v9722
        %v9851 = vpack.c.bf16 %v9723, %v9723
        %v9852 = vpack.c.bf16 %v9724, %v9724
        %v9853 = vpack.c.bf16 %v9725, %v9725
        %v9854 = vpack.c.bf16 %v9726, %v9726
        %v9855 = vpack.c.bf16 %v9727, %v9727
        %v9856 = vpack.c.bf16 %v9728, %v9728
        %v9857 = vpack.c.bf16 %v9729, %v9729
        %v9858 = vpack.c.bf16 %v9730, %v9730
        %v9859 = vpack.c.bf16 %v9731, %v9731
        %v9860 = vpack.c.bf16 %v9732, %v9732
        %v9861 = vpack.c.bf16 %v9733, %v9733
        %v9862 = vpack.c.bf16 %v9734, %v9734
        %v9863 = vpack.c.bf16 %v9735, %v9735
        %v9864 = vpack.c.bf16 %v9736, %v9736
        %v9865 = vpack.c.bf16 %v9737, %v9737
        %v9866 = vpack.c.bf16 %v9738, %v9738
        %v9867 = vpack.c.bf16 %v9739, %v9739
        %v9868 = vpack.c.bf16 %v9740, %v9740
        %v9869 = vpack.c.bf16 %v9741, %v9741
        %v9870 = vpack.c.bf16 %v9742, %v9742
        %v9871 = vpack.c.bf16 %v9743, %v9743
        %v9872 = vpack.c.bf16 %v9744, %v9744
        %v9873 = vpack.c.bf16 %v9745, %v9745
        %v9874 = vpack.c.bf16 %v9746, %v9746
        %v9875 = vpack.c.bf16 %v9747, %v9747
        %v9876 = vpack.c.bf16 %v9748, %v9748
        %v9877 = vpack.c.bf16 %v9749, %v9749
        %v9878 = vpack.c.bf16 %v9750, %v9750
        %v9879 = vpack.c.bf16 %v9751, %v9751
        %v9880 = vpack.c.bf16 %v9752, %v9752
        %v9881 = vpack.c.bf16 %v9753, %v9753
        %v10010 = vunpack.c.l.b16 %v9754
        %v10011 = vunpack.c.l.b16 %v9755
        %v10012 = vunpack.c.l.b16 %v9756
        %v10013 = vunpack.c.l.b16 %v9757
        %v10014 = vunpack.c.l.b16 %v9758
        %v10015 = vunpack.c.l.b16 %v9759
        %v10016 = vunpack.c.l.b16 %v9760
        %v10017 = vunpack.c.l.b16 %v9761
        %v10018 = vunpack.c.l.b16 %v9762
        %v10019 = vunpack.c.l.b16 %v9763
        %v10020 = vunpack.c.l.b16 %v9764
        %v10021 = vunpack.c.l.b16 %v9765
        %v10022 = vunpack.c.l.b16 %v9766
        %v10023 = vunpack.c.l.b16 %v9767
        %v10024 = vunpack.c.l.b16 %v9768
        %v10025 = vunpack.c.l.b16 %v9769
        %v10026 = vunpack.c.l.b16 %v9770
        %v10027 = vunpack.c.l.b16 %v9771
        %v10028 = vunpack.c.l.b16 %v9772
        %v10029 = vunpack.c.l.b16 %v9773
        %v10030 = vunpack.c.l.b16 %v9774
        %v10031 = vunpack.c.l.b16 %v9775
        %v10032 = vunpack.c.l.b16 %v9776
        %v10033 = vunpack.c.l.b16 %v9777
        %v10034 = vunpack.c.l.b16 %v9778
        %v10035 = vunpack.c.l.b16 %v9779
        %v10036 = vunpack.c.l.b16 %v9780
        %v10037 = vunpack.c.l.b16 %v9781
        %v10038 = vunpack.c.l.b16 %v9782
        %v10039 = vunpack.c.l.b16 %v9783
        %v10040 = vunpack.c.l.b16 %v9784
        %v10041 = vunpack.c.l.b16 %v9785
        %v10042 = vunpack.c.l.b16 %v9786
        %v10043 = vunpack.c.l.b16 %v9787
        %v10044 = vunpack.c.l.b16 %v9788
        %v10045 = vunpack.c.l.b16 %v9789
        %v10046 = vunpack.c.l.b16 %v9790
        %v10047 = vunpack.c.l.b16 %v9791
        %v10048 = vunpack.c.l.b16 %v9792
        %v10049 = vunpack.c.l.b16 %v9793
        %v10050 = vunpack.c.l.b16 %v9794
        %v10051 = vunpack.c.l.b16 %v9795
        %v10052 = vunpack.c.l.b16 %v9796
        %v10053 = vunpack.c.l.b16 %v9797
        %v10054 = vunpack.c.l.b16 %v9798
        %v10055 = vunpack.c.l.b16 %v9799
        %v10056 = vunpack.c.l.b16 %v9800
        %v10057 = vunpack.c.l.b16 %v9801
        %v10058 = vunpack.c.l.b16 %v9802
        %v10059 = vunpack.c.l.b16 %v9803
        %v10060 = vunpack.c.l.b16 %v9804
        %v10061 = vunpack.c.l.b16 %v9805
        %v10062 = vunpack.c.l.b16 %v9806
        %v10063 = vunpack.c.l.b16 %v9807
        %v10064 = vunpack.c.l.b16 %v9808
        %v10065 = vunpack.c.l.b16 %v9809
        %v10066 = vunpack.c.l.b16 %v9810
        %v10067 = vunpack.c.l.b16 %v9811
        %v10068 = vunpack.c.l.b16 %v9812
        %v10069 = vunpack.c.l.b16 %v9813
        %v10070 = vunpack.c.l.b16 %v9814
        %v10071 = vunpack.c.l.b16 %v9815
        %v10072 = vunpack.c.l.b16 %v9816
        %v10073 = vunpack.c.l.b16 %v9817
        %v10074 = vunpack.c.l.b16 %v9818
        %v10075 = vunpack.c.l.b16 %v9819
        %v10076 = vunpack.c.l.b16 %v9820
        %v10077 = vunpack.c.l.b16 %v9821
        %v10078 = vunpack.c.l.b16 %v9822
        %v10079 = vunpack.c.l.b16 %v9823
        %v10080 = vunpack.c.l.b16 %v9824
        %v10081 = vunpack.c.l.b16 %v9825
        %v10082 = vunpack.c.l.b16 %v9826
        %v10083 = vunpack.c.l.b16 %v9827
        %v10084 = vunpack.c.l.b16 %v9828
        %v10085 = vunpack.c.l.b16 %v9829
        %v10086 = vunpack.c.l.b16 %v9830
        %v10087 = vunpack.c.l.b16 %v9831
        %v10088 = vunpack.c.l.b16 %v9832
        %v10089 = vunpack.c.l.b16 %v9833
        %v10090 = vunpack.c.l.b16 %v9834
        %v10091 = vunpack.c.l.b16 %v9835
        %v10092 = vunpack.c.l.b16 %v9836
        %v10093 = vunpack.c.l.b16 %v9837
        %v10094 = vunpack.c.l.b16 %v9838
        %v10095 = vunpack.c.l.b16 %v9839
        %v10096 = vunpack.c.l.b16 %v9840
        %v10097 = vunpack.c.l.b16 %v9841
        %v10098 = vunpack.c.l.b16 %v9842
        %v10099 = vunpack.c.l.b16 %v9843
        %v10100 = vunpack.c.l.b16 %v9844
        %v10101 = vunpack.c.l.b16 %v9845
        %v10102 = vunpack.c.l.b16 %v9846
        %v10103 = vunpack.c.l.b16 %v9847
        %v10104 = vunpack.c.l.b16 %v9848
        %v10105 = vunpack.c.l.b16 %v9849
        %v10106 = vunpack.c.l.b16 %v9850
        %v10107 = vunpack.c.l.b16 %v9851
        %v10108 = vunpack.c.l.b16 %v9852
        %v10109 = vunpack.c.l.b16 %v9853
        %v10110 = vunpack.c.l.b16 %v9854
        %v10111 = vunpack.c.l.b16 %v9855
        %v10112 = vunpack.c.l.b16 %v9856
        %v10113 = vunpack.c.l.b16 %v9857
        %v10114 = vunpack.c.l.b16 %v9858
        %v10115 = vunpack.c.l.b16 %v9859
        %v10116 = vunpack.c.l.b16 %v9860
        %v10117 = vunpack.c.l.b16 %v9861
        %v10118 = vunpack.c.l.b16 %v9862
        %v10119 = vunpack.c.l.b16 %v9863
        %v10120 = vunpack.c.l.b16 %v9864
        %v10121 = vunpack.c.l.b16 %v9865
        %v10122 = vunpack.c.l.b16 %v9866
        %v10123 = vunpack.c.l.b16 %v9867
        %v10124 = vunpack.c.l.b16 %v9868
        %v10125 = vunpack.c.l.b16 %v9869
        %v10126 = vunpack.c.l.b16 %v9870
        %v10127 = vunpack.c.l.b16 %v9871
        %v10128 = vunpack.c.l.b16 %v9872
        %v10129 = vunpack.c.l.b16 %v9873
        %v10130 = vunpack.c.l.b16 %v9874
        %v10131 = vunpack.c.l.b16 %v9875
        %v10132 = vunpack.c.l.b16 %v9876
        %v10133 = vunpack.c.l.b16 %v9877
        %v10134 = vunpack.c.l.b16 %v9878
        %v10135 = vunpack.c.l.b16 %v9879
        %v10136 = vunpack.c.l.b16 %v9880
        %v10137 = vunpack.c.l.b16 %v9881
        %v10138 = vpack.c.b16 %v10011, %v10010
        %v10139 = vpack.c.b16 %v10013, %v10012
        %v10140 = vpack.c.b16 %v10015, %v10014
        %v10141 = vpack.c.b16 %v10017, %v10016
        %v10142 = vpack.c.b16 %v10019, %v10018
        %v10143 = vpack.c.b16 %v10021, %v10020
        %v10144 = vpack.c.b16 %v10023, %v10022
        %v10145 = vpack.c.b16 %v10025, %v10024
        %v10146 = vpack.c.b16 %v10027, %v10026
        %v10147 = vpack.c.b16 %v10029, %v10028
        %v10148 = vpack.c.b16 %v10031, %v10030
        %v10149 = vpack.c.b16 %v10033, %v10032
        %v10150 = vpack.c.b16 %v10035, %v10034
        %v10151 = vpack.c.b16 %v10037, %v10036
        %v10152 = vpack.c.b16 %v10039, %v10038
        %v10153 = vpack.c.b16 %v10041, %v10040
        %v10154 = vpack.c.b16 %v10043, %v10042
        %v10155 = vpack.c.b16 %v10045, %v10044
        %v10156 = vpack.c.b16 %v10047, %v10046
        %v10157 = vpack.c.b16 %v10049, %v10048
        %v10158 = vpack.c.b16 %v10051, %v10050
        %v10159 = vpack.c.b16 %v10053, %v10052
        %v10160 = vpack.c.b16 %v10055, %v10054
        %v10161 = vpack.c.b16 %v10057, %v10056
        %v10162 = vpack.c.b16 %v10059, %v10058
        %v10163 = vpack.c.b16 %v10061, %v10060
        %v10164 = vpack.c.b16 %v10063, %v10062
        %v10165 = vpack.c.b16 %v10065, %v10064
        %v10166 = vpack.c.b16 %v10067, %v10066
        %v10167 = vpack.c.b16 %v10069, %v10068
        %v10168 = vpack.c.b16 %v10071, %v10070
        %v10169 = vpack.c.b16 %v10073, %v10072
        %v10170 = vpack.c.b16 %v10075, %v10074
        %v10171 = vpack.c.b16 %v10077, %v10076
        %v10172 = vpack.c.b16 %v10079, %v10078
        %v10173 = vpack.c.b16 %v10081, %v10080
        %v10174 = vpack.c.b16 %v10083, %v10082
        %v10175 = vpack.c.b16 %v10085, %v10084
        %v10176 = vpack.c.b16 %v10087, %v10086
        %v10177 = vpack.c.b16 %v10089, %v10088
        %v10178 = vpack.c.b16 %v10091, %v10090
        %v10179 = vpack.c.b16 %v10093, %v10092
        %v10180 = vpack.c.b16 %v10095, %v10094
        %v10181 = vpack.c.b16 %v10097, %v10096
        %v10182 = vpack.c.b16 %v10099, %v10098
        %v10183 = vpack.c.b16 %v10101, %v10100
        %v10184 = vpack.c.b16 %v10103, %v10102
        %v10185 = vpack.c.b16 %v10105, %v10104
        %v10186 = vpack.c.b16 %v10107, %v10106
        %v10187 = vpack.c.b16 %v10109, %v10108
        %v10188 = vpack.c.b16 %v10111, %v10110
        %v10189 = vpack.c.b16 %v10113, %v10112
        %v10190 = vpack.c.b16 %v10115, %v10114
        %v10191 = vpack.c.b16 %v10117, %v10116
        %v10192 = vpack.c.b16 %v10119, %v10118
        %v10193 = vpack.c.b16 %v10121, %v10120
        %v10194 = vpack.c.b16 %v10123, %v10122
        %v10195 = vpack.c.b16 %v10125, %v10124
        %v10196 = vpack.c.b16 %v10127, %v10126
        %v10197 = vpack.c.b16 %v10129, %v10128
        %v10198 = vpack.c.b16 %v10131, %v10130
        %v10199 = vpack.c.b16 %v10133, %v10132
        %v10200 = vpack.c.b16 %v10135, %v10134
        %v10201 = vpack.c.b16 %v10137, %v10136
        %10266 = vst [vmem:[%s530] sm:$0xff] %v10138
        %10267 = vst [vmem:[%s530 + $0x8] sm:$0xff] %v10139
        %10268 = vst [vmem:[%s530 + $0x10] sm:$0xff] %v10140
        %10269 = vst [vmem:[%s530 + $0x18] sm:$0xff] %v10141
        %10270 = vst [vmem:[%s530 + $0x20] sm:$0xff] %v10142
        %10271 = vst [vmem:[%s530 + $0x28] sm:$0xff] %v10143
        %10272 = vst [vmem:[%s530 + $0x30] sm:$0xff] %v10144
        %10273 = vst [vmem:[%s530 + $0x38] sm:$0xff] %v10145
        %10274 = vst [vmem:[%s530 + $0x40] sm:$0xff] %v10146
        %10275 = vst [vmem:[%s530 + $0x48] sm:$0xff] %v10147
        %10276 = vst [vmem:[%s530 + $0x50] sm:$0xff] %v10148
        %10277 = vst [vmem:[%s530 + $0x58] sm:$0xff] %v10149
        %10278 = vst [vmem:[%s530 + $0x60] sm:$0xff] %v10150
        %10279 = vst [vmem:[%s530 + $0x68] sm:$0xff] %v10151
        %10280 = vst [vmem:[%s530 + $0x70] sm:$0xff] %v10152
        %10281 = vst [vmem:[%s530 + $0x78] sm:$0xff] %v10153
        %10282 = vst [vmem:[%s530 + $0x80] sm:$0xff] %v10154
        %10283 = vst [vmem:[%s530 + $0x88] sm:$0xff] %v10155
        %10284 = vst [vmem:[%s530 + $0x90] sm:$0xff] %v10156
        %10285 = vst [vmem:[%s530 + $0x98] sm:$0xff] %v10157
        %10286 = vst [vmem:[%s530 + $0xa0] sm:$0xff] %v10158
        %10287 = vst [vmem:[%s530 + $0xa8] sm:$0xff] %v10159
        %10288 = vst [vmem:[%s530 + $0xb0] sm:$0xff] %v10160
        %10289 = vst [vmem:[%s530 + $0xb8] sm:$0xff] %v10161
        %10290 = vst [vmem:[%s530 + $0xc0] sm:$0xff] %v10162
        %10291 = vst [vmem:[%s530 + $0xc8] sm:$0xff] %v10163
        %10292 = vst [vmem:[%s530 + $0xd0] sm:$0xff] %v10164
        %10293 = vst [vmem:[%s530 + $0xd8] sm:$0xff] %v10165
        %10294 = vst [vmem:[%s530 + $0xe0] sm:$0xff] %v10166
        %10295 = vst [vmem:[%s530 + $0xe8] sm:$0xff] %v10167
        %10296 = vst [vmem:[%s530 + $0xf0] sm:$0xff] %v10168
        %10297 = vst [vmem:[%s530 + $0xf8] sm:$0xff] %v10169
        %10298 = vst [vmem:[%s530 + $0x100] sm:$0xff] %v10170
        %10299 = vst [vmem:[%s530 + $0x108] sm:$0xff] %v10171
        %10300 = vst [vmem:[%s530 + $0x110] sm:$0xff] %v10172
        %10301 = vst [vmem:[%s530 + $0x118] sm:$0xff] %v10173
        %10302 = vst [vmem:[%s530 + $0x120] sm:$0xff] %v10174
        %10303 = vst [vmem:[%s530 + $0x128] sm:$0xff] %v10175
        %10304 = vst [vmem:[%s530 + $0x130] sm:$0xff] %v10176
        %10305 = vst [vmem:[%s530 + $0x138] sm:$0xff] %v10177
        %10306 = vst [vmem:[%s530 + $0x140] sm:$0xff] %v10178
        %10307 = vst [vmem:[%s530 + $0x148] sm:$0xff] %v10179
        %10308 = vst [vmem:[%s530 + $0x150] sm:$0xff] %v10180
        %10309 = vst [vmem:[%s530 + $0x158] sm:$0xff] %v10181
        %10310 = vst [vmem:[%s530 + $0x160] sm:$0xff] %v10182
        %10311 = vst [vmem:[%s530 + $0x168] sm:$0xff] %v10183
        %10312 = vst [vmem:[%s530 + $0x170] sm:$0xff] %v10184
        %10313 = vst [vmem:[%s530 + $0x178] sm:$0xff] %v10185
        %10314 = vst [vmem:[%s530 + $0x180] sm:$0xff] %v10186
        %10315 = vst [vmem:[%s530 + $0x188] sm:$0xff] %v10187
        %10316 = vst [vmem:[%s530 + $0x190] sm:$0xff] %v10188
        %10317 = vst [vmem:[%s530 + $0x198] sm:$0xff] %v10189
        %10318 = vst [vmem:[%s530 + $0x1a0] sm:$0xff] %v10190
        %10319 = vst [vmem:[%s530 + $0x1a8] sm:$0xff] %v10191
        %10320 = vst [vmem:[%s530 + $0x1b0] sm:$0xff] %v10192
        %10321 = vst [vmem:[%s530 + $0x1b8] sm:$0xff] %v10193
        %10322 = vst [vmem:[%s530 + $0x1c0] sm:$0xff] %v10194
        %10323 = vst [vmem:[%s530 + $0x1c8] sm:$0xff] %v10195
        %10324 = vst [vmem:[%s530 + $0x1d0] sm:$0xff] %v10196
        %10325 = vst [vmem:[%s530 + $0x1d8] sm:$0xff] %v10197
        %10326 = vst [vmem:[%s530 + $0x1e0] sm:$0xff] %v10198
        %10327 = vst [vmem:[%s530 + $0x1e8] sm:$0xff] %v10199
        %10328 = vst [vmem:[%s530 + $0x1f0] sm:$0xff] %v10200
        %10329 = vst [vmem:[%s530 + $0x1f8] sm:$0xff] %v10201
        %s10330 = sand.u32 %s298, 1
        %s10331 = scalar_lea.sflag [#allocation5], %s10330
        %s10332 = sand.u32 %s298, 1
        %s10333 = smul.addr %s10332, 512
        %s10334 = scalar_lea.vmem [#allocation17], %s10333
        // Predicated region
        $region101: #{tpu_custom_call.1} parent=67 // pred_check
          %p10335 = pneg %p308
        $region102: #{tpu_custom_call.1} parent=67 // pred_check_branch
          %10337 = sbr.rel (%p10335) target = $region104
        $region103: #{tpu_custom_call.1} parent=67 // pred_region
          %s10338 = smul.u32 4, %s33
          %s10340 = ssub.s32 8192, 8192
          %10341 = vsyncadd %s10331, %s10340
          %s10342 = smul.addr %s10338, 32
          %s10343 = smul.addr %s10342, 64
          %s10344 = scalar_lea.hbm %s12, %s10343
          %s10345 = sshll.u32 %s10334, 4
          %s10346 = int_to_ptr.vmem [resolvable:$true] %s10345
          %10351 = dma.vmem_to_hbm [thread:$0]  %s10346, 8192, %s10344, %s10331, 256, 256, 16
        $region104: #{tpu_custom_call.1} parent=67 // pred_fallthru
          _
      $region68: #{tpu_custom_call.1} parent=5 // pred_fallthru
        _
      %p10352 = scmp.le.s32.totalorder 2, %s28
      // Predicated region
      $region105: #{tpu_custom_call.1} parent=5 // pred_check
        %p10353 = pneg %p10352
      $region106: #{tpu_custom_call.1} parent=5 // pred_check_branch
        %10355 = sbr.rel (%p10353) target = $region108
      $region107: #{tpu_custom_call.1} parent=5 // pred_region
        %s10356 = ssub.s32 %s28, 2
        // Predicated region
        $region109: #{tpu_custom_call.1} parent=107 // pred_check
          %p10357 = pneg %p314
        $region110: #{tpu_custom_call.1} parent=107 // pred_check_branch
          %10359 = sbr.rel (%p10357) target = $region112
        $region111: #{tpu_custom_call.1} parent=107 // pred_region
          %s10360 = sand.u32 %s299, 1
          %s10361 = scalar_lea.sflag [#allocation5], %s10360
          %s10362 = sand.u32 %s299, 1
          %s10363 = smul.addr %s10362, 512
          %s10364 = scalar_lea.vmem [#allocation17], %s10363
          %10365 = dma.done %s10361, 8192
        $region112: #{tpu_custom_call.1} parent=107 // pred_fallthru
          _
      $region108: #{tpu_custom_call.1} parent=5 // pred_fallthru
        _
    $region6: #{tpu_custom_call.1} parent=1 // loop_footer
      %s32 = sadd.s32 1, %s28
    $region7: #{tpu_custom_call.1} parent=1 // loop_footer_branch
      %27 = sbr.rel target = $region3
    $region8: #{tpu_custom_call.1} parent=1 // loop_exit
      _
    %10366 = vsyncpa [#allocation4], 1
    %s10367 = scalar_lea.sflag [#allocation4], 1
    %10368 = vsyncpa %s10367, 1
    %10369 = vsyncpa [#allocation7], 1
    %10370 = vsyncpa [#allocation10], 1
    %10371 = vsyncpa [#allocation13], 1
    %10372 = vsyncpa [#allocation16], 1
    %10373 = vsyncpa [#allocation5], 1
    %s10374 = scalar_lea.sflag [#allocation5], 1
    %10375 = vsyncpa %s10374, 1

</llo_original>
